<compile_context>
chip_gen: v7x
topology: tpu7x:2x2x1
jax: 0.10.0
libtpu: 0.0.40
codegen_flags: <defaults>
</compile_context>

<pallas_src>
import functools

import jax
import jax.numpy as jnp
from jax.experimental import pallas as pl
from jax.experimental.pallas import tpu as pltpu

_BN_EPS = 1e-5
_LAYER_CFG = [(1, 0), (2, 1), (2, 1), (2, 1), (2, 1)]  # (stride, padding) per layer
_LANE = 128
_VMEM_BUDGET = 20 * 1024 * 1024   # conservative tile budget (fits every generation)
_VMEM_LIMIT = 32 * 1024 * 1024    # scoped VMEM limit passed to Mosaic


def _round_up(x, m):
    return (x + m - 1) // m * m


def _pick_tm(m, per_row_bytes, fixed_bytes, budget=_VMEM_BUDGET):
    """Largest M-tile (multiple of 8) within the VMEM budget that divides m."""
    avail = budget - fixed_bytes
    cap = max(8, (avail // max(per_row_bytes, 1)) // 8 * 8) if avail > 0 else 8
    if m <= cap:
        return m, m                          # single full block (ragged M is OK)
    tm = cap
    while tm >= 8 and m % tm:
        tm -= 8
    if tm >= 8:
        return tm, m                         # divides exactly: no pad / no slice
    return cap, _round_up(m, cap)            # rare fallback: zero-pad rows


# ----------------------------------------------------------------------------
# Fused Pallas kernels
# ----------------------------------------------------------------------------
def _subpix_gemm_bn_relu_kernel(a_ref, b_ref, o_ref, sum_sc, sq_sc, *, m_true, eps):
    """Per (parity, M-tile) step: y = A_p[i] @ B_p; BN+ReLU epilogue at the end.

    Output block is the full (4, Mp, Cpad) array, resident in VMEM across the
    (sequential) grid; per-channel sums accumulate as 8 sublane partials."""
    par = pl.program_id(0)
    i = pl.program_id(1)
    last = (par == pl.num_programs(0) - 1) & (i == pl.num_programs(1) - 1)
    tm = a_ref.shape[1]

    @pl.when((par == 0) & (i == 0))
    def _init():
        sum_sc[...] = jnp.zeros_like(sum_sc)
        sq_sc[...] = jnp.zeros_like(sq_sc)

    y = jnp.dot(a_ref[0], b_ref[0], preferred_element_type=jnp.float32)  # (tm, Cpad)
    row0 = pl.multiple_of(i * tm, tm)
    o_ref[par, pl.ds(row0, tm), :] = y

    if tm % 8 == 0:                      # sublane-partial accumulation (VALU adds)
        y3 = y.reshape(tm // 8, 8, y.shape[1])
        sum_sc[...] += jnp.sum(y3, axis=0)
        sq_sc[...] += jnp.sum(y3 * y3, axis=0)
    else:                                # ragged single-block fallback
        sum_sc[0:1, :] += jnp.sum(y, axis=0, keepdims=True)
        sq_sc[0:1, :] += jnp.sum(y * y, axis=0, keepdims=True)

    @pl.when(last)
    def _epilogue():
        inv_m = 1.0 / float(m_true)          # padded rows are zero -> true count
        tot = jnp.sum(sum_sc[...], axis=0, keepdims=True)
        tot_sq = jnp.sum(sq_sc[...], axis=0, keepdims=True)
        mean = tot * inv_m
        var = jnp.maximum(tot_sq * inv_m - mean * mean, 0.0)
        scale = jax.lax.rsqrt(var + eps)
        shift = -mean * scale
        o_ref[...] = jnp.maximum(o_ref[...] * scale + shift, 0.0)


def _subpix_gemm_tanh_kernel(a_ref, b_ref, o_ref):
    """out = tanh(A_p[i] @ B_p), fused epilogue, streaming lane-dense tiles."""
    o_ref[0] = jnp.tanh(
        jnp.dot(a_ref[0], b_ref[0], preferred_element_type=jnp.float32))


def _input_gemm_bn_relu_kernel(a_ref, b_ref, o_ref, *, groups, n_rows, cpad, eps):
    """Layer 0 (1x1 spatial input): y = x @ W, columns grouped as (pixel, Cpad).

    BN stats per channel are reduced over rows AND the 16 lane-aligned pixel
    groups; BN+ReLU applied group-wise so every op is full-vreg."""
    y = jnp.dot(a_ref[...], b_ref[...], preferred_element_type=jnp.float32)
    s = jnp.zeros((1, cpad), jnp.float32)
    sq = jnp.zeros((1, cpad), jnp.float32)
    for g in range(groups):
        yg = y[:, g * cpad:(g + 1) * cpad]
        s = s + jnp.sum(yg, axis=0, keepdims=True)
        sq = sq + jnp.sum(yg * yg, axis=0, keepdims=True)
    inv_m = 1.0 / float(groups * n_rows)
    mean = s * inv_m
    var = jnp.maximum(sq * inv_m - mean * mean, 0.0)
    scale = jax.lax.rsqrt(var + eps)
    shift = -mean * scale
    for g in range(groups):
        yg = y[:, g * cpad:(g + 1) * cpad]
        o_ref[:, g * cpad:(g + 1) * cpad] = jnp.maximum(yg * scale + shift, 0.0)


# ----------------------------------------------------------------------------
# pallas_call wrappers
# ----------------------------------------------------------------------------
def fused_subpixel_gemm_bn_relu(a_all, b_all, *, m_true):
    P, M, K = a_all.shape
    Cp = b_all.shape[2]
    fixed = 4 * (P * M * Cp) + 2 * 4 * K * Cp + 2 * 4 * 8 * Cp   # resident out + B + scratch
    per_row = 2 * 4 * K                                          # double-buffered A rows
    tm, Mp = _pick_tm(M, per_row, fixed)
    if Mp != M:
        a_all = jnp.pad(a_all, ((0, 0), (0, Mp - M), (0, 0)))
    kernel = functools.partial(_subpix_gemm_bn_relu_kernel, m_true=m_true, eps=_BN_EPS)
    out = pl.pallas_call(
        kernel,
        out_shape=jax.ShapeDtypeStruct((P, Mp, Cp), jnp.float32),
        grid_spec=pltpu.PrefetchScalarGridSpec(
            num_scalar_prefetch=0,
            grid=(P, Mp // tm),
            in_specs=[
                pl.BlockSpec((1, tm, K), lambda p, i: (p, i, 0)),
                pl.BlockSpec((1, K, Cp), lambda p, i: (p, 0, 0)),
            ],
            out_specs=pl.BlockSpec((P, Mp, Cp), lambda p, i: (0, 0, 0)),
            scratch_shapes=[pltpu.VMEM((8, Cp), jnp.float32),
                            pltpu.VMEM((8, Cp), jnp.float32)],
        ),
        compiler_params=pltpu.CompilerParams(
            dimension_semantics=("arbitrary", "arbitrary"),
            vmem_limit_bytes=_VMEM_LIMIT),
        cost_estimate=pl.CostEstimate(
            flops=int(2 * P * Mp * K * Cp + 8 * P * Mp * Cp),
            transcendentals=0,
            bytes_accessed=int(4 * (P * Mp * K + P * K * Cp + P * Mp * Cp))),
    )(a_all, b_all)
    return out[:, :M] if Mp != M else out


def fused_subpixel_gemm_tanh(a_all, b_all):
    P, M, K = a_all.shape
    Cp = b_all.shape[2]
    fixed = 2 * 4 * K * Cp
    per_row = (2 * K + 2 * Cp) * 4
    tm, Mp = _pick_tm(M, per_row, fixed)
    if Mp != M:
        a_all = jnp.pad(a_all, ((0, 0), (0, Mp - M), (0, 0)))
    out = pl.pallas_call(
        _subpix_gemm_tanh_kernel,
        out_shape=jax.ShapeDtypeStruct((P, Mp, Cp), jnp.float32),
        grid_spec=pltpu.PrefetchScalarGridSpec(
            num_scalar_prefetch=0,
            grid=(P, Mp // tm),
            in_specs=[
                pl.BlockSpec((1, tm, K), lambda p, i: (p, i, 0)),
                pl.BlockSpec((1, K, Cp), lambda p, i: (p, 0, 0)),
            ],
            out_specs=pl.BlockSpec((1, tm, Cp), lambda p, i: (p, i, 0)),
        ),
        compiler_params=pltpu.CompilerParams(
            dimension_semantics=("parallel", "parallel"),
            vmem_limit_bytes=_VMEM_LIMIT),
        cost_estimate=pl.CostEstimate(
            flops=int(2 * P * Mp * K * Cp),
            transcendentals=int(P * Mp * Cp),
            bytes_accessed=int(4 * (P * Mp * K + P * K * Cp + P * Mp * Cp))),
    )(a_all, b_all)
    return out[:, :M] if Mp != M else out


def fused_input_gemm_bn_relu(x2d, b0, *, groups, cpad):
    N, Cin = x2d.shape
    kernel = functools.partial(_input_gemm_bn_relu_kernel, groups=groups,
                               n_rows=N, cpad=cpad, eps=_BN_EPS)
    return pl.pallas_call(
        kernel,
        out_shape=jax.ShapeDtypeStruct((N, groups * cpad), jnp.float32),
        grid_spec=pltpu.PrefetchScalarGridSpec(
            num_scalar_prefetch=0,
            grid=(1,),
            in_specs=[pl.BlockSpec((N, Cin), lambda i: (0, 0)),
                      pl.BlockSpec((Cin, groups * cpad), lambda i: (0, 0))],
            out_specs=pl.BlockSpec((N, groups * cpad), lambda i: (0, 0)),
        ),
        compiler_params=pltpu.CompilerParams(
            dimension_semantics=("arbitrary",),
            vmem_limit_bytes=_VMEM_LIMIT),
        cost_estimate=pl.CostEstimate(
            flops=int(2 * N * Cin * groups * cpad + 8 * N * groups * cpad),
            transcendentals=0,
            bytes_accessed=int(4 * (N * Cin + Cin * groups * cpad + N * groups * cpad))),
    )(x2d, b0)


# ----------------------------------------------------------------------------
# ConvTranspose2d(k=4, s=2, p=1) -> sub-pixel (parity) GEMM operands
# ----------------------------------------------------------------------------
def _shift(x, delta, axis):
    """result[m] = x[m + delta] with zero padding (delta in {-1, 0, +1})."""
    if delta == 0:
        return x
    n = x.shape[axis]
    pad = [(0, 0)] * x.ndim
    if delta < 0:
        pad[axis] = (1, 0)
        return jax.lax.slice_in_dim(jnp.pad(x, pad), 0, n, axis=axis)
    pad[axis] = (0, 1)
    return jax.lax.slice_in_dim(jnp.pad(x, pad), 1, n + 1, axis=axis)


def _subpixel_operands(x_nhwc, w_ct, cpad):
    """Output pixel (2m+r, 2n+s) only touches a 2x2 subset of the 4x4 taps, so
    each parity (r, s) is a stride-1 GEMM with K = 4*Cin (no dilated zeros)."""
    N, H, W, Cin = x_nhwc.shape
    Cout = w_ct.shape[1]
    assert w_ct.shape[2:] == (4, 4)
    a_par, b_par = [], []
    for r in (0, 1):
        for s in (0, 1):
            taps, wts = [], []
            for th in (0, 1):
                xh = _shift(x_nhwc, th - 1 + r, axis=1)
                for tw in (0, 1):
                    taps.append(_shift(xh, tw - 1 + s, axis=2))
                    wts.append(w_ct[:, :, 3 - 2 * th - r, 3 - 2 * tw - s])  # (Cin, Cout)
            a = jnp.stack(taps, axis=3).reshape(N * H * W, 4 * Cin)
            b = jnp.concatenate(wts, axis=0)                                 # (4*Cin, Cout)
            a_par.append(a)
            b_par.append(jnp.pad(b, ((0, 0), (0, cpad - Cout))))             # lane-dense
    return jnp.stack(a_par), jnp.stack(b_par)


def _pixel_shuffle(y_par, N, H, W, Cout):
    """(4, N*H*W, Cout) parity outputs -> (N, 2H, 2W, Cout)."""
    y = y_par.reshape(2, 2, N, H, W, Cout)
    return y.transpose(2, 3, 0, 4, 1, 5).reshape(N, 2 * H, 2 * W, Cout)


# ----------------------------------------------------------------------------
# Generator forward (matches the nn.Sequential in the PyTorch module)
# ----------------------------------------------------------------------------
def generator_forward(z_nchw, weights):
    N, nz, h0, w0 = z_nchw.shape
    assert (h0, w0) == (1, 1)

    # Layer 0: 1x1 input, stride 1, pad 0  ->  direct GEMM (N, nz) @ (nz, 16*Cpad).
    w_ct0 = weights[0]                                  # (nz, C0, 4, 4)
    C0 = w_ct0.shape[1]
    cpad0 = _round_up(C0, _LANE)
    b0 = jnp.transpose(w_ct0, (0, 2, 3, 1))             # (nz, 4, 4, C0)
    b0 = jnp.pad(b0, ((0, 0), (0, 0), (0, 0), (0, cpad0 - C0))).reshape(nz, 16 * cpad0)
    x2d = z_nchw.reshape(N, nz).astype(jnp.float32)
    y0 = fused_input_gemm_bn_relu(x2d, b0, groups=16, cpad=cpad0)
    x = y0.reshape(N, 4, 4, cpad0)[..., :C0]            # NHWC

    # Layers 1..4: ConvTranspose2d(4, 2, 1) via sub-pixel decomposition.
    n_layers = len(weights)
    for li in range(1, n_layers):
        w_ct = weights[li]
        Cout = w_ct.shape[1]
        cpad = _round_up(Cout, _LANE)
        Nn, H, W, _ = x.shape
        M = Nn * H * W
        a_all, b_all = _subpixel_operands(x, w_ct, cpad)
        if li < n_layers - 1:
            # BatchNorm2d (training mode, batch stats, gamma=1, beta=0) + ReLU,
            # fused into the GEMM; stats span all 4 parities (count = 4*M).
            y = fused_subpixel_gemm_bn_relu(a_all, b_all, m_true=4 * M)
        else:
            y = fused_subpixel_gemm_tanh(a_all, b_all)
        x = _pixel_shuffle(y[..., :Cout], Nn, H, W, Cout)
    return jnp.transpose(x, (0, 3, 1, 2))               # NHWC -> NCHW


# ----------------------------------------------------------------------------
# Pure-JAX reference (lax conv) for the correctness check
# ----------------------------------------------------------------------------
def reference_forward(z_nchw, weights):
    x = z_nchw
    n_layers = len(weights)
    for li, (w, (s, p)) in enumerate(zip(weights, _LAYER_CFG)):
        k = w.shape[2]
        w_conv = jnp.transpose(jnp.flip(w, axis=(2, 3)), (1, 0, 2, 3))  # (Cout, Cin, k, k)
        x = jax.lax.conv_general_dilated(
            x, w_conv, window_strides=(1, 1),
            padding=[(k - 1 - p, k - 1 - p)] * 2,
            lhs_dilation=(s, s),
            dimension_numbers=("NCHW", "OIHW", "NCHW"),
        )
        if li < n_layers - 1:
            mean = jnp.mean(x, axis=(0, 2, 3), keepdims=True)
            var = jnp.mean((x - mean) ** 2, axis=(0, 2, 3), keepdims=True)
            x = jnp.maximum((x - mean) / jnp.sqrt(var + _BN_EPS), 0.0)
        else:
            x = jnp.tanh(x)
    return x


# ----------------------------------------------------------------------------
if __name__ == "__main__":
    # Small, DCGAN-consistent sizes: latent nz=8, hidden ngf=8, output channels nc=3.
    batch, nz, ngf, nc = 2, 8, 8, 3

    key = jax.random.PRNGKey(0)
    k_z, k_w = jax.random.split(key)
    z = jax.random.normal(k_z, (batch, nz, 1, 1), dtype=jnp.float32)   # NCHW latent

    # ConvTranspose2d weight shapes: (in_channels, out_channels, 4, 4); init N(0, 0.02).
    chans = [nz, ngf * 8, ngf * 4, ngf * 2, ngf, nc]
    wkeys = jax.random.split(k_w, 5)
    weights = [
        0.02 * jax.random.normal(wkeys[i], (chans[i], chans[i + 1], 4, 4), dtype=jnp.float32)
        for i in range(5)
    ]

    fwd = jax.jit(generator_forward)
    out = jax.block_until_ready(fwd(z, weights))
    assert out.shape == (batch, nc, 64, 64), out.shape

    ref = jax.block_until_ready(jax.jit(reference_forward)(z, weights))
    assert jnp.allclose(out, ref, rtol=1e-3, atol=1e-3), float(jnp.max(jnp.abs(out - ref)))

    print("KERNEL_OK")
</pallas_src>

<mosaic_0001>
module attributes {stable_mosaic.version = 11 : i64} {
  func.func @_input_gemm_bn_relu_kernel(%arg0: i32, %arg1: memref<2x8xf32, #tpu.memory_space<vmem>>, %arg2: memref<8x2048xf32, #tpu.memory_space<vmem>>, %arg3: memref<2x2048xf32, #tpu.memory_space<vmem>>) attributes {dimension_semantics = [#tpu.dimension_semantics<arbitrary>], iteration_bounds = array<i64: 1>, scalar_prefetch = 0 : i64, scratch_operands = 0 : i64, tpu.core_type = #tpu.core_type<tc>, window_params = [{pipeline_mode = #tpu.pipeline_mode<synchronous>, transform_indices = @transform_0, window_bounds = array<i64: 2, 8>}, {pipeline_mode = #tpu.pipeline_mode<synchronous>, transform_indices = @transform_1, window_bounds = array<i64: 8, 2048>}, {pipeline_mode = #tpu.pipeline_mode<synchronous>, transform_indices = @transform_2, window_bounds = array<i64: 2, 2048>}]} {
    %c0 = arith.constant 0 : index
    %c0_0 = arith.constant 0 : index
    %0 = vector.load %arg1[%c0, %c0_0] : memref<2x8xf32, #tpu.memory_space<vmem>>, vector<2x8xf32>
    %c0_1 = arith.constant 0 : index
    %c0_2 = arith.constant 0 : index
    %1 = vector.load %arg2[%c0_1, %c0_2] : memref<8x2048xf32, #tpu.memory_space<vmem>>, vector<8x2048xf32>
    %cst = arith.constant dense<0.000000e+00> : vector<2x2048xf32>
    %2 = tpu.matmul %0, %1, %cst {dimension_numbers = #tpu.dot_dimension_numbers<[1], [0], [0], [1], [0, 0, 1, 1], [], []>} : vector<2x8xf32>, vector<8x2048xf32>, vector<2x2048xf32> -> vector<2x2048xf32>
    %cst_3 = arith.constant 0.000000e+00 : f32
    %3 = vector.broadcast %cst_3 : f32 to vector<1x128xf32>
    %cst_4 = arith.constant 0.000000e+00 : f32
    %4 = vector.broadcast %cst_4 : f32 to vector<1x128xf32>
    %5 = vector.extract_strided_slice %2 {offsets = [0, 0], sizes = [2, 128], strides = [1, 1]} : vector<2x2048xf32> to vector<2x128xf32>
    %cst_5 = arith.constant dense<0.000000e+00> : vector<128xf32>
    %6 = vector.multi_reduction <add>, %5, %cst_5 [0] : vector<2x128xf32> to vector<128xf32>
    %7 = vector.shape_cast %6 : vector<128xf32> to vector<1x128xf32>
    %8 = arith.addf %3, %7 : vector<1x128xf32>
    %9 = arith.mulf %5, %5 : vector<2x128xf32>
    %cst_6 = arith.constant dense<0.000000e+00> : vector<128xf32>
    %10 = vector.multi_reduction <add>, %9, %cst_6 [0] : vector<2x128xf32> to vector<128xf32>
    %11 = vector.shape_cast %10 : vector<128xf32> to vector<1x128xf32>
    %12 = arith.addf %4, %11 : vector<1x128xf32>
    %13 = vector.extract_strided_slice %2 {offsets = [0, 128], sizes = [2, 128], strides = [1, 1]} : vector<2x2048xf32> to vector<2x128xf32>
    %cst_7 = arith.constant dense<0.000000e+00> : vector<128xf32>
    %14 = vector.multi_reduction <add>, %13, %cst_7 [0] : vector<2x128xf32> to vector<128xf32>
    %15 = vector.shape_cast %14 : vector<128xf32> to vector<1x128xf32>
    %16 = arith.addf %8, %15 : vector<1x128xf32>
    %17 = arith.mulf %13, %13 : vector<2x128xf32>
    %cst_8 = arith.constant dense<0.000000e+00> : vector<128xf32>
    %18 = vector.multi_reduction <add>, %17, %cst_8 [0] : vector<2x128xf32> to vector<128xf32>
    %19 = vector.shape_cast %18 : vector<128xf32> to vector<1x128xf32>
    %20 = arith.addf %12, %19 : vector<1x128xf32>
    %21 = vector.extract_strided_slice %2 {offsets = [0, 256], sizes = [2, 128], strides = [1, 1]} : vector<2x2048xf32> to vector<2x128xf32>
    %cst_9 = arith.constant dense<0.000000e+00> : vector<128xf32>
    %22 = vector.multi_reduction <add>, %21, %cst_9 [0] : vector<2x128xf32> to vector<128xf32>
    %23 = vector.shape_cast %22 : vector<128xf32> to vector<1x128xf32>
    %24 = arith.addf %16, %23 : vector<1x128xf32>
    %25 = arith.mulf %21, %21 : vector<2x128xf32>
    %cst_10 = arith.constant dense<0.000000e+00> : vector<128xf32>
    %26 = vector.multi_reduction <add>, %25, %cst_10 [0] : vector<2x128xf32> to vector<128xf32>
    %27 = vector.shape_cast %26 : vector<128xf32> to vector<1x128xf32>
    %28 = arith.addf %20, %27 : vector<1x128xf32>
    %29 = vector.extract_strided_slice %2 {offsets = [0, 384], sizes = [2, 128], strides = [1, 1]} : vector<2x2048xf32> to vector<2x128xf32>
    %cst_11 = arith.constant dense<0.000000e+00> : vector<128xf32>
    %30 = vector.multi_reduction <add>, %29, %cst_11 [0] : vector<2x128xf32> to vector<128xf32>
    %31 = vector.shape_cast %30 : vector<128xf32> to vector<1x128xf32>
    %32 = arith.addf %24, %31 : vector<1x128xf32>
    %33 = arith.mulf %29, %29 : vector<2x128xf32>
    %cst_12 = arith.constant dense<0.000000e+00> : vector<128xf32>
    %34 = vector.multi_reduction <add>, %33, %cst_12 [0] : vector<2x128xf32> to vector<128xf32>
    %35 = vector.shape_cast %34 : vector<128xf32> to vector<1x128xf32>
    %36 = arith.addf %28, %35 : vector<1x128xf32>
    %37 = vector.extract_strided_slice %2 {offsets = [0, 512], sizes = [2, 128], strides = [1, 1]} : vector<2x2048xf32> to vector<2x128xf32>
    %cst_13 = arith.constant dense<0.000000e+00> : vector<128xf32>
    %38 = vector.multi_reduction <add>, %37, %cst_13 [0] : vector<2x128xf32> to vector<128xf32>
    %39 = vector.shape_cast %38 : vector<128xf32> to vector<1x128xf32>
    %40 = arith.addf %32, %39 : vector<1x128xf32>
    %41 = arith.mulf %37, %37 : vector<2x128xf32>
    %cst_14 = arith.constant dense<0.000000e+00> : vector<128xf32>
    %42 = vector.multi_reduction <add>, %41, %cst_14 [0] : vector<2x128xf32> to vector<128xf32>
    %43 = vector.shape_cast %42 : vector<128xf32> to vector<1x128xf32>
    %44 = arith.addf %36, %43 : vector<1x128xf32>
    %45 = vector.extract_strided_slice %2 {offsets = [0, 640], sizes = [2, 128], strides = [1, 1]} : vector<2x2048xf32> to vector<2x128xf32>
    %cst_15 = arith.constant dense<0.000000e+00> : vector<128xf32>
    %46 = vector.multi_reduction <add>, %45, %cst_15 [0] : vector<2x128xf32> to vector<128xf32>
    %47 = vector.shape_cast %46 : vector<128xf32> to vector<1x128xf32>
    %48 = arith.addf %40, %47 : vector<1x128xf32>
    %49 = arith.mulf %45, %45 : vector<2x128xf32>
    %cst_16 = arith.constant dense<0.000000e+00> : vector<128xf32>
    %50 = vector.multi_reduction <add>, %49, %cst_16 [0] : vector<2x128xf32> to vector<128xf32>
    %51 = vector.shape_cast %50 : vector<128xf32> to vector<1x128xf32>
    %52 = arith.addf %44, %51 : vector<1x128xf32>
    %53 = vector.extract_strided_slice %2 {offsets = [0, 768], sizes = [2, 128], strides = [1, 1]} : vector<2x2048xf32> to vector<2x128xf32>
    %cst_17 = arith.constant dense<0.000000e+00> : vector<128xf32>
    %54 = vector.multi_reduction <add>, %53, %cst_17 [0] : vector<2x128xf32> to vector<128xf32>
    %55 = vector.shape_cast %54 : vector<128xf32> to vector<1x128xf32>
    %56 = arith.addf %48, %55 : vector<1x128xf32>
    %57 = arith.mulf %53, %53 : vector<2x128xf32>
    %cst_18 = arith.constant dense<0.000000e+00> : vector<128xf32>
    %58 = vector.multi_reduction <add>, %57, %cst_18 [0] : vector<2x128xf32> to vector<128xf32>
    %59 = vector.shape_cast %58 : vector<128xf32> to vector<1x128xf32>
    %60 = arith.addf %52, %59 : vector<1x128xf32>
    %61 = vector.extract_strided_slice %2 {offsets = [0, 896], sizes = [2, 128], strides = [1, 1]} : vector<2x2048xf32> to vector<2x128xf32>
    %cst_19 = arith.constant dense<0.000000e+00> : vector<128xf32>
    %62 = vector.multi_reduction <add>, %61, %cst_19 [0] : vector<2x128xf32> to vector<128xf32>
    %63 = vector.shape_cast %62 : vector<128xf32> to vector<1x128xf32>
    %64 = arith.addf %56, %63 : vector<1x128xf32>
    %65 = arith.mulf %61, %61 : vector<2x128xf32>
    %cst_20 = arith.constant dense<0.000000e+00> : vector<128xf32>
    %66 = vector.multi_reduction <add>, %65, %cst_20 [0] : vector<2x128xf32> to vector<128xf32>
    %67 = vector.shape_cast %66 : vector<128xf32> to vector<1x128xf32>
    %68 = arith.addf %60, %67 : vector<1x128xf32>
    %69 = vector.extract_strided_slice %2 {offsets = [0, 1024], sizes = [2, 128], strides = [1, 1]} : vector<2x2048xf32> to vector<2x128xf32>
    %cst_21 = arith.constant dense<0.000000e+00> : vector<128xf32>
    %70 = vector.multi_reduction <add>, %69, %cst_21 [0] : vector<2x128xf32> to vector<128xf32>
    %71 = vector.shape_cast %70 : vector<128xf32> to vector<1x128xf32>
    %72 = arith.addf %64, %71 : vector<1x128xf32>
    %73 = arith.mulf %69, %69 : vector<2x128xf32>
    %cst_22 = arith.constant dense<0.000000e+00> : vector<128xf32>
    %74 = vector.multi_reduction <add>, %73, %cst_22 [0] : vector<2x128xf32> to vector<128xf32>
    %75 = vector.shape_cast %74 : vector<128xf32> to vector<1x128xf32>
    %76 = arith.addf %68, %75 : vector<1x128xf32>
    %77 = vector.extract_strided_slice %2 {offsets = [0, 1152], sizes = [2, 128], strides = [1, 1]} : vector<2x2048xf32> to vector<2x128xf32>
    %cst_23 = arith.constant dense<0.000000e+00> : vector<128xf32>
    %78 = vector.multi_reduction <add>, %77, %cst_23 [0] : vector<2x128xf32> to vector<128xf32>
    %79 = vector.shape_cast %78 : vector<128xf32> to vector<1x128xf32>
    %80 = arith.addf %72, %79 : vector<1x128xf32>
    %81 = arith.mulf %77, %77 : vector<2x128xf32>
    %cst_24 = arith.constant dense<0.000000e+00> : vector<128xf32>
    %82 = vector.multi_reduction <add>, %81, %cst_24 [0] : vector<2x128xf32> to vector<128xf32>
    %83 = vector.shape_cast %82 : vector<128xf32> to vector<1x128xf32>
    %84 = arith.addf %76, %83 : vector<1x128xf32>
    %85 = vector.extract_strided_slice %2 {offsets = [0, 1280], sizes = [2, 128], strides = [1, 1]} : vector<2x2048xf32> to vector<2x128xf32>
    %cst_25 = arith.constant dense<0.000000e+00> : vector<128xf32>
    %86 = vector.multi_reduction <add>, %85, %cst_25 [0] : vector<2x128xf32> to vector<128xf32>
    %87 = vector.shape_cast %86 : vector<128xf32> to vector<1x128xf32>
    %88 = arith.addf %80, %87 : vector<1x128xf32>
    %89 = arith.mulf %85, %85 : vector<2x128xf32>
    %cst_26 = arith.constant dense<0.000000e+00> : vector<128xf32>
    %90 = vector.multi_reduction <add>, %89, %cst_26 [0] : vector<2x128xf32> to vector<128xf32>
    %91 = vector.shape_cast %90 : vector<128xf32> to vector<1x128xf32>
    %92 = arith.addf %84, %91 : vector<1x128xf32>
    %93 = vector.extract_strided_slice %2 {offsets = [0, 1408], sizes = [2, 128], strides = [1, 1]} : vector<2x2048xf32> to vector<2x128xf32>
    %cst_27 = arith.constant dense<0.000000e+00> : vector<128xf32>
    %94 = vector.multi_reduction <add>, %93, %cst_27 [0] : vector<2x128xf32> to vector<128xf32>
    %95 = vector.shape_cast %94 : vector<128xf32> to vector<1x128xf32>
    %96 = arith.addf %88, %95 : vector<1x128xf32>
    %97 = arith.mulf %93, %93 : vector<2x128xf32>
    %cst_28 = arith.constant dense<0.000000e+00> : vector<128xf32>
    %98 = vector.multi_reduction <add>, %97, %cst_28 [0] : vector<2x128xf32> to vector<128xf32>
    %99 = vector.shape_cast %98 : vector<128xf32> to vector<1x128xf32>
    %100 = arith.addf %92, %99 : vector<1x128xf32>
    %101 = vector.extract_strided_slice %2 {offsets = [0, 1536], sizes = [2, 128], strides = [1, 1]} : vector<2x2048xf32> to vector<2x128xf32>
    %cst_29 = arith.constant dense<0.000000e+00> : vector<128xf32>
    %102 = vector.multi_reduction <add>, %101, %cst_29 [0] : vector<2x128xf32> to vector<128xf32>
    %103 = vector.shape_cast %102 : vector<128xf32> to vector<1x128xf32>
    %104 = arith.addf %96, %103 : vector<1x128xf32>
    %105 = arith.mulf %101, %101 : vector<2x128xf32>
    %cst_30 = arith.constant dense<0.000000e+00> : vector<128xf32>
    %106 = vector.multi_reduction <add>, %105, %cst_30 [0] : vector<2x128xf32> to vector<128xf32>
    %107 = vector.shape_cast %106 : vector<128xf32> to vector<1x128xf32>
    %108 = arith.addf %100, %107 : vector<1x128xf32>
    %109 = vector.extract_strided_slice %2 {offsets = [0, 1664], sizes = [2, 128], strides = [1, 1]} : vector<2x2048xf32> to vector<2x128xf32>
    %cst_31 = arith.constant dense<0.000000e+00> : vector<128xf32>
    %110 = vector.multi_reduction <add>, %109, %cst_31 [0] : vector<2x128xf32> to vector<128xf32>
    %111 = vector.shape_cast %110 : vector<128xf32> to vector<1x128xf32>
    %112 = arith.addf %104, %111 : vector<1x128xf32>
    %113 = arith.mulf %109, %109 : vector<2x128xf32>
    %cst_32 = arith.constant dense<0.000000e+00> : vector<128xf32>
    %114 = vector.multi_reduction <add>, %113, %cst_32 [0] : vector<2x128xf32> to vector<128xf32>
    %115 = vector.shape_cast %114 : vector<128xf32> to vector<1x128xf32>
    %116 = arith.addf %108, %115 : vector<1x128xf32>
    %117 = vector.extract_strided_slice %2 {offsets = [0, 1792], sizes = [2, 128], strides = [1, 1]} : vector<2x2048xf32> to vector<2x128xf32>
    %cst_33 = arith.constant dense<0.000000e+00> : vector<128xf32>
    %118 = vector.multi_reduction <add>, %117, %cst_33 [0] : vector<2x128xf32> to vector<128xf32>
    %119 = vector.shape_cast %118 : vector<128xf32> to vector<1x128xf32>
    %120 = arith.addf %112, %119 : vector<1x128xf32>
    %121 = arith.mulf %117, %117 : vector<2x128xf32>
    %cst_34 = arith.constant dense<0.000000e+00> : vector<128xf32>
    %122 = vector.multi_reduction <add>, %121, %cst_34 [0] : vector<2x128xf32> to vector<128xf32>
    %123 = vector.shape_cast %122 : vector<128xf32> to vector<1x128xf32>
    %124 = arith.addf %116, %123 : vector<1x128xf32>
    %125 = vector.extract_strided_slice %2 {offsets = [0, 1920], sizes = [2, 128], strides = [1, 1]} : vector<2x2048xf32> to vector<2x128xf32>
    %cst_35 = arith.constant dense<0.000000e+00> : vector<128xf32>
    %126 = vector.multi_reduction <add>, %125, %cst_35 [0] : vector<2x128xf32> to vector<128xf32>
    %127 = vector.shape_cast %126 : vector<128xf32> to vector<1x128xf32>
    %128 = arith.addf %120, %127 : vector<1x128xf32>
    %129 = arith.mulf %125, %125 : vector<2x128xf32>
    %cst_36 = arith.constant dense<0.000000e+00> : vector<128xf32>
    %130 = vector.multi_reduction <add>, %129, %cst_36 [0] : vector<2x128xf32> to vector<128xf32>
    %131 = vector.shape_cast %130 : vector<128xf32> to vector<1x128xf32>
    %132 = arith.addf %124, %131 : vector<1x128xf32>
    %cst_37 = arith.constant 3.125000e-02 : f32
    %133 = vector.broadcast %cst_37 : f32 to vector<1x128xf32>
    %134 = arith.mulf %128, %133 : vector<1x128xf32>
    %cst_38 = arith.constant 3.125000e-02 : f32
    %135 = vector.broadcast %cst_38 : f32 to vector<1x128xf32>
    %136 = arith.mulf %132, %135 : vector<1x128xf32>
    %137 = arith.mulf %134, %134 : vector<1x128xf32>
    %138 = arith.subf %136, %137 : vector<1x128xf32>
    %cst_39 = arith.constant 0.000000e+00 : f32
    %139 = vector.broadcast %cst_39 : f32 to vector<1x128xf32>
    %140 = arith.maximumf %138, %139 : vector<1x128xf32>
    %cst_40 = arith.constant 9.99999974E-6 : f32
    %141 = vector.broadcast %cst_40 : f32 to vector<1x128xf32>
    %142 = arith.addf %140, %141 : vector<1x128xf32>
    %143 = math.rsqrt %142 : vector<1x128xf32>
    %cst_41 = arith.constant 0.000000e+00 : f32
    %144 = vector.broadcast %cst_41 : f32 to vector<1x128xf32>
    %145 = arith.subf %144, %134 : vector<1x128xf32>
    %146 = arith.mulf %145, %143 : vector<1x128xf32>
    %147 = vector.extract_strided_slice %2 {offsets = [0, 0], sizes = [2, 128], strides = [1, 1]} : vector<2x2048xf32> to vector<2x128xf32>
    %148 = vector.broadcast %143 : vector<1x128xf32> to vector<2x128xf32>
    %149 = arith.mulf %147, %148 : vector<2x128xf32>
    %150 = vector.broadcast %146 : vector<1x128xf32> to vector<2x128xf32>
    %151 = arith.addf %149, %150 : vector<2x128xf32>
    %cst_42 = arith.constant 0.000000e+00 : f32
    %152 = vector.broadcast %cst_42 : f32 to vector<2x128xf32>
    %153 = arith.maximumf %151, %152 : vector<2x128xf32>
    %c0_43 = arith.constant 0 : index
    %c0_44 = arith.constant 0 : index
    %154 = vector.load %arg3[%c0_43, %c0_44] : memref<2x2048xf32, #tpu.memory_space<vmem>>, vector<2x128xf32>
    tpu.vector_store %arg3[%c0_43, %c0_44], %153 {strides = array<i32>} : memref<2x2048xf32, #tpu.memory_space<vmem>>, vector<2x128xf32>,
    %155 = vector.extract_strided_slice %2 {offsets = [0, 128], sizes = [2, 128], strides = [1, 1]} : vector<2x2048xf32> to vector<2x128xf32>
    %156 = vector.broadcast %143 : vector<1x128xf32> to vector<2x128xf32>
    %157 = arith.mulf %155, %156 : vector<2x128xf32>
    %158 = vector.broadcast %146 : vector<1x128xf32> to vector<2x128xf32>
    %159 = arith.addf %157, %158 : vector<2x128xf32>
    %cst_45 = arith.constant 0.000000e+00 : f32
    %160 = vector.broadcast %cst_45 : f32 to vector<2x128xf32>
    %161 = arith.maximumf %159, %160 : vector<2x128xf32>
    %c0_46 = arith.constant 0 : index
    %c128 = arith.constant 128 : index
    %162 = vector.load %arg3[%c0_46, %c128] : memref<2x2048xf32, #tpu.memory_space<vmem>>, vector<2x128xf32>
    tpu.vector_store %arg3[%c0_46, %c128], %161 {strides = array<i32>} : memref<2x2048xf32, #tpu.memory_space<vmem>>, vector<2x128xf32>,
    %163 = vector.extract_strided_slice %2 {offsets = [0, 256], sizes = [2, 128], strides = [1, 1]} : vector<2x2048xf32> to vector<2x128xf32>
    %164 = vector.broadcast %143 : vector<1x128xf32> to vector<2x128xf32>
    %165 = arith.mulf %163, %164 : vector<2x128xf32>
    %166 = vector.broadcast %146 : vector<1x128xf32> to vector<2x128xf32>
    %167 = arith.addf %165, %166 : vector<2x128xf32>
    %cst_47 = arith.constant 0.000000e+00 : f32
    %168 = vector.broadcast %cst_47 : f32 to vector<2x128xf32>
    %169 = arith.maximumf %167, %168 : vector<2x128xf32>
    %c0_48 = arith.constant 0 : index
    %c256 = arith.constant 256 : index
    %170 = vector.load %arg3[%c0_48, %c256] : memref<2x2048xf32, #tpu.memory_space<vmem>>, vector<2x128xf32>
    tpu.vector_store %arg3[%c0_48, %c256], %169 {strides = array<i32>} : memref<2x2048xf32, #tpu.memory_space<vmem>>, vector<2x128xf32>,
    %171 = vector.extract_strided_slice %2 {offsets = [0, 384], sizes = [2, 128], strides = [1, 1]} : vector<2x2048xf32> to vector<2x128xf32>
    %172 = vector.broadcast %143 : vector<1x128xf32> to vector<2x128xf32>
    %173 = arith.mulf %171, %172 : vector<2x128xf32>
    %174 = vector.broadcast %146 : vector<1x128xf32> to vector<2x128xf32>
    %175 = arith.addf %173, %174 : vector<2x128xf32>
    %cst_49 = arith.constant 0.000000e+00 : f32
    %176 = vector.broadcast %cst_49 : f32 to vector<2x128xf32>
    %177 = arith.maximumf %175, %176 : vector<2x128xf32>
    %c0_50 = arith.constant 0 : index
    %c384 = arith.constant 384 : index
    %178 = vector.load %arg3[%c0_50, %c384] : memref<2x2048xf32, #tpu.memory_space<vmem>>, vector<2x128xf32>
    tpu.vector_store %arg3[%c0_50, %c384], %177 {strides = array<i32>} : memref<2x2048xf32, #tpu.memory_space<vmem>>, vector<2x128xf32>,
    %179 = vector.extract_strided_slice %2 {offsets = [0, 512], sizes = [2, 128], strides = [1, 1]} : vector<2x2048xf32> to vector<2x128xf32>
    %180 = vector.broadcast %143 : vector<1x128xf32> to vector<2x128xf32>
    %181 = arith.mulf %179, %180 : vector<2x128xf32>
    %182 = vector.broadcast %146 : vector<1x128xf32> to vector<2x128xf32>
    %183 = arith.addf %181, %182 : vector<2x128xf32>
    %cst_51 = arith.constant 0.000000e+00 : f32
    %184 = vector.broadcast %cst_51 : f32 to vector<2x128xf32>
    %185 = arith.maximumf %183, %184 : vector<2x128xf32>
    %c0_52 = arith.constant 0 : index
    %c512 = arith.constant 512 : index
    %186 = vector.load %arg3[%c0_52, %c512] : memref<2x2048xf32, #tpu.memory_space<vmem>>, vector<2x128xf32>
    tpu.vector_store %arg3[%c0_52, %c512], %185 {strides = array<i32>} : memref<2x2048xf32, #tpu.memory_space<vmem>>, vector<2x128xf32>,
    %187 = vector.extract_strided_slice %2 {offsets = [0, 640], sizes = [2, 128], strides = [1, 1]} : vector<2x2048xf32> to vector<2x128xf32>
    %188 = vector.broadcast %143 : vector<1x128xf32> to vector<2x128xf32>
    %189 = arith.mulf %187, %188 : vector<2x128xf32>
    %190 = vector.broadcast %146 : vector<1x128xf32> to vector<2x128xf32>
    %191 = arith.addf %189, %190 : vector<2x128xf32>
    %cst_53 = arith.constant 0.000000e+00 : f32
    %192 = vector.broadcast %cst_53 : f32 to vector<2x128xf32>
    %193 = arith.maximumf %191, %192 : vector<2x128xf32>
    %c0_54 = arith.constant 0 : index
    %c640 = arith.constant 640 : index
    %194 = vector.load %arg3[%c0_54, %c640] : memref<2x2048xf32, #tpu.memory_space<vmem>>, vector<2x128xf32>
    tpu.vector_store %arg3[%c0_54, %c640], %193 {strides = array<i32>} : memref<2x2048xf32, #tpu.memory_space<vmem>>, vector<2x128xf32>,
    %195 = vector.extract_strided_slice %2 {offsets = [0, 768], sizes = [2, 128], strides = [1, 1]} : vector<2x2048xf32> to vector<2x128xf32>
    %196 = vector.broadcast %143 : vector<1x128xf32> to vector<2x128xf32>
    %197 = arith.mulf %195, %196 : vector<2x128xf32>
    %198 = vector.broadcast %146 : vector<1x128xf32> to vector<2x128xf32>
    %199 = arith.addf %197, %198 : vector<2x128xf32>
    %cst_55 = arith.constant 0.000000e+00 : f32
    %200 = vector.broadcast %cst_55 : f32 to vector<2x128xf32>
    %201 = arith.maximumf %199, %200 : vector<2x128xf32>
    %c0_56 = arith.constant 0 : index
    %c768 = arith.constant 768 : index
    %202 = vector.load %arg3[%c0_56, %c768] : memref<2x2048xf32, #tpu.memory_space<vmem>>, vector<2x128xf32>
    tpu.vector_store %arg3[%c0_56, %c768], %201 {strides = array<i32>} : memref<2x2048xf32, #tpu.memory_space<vmem>>, vector<2x128xf32>,
    %203 = vector.extract_strided_slice %2 {offsets = [0, 896], sizes = [2, 128], strides = [1, 1]} : vector<2x2048xf32> to vector<2x128xf32>
    %204 = vector.broadcast %143 : vector<1x128xf32> to vector<2x128xf32>
    %205 = arith.mulf %203, %204 : vector<2x128xf32>
    %206 = vector.broadcast %146 : vector<1x128xf32> to vector<2x128xf32>
    %207 = arith.addf %205, %206 : vector<2x128xf32>
    %cst_57 = arith.constant 0.000000e+00 : f32
    %208 = vector.broadcast %cst_57 : f32 to vector<2x128xf32>
    %209 = arith.maximumf %207, %208 : vector<2x128xf32>
    %c0_58 = arith.constant 0 : index
    %c896 = arith.constant 896 : index
    %210 = vector.load %arg3[%c0_58, %c896] : memref<2x2048xf32, #tpu.memory_space<vmem>>, vector<2x128xf32>
    tpu.vector_store %arg3[%c0_58, %c896], %209 {strides = array<i32>} : memref<2x2048xf32, #tpu.memory_space<vmem>>, vector<2x128xf32>,
    %211 = vector.extract_strided_slice %2 {offsets = [0, 1024], sizes = [2, 128], strides = [1, 1]} : vector<2x2048xf32> to vector<2x128xf32>
    %212 = vector.broadcast %143 : vector<1x128xf32> to vector<2x128xf32>
    %213 = arith.mulf %211, %212 : vector<2x128xf32>
    %214 = vector.broadcast %146 : vector<1x128xf32> to vector<2x128xf32>
    %215 = arith.addf %213, %214 : vector<2x128xf32>
    %cst_59 = arith.constant 0.000000e+00 : f32
    %216 = vector.broadcast %cst_59 : f32 to vector<2x128xf32>
    %217 = arith.maximumf %215, %216 : vector<2x128xf32>
    %c0_60 = arith.constant 0 : index
    %c1024 = arith.constant 1024 : index
    %218 = vector.load %arg3[%c0_60, %c1024] : memref<2x2048xf32, #tpu.memory_space<vmem>>, vector<2x128xf32>
    tpu.vector_store %arg3[%c0_60, %c1024], %217 {strides = array<i32>} : memref<2x2048xf32, #tpu.memory_space<vmem>>, vector<2x128xf32>,
    %219 = vector.extract_strided_slice %2 {offsets = [0, 1152], sizes = [2, 128], strides = [1, 1]} : vector<2x2048xf32> to vector<2x128xf32>
    %220 = vector.broadcast %143 : vector<1x128xf32> to vector<2x128xf32>
    %221 = arith.mulf %219, %220 : vector<2x128xf32>
    %222 = vector.broadcast %146 : vector<1x128xf32> to vector<2x128xf32>
    %223 = arith.addf %221, %222 : vector<2x128xf32>
    %cst_61 = arith.constant 0.000000e+00 : f32
    %224 = vector.broadcast %cst_61 : f32 to vector<2x128xf32>
    %225 = arith.maximumf %223, %224 : vector<2x128xf32>
    %c0_62 = arith.constant 0 : index
    %c1152 = arith.constant 1152 : index
    %226 = vector.load %arg3[%c0_62, %c1152] : memref<2x2048xf32, #tpu.memory_space<vmem>>, vector<2x128xf32>
    tpu.vector_store %arg3[%c0_62, %c1152], %225 {strides = array<i32>} : memref<2x2048xf32, #tpu.memory_space<vmem>>, vector<2x128xf32>,
    %227 = vector.extract_strided_slice %2 {offsets = [0, 1280], sizes = [2, 128], strides = [1, 1]} : vector<2x2048xf32> to vector<2x128xf32>
    %228 = vector.broadcast %143 : vector<1x128xf32> to vector<2x128xf32>
    %229 = arith.mulf %227, %228 : vector<2x128xf32>
    %230 = vector.broadcast %146 : vector<1x128xf32> to vector<2x128xf32>
    %231 = arith.addf %229, %230 : vector<2x128xf32>
    %cst_63 = arith.constant 0.000000e+00 : f32
    %232 = vector.broadcast %cst_63 : f32 to vector<2x128xf32>
    %233 = arith.maximumf %231, %232 : vector<2x128xf32>
    %c0_64 = arith.constant 0 : index
    %c1280 = arith.constant 1280 : index
    %234 = vector.load %arg3[%c0_64, %c1280] : memref<2x2048xf32, #tpu.memory_space<vmem>>, vector<2x128xf32>
    tpu.vector_store %arg3[%c0_64, %c1280], %233 {strides = array<i32>} : memref<2x2048xf32, #tpu.memory_space<vmem>>, vector<2x128xf32>,
    %235 = vector.extract_strided_slice %2 {offsets = [0, 1408], sizes = [2, 128], strides = [1, 1]} : vector<2x2048xf32> to vector<2x128xf32>
    %236 = vector.broadcast %143 : vector<1x128xf32> to vector<2x128xf32>
    %237 = arith.mulf %235, %236 : vector<2x128xf32>
    %238 = vector.broadcast %146 : vector<1x128xf32> to vector<2x128xf32>
    %239 = arith.addf %237, %238 : vector<2x128xf32>
    %cst_65 = arith.constant 0.000000e+00 : f32
    %240 = vector.broadcast %cst_65 : f32 to vector<2x128xf32>
    %241 = arith.maximumf %239, %240 : vector<2x128xf32>
    %c0_66 = arith.constant 0 : index
    %c1408 = arith.constant 1408 : index
    %242 = vector.load %arg3[%c0_66, %c1408] : memref<2x2048xf32, #tpu.memory_space<vmem>>, vector<2x128xf32>
    tpu.vector_store %arg3[%c0_66, %c1408], %241 {strides = array<i32>} : memref<2x2048xf32, #tpu.memory_space<vmem>>, vector<2x128xf32>,
    %243 = vector.extract_strided_slice %2 {offsets = [0, 1536], sizes = [2, 128], strides = [1, 1]} : vector<2x2048xf32> to vector<2x128xf32>
    %244 = vector.broadcast %143 : vector<1x128xf32> to vector<2x128xf32>
    %245 = arith.mulf %243, %244 : vector<2x128xf32>
    %246 = vector.broadcast %146 : vector<1x128xf32> to vector<2x128xf32>
    %247 = arith.addf %245, %246 : vector<2x128xf32>
    %cst_67 = arith.constant 0.000000e+00 : f32
    %248 = vector.broadcast %cst_67 : f32 to vector<2x128xf32>
    %249 = arith.maximumf %247, %248 : vector<2x128xf32>
    %c0_68 = arith.constant 0 : index
    %c1536 = arith.constant 1536 : index
    %250 = vector.load %arg3[%c0_68, %c1536] : memref<2x2048xf32, #tpu.memory_space<vmem>>, vector<2x128xf32>
    tpu.vector_store %arg3[%c0_68, %c1536], %249 {strides = array<i32>} : memref<2x2048xf32, #tpu.memory_space<vmem>>, vector<2x128xf32>,
    %251 = vector.extract_strided_slice %2 {offsets = [0, 1664], sizes = [2, 128], strides = [1, 1]} : vector<2x2048xf32> to vector<2x128xf32>
    %252 = vector.broadcast %143 : vector<1x128xf32> to vector<2x128xf32>
    %253 = arith.mulf %251, %252 : vector<2x128xf32>
    %254 = vector.broadcast %146 : vector<1x128xf32> to vector<2x128xf32>
    %255 = arith.addf %253, %254 : vector<2x128xf32>
    %cst_69 = arith.constant 0.000000e+00 : f32
    %256 = vector.broadcast %cst_69 : f32 to vector<2x128xf32>
    %257 = arith.maximumf %255, %256 : vector<2x128xf32>
    %c0_70 = arith.constant 0 : index
    %c1664 = arith.constant 1664 : index
    %258 = vector.load %arg3[%c0_70, %c1664] : memref<2x2048xf32, #tpu.memory_space<vmem>>, vector<2x128xf32>
    tpu.vector_store %arg3[%c0_70, %c1664], %257 {strides = array<i32>} : memref<2x2048xf32, #tpu.memory_space<vmem>>, vector<2x128xf32>,
    %259 = vector.extract_strided_slice %2 {offsets = [0, 1792], sizes = [2, 128], strides = [1, 1]} : vector<2x2048xf32> to vector<2x128xf32>
    %260 = vector.broadcast %143 : vector<1x128xf32> to vector<2x128xf32>
    %261 = arith.mulf %259, %260 : vector<2x128xf32>
    %262 = vector.broadcast %146 : vector<1x128xf32> to vector<2x128xf32>
    %263 = arith.addf %261, %262 : vector<2x128xf32>
    %cst_71 = arith.constant 0.000000e+00 : f32
    %264 = vector.broadcast %cst_71 : f32 to vector<2x128xf32>
    %265 = arith.maximumf %263, %264 : vector<2x128xf32>
    %c0_72 = arith.constant 0 : index
    %c1792 = arith.constant 1792 : index
    %266 = vector.load %arg3[%c0_72, %c1792] : memref<2x2048xf32, #tpu.memory_space<vmem>>, vector<2x128xf32>
    tpu.vector_store %arg3[%c0_72, %c1792], %265 {strides = array<i32>} : memref<2x2048xf32, #tpu.memory_space<vmem>>, vector<2x128xf32>,
    %267 = vector.extract_strided_slice %2 {offsets = [0, 1920], sizes = [2, 128], strides = [1, 1]} : vector<2x2048xf32> to vector<2x128xf32>
    %268 = vector.broadcast %143 : vector<1x128xf32> to vector<2x128xf32>
    %269 = arith.mulf %267, %268 : vector<2x128xf32>
    %270 = vector.broadcast %146 : vector<1x128xf32> to vector<2x128xf32>
    %271 = arith.addf %269, %270 : vector<2x128xf32>
    %cst_73 = arith.constant 0.000000e+00 : f32
    %272 = vector.broadcast %cst_73 : f32 to vector<2x128xf32>
    %273 = arith.maximumf %271, %272 : vector<2x128xf32>
    %c0_74 = arith.constant 0 : index
    %c1920 = arith.constant 1920 : index
    %274 = vector.load %arg3[%c0_74, %c1920] : memref<2x2048xf32, #tpu.memory_space<vmem>>, vector<2x128xf32>
    tpu.vector_store %arg3[%c0_74, %c1920], %273 {strides = array<i32>} : memref<2x2048xf32, #tpu.memory_space<vmem>>, vector<2x128xf32>,
    return
  }
  func.func @transform_0(%arg0: i32) -> (i32, i32) {
    %c0_i32 = arith.constant 0 : i32
    %c0_i32_0 = arith.constant 0 : i32
    %c0_i32_1 = arith.constant 0 : i32
    return %c0_i32, %c0_i32_0 : i32, i32
  }
  func.func @transform_1(%arg0: i32) -> (i32, i32) {
    %c0_i32 = arith.constant 0 : i32
    %c0_i32_0 = arith.constant 0 : i32
    %c0_i32_1 = arith.constant 0 : i32
    return %c0_i32, %c0_i32_0 : i32, i32
  }
  func.func @transform_2(%arg0: i32) -> (i32, i32) {
    %c0_i32 = arith.constant 0 : i32
    %c0_i32_0 = arith.constant 0 : i32
    %c0_i32_1 = arith.constant 0 : i32
    return %c0_i32, %c0_i32_0 : i32, i32
  }
}

module attributes {stable_mosaic.version = 11 : i64} {
  func.func @_subpix_gemm_bn_relu_kernel(%arg0: i32, %arg1: i32, %arg2: memref<1x32x256xf32, #tpu.memory_space<vmem>>, %arg3: memref<1x256x128xf32, #tpu.memory_space<vmem>>, %arg4: memref<4x32x128xf32, #tpu.memory_space<vmem>>, %arg5: memref<8x128xf32, #tpu.memory_space<vmem>>, %arg6: memref<8x128xf32, #tpu.memory_space<vmem>>) attributes {dimension_semantics = [#tpu.dimension_semantics<arbitrary>, #tpu.dimension_semantics<arbitrary>], iteration_bounds = array<i64: 4, 1>, scalar_prefetch = 0 : i64, scratch_operands = 2 : i64, tpu.core_type = #tpu.core_type<tc>, window_params = [{transform_indices = @transform_0, window_bounds = array<i64: 1, 32, 256>}, {transform_indices = @transform_1, window_bounds = array<i64: 1, 256, 128>}, {pipeline_mode = #tpu.pipeline_mode<synchronous>, transform_indices = @transform_2, window_bounds = array<i64: 4, 32, 128>}]} {
    %c3_i32 = arith.constant 3 : i32
    %0 = arith.cmpi eq, %arg0, %c3_i32 : i32
    %c0_i32 = arith.constant 0 : i32
    %1 = arith.cmpi eq, %arg1, %c0_i32 : i32
    %2 = arith.andi %0, %1 : i1
    %c0_i32_0 = arith.constant 0 : i32
    %3 = arith.cmpi eq, %arg0, %c0_i32_0 : i32
    %c0_i32_1 = arith.constant 0 : i32
    %4 = arith.cmpi eq, %arg1, %c0_i32_1 : i32
    %5 = arith.andi %3, %4 : i1
    %6 = arith.extui %5 : i1 to i32
    %c0_i32_2 = arith.constant 0 : i32
    %7 = arith.cmpi ne, %6, %c0_i32_2 : i32
    scf.if %7 {
      %cst_20 = arith.constant 0.000000e+00 : f32
      %32 = vector.broadcast %cst_20 : f32 to vector<8x128xf32>
      %c0_21 = arith.constant 0 : index
      %c0_22 = arith.constant 0 : index
      %33 = vector.load %arg5[%c0_21, %c0_22] : memref<8x128xf32, #tpu.memory_space<vmem>>, vector<8x128xf32>
      tpu.vector_store %arg5[%c0_21, %c0_22], %32 {strides = array<i32>} : memref<8x128xf32, #tpu.memory_space<vmem>>, vector<8x128xf32>,
      %cst_23 = arith.constant 0.000000e+00 : f32
      %34 = vector.broadcast %cst_23 : f32 to vector<8x128xf32>
      %c0_24 = arith.constant 0 : index
      %c0_25 = arith.constant 0 : index
      %35 = vector.load %arg6[%c0_24, %c0_25] : memref<8x128xf32, #tpu.memory_space<vmem>>, vector<8x128xf32>
      tpu.vector_store %arg6[%c0_24, %c0_25], %34 {strides = array<i32>} : memref<8x128xf32, #tpu.memory_space<vmem>>, vector<8x128xf32>,
    } else {
    }
    %c0 = arith.constant 0 : index
    %c0_3 = arith.constant 0 : index
    %c0_4 = arith.constant 0 : index
    %8 = vector.load %arg2[%c0, %c0_3, %c0_4] : memref<1x32x256xf32, #tpu.memory_space<vmem>>, vector<1x32x256xf32>
    %9 = vector.shape_cast %8 : vector<1x32x256xf32> to vector<32x256xf32>
    %c0_5 = arith.constant 0 : index
    %c0_6 = arith.constant 0 : index
    %c0_7 = arith.constant 0 : index
    %10 = vector.load %arg3[%c0_5, %c0_6, %c0_7] : memref<1x256x128xf32, #tpu.memory_space<vmem>>, vector<1x256x128xf32>
    %11 = vector.shape_cast %10 : vector<1x256x128xf32> to vector<256x128xf32>
    %cst = arith.constant dense<0.000000e+00> : vector<32x128xf32>
    %12 = tpu.matmul %9, %11, %cst {dimension_numbers = #tpu.dot_dimension_numbers<[1], [0], [0], [1], [0, 0, 1, 1], [], []>} : vector<32x256xf32>, vector<256x128xf32>, vector<32x128xf32> -> vector<32x128xf32>
    %c32_i32 = arith.constant 32 : i32
    %13 = arith.muli %arg1, %c32_i32 : i32
    %14 = tpu.assume_multiple %13, 32 : i32
    %15 = arith.index_cast %arg0 : i32 to index
    %16 = arith.index_cast %14 : i32 to index
    %c0_8 = arith.constant 0 : index
    %17 = vector.load %arg4[%15, %16, %c0_8] : memref<4x32x128xf32, #tpu.memory_space<vmem>>, vector<1x32x128xf32>
    %18 = vector.shape_cast %17 : vector<1x32x128xf32> to vector<32x128xf32>
    %19 = vector.shape_cast %12 : vector<32x128xf32> to vector<1x32x128xf32>
    tpu.vector_store %arg4[%15, %16, %c0_8], %19 {strides = array<i32>} : memref<4x32x128xf32, #tpu.memory_space<vmem>>, vector<1x32x128xf32>,
    %20 = vector.shape_cast %12 : vector<32x128xf32> to vector<4x8x128xf32>
    %c0_9 = arith.constant 0 : index
    %c0_10 = arith.constant 0 : index
    %21 = vector.load %arg5[%c0_9, %c0_10] : memref<8x128xf32, #tpu.memory_space<vmem>>, vector<8x128xf32>
    %cst_11 = arith.constant dense<0.000000e+00> : vector<8x128xf32>
    %22 = vector.multi_reduction <add>, %20, %cst_11 [0] : vector<4x8x128xf32> to vector<8x128xf32>
    %23 = arith.addf %21, %22 : vector<8x128xf32>
    %c0_12 = arith.constant 0 : index
    %c0_13 = arith.constant 0 : index
    %24 = vector.load %arg5[%c0_12, %c0_13] : memref<8x128xf32, #tpu.memory_space<vmem>>, vector<8x128xf32>
    tpu.vector_store %arg5[%c0_12, %c0_13], %23 {strides = array<i32>} : memref<8x128xf32, #tpu.memory_space<vmem>>, vector<8x128xf32>,
    %c0_14 = arith.constant 0 : index
    %c0_15 = arith.constant 0 : index
    %25 = vector.load %arg6[%c0_14, %c0_15] : memref<8x128xf32, #tpu.memory_space<vmem>>, vector<8x128xf32>
    %26 = arith.mulf %20, %20 : vector<4x8x128xf32>
    %cst_16 = arith.constant dense<0.000000e+00> : vector<8x128xf32>
    %27 = vector.multi_reduction <add>, %26, %cst_16 [0] : vector<4x8x128xf32> to vector<8x128xf32>
    %28 = arith.addf %25, %27 : vector<8x128xf32>
    %c0_17 = arith.constant 0 : index
    %c0_18 = arith.constant 0 : index
    %29 = vector.load %arg6[%c0_17, %c0_18] : memref<8x128xf32, #tpu.memory_space<vmem>>, vector<8x128xf32>
    tpu.vector_store %arg6[%c0_17, %c0_18], %28 {strides = array<i32>} : memref<8x128xf32, #tpu.memory_space<vmem>>, vector<8x128xf32>,
    %30 = arith.extui %2 : i1 to i32
    %c0_i32_19 = arith.constant 0 : i32
    %31 = arith.cmpi ne, %30, %c0_i32_19 : i32
    scf.if %31 {
      %c0_20 = arith.constant 0 : index
      %c0_21 = arith.constant 0 : index
      %32 = vector.load %arg5[%c0_20, %c0_21] : memref<8x128xf32, #tpu.memory_space<vmem>>, vector<8x128xf32>
      %cst_22 = arith.constant dense<0.000000e+00> : vector<128xf32>
      %33 = vector.multi_reduction <add>, %32, %cst_22 [0] : vector<8x128xf32> to vector<128xf32>
      %34 = vector.shape_cast %33 : vector<128xf32> to vector<1x128xf32>
      %c0_23 = arith.constant 0 : index
      %c0_24 = arith.constant 0 : index
      %35 = vector.load %arg6[%c0_23, %c0_24] : memref<8x128xf32, #tpu.memory_space<vmem>>, vector<8x128xf32>
      %cst_25 = arith.constant dense<0.000000e+00> : vector<128xf32>
      %36 = vector.multi_reduction <add>, %35, %cst_25 [0] : vector<8x128xf32> to vector<128xf32>
      %37 = vector.shape_cast %36 : vector<128xf32> to vector<1x128xf32>
      %cst_26 = arith.constant 7.812500e-03 : f32
      %38 = vector.broadcast %cst_26 : f32 to vector<1x128xf32>
      %39 = arith.mulf %34, %38 : vector<1x128xf32>
      %cst_27 = arith.constant 7.812500e-03 : f32
      %40 = vector.broadcast %cst_27 : f32 to vector<1x128xf32>
      %41 = arith.mulf %37, %40 : vector<1x128xf32>
      %42 = arith.mulf %39, %39 : vector<1x128xf32>
      %43 = arith.subf %41, %42 : vector<1x128xf32>
      %cst_28 = arith.constant 0.000000e+00 : f32
      %44 = vector.broadcast %cst_28 : f32 to vector<1x128xf32>
      %45 = arith.maximumf %43, %44 : vector<1x128xf32>
      %cst_29 = arith.constant 9.99999974E-6 : f32
      %46 = vector.broadcast %cst_29 : f32 to vector<1x128xf32>
      %47 = arith.addf %45, %46 : vector<1x128xf32>
      %48 = math.rsqrt %47 : vector<1x128xf32>
      %cst_30 = arith.constant 0.000000e+00 : f32
      %49 = vector.broadcast %cst_30 : f32 to vector<1x128xf32>
      %50 = arith.subf %49, %39 : vector<1x128xf32>
      %51 = arith.mulf %50, %48 : vector<1x128xf32>
      %c0_31 = arith.constant 0 : index
      %c0_32 = arith.constant 0 : index
      %c0_33 = arith.constant 0 : index
      %52 = vector.load %arg4[%c0_31, %c0_32, %c0_33] : memref<4x32x128xf32, #tpu.memory_space<vmem>>, vector<4x32x128xf32>
      %53 = vector.shape_cast %48 : vector<1x128xf32> to vector<1x1x128xf32>
      %54 = vector.broadcast %53 : vector<1x1x128xf32> to vector<4x32x128xf32>
      %55 = arith.mulf %52, %54 : vector<4x32x128xf32>
      %56 = vector.shape_cast %51 : vector<1x128xf32> to vector<1x1x128xf32>
      %57 = vector.broadcast %56 : vector<1x1x128xf32> to vector<4x32x128xf32>
      %58 = arith.addf %55, %57 : vector<4x32x128xf32>
      %cst_34 = arith.constant 0.000000e+00 : f32
      %59 = vector.broadcast %cst_34 : f32 to vector<4x32x128xf32>
      %60 = arith.maximumf %58, %59 : vector<4x32x128xf32>
      %c0_35 = arith.constant 0 : index
      %c0_36 = arith.constant 0 : index
      %c0_37 = arith.constant 0 : index
      %61 = vector.load %arg4[%c0_35, %c0_36, %c0_37] : memref<4x32x128xf32, #tpu.memory_space<vmem>>, vector<4x32x128xf32>
      tpu.vector_store %arg4[%c0_35, %c0_36, %c0_37], %60 {strides = array<i32>} : memref<4x32x128xf32, #tpu.memory_space<vmem>>, vector<4x32x128xf32>,
    } else {
    }
    return
  }
  func.func @transform_0(%arg0: i32, %arg1: i32) -> (i32, i32, i32) {
    %c0_i32 = arith.constant 0 : i32
    %c0_i32_0 = arith.constant 0 : i32
    return %arg0, %arg1, %c0_i32 : i32, i32, i32
  }
  func.func @transform_1(%arg0: i32, %arg1: i32) -> (i32, i32, i32) {
    %c0_i32 = arith.constant 0 : i32
    %c0_i32_0 = arith.constant 0 : i32
    %c0_i32_1 = arith.constant 0 : i32
    return %arg0, %c0_i32, %c0_i32_0 : i32, i32, i32
  }
  func.func @transform_2(%arg0: i32, %arg1: i32) -> (i32, i32, i32) {
    %c0_i32 = arith.constant 0 : i32
    %c0_i32_0 = arith.constant 0 : i32
    %c0_i32_1 = arith.constant 0 : i32
    %c0_i32_2 = arith.constant 0 : i32
    return %c0_i32, %c0_i32_0, %c0_i32_1 : i32, i32, i32
  }
}

module attributes {stable_mosaic.version = 11 : i64} {
  func.func @_subpix_gemm_bn_relu_kernel(%arg0: i32, %arg1: i32, %arg2: memref<1x128x128xf32, #tpu.memory_space<vmem>>, %arg3: memref<1x128x128xf32, #tpu.memory_space<vmem>>, %arg4: memref<4x128x128xf32, #tpu.memory_space<vmem>>, %arg5: memref<8x128xf32, #tpu.memory_space<vmem>>, %arg6: memref<8x128xf32, #tpu.memory_space<vmem>>) attributes {dimension_semantics = [#tpu.dimension_semantics<arbitrary>, #tpu.dimension_semantics<arbitrary>], iteration_bounds = array<i64: 4, 1>, scalar_prefetch = 0 : i64, scratch_operands = 2 : i64, tpu.core_type = #tpu.core_type<tc>, window_params = [{transform_indices = @transform_0, window_bounds = array<i64: 1, 128, 128>}, {transform_indices = @transform_1, window_bounds = array<i64: 1, 128, 128>}, {pipeline_mode = #tpu.pipeline_mode<synchronous>, transform_indices = @transform_2, window_bounds = array<i64: 4, 128, 128>}]} {
    %c3_i32 = arith.constant 3 : i32
    %0 = arith.cmpi eq, %arg0, %c3_i32 : i32
    %c0_i32 = arith.constant 0 : i32
    %1 = arith.cmpi eq, %arg1, %c0_i32 : i32
    %2 = arith.andi %0, %1 : i1
    %c0_i32_0 = arith.constant 0 : i32
    %3 = arith.cmpi eq, %arg0, %c0_i32_0 : i32
    %c0_i32_1 = arith.constant 0 : i32
    %4 = arith.cmpi eq, %arg1, %c0_i32_1 : i32
    %5 = arith.andi %3, %4 : i1
    %6 = arith.extui %5 : i1 to i32
    %c0_i32_2 = arith.constant 0 : i32
    %7 = arith.cmpi ne, %6, %c0_i32_2 : i32
    scf.if %7 {
      %cst_20 = arith.constant 0.000000e+00 : f32
      %32 = vector.broadcast %cst_20 : f32 to vector<8x128xf32>
      %c0_21 = arith.constant 0 : index
      %c0_22 = arith.constant 0 : index
      %33 = vector.load %arg5[%c0_21, %c0_22] : memref<8x128xf32, #tpu.memory_space<vmem>>, vector<8x128xf32>
      tpu.vector_store %arg5[%c0_21, %c0_22], %32 {strides = array<i32>} : memref<8x128xf32, #tpu.memory_space<vmem>>, vector<8x128xf32>,
      %cst_23 = arith.constant 0.000000e+00 : f32
      %34 = vector.broadcast %cst_23 : f32 to vector<8x128xf32>
      %c0_24 = arith.constant 0 : index
      %c0_25 = arith.constant 0 : index
      %35 = vector.load %arg6[%c0_24, %c0_25] : memref<8x128xf32, #tpu.memory_space<vmem>>, vector<8x128xf32>
      tpu.vector_store %arg6[%c0_24, %c0_25], %34 {strides = array<i32>} : memref<8x128xf32, #tpu.memory_space<vmem>>, vector<8x128xf32>,
    } else {
    }
    %c0 = arith.constant 0 : index
    %c0_3 = arith.constant 0 : index
    %c0_4 = arith.constant 0 : index
    %8 = vector.load %arg2[%c0, %c0_3, %c0_4] : memref<1x128x128xf32, #tpu.memory_space<vmem>>, vector<1x128x128xf32>
    %9 = vector.shape_cast %8 : vector<1x128x128xf32> to vector<128x128xf32>
    %c0_5 = arith.constant 0 : index
    %c0_6 = arith.constant 0 : index
    %c0_7 = arith.constant 0 : index
    %10 = vector.load %arg3[%c0_5, %c0_6, %c0_7] : memref<1x128x128xf32, #tpu.memory_space<vmem>>, vector<1x128x128xf32>
    %11 = vector.shape_cast %10 : vector<1x128x128xf32> to vector<128x128xf32>
    %cst = arith.constant dense<0.000000e+00> : vector<128x128xf32>
    %12 = tpu.matmul %9, %11, %cst {dimension_numbers = #tpu.dot_dimension_numbers<[1], [0], [0], [1], [0, 0, 1, 1], [], []>} : vector<128x128xf32>, vector<128x128xf32>, vector<128x128xf32> -> vector<128x128xf32>
    %c128_i32 = arith.constant 128 : i32
    %13 = arith.muli %arg1, %c128_i32 : i32
    %14 = tpu.assume_multiple %13, 128 : i32
    %15 = arith.index_cast %arg0 : i32 to index
    %16 = arith.index_cast %14 : i32 to index
    %c0_8 = arith.constant 0 : index
    %17 = vector.load %arg4[%15, %16, %c0_8] : memref<4x128x128xf32, #tpu.memory_space<vmem>>, vector<1x128x128xf32>
    %18 = vector.shape_cast %17 : vector<1x128x128xf32> to vector<128x128xf32>
    %19 = vector.shape_cast %12 : vector<128x128xf32> to vector<1x128x128xf32>
    tpu.vector_store %arg4[%15, %16, %c0_8], %19 {strides = array<i32>} : memref<4x128x128xf32, #tpu.memory_space<vmem>>, vector<1x128x128xf32>,
    %20 = vector.shape_cast %12 : vector<128x128xf32> to vector<16x8x128xf32>
    %c0_9 = arith.constant 0 : index
    %c0_10 = arith.constant 0 : index
    %21 = vector.load %arg5[%c0_9, %c0_10] : memref<8x128xf32, #tpu.memory_space<vmem>>, vector<8x128xf32>
    %cst_11 = arith.constant dense<0.000000e+00> : vector<8x128xf32>
    %22 = vector.multi_reduction <add>, %20, %cst_11 [0] : vector<16x8x128xf32> to vector<8x128xf32>
    %23 = arith.addf %21, %22 : vector<8x128xf32>
    %c0_12 = arith.constant 0 : index
    %c0_13 = arith.constant 0 : index
    %24 = vector.load %arg5[%c0_12, %c0_13] : memref<8x128xf32, #tpu.memory_space<vmem>>, vector<8x128xf32>
    tpu.vector_store %arg5[%c0_12, %c0_13], %23 {strides = array<i32>} : memref<8x128xf32, #tpu.memory_space<vmem>>, vector<8x128xf32>,
    %c0_14 = arith.constant 0 : index
    %c0_15 = arith.constant 0 : index
    %25 = vector.load %arg6[%c0_14, %c0_15] : memref<8x128xf32, #tpu.memory_space<vmem>>, vector<8x128xf32>
    %26 = arith.mulf %20, %20 : vector<16x8x128xf32>
    %cst_16 = arith.constant dense<0.000000e+00> : vector<8x128xf32>
    %27 = vector.multi_reduction <add>, %26, %cst_16 [0] : vector<16x8x128xf32> to vector<8x128xf32>
    %28 = arith.addf %25, %27 : vector<8x128xf32>
    %c0_17 = arith.constant 0 : index
    %c0_18 = arith.constant 0 : index
    %29 = vector.load %arg6[%c0_17, %c0_18] : memref<8x128xf32, #tpu.memory_space<vmem>>, vector<8x128xf32>
    tpu.vector_store %arg6[%c0_17, %c0_18], %28 {strides = array<i32>} : memref<8x128xf32, #tpu.memory_space<vmem>>, vector<8x128xf32>,
    %30 = arith.extui %2 : i1 to i32
    %c0_i32_19 = arith.constant 0 : i32
    %31 = arith.cmpi ne, %30, %c0_i32_19 : i32
    scf.if %31 {
      %c0_20 = arith.constant 0 : index
      %c0_21 = arith.constant 0 : index
      %32 = vector.load %arg5[%c0_20, %c0_21] : memref<8x128xf32, #tpu.memory_space<vmem>>, vector<8x128xf32>
      %cst_22 = arith.constant dense<0.000000e+00> : vector<128xf32>
      %33 = vector.multi_reduction <add>, %32, %cst_22 [0] : vector<8x128xf32> to vector<128xf32>
      %34 = vector.shape_cast %33 : vector<128xf32> to vector<1x128xf32>
      %c0_23 = arith.constant 0 : index
      %c0_24 = arith.constant 0 : index
      %35 = vector.load %arg6[%c0_23, %c0_24] : memref<8x128xf32, #tpu.memory_space<vmem>>, vector<8x128xf32>
      %cst_25 = arith.constant dense<0.000000e+00> : vector<128xf32>
      %36 = vector.multi_reduction <add>, %35, %cst_25 [0] : vector<8x128xf32> to vector<128xf32>
      %37 = vector.shape_cast %36 : vector<128xf32> to vector<1x128xf32>
      %cst_26 = arith.constant 0.001953125 : f32
      %38 = vector.broadcast %cst_26 : f32 to vector<1x128xf32>
      %39 = arith.mulf %34, %38 : vector<1x128xf32>
      %cst_27 = arith.constant 0.001953125 : f32
      %40 = vector.broadcast %cst_27 : f32 to vector<1x128xf32>
      %41 = arith.mulf %37, %40 : vector<1x128xf32>
      %42 = arith.mulf %39, %39 : vector<1x128xf32>
      %43 = arith.subf %41, %42 : vector<1x128xf32>
      %cst_28 = arith.constant 0.000000e+00 : f32
      %44 = vector.broadcast %cst_28 : f32 to vector<1x128xf32>
      %45 = arith.maximumf %43, %44 : vector<1x128xf32>
      %cst_29 = arith.constant 9.99999974E-6 : f32
      %46 = vector.broadcast %cst_29 : f32 to vector<1x128xf32>
      %47 = arith.addf %45, %46 : vector<1x128xf32>
      %48 = math.rsqrt %47 : vector<1x128xf32>
      %cst_30 = arith.constant 0.000000e+00 : f32
      %49 = vector.broadcast %cst_30 : f32 to vector<1x128xf32>
      %50 = arith.subf %49, %39 : vector<1x128xf32>
      %51 = arith.mulf %50, %48 : vector<1x128xf32>
      %c0_31 = arith.constant 0 : index
      %c0_32 = arith.constant 0 : index
      %c0_33 = arith.constant 0 : index
      %52 = vector.load %arg4[%c0_31, %c0_32, %c0_33] : memref<4x128x128xf32, #tpu.memory_space<vmem>>, vector<4x128x128xf32>
      %53 = vector.shape_cast %48 : vector<1x128xf32> to vector<1x1x128xf32>
      %54 = vector.broadcast %53 : vector<1x1x128xf32> to vector<4x128x128xf32>
      %55 = arith.mulf %52, %54 : vector<4x128x128xf32>
      %56 = vector.shape_cast %51 : vector<1x128xf32> to vector<1x1x128xf32>
      %57 = vector.broadcast %56 : vector<1x1x128xf32> to vector<4x128x128xf32>
      %58 = arith.addf %55, %57 : vector<4x128x128xf32>
      %cst_34 = arith.constant 0.000000e+00 : f32
      %59 = vector.broadcast %cst_34 : f32 to vector<4x128x128xf32>
      %60 = arith.maximumf %58, %59 : vector<4x128x128xf32>
      %c0_35 = arith.constant 0 : index
      %c0_36 = arith.constant 0 : index
      %c0_37 = arith.constant 0 : index
      %61 = vector.load %arg4[%c0_35, %c0_36, %c0_37] : memref<4x128x128xf32, #tpu.memory_space<vmem>>, vector<4x128x128xf32>
      tpu.vector_store %arg4[%c0_35, %c0_36, %c0_37], %60 {strides = array<i32>} : memref<4x128x128xf32, #tpu.memory_space<vmem>>, vector<4x128x128xf32>,
    } else {
    }
    return
  }
  func.func @transform_0(%arg0: i32, %arg1: i32) -> (i32, i32, i32) {
    %c0_i32 = arith.constant 0 : i32
    %c0_i32_0 = arith.constant 0 : i32
    return %arg0, %arg1, %c0_i32 : i32, i32, i32
  }
  func.func @transform_1(%arg0: i32, %arg1: i32) -> (i32, i32, i32) {
    %c0_i32 = arith.constant 0 : i32
    %c0_i32_0 = arith.constant 0 : i32
    %c0_i32_1 = arith.constant 0 : i32
    return %arg0, %c0_i32, %c0_i32_0 : i32, i32, i32
  }
  func.func @transform_2(%arg0: i32, %arg1: i32) -> (i32, i32, i32) {
    %c0_i32 = arith.constant 0 : i32
    %c0_i32_0 = arith.constant 0 : i32
    %c0_i32_1 = arith.constant 0 : i32
    %c0_i32_2 = arith.constant 0 : i32
    return %c0_i32, %c0_i32_0, %c0_i32_1 : i32, i32, i32
  }
}

module attributes {stable_mosaic.version = 11 : i64} {
  func.func @_subpix_gemm_bn_relu_kernel(%arg0: i32, %arg1: i32, %arg2: memref<1x512x64xf32, #tpu.memory_space<vmem>>, %arg3: memref<1x64x128xf32, #tpu.memory_space<vmem>>, %arg4: memref<4x512x128xf32, #tpu.memory_space<vmem>>, %arg5: memref<8x128xf32, #tpu.memory_space<vmem>>, %arg6: memref<8x128xf32, #tpu.memory_space<vmem>>) attributes {dimension_semantics = [#tpu.dimension_semantics<arbitrary>, #tpu.dimension_semantics<arbitrary>], iteration_bounds = array<i64: 4, 1>, scalar_prefetch = 0 : i64, scratch_operands = 2 : i64, tpu.core_type = #tpu.core_type<tc>, window_params = [{transform_indices = @transform_0, window_bounds = array<i64: 1, 512, 64>}, {transform_indices = @transform_1, window_bounds = array<i64: 1, 64, 128>}, {pipeline_mode = #tpu.pipeline_mode<synchronous>, transform_indices = @transform_2, window_bounds = array<i64: 4, 512, 128>}]} {
    %c3_i32 = arith.constant 3 : i32
    %0 = arith.cmpi eq, %arg0, %c3_i32 : i32
    %c0_i32 = arith.constant 0 : i32
    %1 = arith.cmpi eq, %arg1, %c0_i32 : i32
    %2 = arith.andi %0, %1 : i1
    %c0_i32_0 = arith.constant 0 : i32
    %3 = arith.cmpi eq, %arg0, %c0_i32_0 : i32
    %c0_i32_1 = arith.constant 0 : i32
    %4 = arith.cmpi eq, %arg1, %c0_i32_1 : i32
    %5 = arith.andi %3, %4 : i1
    %6 = arith.extui %5 : i1 to i32
    %c0_i32_2 = arith.constant 0 : i32
    %7 = arith.cmpi ne, %6, %c0_i32_2 : i32
    scf.if %7 {
      %cst_20 = arith.constant 0.000000e+00 : f32
      %32 = vector.broadcast %cst_20 : f32 to vector<8x128xf32>
      %c0_21 = arith.constant 0 : index
      %c0_22 = arith.constant 0 : index
      %33 = vector.load %arg5[%c0_21, %c0_22] : memref<8x128xf32, #tpu.memory_space<vmem>>, vector<8x128xf32>
      tpu.vector_store %arg5[%c0_21, %c0_22], %32 {strides = array<i32>} : memref<8x128xf32, #tpu.memory_space<vmem>>, vector<8x128xf32>,
      %cst_23 = arith.constant 0.000000e+00 : f32
      %34 = vector.broadcast %cst_23 : f32 to vector<8x128xf32>
      %c0_24 = arith.constant 0 : index
      %c0_25 = arith.constant 0 : index
      %35 = vector.load %arg6[%c0_24, %c0_25] : memref<8x128xf32, #tpu.memory_space<vmem>>, vector<8x128xf32>
      tpu.vector_store %arg6[%c0_24, %c0_25], %34 {strides = array<i32>} : memref<8x128xf32, #tpu.memory_space<vmem>>, vector<8x128xf32>,
    } else {
    }
    %c0 = arith.constant 0 : index
    %c0_3 = arith.constant 0 : index
    %c0_4 = arith.constant 0 : index
    %8 = vector.load %arg2[%c0, %c0_3, %c0_4] : memref<1x512x64xf32, #tpu.memory_space<vmem>>, vector<1x512x64xf32>
    %9 = vector.shape_cast %8 : vector<1x512x64xf32> to vector<512x64xf32>
    %c0_5 = arith.constant 0 : index
    %c0_6 = arith.constant 0 : index
    %c0_7 = arith.constant 0 : index
    %10 = vector.load %arg3[%c0_5, %c0_6, %c0_7] : memref<1x64x128xf32, #tpu.memory_space<vmem>>, vector<1x64x128xf32>
    %11 = vector.shape_cast %10 : vector<1x64x128xf32> to vector<64x128xf32>
    %cst = arith.constant dense<0.000000e+00> : vector<512x128xf32>
    %12 = tpu.matmul %9, %11, %cst {dimension_numbers = #tpu.dot_dimension_numbers<[1], [0], [0], [1], [0, 0, 1, 1], [], []>} : vector<512x64xf32>, vector<64x128xf32>, vector<512x128xf32> -> vector<512x128xf32>
    %c512_i32 = arith.constant 512 : i32
    %13 = arith.muli %arg1, %c512_i32 : i32
    %14 = tpu.assume_multiple %13, 512 : i32
    %15 = arith.index_cast %arg0 : i32 to index
    %16 = arith.index_cast %14 : i32 to index
    %c0_8 = arith.constant 0 : index
    %17 = vector.load %arg4[%15, %16, %c0_8] : memref<4x512x128xf32, #tpu.memory_space<vmem>>, vector<1x512x128xf32>
    %18 = vector.shape_cast %17 : vector<1x512x128xf32> to vector<512x128xf32>
    %19 = vector.shape_cast %12 : vector<512x128xf32> to vector<1x512x128xf32>
    tpu.vector_store %arg4[%15, %16, %c0_8], %19 {strides = array<i32>} : memref<4x512x128xf32, #tpu.memory_space<vmem>>, vector<1x512x128xf32>,
    %20 = vector.shape_cast %12 : vector<512x128xf32> to vector<64x8x128xf32>
    %c0_9 = arith.constant 0 : index
    %c0_10 = arith.constant 0 : index
    %21 = vector.load %arg5[%c0_9, %c0_10] : memref<8x128xf32, #tpu.memory_space<vmem>>, vector<8x128xf32>
    %cst_11 = arith.constant dense<0.000000e+00> : vector<8x128xf32>
    %22 = vector.multi_reduction <add>, %20, %cst_11 [0] : vector<64x8x128xf32> to vector<8x128xf32>
    %23 = arith.addf %21, %22 : vector<8x128xf32>
    %c0_12 = arith.constant 0 : index
    %c0_13 = arith.constant 0 : index
    %24 = vector.load %arg5[%c0_12, %c0_13] : memref<8x128xf32, #tpu.memory_space<vmem>>, vector<8x128xf32>
    tpu.vector_store %arg5[%c0_12, %c0_13], %23 {strides = array<i32>} : memref<8x128xf32, #tpu.memory_space<vmem>>, vector<8x128xf32>,
    %c0_14 = arith.constant 0 : index
    %c0_15 = arith.constant 0 : index
    %25 = vector.load %arg6[%c0_14, %c0_15] : memref<8x128xf32, #tpu.memory_space<vmem>>, vector<8x128xf32>
    %26 = arith.mulf %20, %20 : vector<64x8x128xf32>
    %cst_16 = arith.constant dense<0.000000e+00> : vector<8x128xf32>
    %27 = vector.multi_reduction <add>, %26, %cst_16 [0] : vector<64x8x128xf32> to vector<8x128xf32>
    %28 = arith.addf %25, %27 : vector<8x128xf32>
    %c0_17 = arith.constant 0 : index
    %c0_18 = arith.constant 0 : index
    %29 = vector.load %arg6[%c0_17, %c0_18] : memref<8x128xf32, #tpu.memory_space<vmem>>, vector<8x128xf32>
    tpu.vector_store %arg6[%c0_17, %c0_18], %28 {strides = array<i32>} : memref<8x128xf32, #tpu.memory_space<vmem>>, vector<8x128xf32>,
    %30 = arith.extui %2 : i1 to i32
    %c0_i32_19 = arith.constant 0 : i32
    %31 = arith.cmpi ne, %30, %c0_i32_19 : i32
    scf.if %31 {
      %c0_20 = arith.constant 0 : index
      %c0_21 = arith.constant 0 : index
      %32 = vector.load %arg5[%c0_20, %c0_21] : memref<8x128xf32, #tpu.memory_space<vmem>>, vector<8x128xf32>
      %cst_22 = arith.constant dense<0.000000e+00> : vector<128xf32>
      %33 = vector.multi_reduction <add>, %32, %cst_22 [0] : vector<8x128xf32> to vector<128xf32>
      %34 = vector.shape_cast %33 : vector<128xf32> to vector<1x128xf32>
      %c0_23 = arith.constant 0 : index
      %c0_24 = arith.constant 0 : index
      %35 = vector.load %arg6[%c0_23, %c0_24] : memref<8x128xf32, #tpu.memory_space<vmem>>, vector<8x128xf32>
      %cst_25 = arith.constant dense<0.000000e+00> : vector<128xf32>
      %36 = vector.multi_reduction <add>, %35, %cst_25 [0] : vector<8x128xf32> to vector<128xf32>
      %37 = vector.shape_cast %36 : vector<128xf32> to vector<1x128xf32>
      %cst_26 = arith.constant 4.8828125E-4 : f32
      %38 = vector.broadcast %cst_26 : f32 to vector<1x128xf32>
      %39 = arith.mulf %34, %38 : vector<1x128xf32>
      %cst_27 = arith.constant 4.8828125E-4 : f32
      %40 = vector.broadcast %cst_27 : f32 to vector<1x128xf32>
      %41 = arith.mulf %37, %40 : vector<1x128xf32>
      %42 = arith.mulf %39, %39 : vector<1x128xf32>
      %43 = arith.subf %41, %42 : vector<1x128xf32>
      %cst_28 = arith.constant 0.000000e+00 : f32
      %44 = vector.broadcast %cst_28 : f32 to vector<1x128xf32>
      %45 = arith.maximumf %43, %44 : vector<1x128xf32>
      %cst_29 = arith.constant 9.99999974E-6 : f32
      %46 = vector.broadcast %cst_29 : f32 to vector<1x128xf32>
      %47 = arith.addf %45, %46 : vector<1x128xf32>
      %48 = math.rsqrt %47 : vector<1x128xf32>
      %cst_30 = arith.constant 0.000000e+00 : f32
      %49 = vector.broadcast %cst_30 : f32 to vector<1x128xf32>
      %50 = arith.subf %49, %39 : vector<1x128xf32>
      %51 = arith.mulf %50, %48 : vector<1x128xf32>
      %c0_31 = arith.constant 0 : index
      %c0_32 = arith.constant 0 : index
      %c0_33 = arith.constant 0 : index
      %52 = vector.load %arg4[%c0_31, %c0_32, %c0_33] : memref<4x512x128xf32, #tpu.memory_space<vmem>>, vector<4x512x128xf32>
      %53 = vector.shape_cast %48 : vector<1x128xf32> to vector<1x1x128xf32>
      %54 = vector.broadcast %53 : vector<1x1x128xf32> to vector<4x512x128xf32>
      %55 = arith.mulf %52, %54 : vector<4x512x128xf32>
      %56 = vector.shape_cast %51 : vector<1x128xf32> to vector<1x1x128xf32>
      %57 = vector.broadcast %56 : vector<1x1x128xf32> to vector<4x512x128xf32>
      %58 = arith.addf %55, %57 : vector<4x512x128xf32>
      %cst_34 = arith.constant 0.000000e+00 : f32
      %59 = vector.broadcast %cst_34 : f32 to vector<4x512x128xf32>
      %60 = arith.maximumf %58, %59 : vector<4x512x128xf32>
      %c0_35 = arith.constant 0 : index
      %c0_36 = arith.constant 0 : index
      %c0_37 = arith.constant 0 : index
      %61 = vector.load %arg4[%c0_35, %c0_36, %c0_37] : memref<4x512x128xf32, #tpu.memory_space<vmem>>, vector<4x512x128xf32>
      tpu.vector_store %arg4[%c0_35, %c0_36, %c0_37], %60 {strides = array<i32>} : memref<4x512x128xf32, #tpu.memory_space<vmem>>, vector<4x512x128xf32>,
    } else {
    }
    return
  }
  func.func @transform_0(%arg0: i32, %arg1: i32) -> (i32, i32, i32) {
    %c0_i32 = arith.constant 0 : i32
    %c0_i32_0 = arith.constant 0 : i32
    return %arg0, %arg1, %c0_i32 : i32, i32, i32
  }
  func.func @transform_1(%arg0: i32, %arg1: i32) -> (i32, i32, i32) {
    %c0_i32 = arith.constant 0 : i32
    %c0_i32_0 = arith.constant 0 : i32
    %c0_i32_1 = arith.constant 0 : i32
    return %arg0, %c0_i32, %c0_i32_0 : i32, i32, i32
  }
  func.func @transform_2(%arg0: i32, %arg1: i32) -> (i32, i32, i32) {
    %c0_i32 = arith.constant 0 : i32
    %c0_i32_0 = arith.constant 0 : i32
    %c0_i32_1 = arith.constant 0 : i32
    %c0_i32_2 = arith.constant 0 : i32
    return %c0_i32, %c0_i32_0, %c0_i32_1 : i32, i32, i32
  }
}

module attributes {stable_mosaic.version = 11 : i64} {
  func.func @_subpix_gemm_tanh_kernel(%arg0: i32, %arg1: i32, %arg2: memref<1x2048x32xf32, #tpu.memory_space<vmem>>, %arg3: memref<1x32x128xf32, #tpu.memory_space<vmem>>, %arg4: memref<1x2048x128xf32, #tpu.memory_space<vmem>>) attributes {dimension_semantics = [#tpu.dimension_semantics<parallel>, #tpu.dimension_semantics<parallel>], iteration_bounds = array<i64: 4, 1>, scalar_prefetch = 0 : i64, scratch_operands = 0 : i64, tpu.core_type = #tpu.core_type<tc>, window_params = [{transform_indices = @transform_0, window_bounds = array<i64: 1, 2048, 32>}, {transform_indices = @transform_1, window_bounds = array<i64: 1, 32, 128>}, {transform_indices = @transform_2, window_bounds = array<i64: 1, 2048, 128>}]} {
    %c0 = arith.constant 0 : index
    %c0_0 = arith.constant 0 : index
    %c0_1 = arith.constant 0 : index
    %0 = vector.load %arg2[%c0, %c0_0, %c0_1] : memref<1x2048x32xf32, #tpu.memory_space<vmem>>, vector<1x2048x32xf32>
    %1 = vector.shape_cast %0 : vector<1x2048x32xf32> to vector<2048x32xf32>
    %c0_2 = arith.constant 0 : index
    %c0_3 = arith.constant 0 : index
    %c0_4 = arith.constant 0 : index
    %2 = vector.load %arg3[%c0_2, %c0_3, %c0_4] : memref<1x32x128xf32, #tpu.memory_space<vmem>>, vector<1x32x128xf32>
    %3 = vector.shape_cast %2 : vector<1x32x128xf32> to vector<32x128xf32>
    %cst = arith.constant dense<0.000000e+00> : vector<2048x128xf32>
    %4 = tpu.matmul %1, %3, %cst {dimension_numbers = #tpu.dot_dimension_numbers<[1], [0], [0], [1], [0, 0, 1, 1], [], []>} : vector<2048x32xf32>, vector<32x128xf32>, vector<2048x128xf32> -> vector<2048x128xf32>
    %5 = math.tanh %4 : vector<2048x128xf32>
    %c0_5 = arith.constant 0 : index
    %c0_6 = arith.constant 0 : index
    %c0_7 = arith.constant 0 : index
    %6 = vector.load %arg4[%c0_5, %c0_6, %c0_7] : memref<1x2048x128xf32, #tpu.memory_space<vmem>>, vector<1x2048x128xf32>
    %7 = vector.shape_cast %6 : vector<1x2048x128xf32> to vector<2048x128xf32>
    %8 = vector.shape_cast %5 : vector<2048x128xf32> to vector<1x2048x128xf32>
    tpu.vector_store %arg4[%c0_5, %c0_6, %c0_7], %8 {strides = array<i32>} : memref<1x2048x128xf32, #tpu.memory_space<vmem>>, vector<1x2048x128xf32>,
    return
  }
  func.func @transform_0(%arg0: i32, %arg1: i32) -> (i32, i32, i32) {
    %c0_i32 = arith.constant 0 : i32
    %c0_i32_0 = arith.constant 0 : i32
    return %arg0, %arg1, %c0_i32 : i32, i32, i32
  }
  func.func @transform_1(%arg0: i32, %arg1: i32) -> (i32, i32, i32) {
    %c0_i32 = arith.constant 0 : i32
    %c0_i32_0 = arith.constant 0 : i32
    %c0_i32_1 = arith.constant 0 : i32
    return %arg0, %c0_i32, %c0_i32_0 : i32, i32, i32
  }
  func.func @transform_2(%arg0: i32, %arg1: i32) -> (i32, i32, i32) {
    %c0_i32 = arith.constant 0 : i32
    %c0_i32_0 = arith.constant 0 : i32
    return %arg0, %arg1, %c0_i32 : i32, i32, i32
  }
}

</mosaic_0001>

<llo_original>
// kernel: generator_forward.5
$region0: #{generator_forward.5}
  #allocation0 [shape = 'u32[]', space=smem, size = 0x4, offset = 0x4, fixed_abs, tag = 'smem constant byte address 0x4 - core index']
  #allocation1 [shape = 'u32[144,128]{1,0:T(1,128)}', space=vmem, size = 0x12000, scoped, tag = 'internal scratch']
  %s0 = inlined_call_operand.hbm [shape: f32[2,8], index: 0, kind: input, shape index: {}]
  %s1 = inlined_call_operand.vmem [shape: f32[8,2048], index: 1, kind: input, shape index: {}]
  %s2 = inlined_call_operand.vmem [shape: f32[2,2048], index: 2, kind: output, shape index: {}]
  %s3 = sld [smem:[#allocation0]]
  $region22: #{generator_forward.5} parent=0
    _
  %s5 = ssub.s32 1, %s3
  %s6 = scalar_select 0, %s5, %s3
  $region1: #{generator_forward.5} parent=0
    #allocation2 [shape = 'u8[1024]{0}', space=vmem, size = 0x400, scoped, tag = 'input window, operand 0, single buffered']
    #allocation3 [shape = 's32[1]{0}', space=sflag, size = 0x4, scoped, tag = 'scoped memory for generator_forward.5']
    %7 = vsyncpa [#allocation3], 0
    // Predicated region
    $region2: #{generator_forward.5} parent=1 // pred_check
      _
    $region3: #{generator_forward.5} parent=1 // pred_check_branch
      %9 = sbr.rel (0) target = $region5
    $region4: #{generator_forward.5} parent=1 // pred_region
      %s11 = ssub.s32 32, 32
      %12 = vsyncadd [#allocation3], %s11
      %s14 = sshll.u32 [#allocation2], 4
      %s15 = int_to_ptr.vmem [resolvable:$true] %s14
      %17 = dma.hbm_to_vmem [thread:$0]  %s0, 32, %s15, [#allocation3]
    $region5: #{generator_forward.5} parent=1 // pred_fallthru
      _
    // Predicated region
    $region6: #{generator_forward.5} parent=1 // pred_check
      _
    $region7: #{generator_forward.5} parent=1 // pred_check_branch
      %19 = sbr.rel (0) target = $region9
    $region8: #{generator_forward.5} parent=1 // pred_region
      _
    $region9: #{generator_forward.5} parent=1 // pred_fallthru
      _
    // Predicated region
    $region10: #{generator_forward.5} parent=1 // pred_check
      _
    $region11: #{generator_forward.5} parent=1 // pred_check_branch
      %21 = sbr.rel (0) target = $region13
    $region12: #{generator_forward.5} parent=1 // pred_region
      %22 = dma.done [#allocation3], 32
    $region13: #{generator_forward.5} parent=1 // pred_fallthru
      _
    %v23 = vld [vmem:[#allocation2] sm:$0x3]
    %v24 = vld [vmem:[%s1] sm:$0xff]
    %v25 = vld [vmem:[%s1 + $0x8] sm:$0xff]
    %v26 = vld [vmem:[%s1 + $0x10] sm:$0xff]
    %v27 = vld [vmem:[%s1 + $0x18] sm:$0xff]
    %v28 = vld [vmem:[%s1 + $0x20] sm:$0xff]
    %v29 = vld [vmem:[%s1 + $0x28] sm:$0xff]
    %v30 = vld [vmem:[%s1 + $0x30] sm:$0xff]
    %v31 = vld [vmem:[%s1 + $0x38] sm:$0xff]
    %v32 = vld [vmem:[%s1 + $0x40] sm:$0xff]
    %v33 = vld [vmem:[%s1 + $0x48] sm:$0xff]
    %v34 = vld [vmem:[%s1 + $0x50] sm:$0xff]
    %v35 = vld [vmem:[%s1 + $0x58] sm:$0xff]
    %v36 = vld [vmem:[%s1 + $0x60] sm:$0xff]
    %v37 = vld [vmem:[%s1 + $0x68] sm:$0xff]
    %v38 = vld [vmem:[%s1 + $0x70] sm:$0xff]
    %v39 = vld [vmem:[%s1 + $0x78] sm:$0xff]
    %vm40 = vcmask 64512
    %v42 = vsel %vm40, %v23, 0
    %44 = vmatprep.subr.mxu0 %v25
    %45 = vmatpush1.msra.mxu0 %v24
    %46 = vmatprep.subr.mxu0 0.0
    %47 = vmatpush1.msra.mxu0 0.0
    %48 = vmatprep.subr.mxu0 0.0
    %49 = vmatpush1.msra.mxu0 0.0
    %50 = vmatprep.subr.mxu0 0.0
    %51 = vmatpush1.msra.mxu0 0.0
    %52 = vmatprep.subr.mxu0 0.0
    %53 = vmatpush1.msra.mxu0 0.0
    %54 = vmatprep.subr.mxu0 0.0
    %55 = vmatpush1.msra.mxu0 0.0
    %56 = vmatprep.subr.mxu0 0.0
    %57 = vmatpush1.msra.mxu0 0.0
    %58 = vmatprep.subr.mxu0 0.0
    %59 = vmatpush1.msra.mxu0 0.0
    %60 = vmatprep.subr.mxu0 0.0
    %61 = vmatpush1.msra.mxu0 0.0
    %62 = vmatprep.subr.mxu0 0.0
    %63 = vmatpush1.msra.mxu0 0.0
    %64 = vmatprep.subr.mxu0 0.0
    %65 = vmatpush1.msra.mxu0 0.0
    %66 = vmatprep.subr.mxu0 0.0
    %67 = vmatpush1.msra.mxu0 0.0
    %68 = vmatprep.subr.mxu0 0.0
    %69 = vmatpush1.msra.mxu0 0.0
    %70 = vmatprep.subr.mxu0 0.0
    %71 = vmatpush1.msra.mxu0 0.0
    %72 = vmatprep.subr.mxu0 0.0
    %73 = vmatpush1.msra.mxu0 0.0
    %74 = vmatprep.subr.mxu0 0.0
    %75 = vmatpush1.msra.mxu0 0.0
    %76 = vmatprep.subr.mxu0 0.0
    %77 = vmatpush1.msra.mxu0 0.0
    %78 = vmatprep.subr.mxu0 0.0
    %79 = vmatpush1.msra.mxu0 0.0
    %80 = vmatprep.subr.mxu0 0.0
    %81 = vmatpush1.msra.mxu0 0.0
    %82 = vmatprep.subr.mxu0 0.0
    %83 = vmatpush1.msra.mxu0 0.0
    %84 = vmatprep.subr.mxu0 0.0
    %85 = vmatpush1.msra.mxu0 0.0
    %86 = vmatprep.subr.mxu0 0.0
    %87 = vmatpush1.msra.mxu0 0.0
    %88 = vmatprep.subr.mxu0 0.0
    %89 = vmatpush1.msra.mxu0 0.0
    %90 = vmatprep.subr.mxu0 0.0
    %91 = vmatpush1.msra.mxu0 0.0
    %92 = vmatprep.subr.mxu0 0.0
    %93 = vmatpush1.msra.mxu0 0.0
    %94 = vmatprep.subr.mxu0 0.0
    %95 = vmatpush1.msra.mxu0 0.0
    %96 = vmatprep.subr.mxu0 0.0
    %97 = vmatpush1.msra.mxu0 0.0
    %98 = vmatprep.subr.mxu0 0.0
    %99 = vmatpush1.msra.mxu0 0.0
    %100 = vmatprep.subr.mxu0 0.0
    %101 = vmatpush1.msra.mxu0 0.0
    %102 = vmatprep.subr.mxu0 0.0
    %103 = vmatpush1.msra.mxu0 0.0
    %104 = vmatprep.subr.mxu0 0.0
    %105 = vmatpush1.msra.mxu0 0.0
    %106 = vmatprep.subr.mxu0 0.0
    %107 = vmatpush1.msra.mxu0 0.0
    %108 = vmatprep.mubr.f32.mxu0 0.0
    %109 = vmatmul.mubr.f32.gmra.mrb[0].mxu0 %v42
    %v110 = vpop.f32.mrb[0].mxu0
    %v111 = vadd.f32 0.0, %v110
    %v112 = vpop.f32.mrb[0].mxu0
    %v113 = vadd.f32 0.0, %v112
    %114 = vdwg.mxu0
    %115 = vmatprep.subr.mxu0 %v27
    %116 = vmatpush1.msra.mxu0 %v26
    %117 = vmatprep.subr.mxu0 0.0
    %118 = vmatpush1.msra.mxu0 0.0
    %119 = vmatprep.subr.mxu0 0.0
    %120 = vmatpush1.msra.mxu0 0.0
    %121 = vmatprep.subr.mxu0 0.0
    %122 = vmatpush1.msra.mxu0 0.0
    %123 = vmatprep.subr.mxu0 0.0
    %124 = vmatpush1.msra.mxu0 0.0
    %125 = vmatprep.subr.mxu0 0.0
    %126 = vmatpush1.msra.mxu0 0.0
    %127 = vmatprep.subr.mxu0 0.0
    %128 = vmatpush1.msra.mxu0 0.0
    %129 = vmatprep.subr.mxu0 0.0
    %130 = vmatpush1.msra.mxu0 0.0
    %131 = vmatprep.subr.mxu0 0.0
    %132 = vmatpush1.msra.mxu0 0.0
    %133 = vmatprep.subr.mxu0 0.0
    %134 = vmatpush1.msra.mxu0 0.0
    %135 = vmatprep.subr.mxu0 0.0
    %136 = vmatpush1.msra.mxu0 0.0
    %137 = vmatprep.subr.mxu0 0.0
    %138 = vmatpush1.msra.mxu0 0.0
    %139 = vmatprep.subr.mxu0 0.0
    %140 = vmatpush1.msra.mxu0 0.0
    %141 = vmatprep.subr.mxu0 0.0
    %142 = vmatpush1.msra.mxu0 0.0
    %143 = vmatprep.subr.mxu0 0.0
    %144 = vmatpush1.msra.mxu0 0.0
    %145 = vmatprep.subr.mxu0 0.0
    %146 = vmatpush1.msra.mxu0 0.0
    %147 = vmatprep.subr.mxu0 0.0
    %148 = vmatpush1.msra.mxu0 0.0
    %149 = vmatprep.subr.mxu0 0.0
    %150 = vmatpush1.msra.mxu0 0.0
    %151 = vmatprep.subr.mxu0 0.0
    %152 = vmatpush1.msra.mxu0 0.0
    %153 = vmatprep.subr.mxu0 0.0
    %154 = vmatpush1.msra.mxu0 0.0
    %155 = vmatprep.subr.mxu0 0.0
    %156 = vmatpush1.msra.mxu0 0.0
    %157 = vmatprep.subr.mxu0 0.0
    %158 = vmatpush1.msra.mxu0 0.0
    %159 = vmatprep.subr.mxu0 0.0
    %160 = vmatpush1.msra.mxu0 0.0
    %161 = vmatprep.subr.mxu0 0.0
    %162 = vmatpush1.msra.mxu0 0.0
    %163 = vmatprep.subr.mxu0 0.0
    %164 = vmatpush1.msra.mxu0 0.0
    %165 = vmatprep.subr.mxu0 0.0
    %166 = vmatpush1.msra.mxu0 0.0
    %167 = vmatprep.subr.mxu0 0.0
    %168 = vmatpush1.msra.mxu0 0.0
    %169 = vmatprep.subr.mxu0 0.0
    %170 = vmatpush1.msra.mxu0 0.0
    %171 = vmatprep.subr.mxu0 0.0
    %172 = vmatpush1.msra.mxu0 0.0
    %173 = vmatprep.subr.mxu0 0.0
    %174 = vmatpush1.msra.mxu0 0.0
    %175 = vmatprep.subr.mxu0 0.0
    %176 = vmatpush1.msra.mxu0 0.0
    %177 = vmatprep.subr.mxu0 0.0
    %178 = vmatpush1.msra.mxu0 0.0
    %179 = vmatprep.mubr.f32.mxu0 0.0
    %180 = vmatmul.mubr.f32.gmra.mrb[0].mxu0 %v42
    %v181 = vpop.f32.mrb[0].mxu0
    %v182 = vadd.f32 0.0, %v181
    %v183 = vpop.f32.mrb[0].mxu0
    %v184 = vadd.f32 0.0, %v183
    %185 = vdwg.mxu0
    %186 = vmatprep.subr.mxu0 %v29
    %187 = vmatpush1.msra.mxu0 %v28
    %188 = vmatprep.subr.mxu0 0.0
    %189 = vmatpush1.msra.mxu0 0.0
    %190 = vmatprep.subr.mxu0 0.0
    %191 = vmatpush1.msra.mxu0 0.0
    %192 = vmatprep.subr.mxu0 0.0
    %193 = vmatpush1.msra.mxu0 0.0
    %194 = vmatprep.subr.mxu0 0.0
    %195 = vmatpush1.msra.mxu0 0.0
    %196 = vmatprep.subr.mxu0 0.0
    %197 = vmatpush1.msra.mxu0 0.0
    %198 = vmatprep.subr.mxu0 0.0
    %199 = vmatpush1.msra.mxu0 0.0
    %200 = vmatprep.subr.mxu0 0.0
    %201 = vmatpush1.msra.mxu0 0.0
    %202 = vmatprep.subr.mxu0 0.0
    %203 = vmatpush1.msra.mxu0 0.0
    %204 = vmatprep.subr.mxu0 0.0
    %205 = vmatpush1.msra.mxu0 0.0
    %206 = vmatprep.subr.mxu0 0.0
    %207 = vmatpush1.msra.mxu0 0.0
    %208 = vmatprep.subr.mxu0 0.0
    %209 = vmatpush1.msra.mxu0 0.0
    %210 = vmatprep.subr.mxu0 0.0
    %211 = vmatpush1.msra.mxu0 0.0
    %212 = vmatprep.subr.mxu0 0.0
    %213 = vmatpush1.msra.mxu0 0.0
    %214 = vmatprep.subr.mxu0 0.0
    %215 = vmatpush1.msra.mxu0 0.0
    %216 = vmatprep.subr.mxu0 0.0
    %217 = vmatpush1.msra.mxu0 0.0
    %218 = vmatprep.subr.mxu0 0.0
    %219 = vmatpush1.msra.mxu0 0.0
    %220 = vmatprep.subr.mxu0 0.0
    %221 = vmatpush1.msra.mxu0 0.0
    %222 = vmatprep.subr.mxu0 0.0
    %223 = vmatpush1.msra.mxu0 0.0
    %224 = vmatprep.subr.mxu0 0.0
    %225 = vmatpush1.msra.mxu0 0.0
    %226 = vmatprep.subr.mxu0 0.0
    %227 = vmatpush1.msra.mxu0 0.0
    %228 = vmatprep.subr.mxu0 0.0
    %229 = vmatpush1.msra.mxu0 0.0
    %230 = vmatprep.subr.mxu0 0.0
    %231 = vmatpush1.msra.mxu0 0.0
    %232 = vmatprep.subr.mxu0 0.0
    %233 = vmatpush1.msra.mxu0 0.0
    %234 = vmatprep.subr.mxu0 0.0
    %235 = vmatpush1.msra.mxu0 0.0
    %236 = vmatprep.subr.mxu0 0.0
    %237 = vmatpush1.msra.mxu0 0.0
    %238 = vmatprep.subr.mxu0 0.0
    %239 = vmatpush1.msra.mxu0 0.0
    %240 = vmatprep.subr.mxu0 0.0
    %241 = vmatpush1.msra.mxu0 0.0
    %242 = vmatprep.subr.mxu0 0.0
    %243 = vmatpush1.msra.mxu0 0.0
    %244 = vmatprep.subr.mxu0 0.0
    %245 = vmatpush1.msra.mxu0 0.0
    %246 = vmatprep.subr.mxu0 0.0
    %247 = vmatpush1.msra.mxu0 0.0
    %248 = vmatprep.subr.mxu0 0.0
    %249 = vmatpush1.msra.mxu0 0.0
    %250 = vmatprep.mubr.f32.mxu0 0.0
    %251 = vmatmul.mubr.f32.gmra.mrb[0].mxu0 %v42
    %v252 = vpop.f32.mrb[0].mxu0
    %v253 = vadd.f32 0.0, %v252
    %v254 = vpop.f32.mrb[0].mxu0
    %v255 = vadd.f32 0.0, %v254
    %256 = vdwg.mxu0
    %257 = vmatprep.subr.mxu0 %v31
    %258 = vmatpush1.msra.mxu0 %v30
    %259 = vmatprep.subr.mxu0 0.0
    %260 = vmatpush1.msra.mxu0 0.0
    %261 = vmatprep.subr.mxu0 0.0
    %262 = vmatpush1.msra.mxu0 0.0
    %263 = vmatprep.subr.mxu0 0.0
    %264 = vmatpush1.msra.mxu0 0.0
    %265 = vmatprep.subr.mxu0 0.0
    %266 = vmatpush1.msra.mxu0 0.0
    %267 = vmatprep.subr.mxu0 0.0
    %268 = vmatpush1.msra.mxu0 0.0
    %269 = vmatprep.subr.mxu0 0.0
    %270 = vmatpush1.msra.mxu0 0.0
    %271 = vmatprep.subr.mxu0 0.0
    %272 = vmatpush1.msra.mxu0 0.0
    %273 = vmatprep.subr.mxu0 0.0
    %274 = vmatpush1.msra.mxu0 0.0
    %275 = vmatprep.subr.mxu0 0.0
    %276 = vmatpush1.msra.mxu0 0.0
    %277 = vmatprep.subr.mxu0 0.0
    %278 = vmatpush1.msra.mxu0 0.0
    %279 = vmatprep.subr.mxu0 0.0
    %280 = vmatpush1.msra.mxu0 0.0
    %281 = vmatprep.subr.mxu0 0.0
    %282 = vmatpush1.msra.mxu0 0.0
    %283 = vmatprep.subr.mxu0 0.0
    %284 = vmatpush1.msra.mxu0 0.0
    %285 = vmatprep.subr.mxu0 0.0
    %286 = vmatpush1.msra.mxu0 0.0
    %287 = vmatprep.subr.mxu0 0.0
    %288 = vmatpush1.msra.mxu0 0.0
    %289 = vmatprep.subr.mxu0 0.0
    %290 = vmatpush1.msra.mxu0 0.0
    %291 = vmatprep.subr.mxu0 0.0
    %292 = vmatpush1.msra.mxu0 0.0
    %293 = vmatprep.subr.mxu0 0.0
    %294 = vmatpush1.msra.mxu0 0.0
    %295 = vmatprep.subr.mxu0 0.0
    %296 = vmatpush1.msra.mxu0 0.0
    %297 = vmatprep.subr.mxu0 0.0
    %298 = vmatpush1.msra.mxu0 0.0
    %299 = vmatprep.subr.mxu0 0.0
    %300 = vmatpush1.msra.mxu0 0.0
    %301 = vmatprep.subr.mxu0 0.0
    %302 = vmatpush1.msra.mxu0 0.0
    %303 = vmatprep.subr.mxu0 0.0
    %304 = vmatpush1.msra.mxu0 0.0
    %305 = vmatprep.subr.mxu0 0.0
    %306 = vmatpush1.msra.mxu0 0.0
    %307 = vmatprep.subr.mxu0 0.0
    %308 = vmatpush1.msra.mxu0 0.0
    %309 = vmatprep.subr.mxu0 0.0
    %310 = vmatpush1.msra.mxu0 0.0
    %311 = vmatprep.subr.mxu0 0.0
    %312 = vmatpush1.msra.mxu0 0.0
    %313 = vmatprep.subr.mxu0 0.0
    %314 = vmatpush1.msra.mxu0 0.0
    %315 = vmatprep.subr.mxu0 0.0
    %316 = vmatpush1.msra.mxu0 0.0
    %317 = vmatprep.subr.mxu0 0.0
    %318 = vmatpush1.msra.mxu0 0.0
    %319 = vmatprep.subr.mxu0 0.0
    %320 = vmatpush1.msra.mxu0 0.0
    %321 = vmatprep.mubr.f32.mxu0 0.0
    %322 = vmatmul.mubr.f32.gmra.mrb[0].mxu0 %v42
    %v323 = vpop.f32.mrb[0].mxu0
    %v324 = vadd.f32 0.0, %v323
    %v325 = vpop.f32.mrb[0].mxu0
    %v326 = vadd.f32 0.0, %v325
    %327 = vdwg.mxu0
    %328 = vmatprep.subr.mxu0 %v33
    %329 = vmatpush1.msra.mxu0 %v32
    %330 = vmatprep.subr.mxu0 0.0
    %331 = vmatpush1.msra.mxu0 0.0
    %332 = vmatprep.subr.mxu0 0.0
    %333 = vmatpush1.msra.mxu0 0.0
    %334 = vmatprep.subr.mxu0 0.0
    %335 = vmatpush1.msra.mxu0 0.0
    %336 = vmatprep.subr.mxu0 0.0
    %337 = vmatpush1.msra.mxu0 0.0
    %338 = vmatprep.subr.mxu0 0.0
    %339 = vmatpush1.msra.mxu0 0.0
    %340 = vmatprep.subr.mxu0 0.0
    %341 = vmatpush1.msra.mxu0 0.0
    %342 = vmatprep.subr.mxu0 0.0
    %343 = vmatpush1.msra.mxu0 0.0
    %344 = vmatprep.subr.mxu0 0.0
    %345 = vmatpush1.msra.mxu0 0.0
    %346 = vmatprep.subr.mxu0 0.0
    %347 = vmatpush1.msra.mxu0 0.0
    %348 = vmatprep.subr.mxu0 0.0
    %349 = vmatpush1.msra.mxu0 0.0
    %350 = vmatprep.subr.mxu0 0.0
    %351 = vmatpush1.msra.mxu0 0.0
    %352 = vmatprep.subr.mxu0 0.0
    %353 = vmatpush1.msra.mxu0 0.0
    %354 = vmatprep.subr.mxu0 0.0
    %355 = vmatpush1.msra.mxu0 0.0
    %356 = vmatprep.subr.mxu0 0.0
    %357 = vmatpush1.msra.mxu0 0.0
    %358 = vmatprep.subr.mxu0 0.0
    %359 = vmatpush1.msra.mxu0 0.0
    %360 = vmatprep.subr.mxu0 0.0
    %361 = vmatpush1.msra.mxu0 0.0
    %362 = vmatprep.subr.mxu0 0.0
    %363 = vmatpush1.msra.mxu0 0.0
    %364 = vmatprep.subr.mxu0 0.0
    %365 = vmatpush1.msra.mxu0 0.0
    %366 = vmatprep.subr.mxu0 0.0
    %367 = vmatpush1.msra.mxu0 0.0
    %368 = vmatprep.subr.mxu0 0.0
    %369 = vmatpush1.msra.mxu0 0.0
    %370 = vmatprep.subr.mxu0 0.0
    %371 = vmatpush1.msra.mxu0 0.0
    %372 = vmatprep.subr.mxu0 0.0
    %373 = vmatpush1.msra.mxu0 0.0
    %374 = vmatprep.subr.mxu0 0.0
    %375 = vmatpush1.msra.mxu0 0.0
    %376 = vmatprep.subr.mxu0 0.0
    %377 = vmatpush1.msra.mxu0 0.0
    %378 = vmatprep.subr.mxu0 0.0
    %379 = vmatpush1.msra.mxu0 0.0
    %380 = vmatprep.subr.mxu0 0.0
    %381 = vmatpush1.msra.mxu0 0.0
    %382 = vmatprep.subr.mxu0 0.0
    %383 = vmatpush1.msra.mxu0 0.0
    %384 = vmatprep.subr.mxu0 0.0
    %385 = vmatpush1.msra.mxu0 0.0
    %386 = vmatprep.subr.mxu0 0.0
    %387 = vmatpush1.msra.mxu0 0.0
    %388 = vmatprep.subr.mxu0 0.0
    %389 = vmatpush1.msra.mxu0 0.0
    %390 = vmatprep.subr.mxu0 0.0
    %391 = vmatpush1.msra.mxu0 0.0
    %392 = vmatprep.mubr.f32.mxu0 0.0
    %393 = vmatmul.mubr.f32.gmra.mrb[0].mxu0 %v42
    %v394 = vpop.f32.mrb[0].mxu0
    %v395 = vadd.f32 0.0, %v394
    %v396 = vpop.f32.mrb[0].mxu0
    %v397 = vadd.f32 0.0, %v396
    %398 = vdwg.mxu0
    %399 = vmatprep.subr.mxu0 %v35
    %400 = vmatpush1.msra.mxu0 %v34
    %401 = vmatprep.subr.mxu0 0.0
    %402 = vmatpush1.msra.mxu0 0.0
    %403 = vmatprep.subr.mxu0 0.0
    %404 = vmatpush1.msra.mxu0 0.0
    %405 = vmatprep.subr.mxu0 0.0
    %406 = vmatpush1.msra.mxu0 0.0
    %407 = vmatprep.subr.mxu0 0.0
    %408 = vmatpush1.msra.mxu0 0.0
    %409 = vmatprep.subr.mxu0 0.0
    %410 = vmatpush1.msra.mxu0 0.0
    %411 = vmatprep.subr.mxu0 0.0
    %412 = vmatpush1.msra.mxu0 0.0
    %413 = vmatprep.subr.mxu0 0.0
    %414 = vmatpush1.msra.mxu0 0.0
    %415 = vmatprep.subr.mxu0 0.0
    %416 = vmatpush1.msra.mxu0 0.0
    %417 = vmatprep.subr.mxu0 0.0
    %418 = vmatpush1.msra.mxu0 0.0
    %419 = vmatprep.subr.mxu0 0.0
    %420 = vmatpush1.msra.mxu0 0.0
    %421 = vmatprep.subr.mxu0 0.0
    %422 = vmatpush1.msra.mxu0 0.0
    %423 = vmatprep.subr.mxu0 0.0
    %424 = vmatpush1.msra.mxu0 0.0
    %425 = vmatprep.subr.mxu0 0.0
    %426 = vmatpush1.msra.mxu0 0.0
    %427 = vmatprep.subr.mxu0 0.0
    %428 = vmatpush1.msra.mxu0 0.0
    %429 = vmatprep.subr.mxu0 0.0
    %430 = vmatpush1.msra.mxu0 0.0
    %431 = vmatprep.subr.mxu0 0.0
    %432 = vmatpush1.msra.mxu0 0.0
    %433 = vmatprep.subr.mxu0 0.0
    %434 = vmatpush1.msra.mxu0 0.0
    %435 = vmatprep.subr.mxu0 0.0
    %436 = vmatpush1.msra.mxu0 0.0
    %437 = vmatprep.subr.mxu0 0.0
    %438 = vmatpush1.msra.mxu0 0.0
    %439 = vmatprep.subr.mxu0 0.0
    %440 = vmatpush1.msra.mxu0 0.0
    %441 = vmatprep.subr.mxu0 0.0
    %442 = vmatpush1.msra.mxu0 0.0
    %443 = vmatprep.subr.mxu0 0.0
    %444 = vmatpush1.msra.mxu0 0.0
    %445 = vmatprep.subr.mxu0 0.0
    %446 = vmatpush1.msra.mxu0 0.0
    %447 = vmatprep.subr.mxu0 0.0
    %448 = vmatpush1.msra.mxu0 0.0
    %449 = vmatprep.subr.mxu0 0.0
    %450 = vmatpush1.msra.mxu0 0.0
    %451 = vmatprep.subr.mxu0 0.0
    %452 = vmatpush1.msra.mxu0 0.0
    %453 = vmatprep.subr.mxu0 0.0
    %454 = vmatpush1.msra.mxu0 0.0
    %455 = vmatprep.subr.mxu0 0.0
    %456 = vmatpush1.msra.mxu0 0.0
    %457 = vmatprep.subr.mxu0 0.0
    %458 = vmatpush1.msra.mxu0 0.0
    %459 = vmatprep.subr.mxu0 0.0
    %460 = vmatpush1.msra.mxu0 0.0
    %461 = vmatprep.subr.mxu0 0.0
    %462 = vmatpush1.msra.mxu0 0.0
    %463 = vmatprep.mubr.f32.mxu0 0.0
    %464 = vmatmul.mubr.f32.gmra.mrb[0].mxu0 %v42
    %v465 = vpop.f32.mrb[0].mxu0
    %v466 = vadd.f32 0.0, %v465
    %v467 = vpop.f32.mrb[0].mxu0
    %v468 = vadd.f32 0.0, %v467
    %469 = vdwg.mxu0
    %470 = vmatprep.subr.mxu0 %v37
    %471 = vmatpush1.msra.mxu0 %v36
    %472 = vmatprep.subr.mxu0 0.0
    %473 = vmatpush1.msra.mxu0 0.0
    %474 = vmatprep.subr.mxu0 0.0
    %475 = vmatpush1.msra.mxu0 0.0
    %476 = vmatprep.subr.mxu0 0.0
    %477 = vmatpush1.msra.mxu0 0.0
    %478 = vmatprep.subr.mxu0 0.0
    %479 = vmatpush1.msra.mxu0 0.0
    %480 = vmatprep.subr.mxu0 0.0
    %481 = vmatpush1.msra.mxu0 0.0
    %482 = vmatprep.subr.mxu0 0.0
    %483 = vmatpush1.msra.mxu0 0.0
    %484 = vmatprep.subr.mxu0 0.0
    %485 = vmatpush1.msra.mxu0 0.0
    %486 = vmatprep.subr.mxu0 0.0
    %487 = vmatpush1.msra.mxu0 0.0
    %488 = vmatprep.subr.mxu0 0.0
    %489 = vmatpush1.msra.mxu0 0.0
    %490 = vmatprep.subr.mxu0 0.0
    %491 = vmatpush1.msra.mxu0 0.0
    %492 = vmatprep.subr.mxu0 0.0
    %493 = vmatpush1.msra.mxu0 0.0
    %494 = vmatprep.subr.mxu0 0.0
    %495 = vmatpush1.msra.mxu0 0.0
    %496 = vmatprep.subr.mxu0 0.0
    %497 = vmatpush1.msra.mxu0 0.0
    %498 = vmatprep.subr.mxu0 0.0
    %499 = vmatpush1.msra.mxu0 0.0
    %500 = vmatprep.subr.mxu0 0.0
    %501 = vmatpush1.msra.mxu0 0.0
    %502 = vmatprep.subr.mxu0 0.0
    %503 = vmatpush1.msra.mxu0 0.0
    %504 = vmatprep.subr.mxu0 0.0
    %505 = vmatpush1.msra.mxu0 0.0
    %506 = vmatprep.subr.mxu0 0.0
    %507 = vmatpush1.msra.mxu0 0.0
    %508 = vmatprep.subr.mxu0 0.0
    %509 = vmatpush1.msra.mxu0 0.0
    %510 = vmatprep.subr.mxu0 0.0
    %511 = vmatpush1.msra.mxu0 0.0
    %512 = vmatprep.subr.mxu0 0.0
    %513 = vmatpush1.msra.mxu0 0.0
    %514 = vmatprep.subr.mxu0 0.0
    %515 = vmatpush1.msra.mxu0 0.0
    %516 = vmatprep.subr.mxu0 0.0
    %517 = vmatpush1.msra.mxu0 0.0
    %518 = vmatprep.subr.mxu0 0.0
    %519 = vmatpush1.msra.mxu0 0.0
    %520 = vmatprep.subr.mxu0 0.0
    %521 = vmatpush1.msra.mxu0 0.0
    %522 = vmatprep.subr.mxu0 0.0
    %523 = vmatpush1.msra.mxu0 0.0
    %524 = vmatprep.subr.mxu0 0.0
    %525 = vmatpush1.msra.mxu0 0.0
    %526 = vmatprep.subr.mxu0 0.0
    %527 = vmatpush1.msra.mxu0 0.0
    %528 = vmatprep.subr.mxu0 0.0
    %529 = vmatpush1.msra.mxu0 0.0
    %530 = vmatprep.subr.mxu0 0.0
    %531 = vmatpush1.msra.mxu0 0.0
    %532 = vmatprep.subr.mxu0 0.0
    %533 = vmatpush1.msra.mxu0 0.0
    %534 = vmatprep.mubr.f32.mxu0 0.0
    %535 = vmatmul.mubr.f32.gmra.mrb[0].mxu0 %v42
    %v536 = vpop.f32.mrb[0].mxu0
    %v537 = vadd.f32 0.0, %v536
    %v538 = vpop.f32.mrb[0].mxu0
    %v539 = vadd.f32 0.0, %v538
    %540 = vdwg.mxu0
    %541 = vmatprep.subr.mxu0 %v39
    %542 = vmatpush1.msra.mxu0 %v38
    %543 = vmatprep.subr.mxu0 0.0
    %544 = vmatpush1.msra.mxu0 0.0
    %545 = vmatprep.subr.mxu0 0.0
    %546 = vmatpush1.msra.mxu0 0.0
    %547 = vmatprep.subr.mxu0 0.0
    %548 = vmatpush1.msra.mxu0 0.0
    %549 = vmatprep.subr.mxu0 0.0
    %550 = vmatpush1.msra.mxu0 0.0
    %551 = vmatprep.subr.mxu0 0.0
    %552 = vmatpush1.msra.mxu0 0.0
    %553 = vmatprep.subr.mxu0 0.0
    %554 = vmatpush1.msra.mxu0 0.0
    %555 = vmatprep.subr.mxu0 0.0
    %556 = vmatpush1.msra.mxu0 0.0
    %557 = vmatprep.subr.mxu0 0.0
    %558 = vmatpush1.msra.mxu0 0.0
    %559 = vmatprep.subr.mxu0 0.0
    %560 = vmatpush1.msra.mxu0 0.0
    %561 = vmatprep.subr.mxu0 0.0
    %562 = vmatpush1.msra.mxu0 0.0
    %563 = vmatprep.subr.mxu0 0.0
    %564 = vmatpush1.msra.mxu0 0.0
    %565 = vmatprep.subr.mxu0 0.0
    %566 = vmatpush1.msra.mxu0 0.0
    %567 = vmatprep.subr.mxu0 0.0
    %568 = vmatpush1.msra.mxu0 0.0
    %569 = vmatprep.subr.mxu0 0.0
    %570 = vmatpush1.msra.mxu0 0.0
    %571 = vmatprep.subr.mxu0 0.0
    %572 = vmatpush1.msra.mxu0 0.0
    %573 = vmatprep.subr.mxu0 0.0
    %574 = vmatpush1.msra.mxu0 0.0
    %575 = vmatprep.subr.mxu0 0.0
    %576 = vmatpush1.msra.mxu0 0.0
    %577 = vmatprep.subr.mxu0 0.0
    %578 = vmatpush1.msra.mxu0 0.0
    %579 = vmatprep.subr.mxu0 0.0
    %580 = vmatpush1.msra.mxu0 0.0
    %581 = vmatprep.subr.mxu0 0.0
    %582 = vmatpush1.msra.mxu0 0.0
    %583 = vmatprep.subr.mxu0 0.0
    %584 = vmatpush1.msra.mxu0 0.0
    %585 = vmatprep.subr.mxu0 0.0
    %586 = vmatpush1.msra.mxu0 0.0
    %587 = vmatprep.subr.mxu0 0.0
    %588 = vmatpush1.msra.mxu0 0.0
    %589 = vmatprep.subr.mxu0 0.0
    %590 = vmatpush1.msra.mxu0 0.0
    %591 = vmatprep.subr.mxu0 0.0
    %592 = vmatpush1.msra.mxu0 0.0
    %593 = vmatprep.subr.mxu0 0.0
    %594 = vmatpush1.msra.mxu0 0.0
    %595 = vmatprep.subr.mxu0 0.0
    %596 = vmatpush1.msra.mxu0 0.0
    %597 = vmatprep.subr.mxu0 0.0
    %598 = vmatpush1.msra.mxu0 0.0
    %599 = vmatprep.subr.mxu0 0.0
    %600 = vmatpush1.msra.mxu0 0.0
    %601 = vmatprep.subr.mxu0 0.0
    %602 = vmatpush1.msra.mxu0 0.0
    %603 = vmatprep.subr.mxu0 0.0
    %604 = vmatpush1.msra.mxu0 0.0
    %605 = vmatprep.mubr.f32.mxu0 0.0
    %606 = vmatmul.mubr.f32.gmra.mrb[0].mxu0 %v42
    %v607 = vpop.f32.mrb[0].mxu0
    %v608 = vadd.f32 0.0, %v607
    %v609 = vpop.f32.mrb[0].mxu0
    %v610 = vadd.f32 0.0, %v609
    %611 = vdwg.mxu0
    %vm612 = vcmask 1041408
    %v613 = vsel %vm612, %v111, 0.0
    %v614 = vrot.slane %v613, 4
    %v615 = vadd.f32 %v613, %v614
    %v616 = vrot.slane %v615, 2
    %v617 = vadd.f32 %v615, %v616
    %v618 = vrot.slane %v617, 1
    %v619 = vadd.f32 %v617, %v618
    %v620 = vadd.f32 %v619, 0.0
    %v621 = vmul.f32 %v111, %v111
    %v622 = vsel %vm612, %v621, 0.0
    %v623 = vrot.slane %v622, 4
    %v624 = vadd.f32 %v622, %v623
    %v625 = vrot.slane %v624, 2
    %v626 = vadd.f32 %v624, %v625
    %v627 = vrot.slane %v626, 1
    %v628 = vadd.f32 %v626, %v627
    %v629 = vadd.f32 %v628, 0.0
    %v630 = vsel %vm612, %v113, 0.0
    %v631 = vrot.slane %v630, 4
    %v632 = vadd.f32 %v630, %v631
    %v633 = vrot.slane %v632, 2
    %v634 = vadd.f32 %v632, %v633
    %v635 = vrot.slane %v634, 1
    %v636 = vadd.f32 %v634, %v635
    %v637 = vadd.f32 %v620, %v636
    %v638 = vmul.f32 %v113, %v113
    %v639 = vsel %vm612, %v638, 0.0
    %v640 = vrot.slane %v639, 4
    %v641 = vadd.f32 %v639, %v640
    %v642 = vrot.slane %v641, 2
    %v643 = vadd.f32 %v641, %v642
    %v644 = vrot.slane %v643, 1
    %v645 = vadd.f32 %v643, %v644
    %v646 = vadd.f32 %v629, %v645
    %v647 = vsel %vm612, %v182, 0.0
    %v648 = vrot.slane %v647, 4
    %v649 = vadd.f32 %v647, %v648
    %v650 = vrot.slane %v649, 2
    %v651 = vadd.f32 %v649, %v650
    %v652 = vrot.slane %v651, 1
    %v653 = vadd.f32 %v651, %v652
    %v654 = vadd.f32 %v637, %v653
    %v655 = vmul.f32 %v182, %v182
    %v656 = vsel %vm612, %v655, 0.0
    %v657 = vrot.slane %v656, 4
    %v658 = vadd.f32 %v656, %v657
    %v659 = vrot.slane %v658, 2
    %v660 = vadd.f32 %v658, %v659
    %v661 = vrot.slane %v660, 1
    %v662 = vadd.f32 %v660, %v661
    %v663 = vadd.f32 %v646, %v662
    %v664 = vsel %vm612, %v184, 0.0
    %v665 = vrot.slane %v664, 4
    %v666 = vadd.f32 %v664, %v665
    %v667 = vrot.slane %v666, 2
    %v668 = vadd.f32 %v666, %v667
    %v669 = vrot.slane %v668, 1
    %v670 = vadd.f32 %v668, %v669
    %v671 = vadd.f32 %v654, %v670
    %v672 = vmul.f32 %v184, %v184
    %v673 = vsel %vm612, %v672, 0.0
    %v674 = vrot.slane %v673, 4
    %v675 = vadd.f32 %v673, %v674
    %v676 = vrot.slane %v675, 2
    %v677 = vadd.f32 %v675, %v676
    %v678 = vrot.slane %v677, 1
    %v679 = vadd.f32 %v677, %v678
    %v680 = vadd.f32 %v663, %v679
    %v681 = vsel %vm612, %v253, 0.0
    %v682 = vrot.slane %v681, 4
    %v683 = vadd.f32 %v681, %v682
    %v684 = vrot.slane %v683, 2
    %v685 = vadd.f32 %v683, %v684
    %v686 = vrot.slane %v685, 1
    %v687 = vadd.f32 %v685, %v686
    %v688 = vadd.f32 %v671, %v687
    %v689 = vmul.f32 %v253, %v253
    %v690 = vsel %vm612, %v689, 0.0
    %v691 = vrot.slane %v690, 4
    %v692 = vadd.f32 %v690, %v691
    %v693 = vrot.slane %v692, 2
    %v694 = vadd.f32 %v692, %v693
    %v695 = vrot.slane %v694, 1
    %v696 = vadd.f32 %v694, %v695
    %v697 = vadd.f32 %v680, %v696
    %v698 = vsel %vm612, %v255, 0.0
    %v699 = vrot.slane %v698, 4
    %v700 = vadd.f32 %v698, %v699
    %v701 = vrot.slane %v700, 2
    %v702 = vadd.f32 %v700, %v701
    %v703 = vrot.slane %v702, 1
    %v704 = vadd.f32 %v702, %v703
    %v705 = vadd.f32 %v688, %v704
    %v706 = vmul.f32 %v255, %v255
    %v707 = vsel %vm612, %v706, 0.0
    %v708 = vrot.slane %v707, 4
    %v709 = vadd.f32 %v707, %v708
    %v710 = vrot.slane %v709, 2
    %v711 = vadd.f32 %v709, %v710
    %v712 = vrot.slane %v711, 1
    %v713 = vadd.f32 %v711, %v712
    %v714 = vadd.f32 %v697, %v713
    %v715 = vsel %vm612, %v324, 0.0
    %v716 = vrot.slane %v715, 4
    %v717 = vadd.f32 %v715, %v716
    %v718 = vrot.slane %v717, 2
    %v719 = vadd.f32 %v717, %v718
    %v720 = vrot.slane %v719, 1
    %v721 = vadd.f32 %v719, %v720
    %v722 = vadd.f32 %v705, %v721
    %v723 = vmul.f32 %v324, %v324
    %v724 = vsel %vm612, %v723, 0.0
    %v725 = vrot.slane %v724, 4
    %v726 = vadd.f32 %v724, %v725
    %v727 = vrot.slane %v726, 2
    %v728 = vadd.f32 %v726, %v727
    %v729 = vrot.slane %v728, 1
    %v730 = vadd.f32 %v728, %v729
    %v731 = vadd.f32 %v714, %v730
    %v732 = vsel %vm612, %v326, 0.0
    %v733 = vrot.slane %v732, 4
    %v734 = vadd.f32 %v732, %v733
    %v735 = vrot.slane %v734, 2
    %v736 = vadd.f32 %v734, %v735
    %v737 = vrot.slane %v736, 1
    %v738 = vadd.f32 %v736, %v737
    %v739 = vadd.f32 %v722, %v738
    %v740 = vmul.f32 %v326, %v326
    %v741 = vsel %vm612, %v740, 0.0
    %v742 = vrot.slane %v741, 4
    %v743 = vadd.f32 %v741, %v742
    %v744 = vrot.slane %v743, 2
    %v745 = vadd.f32 %v743, %v744
    %v746 = vrot.slane %v745, 1
    %v747 = vadd.f32 %v745, %v746
    %v748 = vadd.f32 %v731, %v747
    %v749 = vsel %vm612, %v395, 0.0
    %v750 = vrot.slane %v749, 4
    %v751 = vadd.f32 %v749, %v750
    %v752 = vrot.slane %v751, 2
    %v753 = vadd.f32 %v751, %v752
    %v754 = vrot.slane %v753, 1
    %v755 = vadd.f32 %v753, %v754
    %v756 = vadd.f32 %v739, %v755
    %v757 = vmul.f32 %v395, %v395
    %v758 = vsel %vm612, %v757, 0.0
    %v759 = vrot.slane %v758, 4
    %v760 = vadd.f32 %v758, %v759
    %v761 = vrot.slane %v760, 2
    %v762 = vadd.f32 %v760, %v761
    %v763 = vrot.slane %v762, 1
    %v764 = vadd.f32 %v762, %v763
    %v765 = vadd.f32 %v748, %v764
    %v766 = vsel %vm612, %v397, 0.0
    %v767 = vrot.slane %v766, 4
    %v768 = vadd.f32 %v766, %v767
    %v769 = vrot.slane %v768, 2
    %v770 = vadd.f32 %v768, %v769
    %v771 = vrot.slane %v770, 1
    %v772 = vadd.f32 %v770, %v771
    %v773 = vadd.f32 %v756, %v772
    %v774 = vmul.f32 %v397, %v397
    %v775 = vsel %vm612, %v774, 0.0
    %v776 = vrot.slane %v775, 4
    %v777 = vadd.f32 %v775, %v776
    %v778 = vrot.slane %v777, 2
    %v779 = vadd.f32 %v777, %v778
    %v780 = vrot.slane %v779, 1
    %v781 = vadd.f32 %v779, %v780
    %v782 = vadd.f32 %v765, %v781
    %v783 = vsel %vm612, %v466, 0.0
    %v784 = vrot.slane %v783, 4
    %v785 = vadd.f32 %v783, %v784
    %v786 = vrot.slane %v785, 2
    %v787 = vadd.f32 %v785, %v786
    %v788 = vrot.slane %v787, 1
    %v789 = vadd.f32 %v787, %v788
    %v790 = vadd.f32 %v773, %v789
    %v791 = vmul.f32 %v466, %v466
    %v792 = vsel %vm612, %v791, 0.0
    %v793 = vrot.slane %v792, 4
    %v794 = vadd.f32 %v792, %v793
    %v795 = vrot.slane %v794, 2
    %v796 = vadd.f32 %v794, %v795
    %v797 = vrot.slane %v796, 1
    %v798 = vadd.f32 %v796, %v797
    %v799 = vadd.f32 %v782, %v798
    %v800 = vsel %vm612, %v468, 0.0
    %v801 = vrot.slane %v800, 4
    %v802 = vadd.f32 %v800, %v801
    %v803 = vrot.slane %v802, 2
    %v804 = vadd.f32 %v802, %v803
    %v805 = vrot.slane %v804, 1
    %v806 = vadd.f32 %v804, %v805
    %v807 = vadd.f32 %v790, %v806
    %v808 = vmul.f32 %v468, %v468
    %v809 = vsel %vm612, %v808, 0.0
    %v810 = vrot.slane %v809, 4
    %v811 = vadd.f32 %v809, %v810
    %v812 = vrot.slane %v811, 2
    %v813 = vadd.f32 %v811, %v812
    %v814 = vrot.slane %v813, 1
    %v815 = vadd.f32 %v813, %v814
    %v816 = vadd.f32 %v799, %v815
    %v817 = vsel %vm612, %v537, 0.0
    %v818 = vrot.slane %v817, 4
    %v819 = vadd.f32 %v817, %v818
    %v820 = vrot.slane %v819, 2
    %v821 = vadd.f32 %v819, %v820
    %v822 = vrot.slane %v821, 1
    %v823 = vadd.f32 %v821, %v822
    %v824 = vadd.f32 %v807, %v823
    %v825 = vmul.f32 %v537, %v537
    %v826 = vsel %vm612, %v825, 0.0
    %v827 = vrot.slane %v826, 4
    %v828 = vadd.f32 %v826, %v827
    %v829 = vrot.slane %v828, 2
    %v830 = vadd.f32 %v828, %v829
    %v831 = vrot.slane %v830, 1
    %v832 = vadd.f32 %v830, %v831
    %v833 = vadd.f32 %v816, %v832
    %v834 = vsel %vm612, %v539, 0.0
    %v835 = vrot.slane %v834, 4
    %v836 = vadd.f32 %v834, %v835
    %v837 = vrot.slane %v836, 2
    %v838 = vadd.f32 %v836, %v837
    %v839 = vrot.slane %v838, 1
    %v840 = vadd.f32 %v838, %v839
    %v841 = vadd.f32 %v824, %v840
    %v842 = vmul.f32 %v539, %v539
    %v843 = vsel %vm612, %v842, 0.0
    %v844 = vrot.slane %v843, 4
    %v845 = vadd.f32 %v843, %v844
    %v846 = vrot.slane %v845, 2
    %v847 = vadd.f32 %v845, %v846
    %v848 = vrot.slane %v847, 1
    %v849 = vadd.f32 %v847, %v848
    %v850 = vadd.f32 %v833, %v849
    %v851 = vsel %vm612, %v608, 0.0
    %v852 = vrot.slane %v851, 4
    %v853 = vadd.f32 %v851, %v852
    %v854 = vrot.slane %v853, 2
    %v855 = vadd.f32 %v853, %v854
    %v856 = vrot.slane %v855, 1
    %v857 = vadd.f32 %v855, %v856
    %v858 = vadd.f32 %v841, %v857
    %v859 = vmul.f32 %v608, %v608
    %v860 = vsel %vm612, %v859, 0.0
    %v861 = vrot.slane %v860, 4
    %v862 = vadd.f32 %v860, %v861
    %v863 = vrot.slane %v862, 2
    %v864 = vadd.f32 %v862, %v863
    %v865 = vrot.slane %v864, 1
    %v866 = vadd.f32 %v864, %v865
    %v867 = vadd.f32 %v850, %v866
    %v868 = vsel %vm612, %v610, 0.0
    %v869 = vrot.slane %v868, 4
    %v870 = vadd.f32 %v868, %v869
    %v871 = vrot.slane %v870, 2
    %v872 = vadd.f32 %v870, %v871
    %v873 = vrot.slane %v872, 1
    %v874 = vadd.f32 %v872, %v873
    %v875 = vadd.f32 %v858, %v874
    %v876 = vmul.f32 %v610, %v610
    %v877 = vsel %vm612, %v876, 0.0
    %v878 = vrot.slane %v877, 4
    %v879 = vadd.f32 %v877, %v878
    %v880 = vrot.slane %v879, 2
    %v881 = vadd.f32 %v879, %v880
    %v882 = vrot.slane %v881, 1
    %v883 = vadd.f32 %v881, %v882
    %v884 = vadd.f32 %v867, %v883
    %v885 = vmul.f32 %v875, 0.03125
    %v886 = vmul.f32 %v884, 0.03125
    %v887 = vmul.f32 %v885, %v885
    %v888 = vsub.f32 %v886, %v887
    %v889 = vmax.f32 %v888, 0.0
    %v890 = vadd.f32 %v889, 1e-05
    %v891 = vrsqrt.pop %v890
    %v892 = vsub.f32 0.0, %v885
    %v893 = vmul.f32 %v892, %v891
    %v894 = vmul.f32 %v111, %v891
    %v895 = vadd.f32 %v894, %v893
    %v896 = vmax.f32 %v895, 0.0
    %897 = vst [vmem:[%s2] sm:$0x3] %v896
    %v898 = vmul.f32 %v113, %v891
    %v899 = vadd.f32 %v898, %v893
    %v900 = vmax.f32 %v899, 0.0
    %901 = vst [vmem:[%s2 + $0x2] sm:$0x3] %v900
    %v902 = vmul.f32 %v182, %v891
    %v903 = vadd.f32 %v902, %v893
    %v904 = vmax.f32 %v903, 0.0
    %905 = vst [vmem:[%s2 + $0x4] sm:$0x3] %v904
    %v906 = vmul.f32 %v184, %v891
    %v907 = vadd.f32 %v906, %v893
    %v908 = vmax.f32 %v907, 0.0
    %909 = vst [vmem:[%s2 + $0x6] sm:$0x3] %v908
    %v910 = vmul.f32 %v253, %v891
    %v911 = vadd.f32 %v910, %v893
    %v912 = vmax.f32 %v911, 0.0
    %913 = vst [vmem:[%s2 + $0x8] sm:$0x3] %v912
    %v914 = vmul.f32 %v255, %v891
    %v915 = vadd.f32 %v914, %v893
    %v916 = vmax.f32 %v915, 0.0
    %917 = vst [vmem:[%s2 + $0xa] sm:$0x3] %v916
    %v918 = vmul.f32 %v324, %v891
    %v919 = vadd.f32 %v918, %v893
    %v920 = vmax.f32 %v919, 0.0
    %921 = vst [vmem:[%s2 + $0xc] sm:$0x3] %v920
    %v922 = vmul.f32 %v326, %v891
    %v923 = vadd.f32 %v922, %v893
    %v924 = vmax.f32 %v923, 0.0
    %925 = vst [vmem:[%s2 + $0xe] sm:$0x3] %v924
    %v926 = vmul.f32 %v395, %v891
    %v927 = vadd.f32 %v926, %v893
    %v928 = vmax.f32 %v927, 0.0
    %929 = vst [vmem:[%s2 + $0x10] sm:$0x3] %v928
    %v930 = vmul.f32 %v397, %v891
    %v931 = vadd.f32 %v930, %v893
    %v932 = vmax.f32 %v931, 0.0
    %933 = vst [vmem:[%s2 + $0x12] sm:$0x3] %v932
    %v934 = vmul.f32 %v466, %v891
    %v935 = vadd.f32 %v934, %v893
    %v936 = vmax.f32 %v935, 0.0
    %937 = vst [vmem:[%s2 + $0x14] sm:$0x3] %v936
    %v938 = vmul.f32 %v468, %v891
    %v939 = vadd.f32 %v938, %v893
    %v940 = vmax.f32 %v939, 0.0
    %941 = vst [vmem:[%s2 + $0x16] sm:$0x3] %v940
    %v942 = vmul.f32 %v537, %v891
    %v943 = vadd.f32 %v942, %v893
    %v944 = vmax.f32 %v943, 0.0
    %945 = vst [vmem:[%s2 + $0x18] sm:$0x3] %v944
    %v946 = vmul.f32 %v539, %v891
    %v947 = vadd.f32 %v946, %v893
    %v948 = vmax.f32 %v947, 0.0
    %949 = vst [vmem:[%s2 + $0x1a] sm:$0x3] %v948
    %v950 = vmul.f32 %v608, %v891
    %v951 = vadd.f32 %v950, %v893
    %v952 = vmax.f32 %v951, 0.0
    %953 = vst [vmem:[%s2 + $0x1c] sm:$0x3] %v952
    %v954 = vmul.f32 %v610, %v891
    %v955 = vadd.f32 %v954, %v893
    %v956 = vmax.f32 %v955, 0.0
    %957 = vst [vmem:[%s2 + $0x1e] sm:$0x3] %v956
    // Predicated region
    $region14: #{generator_forward.5} parent=1 // pred_check
      _
    $region15: #{generator_forward.5} parent=1 // pred_check_branch
      %959 = sbr.rel (0) target = $region17
    $region16: #{generator_forward.5} parent=1 // pred_region
      _
    $region17: #{generator_forward.5} parent=1 // pred_fallthru
      _
    // Predicated region
    $region18: #{generator_forward.5} parent=1 // pred_check
      _
    $region19: #{generator_forward.5} parent=1 // pred_check_branch
      %961 = sbr.rel (0) target = $region21
    $region20: #{generator_forward.5} parent=1 // pred_region
      _
    $region21: #{generator_forward.5} parent=1 // pred_fallthru
      _
    %962 = vsyncpa [#allocation3], 1

// kernel: generator_forward.6
$region0: #{generator_forward.6}
  #allocation0 [shape = 'u32[]', space=smem, size = 0x4, offset = 0x4, fixed_abs, tag = 'smem constant byte address 0x4 - core index']
  #allocation1 [shape = 'u32[144,128]{1,0:T(1,128)}', space=vmem, size = 0x12000, scoped, tag = 'internal scratch']
  #allocation2 [shape = 'f32[8,128]{1,0:T(8,128)}', space=vmem, size = 0x1000, scoped, tag = 'scratch operand']
  #allocation3 [shape = 'f32[8,128]{1,0:T(8,128)}', space=vmem, size = 0x1000, scoped, tag = 'scratch operand']
  %s0 = inlined_call_operand.vmem [shape: f32[4,32,256], index: 0, kind: input, shape index: {}]
  %s1 = inlined_call_operand.vmem [shape: f32[4,256,128], index: 1, kind: input, shape index: {}]
  %s2 = inlined_call_operand.vmem [shape: f32[4,32,128], index: 2, kind: output, shape index: {}]
  %s3 = sld [smem:[#allocation0]]
  $region49: #{generator_forward.6} parent=0
    _
  %s5 = ssub.s32 1, %s3
  %s6 = scalar_select 0, %s5, %s3
  loop: start=0, step=1, limit=6
  $region2: #{generator_forward.6} parent=0 // loop_pre_header
    _
  $region3: #{generator_forward.6} parent=0 // loop_header
    %s8 = sphi 0, %s12
    %p9 = scmp.ge.s32.totalorder %s8, 6
    %s15 = sphi 0, %s27
    %s16 = sphi 0, %s23
    %s17 = sphi 0, %s15
    %s18 = sphi 0, %s16
    %s19 = sphi 0, %s17
    %s20 = sphi 0, %s18
    %s32 = sphi 0, %s34
    %s35 = sphi 0, %s32
    %s36 = sphi 0, %s35
    %s52 = sphi 0, %s36
    %s58 = sphi 0, %s60
    %s61 = sphi 0, %s58
    %s62 = sphi 0, %s61
    %s78 = sphi 0, %s62
    %s82 = sphi 0, %s82
    %s84 = sphi 0, %s82
    %s85 = sphi 0, %s84
    %s99 = sphi 0, %s85
  $region4: #{generator_forward.6} parent=0 // loop_header_branch
    %11 = sbr.rel (%p9) target = $region8
  $region5: #{generator_forward.6} parent=0 // loop_body
    %s13 = ssub.s32 %s8, 1
    %s14 = ssub.s32 %s8, 2
    %s21 = sadd.s32 1, %s16
    %p22 = scmp.ge.s32.totalorder %s21, 1
    %s23 = scalar_select %p22, 0, %s21
    %s24 = sadd.s32 1, %s15
    %s25 = scalar_select %p22, %s24, %s15
    %p26 = scmp.ge.s32.totalorder %s25, 4
    %s27 = scalar_select %p26, 0, %s25
    %s28 = ssub.s32 %s15, %s27
    %s29 = ssub.s32 %s16, %s23
    %s30 = sor.u32 %s28, %s29
    %p31 = scmp.eq.s32.totalorder %s30, 0
    %s33 = sadd.s32 %s32, 1
    %s34 = scalar_select %p31, %s32, %s33
    %p37 = pneg %p31
    %p38 = scmp.eq.s32.totalorder %s8, 3
    %p39 = por %p37, %p38
    %p40 = scmp.ne.s32.totalorder %s32, %s35
    %p41 = scmp.eq.s32.totalorder %s8, 0
    %p42 = por %p40, %p41
    %p43 = scmp.ne.s32.totalorder %s32, %s35
    %p44 = scmp.eq.s32.totalorder %s13, 3
    %p45 = por %p43, %p44
    %p46 = scmp.ne.s32.totalorder %s35, %s36
    %p47 = scmp.eq.s32.totalorder %s13, 0
    %p48 = por %p46, %p47
    %p49 = scmp.ne.s32.totalorder %s35, %s36
    %p50 = scmp.eq.s32.totalorder %s14, 3
    %p51 = por %p49, %p50
    %p53 = scmp.ne.s32.totalorder %s36, %s52
    %p54 = scmp.eq.s32.totalorder %s14, 0
    %p55 = por %p53, %p54
    %s56 = ssub.s32 %s15, %s27
    %p57 = scmp.eq.s32.totalorder %s56, 0
    %s59 = sadd.s32 %s58, 1
    %s60 = scalar_select %p57, %s58, %s59
    %p63 = pneg %p57
    %p64 = scmp.eq.s32.totalorder %s8, 3
    %p65 = por %p63, %p64
    %p66 = scmp.ne.s32.totalorder %s58, %s61
    %p67 = scmp.eq.s32.totalorder %s8, 0
    %p68 = por %p66, %p67
    %p69 = scmp.ne.s32.totalorder %s58, %s61
    %p70 = scmp.eq.s32.totalorder %s13, 3
    %p71 = por %p69, %p70
    %p72 = scmp.ne.s32.totalorder %s61, %s62
    %p73 = scmp.eq.s32.totalorder %s13, 0
    %p74 = por %p72, %p73
    %p75 = scmp.ne.s32.totalorder %s61, %s62
    %p76 = scmp.eq.s32.totalorder %s14, 3
    %p77 = por %p75, %p76
    %p79 = scmp.ne.s32.totalorder %s62, %s78
    %p80 = scmp.eq.s32.totalorder %s14, 0
    %p81 = por %p79, %p80
    %s83 = sadd.s32 %s82, 1
    %p86 = scmp.eq.s32.totalorder %s8, 3
    %p87 = scmp.ne.s32.totalorder %s82, %s84
    %p88 = scmp.eq.s32.totalorder %s8, 0
    %p89 = por %p87, %p88
    %p90 = scmp.ne.s32.totalorder %s82, %s84
    %p91 = scmp.eq.s32.totalorder %s13, 3
    %p92 = por %p90, %p91
    %p93 = scmp.ne.s32.totalorder %s84, %s85
    %p94 = scmp.eq.s32.totalorder %s13, 0
    %p95 = por %p93, %p94
    %p96 = scmp.ne.s32.totalorder %s84, %s85
    %p97 = scmp.eq.s32.totalorder %s14, 3
    %p98 = por %p96, %p97
    %p100 = scmp.ne.s32.totalorder %s85, %s99
    %p101 = scmp.eq.s32.totalorder %s14, 0
    %p102 = por %p100, %p101
    %p103 = scmp.le.s32.totalorder 1, %s8
    %p104 = scmp.lt.s32.totalorder %s8, 5
    %p105 = pnand %p103, %p104
    %p106 = pneg %p105
    // Predicated region
    $region9: #{generator_forward.6} parent=5 // pred_check
      _
    $region10: #{generator_forward.6} parent=5 // pred_check_branch
      %108 = sbr.rel (%p105) target = $region12
    $region11: #{generator_forward.6} parent=5 // pred_region
      %s109 = ssub.s32 %s8, 1
    $region12: #{generator_forward.6} parent=5 // pred_fallthru
      _
    %p110 = scmp.lt.s32.totalorder %s8, 4
    // Predicated region
    $region13: #{generator_forward.6} parent=5 // pred_check
      %p111 = pneg %p110
    $region14: #{generator_forward.6} parent=5 // pred_check_branch
      %113 = sbr.rel (%p111) target = $region16
    $region15: #{generator_forward.6} parent=5 // pred_region
      // Predicated region
      $region17: #{generator_forward.6} parent=15 // pred_check
        %p114 = pneg %p42
      $region18: #{generator_forward.6} parent=15 // pred_check_branch
        %116 = sbr.rel (%p114) target = $region20
      $region19: #{generator_forward.6} parent=15 // pred_region
        %s117 = smul.u32 4, %s16
        %p118 = scmp.lt.s32.totalorder %s15, 3
        %s119 = scalar_select %p118, %s15, 3
        %p120 = scmp.lt.s32.totalorder %s117, 3
        %s121 = scalar_select %p120, %s117, 3
        %s122 = smul.addr %s121, 2
        %s123 = smul.addr %s119, 8
        %s124 = sadd.s32 %s122, %s123
        %s125 = smul.addr %s124, 8
        %s126 = scalar_lea.vmem %s0, %s125
        %s127 = smul.u32 4, %s16
      $region20: #{generator_forward.6} parent=15 // pred_fallthru
        _
      // Predicated region
      $region21: #{generator_forward.6} parent=15 // pred_check
        %p128 = pneg %p68
      $region22: #{generator_forward.6} parent=15 // pred_check_branch
        %130 = sbr.rel (%p128) target = $region24
      $region23: #{generator_forward.6} parent=15 // pred_region
        %p131 = scmp.lt.s32.totalorder %s15, 3
        %s132 = scalar_select %p131, %s15, 3
        %s133 = smul.addr %s132, 32
        %s134 = smul.addr %s133, 8
        %s135 = scalar_lea.vmem %s1, %s134
      $region24: #{generator_forward.6} parent=15 // pred_fallthru
        _
    $region16: #{generator_forward.6} parent=5 // pred_fallthru
      _
    %p136 = scmp.le.s32.totalorder 1, %s8
    %p137 = scmp.lt.s32.totalorder %s8, 5
    %p138 = pnand %p136, %p137
    %p139 = pneg %p138
    // Predicated region
    $region25: #{generator_forward.6} parent=5 // pred_check
      _
    $region26: #{generator_forward.6} parent=5 // pred_check_branch
      %141 = sbr.rel (%p138) target = $region28
    $region27: #{generator_forward.6} parent=5 // pred_region
      %s142 = ssub.s32 %s8, 1
      %s143 = smul.u32 4, %s18
      %p144 = scmp.lt.s32.totalorder %s17, 3
      %s145 = scalar_select %p144, %s17, 3
      %p146 = scmp.lt.s32.totalorder %s143, 3
      %s147 = scalar_select %p146, %s143, 3
      %s148 = smul.addr %s147, 2
      %s149 = smul.addr %s145, 8
      %s150 = sadd.s32 %s148, %s149
      %s151 = smul.addr %s150, 8
      %s152 = scalar_lea.vmem %s0, %s151
      %p153 = pneg %p48
      %p154 = pneg %p45
      %p155 = scmp.lt.s32.totalorder %s17, 3
      %s156 = scalar_select %p155, %s17, 3
      %s157 = smul.addr %s156, 32
      %s158 = smul.addr %s157, 8
      %s159 = scalar_lea.vmem %s1, %s158
      %p160 = pneg %p74
      %p161 = pneg %p71
      %p162 = pneg %p95
      %p163 = pneg %p92
      %s164 = smul.u32 4, %s18
      %p165 = scmp.lt.s32.totalorder %s17, 3
      %s166 = scalar_select %p165, %s17, 3
      %p167 = scmp.lt.s32.totalorder %s164, 3
      %s168 = scalar_select %p167, %s164, 3
      %s169 = smul.addr %s168, 2
      %s170 = smul.addr %s166, 8
      %s171 = sadd.s32 %s169, %s170
      %s172 = smul.addr %s171, 8
      %s173 = scalar_lea.vmem %s0, %s172
      %s174 = smul.u32 4, %s18
      %p175 = scmp.lt.s32.totalorder %s17, 3
      %s176 = scalar_select %p175, %s17, 3
      %s177 = smul.addr %s176, 32
      %s178 = smul.addr %s177, 8
      %s179 = scalar_lea.vmem %s1, %s178
      %p180 = scmp.eq.s32.totalorder %s17, 3
      %p181 = scmp.eq.s32.totalorder %s18, 0
      %p182 = pnand %p180, %p181
      %p183 = pneg %p182
      %p184 = scmp.eq.s32.totalorder %s17, 0
      %p185 = pnand %p184, %p181
      %p186 = pneg %p185
      // Predicated region
      $region29: #{generator_forward.6} parent=27 // pred_check
        _
      $region30: #{generator_forward.6} parent=27 // pred_check_branch
        %188 = sbr.rel (%p185) target = $region32
      $region31: #{generator_forward.6} parent=27 // pred_region
        %189 = vst [vmem:[#allocation2] sm:$0xff] 0.0
        %190 = vst [vmem:[#allocation3] sm:$0xff] 0.0
      $region32: #{generator_forward.6} parent=27 // pred_fallthru
        _
      %v191 = vld [vmem:[%s173] sm:$0xff]
      %v192 = vld [vmem:[%s173 + $0x8] sm:$0xff]
      %v193 = vld [vmem:[%s173 + $0x10] sm:$0xff]
      %v194 = vld [vmem:[%s173 + $0x18] sm:$0xff]
      %v195 = vld [vmem:[%s173 + $0x20] sm:$0xff]
      %v196 = vld [vmem:[%s173 + $0x28] sm:$0xff]
      %v197 = vld [vmem:[%s173 + $0x30] sm:$0xff]
      %v198 = vld [vmem:[%s173 + $0x38] sm:$0xff]
      %v199 = vld [vmem:[%s179] sm:$0xff]
      %v200 = vld [vmem:[%s179 + $0x8] sm:$0xff]
      %v201 = vld [vmem:[%s179 + $0x10] sm:$0xff]
      %v202 = vld [vmem:[%s179 + $0x18] sm:$0xff]
      %v203 = vld [vmem:[%s179 + $0x20] sm:$0xff]
      %v204 = vld [vmem:[%s179 + $0x28] sm:$0xff]
      %v205 = vld [vmem:[%s179 + $0x30] sm:$0xff]
      %v206 = vld [vmem:[%s179 + $0x38] sm:$0xff]
      %v207 = vld [vmem:[%s179 + $0x40] sm:$0xff]
      %v208 = vld [vmem:[%s179 + $0x48] sm:$0xff]
      %v209 = vld [vmem:[%s179 + $0x50] sm:$0xff]
      %v210 = vld [vmem:[%s179 + $0x58] sm:$0xff]
      %v211 = vld [vmem:[%s179 + $0x60] sm:$0xff]
      %v212 = vld [vmem:[%s179 + $0x68] sm:$0xff]
      %v213 = vld [vmem:[%s179 + $0x70] sm:$0xff]
      %v214 = vld [vmem:[%s179 + $0x78] sm:$0xff]
      %v215 = vld [vmem:[%s179 + $0x80] sm:$0xff]
      %v216 = vld [vmem:[%s179 + $0x88] sm:$0xff]
      %v217 = vld [vmem:[%s179 + $0x90] sm:$0xff]
      %v218 = vld [vmem:[%s179 + $0x98] sm:$0xff]
      %v219 = vld [vmem:[%s179 + $0xa0] sm:$0xff]
      %v220 = vld [vmem:[%s179 + $0xa8] sm:$0xff]
      %v221 = vld [vmem:[%s179 + $0xb0] sm:$0xff]
      %v222 = vld [vmem:[%s179 + $0xb8] sm:$0xff]
      %v223 = vld [vmem:[%s179 + $0xc0] sm:$0xff]
      %v224 = vld [vmem:[%s179 + $0xc8] sm:$0xff]
      %v225 = vld [vmem:[%s179 + $0xd0] sm:$0xff]
      %v226 = vld [vmem:[%s179 + $0xd8] sm:$0xff]
      %v227 = vld [vmem:[%s179 + $0xe0] sm:$0xff]
      %v228 = vld [vmem:[%s179 + $0xe8] sm:$0xff]
      %v229 = vld [vmem:[%s179 + $0xf0] sm:$0xff]
      %v230 = vld [vmem:[%s179 + $0xf8] sm:$0xff]
      %231 = vmatprep.subr.mxu0 0.0
      %232 = vmatpush1.msra.mxu0 %v199
      %233 = vmatprep.subr.mxu0 0.0
      %234 = vmatpush1.msra.mxu0 %v200
      %235 = vmatprep.subr.mxu0 0.0
      %236 = vmatpush1.msra.mxu0 %v201
      %237 = vmatprep.subr.mxu0 0.0
      %238 = vmatpush1.msra.mxu0 %v202
      %239 = vmatprep.subr.mxu0 0.0
      %240 = vmatpush1.msra.mxu0 %v203
      %241 = vmatprep.subr.mxu0 0.0
      %242 = vmatpush1.msra.mxu0 %v204
      %243 = vmatprep.subr.mxu0 0.0
      %244 = vmatpush1.msra.mxu0 %v205
      %245 = vmatprep.subr.mxu0 0.0
      %246 = vmatpush1.msra.mxu0 %v206
      %247 = vmatprep.subr.mxu0 0.0
      %248 = vmatpush1.msra.mxu0 %v207
      %249 = vmatprep.subr.mxu0 0.0
      %250 = vmatpush1.msra.mxu0 %v208
      %251 = vmatprep.subr.mxu0 0.0
      %252 = vmatpush1.msra.mxu0 %v209
      %253 = vmatprep.subr.mxu0 0.0
      %254 = vmatpush1.msra.mxu0 %v210
      %255 = vmatprep.subr.mxu0 0.0
      %256 = vmatpush1.msra.mxu0 %v211
      %257 = vmatprep.subr.mxu0 0.0
      %258 = vmatpush1.msra.mxu0 %v212
      %259 = vmatprep.subr.mxu0 0.0
      %260 = vmatpush1.msra.mxu0 %v213
      %261 = vmatprep.subr.mxu0 0.0
      %262 = vmatpush1.msra.mxu0 %v214
      %263 = vmatprep.subr.mxu0 0.0
      %264 = vmatpush1.msra.mxu0 %v215
      %265 = vmatprep.subr.mxu0 0.0
      %266 = vmatpush1.msra.mxu0 %v216
      %267 = vmatprep.subr.mxu0 0.0
      %268 = vmatpush1.msra.mxu0 %v217
      %269 = vmatprep.subr.mxu0 0.0
      %270 = vmatpush1.msra.mxu0 %v218
      %271 = vmatprep.subr.mxu0 0.0
      %272 = vmatpush1.msra.mxu0 %v219
      %273 = vmatprep.subr.mxu0 0.0
      %274 = vmatpush1.msra.mxu0 %v220
      %275 = vmatprep.subr.mxu0 0.0
      %276 = vmatpush1.msra.mxu0 %v221
      %277 = vmatprep.subr.mxu0 0.0
      %278 = vmatpush1.msra.mxu0 %v222
      %279 = vmatprep.subr.mxu0 0.0
      %280 = vmatpush1.msra.mxu0 %v223
      %281 = vmatprep.subr.mxu0 0.0
      %282 = vmatpush1.msra.mxu0 %v224
      %283 = vmatprep.subr.mxu0 0.0
      %284 = vmatpush1.msra.mxu0 %v225
      %285 = vmatprep.subr.mxu0 0.0
      %286 = vmatpush1.msra.mxu0 %v226
      %287 = vmatprep.subr.mxu0 0.0
      %288 = vmatpush1.msra.mxu0 %v227
      %289 = vmatprep.subr.mxu0 0.0
      %290 = vmatpush1.msra.mxu0 %v228
      %291 = vmatprep.subr.mxu0 0.0
      %292 = vmatpush1.msra.mxu0 %v229
      %293 = vmatprep.subr.mxu0 0.0
      %294 = vmatpush1.msra.mxu0 %v230
      %295 = vmatprep.mubr.f32.mxu0 %v192
      %296 = vmatmul.mubr.f32.gmra.mrb[0].mxu0 %v191
      %v297 = vpop.f32.mrb[0].mxu0
      %v298 = vadd.f32 0.0, %v297
      %v299 = vpop.f32.mrb[0].mxu0
      %300 = vmatprep.mubr.f32.mxu0 %v194
      %301 = vmatmul.mubr.f32.gmra.mrb[0].mxu0 %v193
      %v302 = vpop.f32.mrb[0].mxu0
      %v303 = vadd.f32 0.0, %v302
      %v304 = vpop.f32.mrb[0].mxu0
      %305 = vmatprep.mubr.f32.mxu0 %v196
      %306 = vmatmul.mubr.f32.gmra.mrb[0].mxu0 %v195
      %v307 = vpop.f32.mrb[0].mxu0
      %v308 = vadd.f32 0.0, %v307
      %v309 = vpop.f32.mrb[0].mxu0
      %310 = vmatprep.mubr.f32.mxu0 %v198
      %311 = vmatmul.mubr.f32.gmra.mrb[0].mxu0 %v197
      %v312 = vpop.f32.mrb[0].mxu0
      %v313 = vadd.f32 0.0, %v312
      %v314 = vpop.f32.mrb[0].mxu0
      %315 = vdwg.mxu0
      %s316 = smul.u32 %s18, 32
      %s317 = smul.u32 %s17, 32
      %s318 = sadd.s32 %s316, %s317
      %s319 = scalar_lea.vmem %s2, %s318
      %320 = vst [vmem:[%s319] sm:$0xff] %v298
      %321 = vst [vmem:[%s319 + $0x8] sm:$0xff] %v303
      %322 = vst [vmem:[%s319 + $0x10] sm:$0xff] %v308
      %323 = vst [vmem:[%s319 + $0x18] sm:$0xff] %v313
      %v324 = vld [vmem:[#allocation2] sm:$0xff]
      %v325 = vadd.f32 %v298, %v303
      %v326 = vadd.f32 %v325, %v308
      %v327 = vadd.f32 %v326, %v313
      %v328 = vadd.f32 %v324, %v327
      %329 = vst [vmem:[#allocation2] sm:$0xff] %v328
      %v330 = vld [vmem:[#allocation3] sm:$0xff]
      %v331 = vmul.f32 %v298, %v298
      %v332 = vmul.f32 %v303, %v303
      %v333 = vmul.f32 %v308, %v308
      %v334 = vmul.f32 %v313, %v313
      %v335 = vadd.f32 %v331, %v332
      %v336 = vadd.f32 %v335, %v333
      %v337 = vadd.f32 %v336, %v334
      %v338 = vadd.f32 %v330, %v337
      %339 = vst [vmem:[#allocation3] sm:$0xff] %v338
      // Predicated region
      $region33: #{generator_forward.6} parent=27 // pred_check
        _
      $region34: #{generator_forward.6} parent=27 // pred_check_branch
        %341 = sbr.rel (%p182) target = $region36
      $region35: #{generator_forward.6} parent=27 // pred_region
        %v342 = vld [vmem:[#allocation2] sm:$0xff]
        %v343 = vrot.slane %v342, 4
        %v344 = vadd.f32 %v342, %v343
        %v345 = vrot.slane %v344, 2
        %v346 = vadd.f32 %v344, %v345
        %v347 = vrot.slane %v346, 1
        %v348 = vadd.f32 %v346, %v347
        %v349 = vld [vmem:[#allocation3] sm:$0xff]
        %v350 = vrot.slane %v349, 4
        %v351 = vadd.f32 %v349, %v350
        %v352 = vrot.slane %v351, 2
        %v353 = vadd.f32 %v351, %v352
        %v354 = vrot.slane %v353, 1
        %v355 = vadd.f32 %v353, %v354
        %v356 = vmul.f32 %v348, 0.0078125
        %v357 = vmul.f32 %v355, 0.0078125
        %v358 = vmul.f32 %v356, %v356
        %v359 = vsub.f32 %v357, %v358
        %v360 = vmax.f32 %v359, 0.0
        %v361 = vadd.f32 %v360, 1e-05
        %v362 = vrsqrt.pop %v361
        %v363 = vsub.f32 0.0, %v356
        %v364 = vmul.f32 %v363, %v362
        %v365 = vld [vmem:[%s2] sm:$0xff]
        %v366 = vld [vmem:[%s2 + $0x8] sm:$0xff]
        %v367 = vld [vmem:[%s2 + $0x10] sm:$0xff]
        %v368 = vld [vmem:[%s2 + $0x18] sm:$0xff]
        %v369 = vld [vmem:[%s2 + $0x20] sm:$0xff]
        %v370 = vld [vmem:[%s2 + $0x28] sm:$0xff]
        %v371 = vld [vmem:[%s2 + $0x30] sm:$0xff]
        %v372 = vld [vmem:[%s2 + $0x38] sm:$0xff]
        %v373 = vld [vmem:[%s2 + $0x40] sm:$0xff]
        %v374 = vld [vmem:[%s2 + $0x48] sm:$0xff]
        %v375 = vld [vmem:[%s2 + $0x50] sm:$0xff]
        %v376 = vld [vmem:[%s2 + $0x58] sm:$0xff]
        %v377 = vld [vmem:[%s2 + $0x60] sm:$0xff]
        %v378 = vld [vmem:[%s2 + $0x68] sm:$0xff]
        %v379 = vld [vmem:[%s2 + $0x70] sm:$0xff]
        %v380 = vld [vmem:[%s2 + $0x78] sm:$0xff]
        %v381 = vmul.f32 %v365, %v362
        %v382 = vmul.f32 %v366, %v362
        %v383 = vmul.f32 %v367, %v362
        %v384 = vmul.f32 %v368, %v362
        %v385 = vmul.f32 %v369, %v362
        %v386 = vmul.f32 %v370, %v362
        %v387 = vmul.f32 %v371, %v362
        %v388 = vmul.f32 %v372, %v362
        %v389 = vmul.f32 %v373, %v362
        %v390 = vmul.f32 %v374, %v362
        %v391 = vmul.f32 %v375, %v362
        %v392 = vmul.f32 %v376, %v362
        %v393 = vmul.f32 %v377, %v362
        %v394 = vmul.f32 %v378, %v362
        %v395 = vmul.f32 %v379, %v362
        %v396 = vmul.f32 %v380, %v362
        %v397 = vadd.f32 %v381, %v364
        %v398 = vadd.f32 %v382, %v364
        %v399 = vadd.f32 %v383, %v364
        %v400 = vadd.f32 %v384, %v364
        %v401 = vadd.f32 %v385, %v364
        %v402 = vadd.f32 %v386, %v364
        %v403 = vadd.f32 %v387, %v364
        %v404 = vadd.f32 %v388, %v364
        %v405 = vadd.f32 %v389, %v364
        %v406 = vadd.f32 %v390, %v364
        %v407 = vadd.f32 %v391, %v364
        %v408 = vadd.f32 %v392, %v364
        %v409 = vadd.f32 %v393, %v364
        %v410 = vadd.f32 %v394, %v364
        %v411 = vadd.f32 %v395, %v364
        %v412 = vadd.f32 %v396, %v364
        %v413 = vmax.f32 %v397, 0.0
        %v414 = vmax.f32 %v398, 0.0
        %v415 = vmax.f32 %v399, 0.0
        %v416 = vmax.f32 %v400, 0.0
        %v417 = vmax.f32 %v401, 0.0
        %v418 = vmax.f32 %v402, 0.0
        %v419 = vmax.f32 %v403, 0.0
        %v420 = vmax.f32 %v404, 0.0
        %v421 = vmax.f32 %v405, 0.0
        %v422 = vmax.f32 %v406, 0.0
        %v423 = vmax.f32 %v407, 0.0
        %v424 = vmax.f32 %v408, 0.0
        %v425 = vmax.f32 %v409, 0.0
        %v426 = vmax.f32 %v410, 0.0
        %v427 = vmax.f32 %v411, 0.0
        %v428 = vmax.f32 %v412, 0.0
        %429 = vst [vmem:[%s2] sm:$0xff] %v413
        %430 = vst [vmem:[%s2 + $0x8] sm:$0xff] %v414
        %431 = vst [vmem:[%s2 + $0x10] sm:$0xff] %v415
        %432 = vst [vmem:[%s2 + $0x18] sm:$0xff] %v416
        %433 = vst [vmem:[%s2 + $0x20] sm:$0xff] %v417
        %434 = vst [vmem:[%s2 + $0x28] sm:$0xff] %v418
        %435 = vst [vmem:[%s2 + $0x30] sm:$0xff] %v419
        %436 = vst [vmem:[%s2 + $0x38] sm:$0xff] %v420
        %437 = vst [vmem:[%s2 + $0x40] sm:$0xff] %v421
        %438 = vst [vmem:[%s2 + $0x48] sm:$0xff] %v422
        %439 = vst [vmem:[%s2 + $0x50] sm:$0xff] %v423
        %440 = vst [vmem:[%s2 + $0x58] sm:$0xff] %v424
        %441 = vst [vmem:[%s2 + $0x60] sm:$0xff] %v425
        %442 = vst [vmem:[%s2 + $0x68] sm:$0xff] %v426
        %443 = vst [vmem:[%s2 + $0x70] sm:$0xff] %v427
        %444 = vst [vmem:[%s2 + $0x78] sm:$0xff] %v428
      $region36: #{generator_forward.6} parent=27 // pred_fallthru
        _
      // Predicated region
      $region37: #{generator_forward.6} parent=27 // pred_check
        %p445 = pneg %p92
      $region38: #{generator_forward.6} parent=27 // pred_check_branch
        %447 = sbr.rel (%p445) target = $region40
      $region39: #{generator_forward.6} parent=27 // pred_region
        _
      $region40: #{generator_forward.6} parent=27 // pred_fallthru
        _
      // Predicated region
      $region41: #{generator_forward.6} parent=27 // pred_check
        %p448 = pneg %p92
      $region42: #{generator_forward.6} parent=27 // pred_check_branch
        %450 = sbr.rel (%p448) target = $region44
      $region43: #{generator_forward.6} parent=27 // pred_region
        _
      $region44: #{generator_forward.6} parent=27 // pred_fallthru
        _
    $region28: #{generator_forward.6} parent=5 // pred_fallthru
      _
    %p451 = scmp.le.s32.totalorder 2, %s8
    // Predicated region
    $region45: #{generator_forward.6} parent=5 // pred_check
      %p452 = pneg %p451
    $region46: #{generator_forward.6} parent=5 // pred_check_branch
      %454 = sbr.rel (%p452) target = $region48
    $region47: #{generator_forward.6} parent=5 // pred_region
      %s455 = ssub.s32 %s8, 2
    $region48: #{generator_forward.6} parent=5 // pred_fallthru
      _
  $region6: #{generator_forward.6} parent=0 // loop_footer
    %s12 = sadd.s32 1, %s8
  $region7: #{generator_forward.6} parent=0 // loop_footer_branch
    %7 = sbr.rel target = $region3
  $region8: #{generator_forward.6} parent=0 // loop_exit
    _

// kernel: generator_forward.7
$region0: #{generator_forward.7}
  #allocation0 [shape = 'u32[]', space=smem, size = 0x4, offset = 0x4, fixed_abs, tag = 'smem constant byte address 0x4 - core index']
  #allocation1 [shape = 'u32[144,128]{1,0:T(1,128)}', space=vmem, size = 0x12000, scoped, tag = 'internal scratch']
  #allocation2 [shape = 'f32[8,128]{1,0:T(8,128)}', space=vmem, size = 0x1000, scoped, tag = 'scratch operand']
  #allocation3 [shape = 'f32[8,128]{1,0:T(8,128)}', space=vmem, size = 0x1000, scoped, tag = 'scratch operand']
  %s0 = inlined_call_operand.vmem [shape: f32[4,128,128], index: 0, kind: input, shape index: {}]
  %s1 = inlined_call_operand.vmem [shape: f32[4,128,128], index: 1, kind: input, shape index: {}]
  %s2 = inlined_call_operand.vmem [shape: f32[4,128,128], index: 2, kind: output, shape index: {}]
  %s3 = sld [smem:[#allocation0]]
  $region49: #{generator_forward.7} parent=0
    _
  %s5 = ssub.s32 1, %s3
  %s6 = scalar_select 0, %s5, %s3
  loop: start=0, step=1, limit=6
  $region2: #{generator_forward.7} parent=0 // loop_pre_header
    _
  $region3: #{generator_forward.7} parent=0 // loop_header
    %s8 = sphi 0, %s12
    %p9 = scmp.ge.s32.totalorder %s8, 6
    %s15 = sphi 0, %s27
    %s16 = sphi 0, %s23
    %s17 = sphi 0, %s15
    %s18 = sphi 0, %s16
    %s19 = sphi 0, %s17
    %s20 = sphi 0, %s18
    %s32 = sphi 0, %s34
    %s35 = sphi 0, %s32
    %s36 = sphi 0, %s35
    %s52 = sphi 0, %s36
    %s58 = sphi 0, %s60
    %s61 = sphi 0, %s58
    %s62 = sphi 0, %s61
    %s78 = sphi 0, %s62
    %s82 = sphi 0, %s82
    %s84 = sphi 0, %s82
    %s85 = sphi 0, %s84
    %s99 = sphi 0, %s85
  $region4: #{generator_forward.7} parent=0 // loop_header_branch
    %11 = sbr.rel (%p9) target = $region8
  $region5: #{generator_forward.7} parent=0 // loop_body
    %s13 = ssub.s32 %s8, 1
    %s14 = ssub.s32 %s8, 2
    %s21 = sadd.s32 1, %s16
    %p22 = scmp.ge.s32.totalorder %s21, 1
    %s23 = scalar_select %p22, 0, %s21
    %s24 = sadd.s32 1, %s15
    %s25 = scalar_select %p22, %s24, %s15
    %p26 = scmp.ge.s32.totalorder %s25, 4
    %s27 = scalar_select %p26, 0, %s25
    %s28 = ssub.s32 %s15, %s27
    %s29 = ssub.s32 %s16, %s23
    %s30 = sor.u32 %s28, %s29
    %p31 = scmp.eq.s32.totalorder %s30, 0
    %s33 = sadd.s32 %s32, 1
    %s34 = scalar_select %p31, %s32, %s33
    %p37 = pneg %p31
    %p38 = scmp.eq.s32.totalorder %s8, 3
    %p39 = por %p37, %p38
    %p40 = scmp.ne.s32.totalorder %s32, %s35
    %p41 = scmp.eq.s32.totalorder %s8, 0
    %p42 = por %p40, %p41
    %p43 = scmp.ne.s32.totalorder %s32, %s35
    %p44 = scmp.eq.s32.totalorder %s13, 3
    %p45 = por %p43, %p44
    %p46 = scmp.ne.s32.totalorder %s35, %s36
    %p47 = scmp.eq.s32.totalorder %s13, 0
    %p48 = por %p46, %p47
    %p49 = scmp.ne.s32.totalorder %s35, %s36
    %p50 = scmp.eq.s32.totalorder %s14, 3
    %p51 = por %p49, %p50
    %p53 = scmp.ne.s32.totalorder %s36, %s52
    %p54 = scmp.eq.s32.totalorder %s14, 0
    %p55 = por %p53, %p54
    %s56 = ssub.s32 %s15, %s27
    %p57 = scmp.eq.s32.totalorder %s56, 0
    %s59 = sadd.s32 %s58, 1
    %s60 = scalar_select %p57, %s58, %s59
    %p63 = pneg %p57
    %p64 = scmp.eq.s32.totalorder %s8, 3
    %p65 = por %p63, %p64
    %p66 = scmp.ne.s32.totalorder %s58, %s61
    %p67 = scmp.eq.s32.totalorder %s8, 0
    %p68 = por %p66, %p67
    %p69 = scmp.ne.s32.totalorder %s58, %s61
    %p70 = scmp.eq.s32.totalorder %s13, 3
    %p71 = por %p69, %p70
    %p72 = scmp.ne.s32.totalorder %s61, %s62
    %p73 = scmp.eq.s32.totalorder %s13, 0
    %p74 = por %p72, %p73
    %p75 = scmp.ne.s32.totalorder %s61, %s62
    %p76 = scmp.eq.s32.totalorder %s14, 3
    %p77 = por %p75, %p76
    %p79 = scmp.ne.s32.totalorder %s62, %s78
    %p80 = scmp.eq.s32.totalorder %s14, 0
    %p81 = por %p79, %p80
    %s83 = sadd.s32 %s82, 1
    %p86 = scmp.eq.s32.totalorder %s8, 3
    %p87 = scmp.ne.s32.totalorder %s82, %s84
    %p88 = scmp.eq.s32.totalorder %s8, 0
    %p89 = por %p87, %p88
    %p90 = scmp.ne.s32.totalorder %s82, %s84
    %p91 = scmp.eq.s32.totalorder %s13, 3
    %p92 = por %p90, %p91
    %p93 = scmp.ne.s32.totalorder %s84, %s85
    %p94 = scmp.eq.s32.totalorder %s13, 0
    %p95 = por %p93, %p94
    %p96 = scmp.ne.s32.totalorder %s84, %s85
    %p97 = scmp.eq.s32.totalorder %s14, 3
    %p98 = por %p96, %p97
    %p100 = scmp.ne.s32.totalorder %s85, %s99
    %p101 = scmp.eq.s32.totalorder %s14, 0
    %p102 = por %p100, %p101
    %p103 = scmp.le.s32.totalorder 1, %s8
    %p104 = scmp.lt.s32.totalorder %s8, 5
    %p105 = pnand %p103, %p104
    %p106 = pneg %p105
    // Predicated region
    $region9: #{generator_forward.7} parent=5 // pred_check
      _
    $region10: #{generator_forward.7} parent=5 // pred_check_branch
      %108 = sbr.rel (%p105) target = $region12
    $region11: #{generator_forward.7} parent=5 // pred_region
      %s109 = ssub.s32 %s8, 1
    $region12: #{generator_forward.7} parent=5 // pred_fallthru
      _
    %p110 = scmp.lt.s32.totalorder %s8, 4
    // Predicated region
    $region13: #{generator_forward.7} parent=5 // pred_check
      %p111 = pneg %p110
    $region14: #{generator_forward.7} parent=5 // pred_check_branch
      %113 = sbr.rel (%p111) target = $region16
    $region15: #{generator_forward.7} parent=5 // pred_region
      // Predicated region
      $region17: #{generator_forward.7} parent=15 // pred_check
        %p114 = pneg %p42
      $region18: #{generator_forward.7} parent=15 // pred_check_branch
        %116 = sbr.rel (%p114) target = $region20
      $region19: #{generator_forward.7} parent=15 // pred_region
        %s117 = smul.u32 16, %s16
        %p118 = scmp.lt.s32.totalorder %s15, 3
        %s119 = scalar_select %p118, %s15, 3
        %p120 = scmp.lt.s32.totalorder %s117, 15
        %s121 = scalar_select %p120, %s117, 15
        %s122 = smul.addr %s119, 16
        %s123 = sadd.s32 %s121, %s122
        %s124 = smul.addr %s123, 8
        %s125 = scalar_lea.vmem %s0, %s124
        %s126 = smul.u32 16, %s16
      $region20: #{generator_forward.7} parent=15 // pred_fallthru
        _
      // Predicated region
      $region21: #{generator_forward.7} parent=15 // pred_check
        %p127 = pneg %p68
      $region22: #{generator_forward.7} parent=15 // pred_check_branch
        %129 = sbr.rel (%p127) target = $region24
      $region23: #{generator_forward.7} parent=15 // pred_region
        %p130 = scmp.lt.s32.totalorder %s15, 3
        %s131 = scalar_select %p130, %s15, 3
        %s132 = smul.addr %s131, 16
        %s133 = smul.addr %s132, 8
        %s134 = scalar_lea.vmem %s1, %s133
      $region24: #{generator_forward.7} parent=15 // pred_fallthru
        _
    $region16: #{generator_forward.7} parent=5 // pred_fallthru
      _
    %p135 = scmp.le.s32.totalorder 1, %s8
    %p136 = scmp.lt.s32.totalorder %s8, 5
    %p137 = pnand %p135, %p136
    %p138 = pneg %p137
    // Predicated region
    $region25: #{generator_forward.7} parent=5 // pred_check
      _
    $region26: #{generator_forward.7} parent=5 // pred_check_branch
      %140 = sbr.rel (%p137) target = $region28
    $region27: #{generator_forward.7} parent=5 // pred_region
      %s141 = ssub.s32 %s8, 1
      %s142 = smul.u32 16, %s18
      %p143 = scmp.lt.s32.totalorder %s17, 3
      %s144 = scalar_select %p143, %s17, 3
      %p145 = scmp.lt.s32.totalorder %s142, 15
      %s146 = scalar_select %p145, %s142, 15
      %s147 = smul.addr %s144, 16
      %s148 = sadd.s32 %s146, %s147
      %s149 = smul.addr %s148, 8
      %s150 = scalar_lea.vmem %s0, %s149
      %p151 = pneg %p48
      %p152 = pneg %p45
      %p153 = scmp.lt.s32.totalorder %s17, 3
      %s154 = scalar_select %p153, %s17, 3
      %s155 = smul.addr %s154, 16
      %s156 = smul.addr %s155, 8
      %s157 = scalar_lea.vmem %s1, %s156
      %p158 = pneg %p74
      %p159 = pneg %p71
      %p160 = pneg %p95
      %p161 = pneg %p92
      %s162 = smul.u32 16, %s18
      %p163 = scmp.lt.s32.totalorder %s17, 3
      %s164 = scalar_select %p163, %s17, 3
      %p165 = scmp.lt.s32.totalorder %s162, 15
      %s166 = scalar_select %p165, %s162, 15
      %s167 = smul.addr %s164, 16
      %s168 = sadd.s32 %s166, %s167
      %s169 = smul.addr %s168, 8
      %s170 = scalar_lea.vmem %s0, %s169
      %s171 = smul.u32 16, %s18
      %p172 = scmp.lt.s32.totalorder %s17, 3
      %s173 = scalar_select %p172, %s17, 3
      %s174 = smul.addr %s173, 16
      %s175 = smul.addr %s174, 8
      %s176 = scalar_lea.vmem %s1, %s175
      %p177 = scmp.eq.s32.totalorder %s17, 3
      %p178 = scmp.eq.s32.totalorder %s18, 0
      %p179 = pnand %p177, %p178
      %p180 = pneg %p179
      %p181 = scmp.eq.s32.totalorder %s17, 0
      %p182 = pnand %p181, %p178
      %p183 = pneg %p182
      // Predicated region
      $region29: #{generator_forward.7} parent=27 // pred_check
        _
      $region30: #{generator_forward.7} parent=27 // pred_check_branch
        %185 = sbr.rel (%p182) target = $region32
      $region31: #{generator_forward.7} parent=27 // pred_region
        %186 = vst [vmem:[#allocation2] sm:$0xff] 0.0
        %187 = vst [vmem:[#allocation3] sm:$0xff] 0.0
      $region32: #{generator_forward.7} parent=27 // pred_fallthru
        _
      %v188 = vld [vmem:[%s170] sm:$0xff]
      %v189 = vld [vmem:[%s170 + $0x8] sm:$0xff]
      %v190 = vld [vmem:[%s170 + $0x10] sm:$0xff]
      %v191 = vld [vmem:[%s170 + $0x18] sm:$0xff]
      %v192 = vld [vmem:[%s170 + $0x20] sm:$0xff]
      %v193 = vld [vmem:[%s170 + $0x28] sm:$0xff]
      %v194 = vld [vmem:[%s170 + $0x30] sm:$0xff]
      %v195 = vld [vmem:[%s170 + $0x38] sm:$0xff]
      %v196 = vld [vmem:[%s170 + $0x40] sm:$0xff]
      %v197 = vld [vmem:[%s170 + $0x48] sm:$0xff]
      %v198 = vld [vmem:[%s170 + $0x50] sm:$0xff]
      %v199 = vld [vmem:[%s170 + $0x58] sm:$0xff]
      %v200 = vld [vmem:[%s170 + $0x60] sm:$0xff]
      %v201 = vld [vmem:[%s170 + $0x68] sm:$0xff]
      %v202 = vld [vmem:[%s170 + $0x70] sm:$0xff]
      %v203 = vld [vmem:[%s170 + $0x78] sm:$0xff]
      %v204 = vld [vmem:[%s176] sm:$0xff]
      %v205 = vld [vmem:[%s176 + $0x8] sm:$0xff]
      %v206 = vld [vmem:[%s176 + $0x10] sm:$0xff]
      %v207 = vld [vmem:[%s176 + $0x18] sm:$0xff]
      %v208 = vld [vmem:[%s176 + $0x20] sm:$0xff]
      %v209 = vld [vmem:[%s176 + $0x28] sm:$0xff]
      %v210 = vld [vmem:[%s176 + $0x30] sm:$0xff]
      %v211 = vld [vmem:[%s176 + $0x38] sm:$0xff]
      %v212 = vld [vmem:[%s176 + $0x40] sm:$0xff]
      %v213 = vld [vmem:[%s176 + $0x48] sm:$0xff]
      %v214 = vld [vmem:[%s176 + $0x50] sm:$0xff]
      %v215 = vld [vmem:[%s176 + $0x58] sm:$0xff]
      %v216 = vld [vmem:[%s176 + $0x60] sm:$0xff]
      %v217 = vld [vmem:[%s176 + $0x68] sm:$0xff]
      %v218 = vld [vmem:[%s176 + $0x70] sm:$0xff]
      %v219 = vld [vmem:[%s176 + $0x78] sm:$0xff]
      %220 = vmatprep.subr.mxu0 0.0
      %221 = vmatpush1.msra.mxu0 %v204
      %222 = vmatprep.subr.mxu0 0.0
      %223 = vmatpush1.msra.mxu0 %v205
      %224 = vmatprep.subr.mxu0 0.0
      %225 = vmatpush1.msra.mxu0 %v206
      %226 = vmatprep.subr.mxu0 0.0
      %227 = vmatpush1.msra.mxu0 %v207
      %228 = vmatprep.subr.mxu0 0.0
      %229 = vmatpush1.msra.mxu0 %v208
      %230 = vmatprep.subr.mxu0 0.0
      %231 = vmatpush1.msra.mxu0 %v209
      %232 = vmatprep.subr.mxu0 0.0
      %233 = vmatpush1.msra.mxu0 %v210
      %234 = vmatprep.subr.mxu0 0.0
      %235 = vmatpush1.msra.mxu0 %v211
      %236 = vmatprep.subr.mxu0 0.0
      %237 = vmatpush1.msra.mxu0 %v212
      %238 = vmatprep.subr.mxu0 0.0
      %239 = vmatpush1.msra.mxu0 %v213
      %240 = vmatprep.subr.mxu0 0.0
      %241 = vmatpush1.msra.mxu0 %v214
      %242 = vmatprep.subr.mxu0 0.0
      %243 = vmatpush1.msra.mxu0 %v215
      %244 = vmatprep.subr.mxu0 0.0
      %245 = vmatpush1.msra.mxu0 %v216
      %246 = vmatprep.subr.mxu0 0.0
      %247 = vmatpush1.msra.mxu0 %v217
      %248 = vmatprep.subr.mxu0 0.0
      %249 = vmatpush1.msra.mxu0 %v218
      %250 = vmatprep.subr.mxu0 0.0
      %251 = vmatpush1.msra.mxu0 %v219
      %252 = vmatprep.subr.mxu0 0.0
      %253 = vmatpush1.msra.mxu0 0.0
      %254 = vmatprep.subr.mxu0 0.0
      %255 = vmatpush1.msra.mxu0 0.0
      %256 = vmatprep.subr.mxu0 0.0
      %257 = vmatpush1.msra.mxu0 0.0
      %258 = vmatprep.subr.mxu0 0.0
      %259 = vmatpush1.msra.mxu0 0.0
      %260 = vmatprep.subr.mxu0 0.0
      %261 = vmatpush1.msra.mxu0 0.0
      %262 = vmatprep.subr.mxu0 0.0
      %263 = vmatpush1.msra.mxu0 0.0
      %264 = vmatprep.subr.mxu0 0.0
      %265 = vmatpush1.msra.mxu0 0.0
      %266 = vmatprep.subr.mxu0 0.0
      %267 = vmatpush1.msra.mxu0 0.0
      %268 = vmatprep.subr.mxu0 0.0
      %269 = vmatpush1.msra.mxu0 0.0
      %270 = vmatprep.subr.mxu0 0.0
      %271 = vmatpush1.msra.mxu0 0.0
      %272 = vmatprep.subr.mxu0 0.0
      %273 = vmatpush1.msra.mxu0 0.0
      %274 = vmatprep.subr.mxu0 0.0
      %275 = vmatpush1.msra.mxu0 0.0
      %276 = vmatprep.subr.mxu0 0.0
      %277 = vmatpush1.msra.mxu0 0.0
      %278 = vmatprep.subr.mxu0 0.0
      %279 = vmatpush1.msra.mxu0 0.0
      %280 = vmatprep.subr.mxu0 0.0
      %281 = vmatpush1.msra.mxu0 0.0
      %282 = vmatprep.subr.mxu0 0.0
      %283 = vmatpush1.msra.mxu0 0.0
      %284 = vmatprep.mubr.f32.mxu0 0.0
      %285 = vmatmul.mubr.f32.gmra.mrb[0].mxu0 %v188
      %v286 = vpop.f32.mrb[0].mxu0
      %v287 = vadd.f32 0.0, %v286
      %v288 = vpop.f32.mrb[0].mxu0
      %289 = vmatprep.mubr.f32.mxu0 0.0
      %290 = vmatmul.mubr.f32.gmra.mrb[0].mxu0 %v189
      %v291 = vpop.f32.mrb[0].mxu0
      %v292 = vadd.f32 0.0, %v291
      %v293 = vpop.f32.mrb[0].mxu0
      %294 = vmatprep.mubr.f32.mxu0 0.0
      %295 = vmatmul.mubr.f32.gmra.mrb[0].mxu0 %v190
      %v296 = vpop.f32.mrb[0].mxu0
      %v297 = vadd.f32 0.0, %v296
      %v298 = vpop.f32.mrb[0].mxu0
      %299 = vmatprep.mubr.f32.mxu0 0.0
      %300 = vmatmul.mubr.f32.gmra.mrb[0].mxu0 %v191
      %v301 = vpop.f32.mrb[0].mxu0
      %v302 = vadd.f32 0.0, %v301
      %v303 = vpop.f32.mrb[0].mxu0
      %304 = vmatprep.mubr.f32.mxu0 0.0
      %305 = vmatmul.mubr.f32.gmra.mrb[0].mxu0 %v192
      %v306 = vpop.f32.mrb[0].mxu0
      %v307 = vadd.f32 0.0, %v306
      %v308 = vpop.f32.mrb[0].mxu0
      %309 = vmatprep.mubr.f32.mxu0 0.0
      %310 = vmatmul.mubr.f32.gmra.mrb[0].mxu0 %v193
      %v311 = vpop.f32.mrb[0].mxu0
      %v312 = vadd.f32 0.0, %v311
      %v313 = vpop.f32.mrb[0].mxu0
      %314 = vmatprep.mubr.f32.mxu0 0.0
      %315 = vmatmul.mubr.f32.gmra.mrb[0].mxu0 %v194
      %v316 = vpop.f32.mrb[0].mxu0
      %v317 = vadd.f32 0.0, %v316
      %v318 = vpop.f32.mrb[0].mxu0
      %319 = vmatprep.mubr.f32.mxu0 0.0
      %320 = vmatmul.mubr.f32.gmra.mrb[0].mxu0 %v195
      %v321 = vpop.f32.mrb[0].mxu0
      %v322 = vadd.f32 0.0, %v321
      %v323 = vpop.f32.mrb[0].mxu0
      %324 = vmatprep.mubr.f32.mxu0 0.0
      %325 = vmatmul.mubr.f32.gmra.mrb[0].mxu0 %v196
      %v326 = vpop.f32.mrb[0].mxu0
      %v327 = vadd.f32 0.0, %v326
      %v328 = vpop.f32.mrb[0].mxu0
      %329 = vmatprep.mubr.f32.mxu0 0.0
      %330 = vmatmul.mubr.f32.gmra.mrb[0].mxu0 %v197
      %v331 = vpop.f32.mrb[0].mxu0
      %v332 = vadd.f32 0.0, %v331
      %v333 = vpop.f32.mrb[0].mxu0
      %334 = vmatprep.mubr.f32.mxu0 0.0
      %335 = vmatmul.mubr.f32.gmra.mrb[0].mxu0 %v198
      %v336 = vpop.f32.mrb[0].mxu0
      %v337 = vadd.f32 0.0, %v336
      %v338 = vpop.f32.mrb[0].mxu0
      %339 = vmatprep.mubr.f32.mxu0 0.0
      %340 = vmatmul.mubr.f32.gmra.mrb[0].mxu0 %v199
      %v341 = vpop.f32.mrb[0].mxu0
      %v342 = vadd.f32 0.0, %v341
      %v343 = vpop.f32.mrb[0].mxu0
      %344 = vmatprep.mubr.f32.mxu0 0.0
      %345 = vmatmul.mubr.f32.gmra.mrb[0].mxu0 %v200
      %v346 = vpop.f32.mrb[0].mxu0
      %v347 = vadd.f32 0.0, %v346
      %v348 = vpop.f32.mrb[0].mxu0
      %349 = vmatprep.mubr.f32.mxu0 0.0
      %350 = vmatmul.mubr.f32.gmra.mrb[0].mxu0 %v201
      %v351 = vpop.f32.mrb[0].mxu0
      %v352 = vadd.f32 0.0, %v351
      %v353 = vpop.f32.mrb[0].mxu0
      %354 = vmatprep.mubr.f32.mxu0 0.0
      %355 = vmatmul.mubr.f32.gmra.mrb[0].mxu0 %v202
      %v356 = vpop.f32.mrb[0].mxu0
      %v357 = vadd.f32 0.0, %v356
      %v358 = vpop.f32.mrb[0].mxu0
      %359 = vmatprep.mubr.f32.mxu0 0.0
      %360 = vmatmul.mubr.f32.gmra.mrb[0].mxu0 %v203
      %v361 = vpop.f32.mrb[0].mxu0
      %v362 = vadd.f32 0.0, %v361
      %v363 = vpop.f32.mrb[0].mxu0
      %364 = vdwg.mxu0
      %s365 = smul.u32 %s18, 128
      %s366 = smul.u32 %s17, 128
      %s367 = sadd.s32 %s365, %s366
      %s368 = scalar_lea.vmem %s2, %s367
      %369 = vst [vmem:[%s368] sm:$0xff] %v287
      %370 = vst [vmem:[%s368 + $0x8] sm:$0xff] %v292
      %371 = vst [vmem:[%s368 + $0x10] sm:$0xff] %v297
      %372 = vst [vmem:[%s368 + $0x18] sm:$0xff] %v302
      %373 = vst [vmem:[%s368 + $0x20] sm:$0xff] %v307
      %374 = vst [vmem:[%s368 + $0x28] sm:$0xff] %v312
      %375 = vst [vmem:[%s368 + $0x30] sm:$0xff] %v317
      %376 = vst [vmem:[%s368 + $0x38] sm:$0xff] %v322
      %377 = vst [vmem:[%s368 + $0x40] sm:$0xff] %v327
      %378 = vst [vmem:[%s368 + $0x48] sm:$0xff] %v332
      %379 = vst [vmem:[%s368 + $0x50] sm:$0xff] %v337
      %380 = vst [vmem:[%s368 + $0x58] sm:$0xff] %v342
      %381 = vst [vmem:[%s368 + $0x60] sm:$0xff] %v347
      %382 = vst [vmem:[%s368 + $0x68] sm:$0xff] %v352
      %383 = vst [vmem:[%s368 + $0x70] sm:$0xff] %v357
      %384 = vst [vmem:[%s368 + $0x78] sm:$0xff] %v362
      %v385 = vld [vmem:[#allocation2] sm:$0xff]
      %v386 = vadd.f32 %v287, %v292
      %v387 = vadd.f32 %v386, %v297
      %v388 = vadd.f32 %v387, %v302
      %v389 = vadd.f32 %v388, %v307
      %v390 = vadd.f32 %v389, %v312
      %v391 = vadd.f32 %v390, %v317
      %v392 = vadd.f32 %v391, %v322
      %v393 = vadd.f32 %v392, %v327
      %v394 = vadd.f32 %v393, %v332
      %v395 = vadd.f32 %v394, %v337
      %v396 = vadd.f32 %v395, %v342
      %v397 = vadd.f32 %v396, %v347
      %v398 = vadd.f32 %v397, %v352
      %v399 = vadd.f32 %v398, %v357
      %v400 = vadd.f32 %v399, %v362
      %v401 = vadd.f32 %v385, %v400
      %402 = vst [vmem:[#allocation2] sm:$0xff] %v401
      %v403 = vld [vmem:[#allocation3] sm:$0xff]
      %v404 = vmul.f32 %v287, %v287
      %v405 = vmul.f32 %v292, %v292
      %v406 = vmul.f32 %v297, %v297
      %v407 = vmul.f32 %v302, %v302
      %v408 = vmul.f32 %v307, %v307
      %v409 = vmul.f32 %v312, %v312
      %v410 = vmul.f32 %v317, %v317
      %v411 = vmul.f32 %v322, %v322
      %v412 = vmul.f32 %v327, %v327
      %v413 = vmul.f32 %v332, %v332
      %v414 = vmul.f32 %v337, %v337
      %v415 = vmul.f32 %v342, %v342
      %v416 = vmul.f32 %v347, %v347
      %v417 = vmul.f32 %v352, %v352
      %v418 = vmul.f32 %v357, %v357
      %v419 = vmul.f32 %v362, %v362
      %v420 = vadd.f32 %v404, %v405
      %v421 = vadd.f32 %v420, %v406
      %v422 = vadd.f32 %v421, %v407
      %v423 = vadd.f32 %v422, %v408
      %v424 = vadd.f32 %v423, %v409
      %v425 = vadd.f32 %v424, %v410
      %v426 = vadd.f32 %v425, %v411
      %v427 = vadd.f32 %v426, %v412
      %v428 = vadd.f32 %v427, %v413
      %v429 = vadd.f32 %v428, %v414
      %v430 = vadd.f32 %v429, %v415
      %v431 = vadd.f32 %v430, %v416
      %v432 = vadd.f32 %v431, %v417
      %v433 = vadd.f32 %v432, %v418
      %v434 = vadd.f32 %v433, %v419
      %v435 = vadd.f32 %v403, %v434
      %436 = vst [vmem:[#allocation3] sm:$0xff] %v435
      // Predicated region
      $region33: #{generator_forward.7} parent=27 // pred_check
        _
      $region34: #{generator_forward.7} parent=27 // pred_check_branch
        %438 = sbr.rel (%p179) target = $region36
      $region35: #{generator_forward.7} parent=27 // pred_region
        %v439 = vld [vmem:[#allocation2] sm:$0xff]
        %v440 = vrot.slane %v439, 4
        %v441 = vadd.f32 %v439, %v440
        %v442 = vrot.slane %v441, 2
        %v443 = vadd.f32 %v441, %v442
        %v444 = vrot.slane %v443, 1
        %v445 = vadd.f32 %v443, %v444
        %v446 = vld [vmem:[#allocation3] sm:$0xff]
        %v447 = vrot.slane %v446, 4
        %v448 = vadd.f32 %v446, %v447
        %v449 = vrot.slane %v448, 2
        %v450 = vadd.f32 %v448, %v449
        %v451 = vrot.slane %v450, 1
        %v452 = vadd.f32 %v450, %v451
        %v453 = vmul.f32 %v445, 0.001953125
        %v454 = vmul.f32 %v452, 0.001953125
        %v455 = vmul.f32 %v453, %v453
        %v456 = vsub.f32 %v454, %v455
        %v457 = vmax.f32 %v456, 0.0
        %v458 = vadd.f32 %v457, 1e-05
        %v459 = vrsqrt.pop %v458
        %v460 = vsub.f32 0.0, %v453
        %v461 = vmul.f32 %v460, %v459
        %v462 = vld [vmem:[%s2] sm:$0xff]
        %v463 = vld [vmem:[%s2 + $0x8] sm:$0xff]
        %v464 = vld [vmem:[%s2 + $0x10] sm:$0xff]
        %v465 = vld [vmem:[%s2 + $0x18] sm:$0xff]
        %v466 = vld [vmem:[%s2 + $0x20] sm:$0xff]
        %v467 = vld [vmem:[%s2 + $0x28] sm:$0xff]
        %v468 = vld [vmem:[%s2 + $0x30] sm:$0xff]
        %v469 = vld [vmem:[%s2 + $0x38] sm:$0xff]
        %v470 = vld [vmem:[%s2 + $0x40] sm:$0xff]
        %v471 = vld [vmem:[%s2 + $0x48] sm:$0xff]
        %v472 = vld [vmem:[%s2 + $0x50] sm:$0xff]
        %v473 = vld [vmem:[%s2 + $0x58] sm:$0xff]
        %v474 = vld [vmem:[%s2 + $0x60] sm:$0xff]
        %v475 = vld [vmem:[%s2 + $0x68] sm:$0xff]
        %v476 = vld [vmem:[%s2 + $0x70] sm:$0xff]
        %v477 = vld [vmem:[%s2 + $0x78] sm:$0xff]
        %v478 = vld [vmem:[%s2 + $0x80] sm:$0xff]
        %v479 = vld [vmem:[%s2 + $0x88] sm:$0xff]
        %v480 = vld [vmem:[%s2 + $0x90] sm:$0xff]
        %v481 = vld [vmem:[%s2 + $0x98] sm:$0xff]
        %v482 = vld [vmem:[%s2 + $0xa0] sm:$0xff]
        %v483 = vld [vmem:[%s2 + $0xa8] sm:$0xff]
        %v484 = vld [vmem:[%s2 + $0xb0] sm:$0xff]
        %v485 = vld [vmem:[%s2 + $0xb8] sm:$0xff]
        %v486 = vld [vmem:[%s2 + $0xc0] sm:$0xff]
        %v487 = vld [vmem:[%s2 + $0xc8] sm:$0xff]
        %v488 = vld [vmem:[%s2 + $0xd0] sm:$0xff]
        %v489 = vld [vmem:[%s2 + $0xd8] sm:$0xff]
        %v490 = vld [vmem:[%s2 + $0xe0] sm:$0xff]
        %v491 = vld [vmem:[%s2 + $0xe8] sm:$0xff]
        %v492 = vld [vmem:[%s2 + $0xf0] sm:$0xff]
        %v493 = vld [vmem:[%s2 + $0xf8] sm:$0xff]
        %v494 = vld [vmem:[%s2 + $0x100] sm:$0xff]
        %v495 = vld [vmem:[%s2 + $0x108] sm:$0xff]
        %v496 = vld [vmem:[%s2 + $0x110] sm:$0xff]
        %v497 = vld [vmem:[%s2 + $0x118] sm:$0xff]
        %v498 = vld [vmem:[%s2 + $0x120] sm:$0xff]
        %v499 = vld [vmem:[%s2 + $0x128] sm:$0xff]
        %v500 = vld [vmem:[%s2 + $0x130] sm:$0xff]
        %v501 = vld [vmem:[%s2 + $0x138] sm:$0xff]
        %v502 = vld [vmem:[%s2 + $0x140] sm:$0xff]
        %v503 = vld [vmem:[%s2 + $0x148] sm:$0xff]
        %v504 = vld [vmem:[%s2 + $0x150] sm:$0xff]
        %v505 = vld [vmem:[%s2 + $0x158] sm:$0xff]
        %v506 = vld [vmem:[%s2 + $0x160] sm:$0xff]
        %v507 = vld [vmem:[%s2 + $0x168] sm:$0xff]
        %v508 = vld [vmem:[%s2 + $0x170] sm:$0xff]
        %v509 = vld [vmem:[%s2 + $0x178] sm:$0xff]
        %v510 = vld [vmem:[%s2 + $0x180] sm:$0xff]
        %v511 = vld [vmem:[%s2 + $0x188] sm:$0xff]
        %v512 = vld [vmem:[%s2 + $0x190] sm:$0xff]
        %v513 = vld [vmem:[%s2 + $0x198] sm:$0xff]
        %v514 = vld [vmem:[%s2 + $0x1a0] sm:$0xff]
        %v515 = vld [vmem:[%s2 + $0x1a8] sm:$0xff]
        %v516 = vld [vmem:[%s2 + $0x1b0] sm:$0xff]
        %v517 = vld [vmem:[%s2 + $0x1b8] sm:$0xff]
        %v518 = vld [vmem:[%s2 + $0x1c0] sm:$0xff]
        %v519 = vld [vmem:[%s2 + $0x1c8] sm:$0xff]
        %v520 = vld [vmem:[%s2 + $0x1d0] sm:$0xff]
        %v521 = vld [vmem:[%s2 + $0x1d8] sm:$0xff]
        %v522 = vld [vmem:[%s2 + $0x1e0] sm:$0xff]
        %v523 = vld [vmem:[%s2 + $0x1e8] sm:$0xff]
        %v524 = vld [vmem:[%s2 + $0x1f0] sm:$0xff]
        %v525 = vld [vmem:[%s2 + $0x1f8] sm:$0xff]
        %v526 = vmul.f32 %v462, %v459
        %v527 = vmul.f32 %v463, %v459
        %v528 = vmul.f32 %v464, %v459
        %v529 = vmul.f32 %v465, %v459
        %v530 = vmul.f32 %v466, %v459
        %v531 = vmul.f32 %v467, %v459
        %v532 = vmul.f32 %v468, %v459
        %v533 = vmul.f32 %v469, %v459
        %v534 = vmul.f32 %v470, %v459
        %v535 = vmul.f32 %v471, %v459
        %v536 = vmul.f32 %v472, %v459
        %v537 = vmul.f32 %v473, %v459
        %v538 = vmul.f32 %v474, %v459
        %v539 = vmul.f32 %v475, %v459
        %v540 = vmul.f32 %v476, %v459
        %v541 = vmul.f32 %v477, %v459
        %v542 = vmul.f32 %v478, %v459
        %v543 = vmul.f32 %v479, %v459
        %v544 = vmul.f32 %v480, %v459
        %v545 = vmul.f32 %v481, %v459
        %v546 = vmul.f32 %v482, %v459
        %v547 = vmul.f32 %v483, %v459
        %v548 = vmul.f32 %v484, %v459
        %v549 = vmul.f32 %v485, %v459
        %v550 = vmul.f32 %v486, %v459
        %v551 = vmul.f32 %v487, %v459
        %v552 = vmul.f32 %v488, %v459
        %v553 = vmul.f32 %v489, %v459
        %v554 = vmul.f32 %v490, %v459
        %v555 = vmul.f32 %v491, %v459
        %v556 = vmul.f32 %v492, %v459
        %v557 = vmul.f32 %v493, %v459
        %v558 = vmul.f32 %v494, %v459
        %v559 = vmul.f32 %v495, %v459
        %v560 = vmul.f32 %v496, %v459
        %v561 = vmul.f32 %v497, %v459
        %v562 = vmul.f32 %v498, %v459
        %v563 = vmul.f32 %v499, %v459
        %v564 = vmul.f32 %v500, %v459
        %v565 = vmul.f32 %v501, %v459
        %v566 = vmul.f32 %v502, %v459
        %v567 = vmul.f32 %v503, %v459
        %v568 = vmul.f32 %v504, %v459
        %v569 = vmul.f32 %v505, %v459
        %v570 = vmul.f32 %v506, %v459
        %v571 = vmul.f32 %v507, %v459
        %v572 = vmul.f32 %v508, %v459
        %v573 = vmul.f32 %v509, %v459
        %v574 = vmul.f32 %v510, %v459
        %v575 = vmul.f32 %v511, %v459
        %v576 = vmul.f32 %v512, %v459
        %v577 = vmul.f32 %v513, %v459
        %v578 = vmul.f32 %v514, %v459
        %v579 = vmul.f32 %v515, %v459
        %v580 = vmul.f32 %v516, %v459
        %v581 = vmul.f32 %v517, %v459
        %v582 = vmul.f32 %v518, %v459
        %v583 = vmul.f32 %v519, %v459
        %v584 = vmul.f32 %v520, %v459
        %v585 = vmul.f32 %v521, %v459
        %v586 = vmul.f32 %v522, %v459
        %v587 = vmul.f32 %v523, %v459
        %v588 = vmul.f32 %v524, %v459
        %v589 = vmul.f32 %v525, %v459
        %v590 = vadd.f32 %v526, %v461
        %v591 = vadd.f32 %v527, %v461
        %v592 = vadd.f32 %v528, %v461
        %v593 = vadd.f32 %v529, %v461
        %v594 = vadd.f32 %v530, %v461
        %v595 = vadd.f32 %v531, %v461
        %v596 = vadd.f32 %v532, %v461
        %v597 = vadd.f32 %v533, %v461
        %v598 = vadd.f32 %v534, %v461
        %v599 = vadd.f32 %v535, %v461
        %v600 = vadd.f32 %v536, %v461
        %v601 = vadd.f32 %v537, %v461
        %v602 = vadd.f32 %v538, %v461
        %v603 = vadd.f32 %v539, %v461
        %v604 = vadd.f32 %v540, %v461
        %v605 = vadd.f32 %v541, %v461
        %v606 = vadd.f32 %v542, %v461
        %v607 = vadd.f32 %v543, %v461
        %v608 = vadd.f32 %v544, %v461
        %v609 = vadd.f32 %v545, %v461
        %v610 = vadd.f32 %v546, %v461
        %v611 = vadd.f32 %v547, %v461
        %v612 = vadd.f32 %v548, %v461
        %v613 = vadd.f32 %v549, %v461
        %v614 = vadd.f32 %v550, %v461
        %v615 = vadd.f32 %v551, %v461
        %v616 = vadd.f32 %v552, %v461
        %v617 = vadd.f32 %v553, %v461
        %v618 = vadd.f32 %v554, %v461
        %v619 = vadd.f32 %v555, %v461
        %v620 = vadd.f32 %v556, %v461
        %v621 = vadd.f32 %v557, %v461
        %v622 = vadd.f32 %v558, %v461
        %v623 = vadd.f32 %v559, %v461
        %v624 = vadd.f32 %v560, %v461
        %v625 = vadd.f32 %v561, %v461
        %v626 = vadd.f32 %v562, %v461
        %v627 = vadd.f32 %v563, %v461
        %v628 = vadd.f32 %v564, %v461
        %v629 = vadd.f32 %v565, %v461
        %v630 = vadd.f32 %v566, %v461
        %v631 = vadd.f32 %v567, %v461
        %v632 = vadd.f32 %v568, %v461
        %v633 = vadd.f32 %v569, %v461
        %v634 = vadd.f32 %v570, %v461
        %v635 = vadd.f32 %v571, %v461
        %v636 = vadd.f32 %v572, %v461
        %v637 = vadd.f32 %v573, %v461
        %v638 = vadd.f32 %v574, %v461
        %v639 = vadd.f32 %v575, %v461
        %v640 = vadd.f32 %v576, %v461
        %v641 = vadd.f32 %v577, %v461
        %v642 = vadd.f32 %v578, %v461
        %v643 = vadd.f32 %v579, %v461
        %v644 = vadd.f32 %v580, %v461
        %v645 = vadd.f32 %v581, %v461
        %v646 = vadd.f32 %v582, %v461
        %v647 = vadd.f32 %v583, %v461
        %v648 = vadd.f32 %v584, %v461
        %v649 = vadd.f32 %v585, %v461
        %v650 = vadd.f32 %v586, %v461
        %v651 = vadd.f32 %v587, %v461
        %v652 = vadd.f32 %v588, %v461
        %v653 = vadd.f32 %v589, %v461
        %v654 = vmax.f32 %v590, 0.0
        %v655 = vmax.f32 %v591, 0.0
        %v656 = vmax.f32 %v592, 0.0
        %v657 = vmax.f32 %v593, 0.0
        %v658 = vmax.f32 %v594, 0.0
        %v659 = vmax.f32 %v595, 0.0
        %v660 = vmax.f32 %v596, 0.0
        %v661 = vmax.f32 %v597, 0.0
        %v662 = vmax.f32 %v598, 0.0
        %v663 = vmax.f32 %v599, 0.0
        %v664 = vmax.f32 %v600, 0.0
        %v665 = vmax.f32 %v601, 0.0
        %v666 = vmax.f32 %v602, 0.0
        %v667 = vmax.f32 %v603, 0.0
        %v668 = vmax.f32 %v604, 0.0
        %v669 = vmax.f32 %v605, 0.0
        %v670 = vmax.f32 %v606, 0.0
        %v671 = vmax.f32 %v607, 0.0
        %v672 = vmax.f32 %v608, 0.0
        %v673 = vmax.f32 %v609, 0.0
        %v674 = vmax.f32 %v610, 0.0
        %v675 = vmax.f32 %v611, 0.0
        %v676 = vmax.f32 %v612, 0.0
        %v677 = vmax.f32 %v613, 0.0
        %v678 = vmax.f32 %v614, 0.0
        %v679 = vmax.f32 %v615, 0.0
        %v680 = vmax.f32 %v616, 0.0
        %v681 = vmax.f32 %v617, 0.0
        %v682 = vmax.f32 %v618, 0.0
        %v683 = vmax.f32 %v619, 0.0
        %v684 = vmax.f32 %v620, 0.0
        %v685 = vmax.f32 %v621, 0.0
        %v686 = vmax.f32 %v622, 0.0
        %v687 = vmax.f32 %v623, 0.0
        %v688 = vmax.f32 %v624, 0.0
        %v689 = vmax.f32 %v625, 0.0
        %v690 = vmax.f32 %v626, 0.0
        %v691 = vmax.f32 %v627, 0.0
        %v692 = vmax.f32 %v628, 0.0
        %v693 = vmax.f32 %v629, 0.0
        %v694 = vmax.f32 %v630, 0.0
        %v695 = vmax.f32 %v631, 0.0
        %v696 = vmax.f32 %v632, 0.0
        %v697 = vmax.f32 %v633, 0.0
        %v698 = vmax.f32 %v634, 0.0
        %v699 = vmax.f32 %v635, 0.0
        %v700 = vmax.f32 %v636, 0.0
        %v701 = vmax.f32 %v637, 0.0
        %v702 = vmax.f32 %v638, 0.0
        %v703 = vmax.f32 %v639, 0.0
        %v704 = vmax.f32 %v640, 0.0
        %v705 = vmax.f32 %v641, 0.0
        %v706 = vmax.f32 %v642, 0.0
        %v707 = vmax.f32 %v643, 0.0
        %v708 = vmax.f32 %v644, 0.0
        %v709 = vmax.f32 %v645, 0.0
        %v710 = vmax.f32 %v646, 0.0
        %v711 = vmax.f32 %v647, 0.0
        %v712 = vmax.f32 %v648, 0.0
        %v713 = vmax.f32 %v649, 0.0
        %v714 = vmax.f32 %v650, 0.0
        %v715 = vmax.f32 %v651, 0.0
        %v716 = vmax.f32 %v652, 0.0
        %v717 = vmax.f32 %v653, 0.0
        %718 = vst [vmem:[%s2] sm:$0xff] %v654
        %719 = vst [vmem:[%s2 + $0x8] sm:$0xff] %v655
        %720 = vst [vmem:[%s2 + $0x10] sm:$0xff] %v656
        %721 = vst [vmem:[%s2 + $0x18] sm:$0xff] %v657
        %722 = vst [vmem:[%s2 + $0x20] sm:$0xff] %v658
        %723 = vst [vmem:[%s2 + $0x28] sm:$0xff] %v659
        %724 = vst [vmem:[%s2 + $0x30] sm:$0xff] %v660
        %725 = vst [vmem:[%s2 + $0x38] sm:$0xff] %v661
        %726 = vst [vmem:[%s2 + $0x40] sm:$0xff] %v662
        %727 = vst [vmem:[%s2 + $0x48] sm:$0xff] %v663
        %728 = vst [vmem:[%s2 + $0x50] sm:$0xff] %v664
        %729 = vst [vmem:[%s2 + $0x58] sm:$0xff] %v665
        %730 = vst [vmem:[%s2 + $0x60] sm:$0xff] %v666
        %731 = vst [vmem:[%s2 + $0x68] sm:$0xff] %v667
        %732 = vst [vmem:[%s2 + $0x70] sm:$0xff] %v668
        %733 = vst [vmem:[%s2 + $0x78] sm:$0xff] %v669
        %734 = vst [vmem:[%s2 + $0x80] sm:$0xff] %v670
        %735 = vst [vmem:[%s2 + $0x88] sm:$0xff] %v671
        %736 = vst [vmem:[%s2 + $0x90] sm:$0xff] %v672
        %737 = vst [vmem:[%s2 + $0x98] sm:$0xff] %v673
        %738 = vst [vmem:[%s2 + $0xa0] sm:$0xff] %v674
        %739 = vst [vmem:[%s2 + $0xa8] sm:$0xff] %v675
        %740 = vst [vmem:[%s2 + $0xb0] sm:$0xff] %v676
        %741 = vst [vmem:[%s2 + $0xb8] sm:$0xff] %v677
        %742 = vst [vmem:[%s2 + $0xc0] sm:$0xff] %v678
        %743 = vst [vmem:[%s2 + $0xc8] sm:$0xff] %v679
        %744 = vst [vmem:[%s2 + $0xd0] sm:$0xff] %v680
        %745 = vst [vmem:[%s2 + $0xd8] sm:$0xff] %v681
        %746 = vst [vmem:[%s2 + $0xe0] sm:$0xff] %v682
        %747 = vst [vmem:[%s2 + $0xe8] sm:$0xff] %v683
        %748 = vst [vmem:[%s2 + $0xf0] sm:$0xff] %v684
        %749 = vst [vmem:[%s2 + $0xf8] sm:$0xff] %v685
        %750 = vst [vmem:[%s2 + $0x100] sm:$0xff] %v686
        %751 = vst [vmem:[%s2 + $0x108] sm:$0xff] %v687
        %752 = vst [vmem:[%s2 + $0x110] sm:$0xff] %v688
        %753 = vst [vmem:[%s2 + $0x118] sm:$0xff] %v689
        %754 = vst [vmem:[%s2 + $0x120] sm:$0xff] %v690
        %755 = vst [vmem:[%s2 + $0x128] sm:$0xff] %v691
        %756 = vst [vmem:[%s2 + $0x130] sm:$0xff] %v692
        %757 = vst [vmem:[%s2 + $0x138] sm:$0xff] %v693
        %758 = vst [vmem:[%s2 + $0x140] sm:$0xff] %v694
        %759 = vst [vmem:[%s2 + $0x148] sm:$0xff] %v695
        %760 = vst [vmem:[%s2 + $0x150] sm:$0xff] %v696
        %761 = vst [vmem:[%s2 + $0x158] sm:$0xff] %v697
        %762 = vst [vmem:[%s2 + $0x160] sm:$0xff] %v698
        %763 = vst [vmem:[%s2 + $0x168] sm:$0xff] %v699
        %764 = vst [vmem:[%s2 + $0x170] sm:$0xff] %v700
        %765 = vst [vmem:[%s2 + $0x178] sm:$0xff] %v701
        %766 = vst [vmem:[%s2 + $0x180] sm:$0xff] %v702
        %767 = vst [vmem:[%s2 + $0x188] sm:$0xff] %v703
        %768 = vst [vmem:[%s2 + $0x190] sm:$0xff] %v704
        %769 = vst [vmem:[%s2 + $0x198] sm:$0xff] %v705
        %770 = vst [vmem:[%s2 + $0x1a0] sm:$0xff] %v706
        %771 = vst [vmem:[%s2 + $0x1a8] sm:$0xff] %v707
        %772 = vst [vmem:[%s2 + $0x1b0] sm:$0xff] %v708
        %773 = vst [vmem:[%s2 + $0x1b8] sm:$0xff] %v709
        %774 = vst [vmem:[%s2 + $0x1c0] sm:$0xff] %v710
        %775 = vst [vmem:[%s2 + $0x1c8] sm:$0xff] %v711
        %776 = vst [vmem:[%s2 + $0x1d0] sm:$0xff] %v712
        %777 = vst [vmem:[%s2 + $0x1d8] sm:$0xff] %v713
        %778 = vst [vmem:[%s2 + $0x1e0] sm:$0xff] %v714
        %779 = vst [vmem:[%s2 + $0x1e8] sm:$0xff] %v715
        %780 = vst [vmem:[%s2 + $0x1f0] sm:$0xff] %v716
        %781 = vst [vmem:[%s2 + $0x1f8] sm:$0xff] %v717
      $region36: #{generator_forward.7} parent=27 // pred_fallthru
        _
      // Predicated region
      $region37: #{generator_forward.7} parent=27 // pred_check
        %p782 = pneg %p92
      $region38: #{generator_forward.7} parent=27 // pred_check_branch
        %784 = sbr.rel (%p782) target = $region40
      $region39: #{generator_forward.7} parent=27 // pred_region
        _
      $region40: #{generator_forward.7} parent=27 // pred_fallthru
        _
      // Predicated region
      $region41: #{generator_forward.7} parent=27 // pred_check
        %p785 = pneg %p92
      $region42: #{generator_forward.7} parent=27 // pred_check_branch
        %787 = sbr.rel (%p785) target = $region44
      $region43: #{generator_forward.7} parent=27 // pred_region
        _
      $region44: #{generator_forward.7} parent=27 // pred_fallthru
        _
    $region28: #{generator_forward.7} parent=5 // pred_fallthru
      _
    %p788 = scmp.le.s32.totalorder 2, %s8
    // Predicated region
    $region45: #{generator_forward.7} parent=5 // pred_check
      %p789 = pneg %p788
    $region46: #{generator_forward.7} parent=5 // pred_check_branch
      %791 = sbr.rel (%p789) target = $region48
    $region47: #{generator_forward.7} parent=5 // pred_region
      %s792 = ssub.s32 %s8, 2
    $region48: #{generator_forward.7} parent=5 // pred_fallthru
      _
  $region6: #{generator_forward.7} parent=0 // loop_footer
    %s12 = sadd.s32 1, %s8
  $region7: #{generator_forward.7} parent=0 // loop_footer_branch
    %7 = sbr.rel target = $region3
  $region8: #{generator_forward.7} parent=0 // loop_exit
    _

// kernel: generator_forward.8
$region0: #{generator_forward.8}
  #allocation0 [shape = 'u32[]', space=smem, size = 0x4, offset = 0x4, fixed_abs, tag = 'smem constant byte address 0x4 - core index']
  #allocation1 [shape = 'u32[144,128]{1,0:T(1,128)}', space=vmem, size = 0x12000, scoped, tag = 'internal scratch']
  #allocation2 [shape = 'f32[8,128]{1,0:T(8,128)}', space=vmem, size = 0x1000, scoped, tag = 'scratch operand']
  #allocation3 [shape = 'f32[8,128]{1,0:T(8,128)}', space=vmem, size = 0x1000, scoped, tag = 'scratch operand']
  %s0 = inlined_call_operand.vmem [shape: f32[4,512,64], index: 0, kind: input, shape index: {}]
  %s1 = inlined_call_operand.vmem [shape: f32[4,64,128], index: 1, kind: input, shape index: {}]
  %s2 = inlined_call_operand.vmem [shape: f32[4,512,128], index: 2, kind: output, shape index: {}]
  %s3 = sld [smem:[#allocation0]]
  $region49: #{generator_forward.8} parent=0
    _
  %s5 = ssub.s32 1, %s3
  %s6 = scalar_select 0, %s5, %s3
  loop: start=0, step=1, limit=6
  $region2: #{generator_forward.8} parent=0 // loop_pre_header
    _
  $region3: #{generator_forward.8} parent=0 // loop_header
    %s8 = sphi 0, %s12
    %p9 = scmp.ge.s32.totalorder %s8, 6
    %s15 = sphi 0, %s27
    %s16 = sphi 0, %s23
    %s17 = sphi 0, %s15
    %s18 = sphi 0, %s16
    %s19 = sphi 0, %s17
    %s20 = sphi 0, %s18
    %s32 = sphi 0, %s34
    %s35 = sphi 0, %s32
    %s36 = sphi 0, %s35
    %s52 = sphi 0, %s36
    %s58 = sphi 0, %s60
    %s61 = sphi 0, %s58
    %s62 = sphi 0, %s61
    %s78 = sphi 0, %s62
    %s82 = sphi 0, %s82
    %s84 = sphi 0, %s82
    %s85 = sphi 0, %s84
    %s99 = sphi 0, %s85
  $region4: #{generator_forward.8} parent=0 // loop_header_branch
    %11 = sbr.rel (%p9) target = $region8
  $region5: #{generator_forward.8} parent=0 // loop_body
    %s13 = ssub.s32 %s8, 1
    %s14 = ssub.s32 %s8, 2
    %s21 = sadd.s32 1, %s16
    %p22 = scmp.ge.s32.totalorder %s21, 1
    %s23 = scalar_select %p22, 0, %s21
    %s24 = sadd.s32 1, %s15
    %s25 = scalar_select %p22, %s24, %s15
    %p26 = scmp.ge.s32.totalorder %s25, 4
    %s27 = scalar_select %p26, 0, %s25
    %s28 = ssub.s32 %s15, %s27
    %s29 = ssub.s32 %s16, %s23
    %s30 = sor.u32 %s28, %s29
    %p31 = scmp.eq.s32.totalorder %s30, 0
    %s33 = sadd.s32 %s32, 1
    %s34 = scalar_select %p31, %s32, %s33
    %p37 = pneg %p31
    %p38 = scmp.eq.s32.totalorder %s8, 3
    %p39 = por %p37, %p38
    %p40 = scmp.ne.s32.totalorder %s32, %s35
    %p41 = scmp.eq.s32.totalorder %s8, 0
    %p42 = por %p40, %p41
    %p43 = scmp.ne.s32.totalorder %s32, %s35
    %p44 = scmp.eq.s32.totalorder %s13, 3
    %p45 = por %p43, %p44
    %p46 = scmp.ne.s32.totalorder %s35, %s36
    %p47 = scmp.eq.s32.totalorder %s13, 0
    %p48 = por %p46, %p47
    %p49 = scmp.ne.s32.totalorder %s35, %s36
    %p50 = scmp.eq.s32.totalorder %s14, 3
    %p51 = por %p49, %p50
    %p53 = scmp.ne.s32.totalorder %s36, %s52
    %p54 = scmp.eq.s32.totalorder %s14, 0
    %p55 = por %p53, %p54
    %s56 = ssub.s32 %s15, %s27
    %p57 = scmp.eq.s32.totalorder %s56, 0
    %s59 = sadd.s32 %s58, 1
    %s60 = scalar_select %p57, %s58, %s59
    %p63 = pneg %p57
    %p64 = scmp.eq.s32.totalorder %s8, 3
    %p65 = por %p63, %p64
    %p66 = scmp.ne.s32.totalorder %s58, %s61
    %p67 = scmp.eq.s32.totalorder %s8, 0
    %p68 = por %p66, %p67
    %p69 = scmp.ne.s32.totalorder %s58, %s61
    %p70 = scmp.eq.s32.totalorder %s13, 3
    %p71 = por %p69, %p70
    %p72 = scmp.ne.s32.totalorder %s61, %s62
    %p73 = scmp.eq.s32.totalorder %s13, 0
    %p74 = por %p72, %p73
    %p75 = scmp.ne.s32.totalorder %s61, %s62
    %p76 = scmp.eq.s32.totalorder %s14, 3
    %p77 = por %p75, %p76
    %p79 = scmp.ne.s32.totalorder %s62, %s78
    %p80 = scmp.eq.s32.totalorder %s14, 0
    %p81 = por %p79, %p80
    %s83 = sadd.s32 %s82, 1
    %p86 = scmp.eq.s32.totalorder %s8, 3
    %p87 = scmp.ne.s32.totalorder %s82, %s84
    %p88 = scmp.eq.s32.totalorder %s8, 0
    %p89 = por %p87, %p88
    %p90 = scmp.ne.s32.totalorder %s82, %s84
    %p91 = scmp.eq.s32.totalorder %s13, 3
    %p92 = por %p90, %p91
    %p93 = scmp.ne.s32.totalorder %s84, %s85
    %p94 = scmp.eq.s32.totalorder %s13, 0
    %p95 = por %p93, %p94
    %p96 = scmp.ne.s32.totalorder %s84, %s85
    %p97 = scmp.eq.s32.totalorder %s14, 3
    %p98 = por %p96, %p97
    %p100 = scmp.ne.s32.totalorder %s85, %s99
    %p101 = scmp.eq.s32.totalorder %s14, 0
    %p102 = por %p100, %p101
    %p103 = scmp.le.s32.totalorder 1, %s8
    %p104 = scmp.lt.s32.totalorder %s8, 5
    %p105 = pnand %p103, %p104
    %p106 = pneg %p105
    // Predicated region
    $region9: #{generator_forward.8} parent=5 // pred_check
      _
    $region10: #{generator_forward.8} parent=5 // pred_check_branch
      %108 = sbr.rel (%p105) target = $region12
    $region11: #{generator_forward.8} parent=5 // pred_region
      %s109 = ssub.s32 %s8, 1
    $region12: #{generator_forward.8} parent=5 // pred_fallthru
      _
    %p110 = scmp.lt.s32.totalorder %s8, 4
    // Predicated region
    $region13: #{generator_forward.8} parent=5 // pred_check
      %p111 = pneg %p110
    $region14: #{generator_forward.8} parent=5 // pred_check_branch
      %113 = sbr.rel (%p111) target = $region16
    $region15: #{generator_forward.8} parent=5 // pred_region
      // Predicated region
      $region17: #{generator_forward.8} parent=15 // pred_check
        %p114 = pneg %p42
      $region18: #{generator_forward.8} parent=15 // pred_check_branch
        %116 = sbr.rel (%p114) target = $region20
      $region19: #{generator_forward.8} parent=15 // pred_region
        %s117 = smul.u32 64, %s16
        %p118 = scmp.lt.s32.totalorder %s15, 3
        %s119 = scalar_select %p118, %s15, 3
        %p120 = scmp.lt.s32.totalorder %s117, 63
        %s121 = scalar_select %p120, %s117, 63
        %s122 = smul.addr %s119, 64
        %s123 = sadd.s32 %s121, %s122
        %s124 = smul.addr %s123, 8
        %s125 = scalar_lea.vmem %s0, %s124
        %s126 = smul.u32 64, %s16
      $region20: #{generator_forward.8} parent=15 // pred_fallthru
        _
      // Predicated region
      $region21: #{generator_forward.8} parent=15 // pred_check
        %p127 = pneg %p68
      $region22: #{generator_forward.8} parent=15 // pred_check_branch
        %129 = sbr.rel (%p127) target = $region24
      $region23: #{generator_forward.8} parent=15 // pred_region
        %p130 = scmp.lt.s32.totalorder %s15, 3
        %s131 = scalar_select %p130, %s15, 3
        %s132 = smul.addr %s131, 8
        %s133 = smul.addr %s132, 8
        %s134 = scalar_lea.vmem %s1, %s133
      $region24: #{generator_forward.8} parent=15 // pred_fallthru
        _
    $region16: #{generator_forward.8} parent=5 // pred_fallthru
      _
    %p135 = scmp.le.s32.totalorder 1, %s8
    %p136 = scmp.lt.s32.totalorder %s8, 5
    %p137 = pnand %p135, %p136
    %p138 = pneg %p137
    // Predicated region
    $region25: #{generator_forward.8} parent=5 // pred_check
      _
    $region26: #{generator_forward.8} parent=5 // pred_check_branch
      %140 = sbr.rel (%p137) target = $region28
    $region27: #{generator_forward.8} parent=5 // pred_region
      %s141 = ssub.s32 %s8, 1
      %s142 = smul.u32 64, %s18
      %p143 = scmp.lt.s32.totalorder %s17, 3
      %s144 = scalar_select %p143, %s17, 3
      %p145 = scmp.lt.s32.totalorder %s142, 63
      %s146 = scalar_select %p145, %s142, 63
      %s147 = smul.addr %s144, 64
      %s148 = sadd.s32 %s146, %s147
      %s149 = smul.addr %s148, 8
      %s150 = scalar_lea.vmem %s0, %s149
      %p151 = pneg %p48
      %p152 = pneg %p45
      %p153 = scmp.lt.s32.totalorder %s17, 3
      %s154 = scalar_select %p153, %s17, 3
      %s155 = smul.addr %s154, 8
      %s156 = smul.addr %s155, 8
      %s157 = scalar_lea.vmem %s1, %s156
      %p158 = pneg %p74
      %p159 = pneg %p71
      %p160 = pneg %p95
      %p161 = pneg %p92
      %s162 = smul.u32 64, %s18
      %p163 = scmp.lt.s32.totalorder %s17, 3
      %s164 = scalar_select %p163, %s17, 3
      %p165 = scmp.lt.s32.totalorder %s162, 63
      %s166 = scalar_select %p165, %s162, 63
      %s167 = smul.addr %s164, 64
      %s168 = sadd.s32 %s166, %s167
      %s169 = smul.addr %s168, 8
      %s170 = scalar_lea.vmem %s0, %s169
      %s171 = smul.u32 64, %s18
      %p172 = scmp.lt.s32.totalorder %s17, 3
      %s173 = scalar_select %p172, %s17, 3
      %s174 = smul.addr %s173, 8
      %s175 = smul.addr %s174, 8
      %s176 = scalar_lea.vmem %s1, %s175
      %p177 = scmp.eq.s32.totalorder %s17, 3
      %p178 = scmp.eq.s32.totalorder %s18, 0
      %p179 = pnand %p177, %p178
      %p180 = pneg %p179
      %p181 = scmp.eq.s32.totalorder %s17, 0
      %p182 = pnand %p181, %p178
      %p183 = pneg %p182
      // Predicated region
      $region29: #{generator_forward.8} parent=27 // pred_check
        _
      $region30: #{generator_forward.8} parent=27 // pred_check_branch
        %185 = sbr.rel (%p182) target = $region32
      $region31: #{generator_forward.8} parent=27 // pred_region
        %186 = vst [vmem:[#allocation2] sm:$0xff] 0.0
        %187 = vst [vmem:[#allocation3] sm:$0xff] 0.0
      $region32: #{generator_forward.8} parent=27 // pred_fallthru
        _
      %v188 = vld [vmem:[%s170] sm:$0xff]
      %v189 = vld [vmem:[%s170 + $0x8] sm:$0xff]
      %v190 = vld [vmem:[%s170 + $0x10] sm:$0xff]
      %v191 = vld [vmem:[%s170 + $0x18] sm:$0xff]
      %v192 = vld [vmem:[%s170 + $0x20] sm:$0xff]
      %v193 = vld [vmem:[%s170 + $0x28] sm:$0xff]
      %v194 = vld [vmem:[%s170 + $0x30] sm:$0xff]
      %v195 = vld [vmem:[%s170 + $0x38] sm:$0xff]
      %v196 = vld [vmem:[%s170 + $0x40] sm:$0xff]
      %v197 = vld [vmem:[%s170 + $0x48] sm:$0xff]
      %v198 = vld [vmem:[%s170 + $0x50] sm:$0xff]
      %v199 = vld [vmem:[%s170 + $0x58] sm:$0xff]
      %v200 = vld [vmem:[%s170 + $0x60] sm:$0xff]
      %v201 = vld [vmem:[%s170 + $0x68] sm:$0xff]
      %v202 = vld [vmem:[%s170 + $0x70] sm:$0xff]
      %v203 = vld [vmem:[%s170 + $0x78] sm:$0xff]
      %v204 = vld [vmem:[%s170 + $0x80] sm:$0xff]
      %v205 = vld [vmem:[%s170 + $0x88] sm:$0xff]
      %v206 = vld [vmem:[%s170 + $0x90] sm:$0xff]
      %v207 = vld [vmem:[%s170 + $0x98] sm:$0xff]
      %v208 = vld [vmem:[%s170 + $0xa0] sm:$0xff]
      %v209 = vld [vmem:[%s170 + $0xa8] sm:$0xff]
      %v210 = vld [vmem:[%s170 + $0xb0] sm:$0xff]
      %v211 = vld [vmem:[%s170 + $0xb8] sm:$0xff]
      %v212 = vld [vmem:[%s170 + $0xc0] sm:$0xff]
      %v213 = vld [vmem:[%s170 + $0xc8] sm:$0xff]
      %v214 = vld [vmem:[%s170 + $0xd0] sm:$0xff]
      %v215 = vld [vmem:[%s170 + $0xd8] sm:$0xff]
      %v216 = vld [vmem:[%s170 + $0xe0] sm:$0xff]
      %v217 = vld [vmem:[%s170 + $0xe8] sm:$0xff]
      %v218 = vld [vmem:[%s170 + $0xf0] sm:$0xff]
      %v219 = vld [vmem:[%s170 + $0xf8] sm:$0xff]
      %v220 = vld [vmem:[%s170 + $0x100] sm:$0xff]
      %v221 = vld [vmem:[%s170 + $0x108] sm:$0xff]
      %v222 = vld [vmem:[%s170 + $0x110] sm:$0xff]
      %v223 = vld [vmem:[%s170 + $0x118] sm:$0xff]
      %v224 = vld [vmem:[%s170 + $0x120] sm:$0xff]
      %v225 = vld [vmem:[%s170 + $0x128] sm:$0xff]
      %v226 = vld [vmem:[%s170 + $0x130] sm:$0xff]
      %v227 = vld [vmem:[%s170 + $0x138] sm:$0xff]
      %v228 = vld [vmem:[%s170 + $0x140] sm:$0xff]
      %v229 = vld [vmem:[%s170 + $0x148] sm:$0xff]
      %v230 = vld [vmem:[%s170 + $0x150] sm:$0xff]
      %v231 = vld [vmem:[%s170 + $0x158] sm:$0xff]
      %v232 = vld [vmem:[%s170 + $0x160] sm:$0xff]
      %v233 = vld [vmem:[%s170 + $0x168] sm:$0xff]
      %v234 = vld [vmem:[%s170 + $0x170] sm:$0xff]
      %v235 = vld [vmem:[%s170 + $0x178] sm:$0xff]
      %v236 = vld [vmem:[%s170 + $0x180] sm:$0xff]
      %v237 = vld [vmem:[%s170 + $0x188] sm:$0xff]
      %v238 = vld [vmem:[%s170 + $0x190] sm:$0xff]
      %v239 = vld [vmem:[%s170 + $0x198] sm:$0xff]
      %v240 = vld [vmem:[%s170 + $0x1a0] sm:$0xff]
      %v241 = vld [vmem:[%s170 + $0x1a8] sm:$0xff]
      %v242 = vld [vmem:[%s170 + $0x1b0] sm:$0xff]
      %v243 = vld [vmem:[%s170 + $0x1b8] sm:$0xff]
      %v244 = vld [vmem:[%s170 + $0x1c0] sm:$0xff]
      %v245 = vld [vmem:[%s170 + $0x1c8] sm:$0xff]
      %v246 = vld [vmem:[%s170 + $0x1d0] sm:$0xff]
      %v247 = vld [vmem:[%s170 + $0x1d8] sm:$0xff]
      %v248 = vld [vmem:[%s170 + $0x1e0] sm:$0xff]
      %v249 = vld [vmem:[%s170 + $0x1e8] sm:$0xff]
      %v250 = vld [vmem:[%s170 + $0x1f0] sm:$0xff]
      %v251 = vld [vmem:[%s170 + $0x1f8] sm:$0xff]
      %v252 = vld [vmem:[%s176] sm:$0xff]
      %v253 = vld [vmem:[%s176 + $0x8] sm:$0xff]
      %v254 = vld [vmem:[%s176 + $0x10] sm:$0xff]
      %v255 = vld [vmem:[%s176 + $0x18] sm:$0xff]
      %v256 = vld [vmem:[%s176 + $0x20] sm:$0xff]
      %v257 = vld [vmem:[%s176 + $0x28] sm:$0xff]
      %v258 = vld [vmem:[%s176 + $0x30] sm:$0xff]
      %v259 = vld [vmem:[%s176 + $0x38] sm:$0xff]
      %vm260 = vcmask 523264
      %v262 = vsel %vm260, %v188, 0
      %v265 = vsel %vm260, %v189, 0
      %v268 = vsel %vm260, %v190, 0
      %v271 = vsel %vm260, %v191, 0
      %v274 = vsel %vm260, %v192, 0
      %v277 = vsel %vm260, %v193, 0
      %v280 = vsel %vm260, %v194, 0
      %v283 = vsel %vm260, %v195, 0
      %v286 = vsel %vm260, %v196, 0
      %v289 = vsel %vm260, %v197, 0
      %v292 = vsel %vm260, %v198, 0
      %v295 = vsel %vm260, %v199, 0
      %v298 = vsel %vm260, %v200, 0
      %v301 = vsel %vm260, %v201, 0
      %v304 = vsel %vm260, %v202, 0
      %v307 = vsel %vm260, %v203, 0
      %v310 = vsel %vm260, %v204, 0
      %v313 = vsel %vm260, %v205, 0
      %v316 = vsel %vm260, %v206, 0
      %v319 = vsel %vm260, %v207, 0
      %v322 = vsel %vm260, %v208, 0
      %v325 = vsel %vm260, %v209, 0
      %v328 = vsel %vm260, %v210, 0
      %v331 = vsel %vm260, %v211, 0
      %v334 = vsel %vm260, %v212, 0
      %v337 = vsel %vm260, %v213, 0
      %v340 = vsel %vm260, %v214, 0
      %v343 = vsel %vm260, %v215, 0
      %v346 = vsel %vm260, %v216, 0
      %v349 = vsel %vm260, %v217, 0
      %v352 = vsel %vm260, %v218, 0
      %v355 = vsel %vm260, %v219, 0
      %v358 = vsel %vm260, %v220, 0
      %v361 = vsel %vm260, %v221, 0
      %v364 = vsel %vm260, %v222, 0
      %v367 = vsel %vm260, %v223, 0
      %v370 = vsel %vm260, %v224, 0
      %v373 = vsel %vm260, %v225, 0
      %v376 = vsel %vm260, %v226, 0
      %v379 = vsel %vm260, %v227, 0
      %v382 = vsel %vm260, %v228, 0
      %v385 = vsel %vm260, %v229, 0
      %v388 = vsel %vm260, %v230, 0
      %v391 = vsel %vm260, %v231, 0
      %v394 = vsel %vm260, %v232, 0
      %v397 = vsel %vm260, %v233, 0
      %v400 = vsel %vm260, %v234, 0
      %v403 = vsel %vm260, %v235, 0
      %v406 = vsel %vm260, %v236, 0
      %v409 = vsel %vm260, %v237, 0
      %v412 = vsel %vm260, %v238, 0
      %v415 = vsel %vm260, %v239, 0
      %v418 = vsel %vm260, %v240, 0
      %v421 = vsel %vm260, %v241, 0
      %v424 = vsel %vm260, %v242, 0
      %v427 = vsel %vm260, %v243, 0
      %v430 = vsel %vm260, %v244, 0
      %v433 = vsel %vm260, %v245, 0
      %v436 = vsel %vm260, %v246, 0
      %v439 = vsel %vm260, %v247, 0
      %v442 = vsel %vm260, %v248, 0
      %v445 = vsel %vm260, %v249, 0
      %v448 = vsel %vm260, %v250, 0
      %v451 = vsel %vm260, %v251, 0
      %453 = vmatprep.subr.mxu0 0.0
      %454 = vmatpush1.msra.mxu0 %v252
      %455 = vmatprep.subr.mxu0 0.0
      %456 = vmatpush1.msra.mxu0 %v253
      %457 = vmatprep.subr.mxu0 0.0
      %458 = vmatpush1.msra.mxu0 %v254
      %459 = vmatprep.subr.mxu0 0.0
      %460 = vmatpush1.msra.mxu0 %v255
      %461 = vmatprep.subr.mxu0 0.0
      %462 = vmatpush1.msra.mxu0 %v256
      %463 = vmatprep.subr.mxu0 0.0
      %464 = vmatpush1.msra.mxu0 %v257
      %465 = vmatprep.subr.mxu0 0.0
      %466 = vmatpush1.msra.mxu0 %v258
      %467 = vmatprep.subr.mxu0 0.0
      %468 = vmatpush1.msra.mxu0 %v259
      %469 = vmatprep.subr.mxu0 0.0
      %470 = vmatpush1.msra.mxu0 0.0
      %471 = vmatprep.subr.mxu0 0.0
      %472 = vmatpush1.msra.mxu0 0.0
      %473 = vmatprep.subr.mxu0 0.0
      %474 = vmatpush1.msra.mxu0 0.0
      %475 = vmatprep.subr.mxu0 0.0
      %476 = vmatpush1.msra.mxu0 0.0
      %477 = vmatprep.subr.mxu0 0.0
      %478 = vmatpush1.msra.mxu0 0.0
      %479 = vmatprep.subr.mxu0 0.0
      %480 = vmatpush1.msra.mxu0 0.0
      %481 = vmatprep.subr.mxu0 0.0
      %482 = vmatpush1.msra.mxu0 0.0
      %483 = vmatprep.subr.mxu0 0.0
      %484 = vmatpush1.msra.mxu0 0.0
      %485 = vmatprep.subr.mxu0 0.0
      %486 = vmatpush1.msra.mxu0 0.0
      %487 = vmatprep.subr.mxu0 0.0
      %488 = vmatpush1.msra.mxu0 0.0
      %489 = vmatprep.subr.mxu0 0.0
      %490 = vmatpush1.msra.mxu0 0.0
      %491 = vmatprep.subr.mxu0 0.0
      %492 = vmatpush1.msra.mxu0 0.0
      %493 = vmatprep.subr.mxu0 0.0
      %494 = vmatpush1.msra.mxu0 0.0
      %495 = vmatprep.subr.mxu0 0.0
      %496 = vmatpush1.msra.mxu0 0.0
      %497 = vmatprep.subr.mxu0 0.0
      %498 = vmatpush1.msra.mxu0 0.0
      %499 = vmatprep.subr.mxu0 0.0
      %500 = vmatpush1.msra.mxu0 0.0
      %501 = vmatprep.subr.mxu0 0.0
      %502 = vmatpush1.msra.mxu0 0.0
      %503 = vmatprep.subr.mxu0 0.0
      %504 = vmatpush1.msra.mxu0 0.0
      %505 = vmatprep.subr.mxu0 0.0
      %506 = vmatpush1.msra.mxu0 0.0
      %507 = vmatprep.subr.mxu0 0.0
      %508 = vmatpush1.msra.mxu0 0.0
      %509 = vmatprep.subr.mxu0 0.0
      %510 = vmatpush1.msra.mxu0 0.0
      %511 = vmatprep.subr.mxu0 0.0
      %512 = vmatpush1.msra.mxu0 0.0
      %513 = vmatprep.subr.mxu0 0.0
      %514 = vmatpush1.msra.mxu0 0.0
      %515 = vmatprep.subr.mxu0 0.0
      %516 = vmatpush1.msra.mxu0 0.0
      %517 = vmatprep.mubr.f32.mxu0 0.0
      %518 = vmatmul.mubr.f32.gmra.mrb[0].mxu0 %v262
      %v519 = vpop.f32.mrb[0].mxu0
      %v520 = vadd.f32 0.0, %v519
      %v521 = vpop.f32.mrb[0].mxu0
      %522 = vmatprep.mubr.f32.mxu0 0.0
      %523 = vmatmul.mubr.f32.gmra.mrb[0].mxu0 %v265
      %v524 = vpop.f32.mrb[0].mxu0
      %v525 = vadd.f32 0.0, %v524
      %v526 = vpop.f32.mrb[0].mxu0
      %527 = vmatprep.mubr.f32.mxu0 0.0
      %528 = vmatmul.mubr.f32.gmra.mrb[0].mxu0 %v268
      %v529 = vpop.f32.mrb[0].mxu0
      %v530 = vadd.f32 0.0, %v529
      %v531 = vpop.f32.mrb[0].mxu0
      %532 = vmatprep.mubr.f32.mxu0 0.0
      %533 = vmatmul.mubr.f32.gmra.mrb[0].mxu0 %v271
      %v534 = vpop.f32.mrb[0].mxu0
      %v535 = vadd.f32 0.0, %v534
      %v536 = vpop.f32.mrb[0].mxu0
      %537 = vmatprep.mubr.f32.mxu0 0.0
      %538 = vmatmul.mubr.f32.gmra.mrb[0].mxu0 %v274
      %v539 = vpop.f32.mrb[0].mxu0
      %v540 = vadd.f32 0.0, %v539
      %v541 = vpop.f32.mrb[0].mxu0
      %542 = vmatprep.mubr.f32.mxu0 0.0
      %543 = vmatmul.mubr.f32.gmra.mrb[0].mxu0 %v277
      %v544 = vpop.f32.mrb[0].mxu0
      %v545 = vadd.f32 0.0, %v544
      %v546 = vpop.f32.mrb[0].mxu0
      %547 = vmatprep.mubr.f32.mxu0 0.0
      %548 = vmatmul.mubr.f32.gmra.mrb[0].mxu0 %v280
      %v549 = vpop.f32.mrb[0].mxu0
      %v550 = vadd.f32 0.0, %v549
      %v551 = vpop.f32.mrb[0].mxu0
      %552 = vmatprep.mubr.f32.mxu0 0.0
      %553 = vmatmul.mubr.f32.gmra.mrb[0].mxu0 %v283
      %v554 = vpop.f32.mrb[0].mxu0
      %v555 = vadd.f32 0.0, %v554
      %v556 = vpop.f32.mrb[0].mxu0
      %557 = vmatprep.mubr.f32.mxu0 0.0
      %558 = vmatmul.mubr.f32.gmra.mrb[0].mxu0 %v286
      %v559 = vpop.f32.mrb[0].mxu0
      %v560 = vadd.f32 0.0, %v559
      %v561 = vpop.f32.mrb[0].mxu0
      %562 = vmatprep.mubr.f32.mxu0 0.0
      %563 = vmatmul.mubr.f32.gmra.mrb[0].mxu0 %v289
      %v564 = vpop.f32.mrb[0].mxu0
      %v565 = vadd.f32 0.0, %v564
      %v566 = vpop.f32.mrb[0].mxu0
      %567 = vmatprep.mubr.f32.mxu0 0.0
      %568 = vmatmul.mubr.f32.gmra.mrb[0].mxu0 %v292
      %v569 = vpop.f32.mrb[0].mxu0
      %v570 = vadd.f32 0.0, %v569
      %v571 = vpop.f32.mrb[0].mxu0
      %572 = vmatprep.mubr.f32.mxu0 0.0
      %573 = vmatmul.mubr.f32.gmra.mrb[0].mxu0 %v295
      %v574 = vpop.f32.mrb[0].mxu0
      %v575 = vadd.f32 0.0, %v574
      %v576 = vpop.f32.mrb[0].mxu0
      %577 = vmatprep.mubr.f32.mxu0 0.0
      %578 = vmatmul.mubr.f32.gmra.mrb[0].mxu0 %v298
      %v579 = vpop.f32.mrb[0].mxu0
      %v580 = vadd.f32 0.0, %v579
      %v581 = vpop.f32.mrb[0].mxu0
      %582 = vmatprep.mubr.f32.mxu0 0.0
      %583 = vmatmul.mubr.f32.gmra.mrb[0].mxu0 %v301
      %v584 = vpop.f32.mrb[0].mxu0
      %v585 = vadd.f32 0.0, %v584
      %v586 = vpop.f32.mrb[0].mxu0
      %587 = vmatprep.mubr.f32.mxu0 0.0
      %588 = vmatmul.mubr.f32.gmra.mrb[0].mxu0 %v304
      %v589 = vpop.f32.mrb[0].mxu0
      %v590 = vadd.f32 0.0, %v589
      %v591 = vpop.f32.mrb[0].mxu0
      %592 = vmatprep.mubr.f32.mxu0 0.0
      %593 = vmatmul.mubr.f32.gmra.mrb[0].mxu0 %v307
      %v594 = vpop.f32.mrb[0].mxu0
      %v595 = vadd.f32 0.0, %v594
      %v596 = vpop.f32.mrb[0].mxu0
      %597 = vmatprep.mubr.f32.mxu0 0.0
      %598 = vmatmul.mubr.f32.gmra.mrb[0].mxu0 %v310
      %v599 = vpop.f32.mrb[0].mxu0
      %v600 = vadd.f32 0.0, %v599
      %v601 = vpop.f32.mrb[0].mxu0
      %602 = vmatprep.mubr.f32.mxu0 0.0
      %603 = vmatmul.mubr.f32.gmra.mrb[0].mxu0 %v313
      %v604 = vpop.f32.mrb[0].mxu0
      %v605 = vadd.f32 0.0, %v604
      %v606 = vpop.f32.mrb[0].mxu0
      %607 = vmatprep.mubr.f32.mxu0 0.0
      %608 = vmatmul.mubr.f32.gmra.mrb[0].mxu0 %v316
      %v609 = vpop.f32.mrb[0].mxu0
      %v610 = vadd.f32 0.0, %v609
      %v611 = vpop.f32.mrb[0].mxu0
      %612 = vmatprep.mubr.f32.mxu0 0.0
      %613 = vmatmul.mubr.f32.gmra.mrb[0].mxu0 %v319
      %v614 = vpop.f32.mrb[0].mxu0
      %v615 = vadd.f32 0.0, %v614
      %v616 = vpop.f32.mrb[0].mxu0
      %617 = vmatprep.mubr.f32.mxu0 0.0
      %618 = vmatmul.mubr.f32.gmra.mrb[0].mxu0 %v322
      %v619 = vpop.f32.mrb[0].mxu0
      %v620 = vadd.f32 0.0, %v619
      %v621 = vpop.f32.mrb[0].mxu0
      %622 = vmatprep.mubr.f32.mxu0 0.0
      %623 = vmatmul.mubr.f32.gmra.mrb[0].mxu0 %v325
      %v624 = vpop.f32.mrb[0].mxu0
      %v625 = vadd.f32 0.0, %v624
      %v626 = vpop.f32.mrb[0].mxu0
      %627 = vmatprep.mubr.f32.mxu0 0.0
      %628 = vmatmul.mubr.f32.gmra.mrb[0].mxu0 %v328
      %v629 = vpop.f32.mrb[0].mxu0
      %v630 = vadd.f32 0.0, %v629
      %v631 = vpop.f32.mrb[0].mxu0
      %632 = vmatprep.mubr.f32.mxu0 0.0
      %633 = vmatmul.mubr.f32.gmra.mrb[0].mxu0 %v331
      %v634 = vpop.f32.mrb[0].mxu0
      %v635 = vadd.f32 0.0, %v634
      %v636 = vpop.f32.mrb[0].mxu0
      %637 = vmatprep.mubr.f32.mxu0 0.0
      %638 = vmatmul.mubr.f32.gmra.mrb[0].mxu0 %v334
      %v639 = vpop.f32.mrb[0].mxu0
      %v640 = vadd.f32 0.0, %v639
      %v641 = vpop.f32.mrb[0].mxu0
      %642 = vmatprep.mubr.f32.mxu0 0.0
      %643 = vmatmul.mubr.f32.gmra.mrb[0].mxu0 %v337
      %v644 = vpop.f32.mrb[0].mxu0
      %v645 = vadd.f32 0.0, %v644
      %v646 = vpop.f32.mrb[0].mxu0
      %647 = vmatprep.mubr.f32.mxu0 0.0
      %648 = vmatmul.mubr.f32.gmra.mrb[0].mxu0 %v340
      %v649 = vpop.f32.mrb[0].mxu0
      %v650 = vadd.f32 0.0, %v649
      %v651 = vpop.f32.mrb[0].mxu0
      %652 = vmatprep.mubr.f32.mxu0 0.0
      %653 = vmatmul.mubr.f32.gmra.mrb[0].mxu0 %v343
      %v654 = vpop.f32.mrb[0].mxu0
      %v655 = vadd.f32 0.0, %v654
      %v656 = vpop.f32.mrb[0].mxu0
      %657 = vmatprep.mubr.f32.mxu0 0.0
      %658 = vmatmul.mubr.f32.gmra.mrb[0].mxu0 %v346
      %v659 = vpop.f32.mrb[0].mxu0
      %v660 = vadd.f32 0.0, %v659
      %v661 = vpop.f32.mrb[0].mxu0
      %662 = vmatprep.mubr.f32.mxu0 0.0
      %663 = vmatmul.mubr.f32.gmra.mrb[0].mxu0 %v349
      %v664 = vpop.f32.mrb[0].mxu0
      %v665 = vadd.f32 0.0, %v664
      %v666 = vpop.f32.mrb[0].mxu0
      %667 = vmatprep.mubr.f32.mxu0 0.0
      %668 = vmatmul.mubr.f32.gmra.mrb[0].mxu0 %v352
      %v669 = vpop.f32.mrb[0].mxu0
      %v670 = vadd.f32 0.0, %v669
      %v671 = vpop.f32.mrb[0].mxu0
      %672 = vmatprep.mubr.f32.mxu0 0.0
      %673 = vmatmul.mubr.f32.gmra.mrb[0].mxu0 %v355
      %v674 = vpop.f32.mrb[0].mxu0
      %v675 = vadd.f32 0.0, %v674
      %v676 = vpop.f32.mrb[0].mxu0
      %677 = vmatprep.mubr.f32.mxu0 0.0
      %678 = vmatmul.mubr.f32.gmra.mrb[0].mxu0 %v358
      %v679 = vpop.f32.mrb[0].mxu0
      %v680 = vadd.f32 0.0, %v679
      %v681 = vpop.f32.mrb[0].mxu0
      %682 = vmatprep.mubr.f32.mxu0 0.0
      %683 = vmatmul.mubr.f32.gmra.mrb[0].mxu0 %v361
      %v684 = vpop.f32.mrb[0].mxu0
      %v685 = vadd.f32 0.0, %v684
      %v686 = vpop.f32.mrb[0].mxu0
      %687 = vmatprep.mubr.f32.mxu0 0.0
      %688 = vmatmul.mubr.f32.gmra.mrb[0].mxu0 %v364
      %v689 = vpop.f32.mrb[0].mxu0
      %v690 = vadd.f32 0.0, %v689
      %v691 = vpop.f32.mrb[0].mxu0
      %692 = vmatprep.mubr.f32.mxu0 0.0
      %693 = vmatmul.mubr.f32.gmra.mrb[0].mxu0 %v367
      %v694 = vpop.f32.mrb[0].mxu0
      %v695 = vadd.f32 0.0, %v694
      %v696 = vpop.f32.mrb[0].mxu0
      %697 = vmatprep.mubr.f32.mxu0 0.0
      %698 = vmatmul.mubr.f32.gmra.mrb[0].mxu0 %v370
      %v699 = vpop.f32.mrb[0].mxu0
      %v700 = vadd.f32 0.0, %v699
      %v701 = vpop.f32.mrb[0].mxu0
      %702 = vmatprep.mubr.f32.mxu0 0.0
      %703 = vmatmul.mubr.f32.gmra.mrb[0].mxu0 %v373
      %v704 = vpop.f32.mrb[0].mxu0
      %v705 = vadd.f32 0.0, %v704
      %v706 = vpop.f32.mrb[0].mxu0
      %707 = vmatprep.mubr.f32.mxu0 0.0
      %708 = vmatmul.mubr.f32.gmra.mrb[0].mxu0 %v376
      %v709 = vpop.f32.mrb[0].mxu0
      %v710 = vadd.f32 0.0, %v709
      %v711 = vpop.f32.mrb[0].mxu0
      %712 = vmatprep.mubr.f32.mxu0 0.0
      %713 = vmatmul.mubr.f32.gmra.mrb[0].mxu0 %v379
      %v714 = vpop.f32.mrb[0].mxu0
      %v715 = vadd.f32 0.0, %v714
      %v716 = vpop.f32.mrb[0].mxu0
      %717 = vmatprep.mubr.f32.mxu0 0.0
      %718 = vmatmul.mubr.f32.gmra.mrb[0].mxu0 %v382
      %v719 = vpop.f32.mrb[0].mxu0
      %v720 = vadd.f32 0.0, %v719
      %v721 = vpop.f32.mrb[0].mxu0
      %722 = vmatprep.mubr.f32.mxu0 0.0
      %723 = vmatmul.mubr.f32.gmra.mrb[0].mxu0 %v385
      %v724 = vpop.f32.mrb[0].mxu0
      %v725 = vadd.f32 0.0, %v724
      %v726 = vpop.f32.mrb[0].mxu0
      %727 = vmatprep.mubr.f32.mxu0 0.0
      %728 = vmatmul.mubr.f32.gmra.mrb[0].mxu0 %v388
      %v729 = vpop.f32.mrb[0].mxu0
      %v730 = vadd.f32 0.0, %v729
      %v731 = vpop.f32.mrb[0].mxu0
      %732 = vmatprep.mubr.f32.mxu0 0.0
      %733 = vmatmul.mubr.f32.gmra.mrb[0].mxu0 %v391
      %v734 = vpop.f32.mrb[0].mxu0
      %v735 = vadd.f32 0.0, %v734
      %v736 = vpop.f32.mrb[0].mxu0
      %737 = vmatprep.mubr.f32.mxu0 0.0
      %738 = vmatmul.mubr.f32.gmra.mrb[0].mxu0 %v394
      %v739 = vpop.f32.mrb[0].mxu0
      %v740 = vadd.f32 0.0, %v739
      %v741 = vpop.f32.mrb[0].mxu0
      %742 = vmatprep.mubr.f32.mxu0 0.0
      %743 = vmatmul.mubr.f32.gmra.mrb[0].mxu0 %v397
      %v744 = vpop.f32.mrb[0].mxu0
      %v745 = vadd.f32 0.0, %v744
      %v746 = vpop.f32.mrb[0].mxu0
      %747 = vmatprep.mubr.f32.mxu0 0.0
      %748 = vmatmul.mubr.f32.gmra.mrb[0].mxu0 %v400
      %v749 = vpop.f32.mrb[0].mxu0
      %v750 = vadd.f32 0.0, %v749
      %v751 = vpop.f32.mrb[0].mxu0
      %752 = vmatprep.mubr.f32.mxu0 0.0
      %753 = vmatmul.mubr.f32.gmra.mrb[0].mxu0 %v403
      %v754 = vpop.f32.mrb[0].mxu0
      %v755 = vadd.f32 0.0, %v754
      %v756 = vpop.f32.mrb[0].mxu0
      %757 = vmatprep.mubr.f32.mxu0 0.0
      %758 = vmatmul.mubr.f32.gmra.mrb[0].mxu0 %v406
      %v759 = vpop.f32.mrb[0].mxu0
      %v760 = vadd.f32 0.0, %v759
      %v761 = vpop.f32.mrb[0].mxu0
      %762 = vmatprep.mubr.f32.mxu0 0.0
      %763 = vmatmul.mubr.f32.gmra.mrb[0].mxu0 %v409
      %v764 = vpop.f32.mrb[0].mxu0
      %v765 = vadd.f32 0.0, %v764
      %v766 = vpop.f32.mrb[0].mxu0
      %767 = vmatprep.mubr.f32.mxu0 0.0
      %768 = vmatmul.mubr.f32.gmra.mrb[0].mxu0 %v412
      %v769 = vpop.f32.mrb[0].mxu0
      %v770 = vadd.f32 0.0, %v769
      %v771 = vpop.f32.mrb[0].mxu0
      %772 = vmatprep.mubr.f32.mxu0 0.0
      %773 = vmatmul.mubr.f32.gmra.mrb[0].mxu0 %v415
      %v774 = vpop.f32.mrb[0].mxu0
      %v775 = vadd.f32 0.0, %v774
      %v776 = vpop.f32.mrb[0].mxu0
      %777 = vmatprep.mubr.f32.mxu0 0.0
      %778 = vmatmul.mubr.f32.gmra.mrb[0].mxu0 %v418
      %v779 = vpop.f32.mrb[0].mxu0
      %v780 = vadd.f32 0.0, %v779
      %v781 = vpop.f32.mrb[0].mxu0
      %782 = vmatprep.mubr.f32.mxu0 0.0
      %783 = vmatmul.mubr.f32.gmra.mrb[0].mxu0 %v421
      %v784 = vpop.f32.mrb[0].mxu0
      %v785 = vadd.f32 0.0, %v784
      %v786 = vpop.f32.mrb[0].mxu0
      %787 = vmatprep.mubr.f32.mxu0 0.0
      %788 = vmatmul.mubr.f32.gmra.mrb[0].mxu0 %v424
      %v789 = vpop.f32.mrb[0].mxu0
      %v790 = vadd.f32 0.0, %v789
      %v791 = vpop.f32.mrb[0].mxu0
      %792 = vmatprep.mubr.f32.mxu0 0.0
      %793 = vmatmul.mubr.f32.gmra.mrb[0].mxu0 %v427
      %v794 = vpop.f32.mrb[0].mxu0
      %v795 = vadd.f32 0.0, %v794
      %v796 = vpop.f32.mrb[0].mxu0
      %797 = vmatprep.mubr.f32.mxu0 0.0
      %798 = vmatmul.mubr.f32.gmra.mrb[0].mxu0 %v430
      %v799 = vpop.f32.mrb[0].mxu0
      %v800 = vadd.f32 0.0, %v799
      %v801 = vpop.f32.mrb[0].mxu0
      %802 = vmatprep.mubr.f32.mxu0 0.0
      %803 = vmatmul.mubr.f32.gmra.mrb[0].mxu0 %v433
      %v804 = vpop.f32.mrb[0].mxu0
      %v805 = vadd.f32 0.0, %v804
      %v806 = vpop.f32.mrb[0].mxu0
      %807 = vmatprep.mubr.f32.mxu0 0.0
      %808 = vmatmul.mubr.f32.gmra.mrb[0].mxu0 %v436
      %v809 = vpop.f32.mrb[0].mxu0
      %v810 = vadd.f32 0.0, %v809
      %v811 = vpop.f32.mrb[0].mxu0
      %812 = vmatprep.mubr.f32.mxu0 0.0
      %813 = vmatmul.mubr.f32.gmra.mrb[0].mxu0 %v439
      %v814 = vpop.f32.mrb[0].mxu0
      %v815 = vadd.f32 0.0, %v814
      %v816 = vpop.f32.mrb[0].mxu0
      %817 = vmatprep.mubr.f32.mxu0 0.0
      %818 = vmatmul.mubr.f32.gmra.mrb[0].mxu0 %v442
      %v819 = vpop.f32.mrb[0].mxu0
      %v820 = vadd.f32 0.0, %v819
      %v821 = vpop.f32.mrb[0].mxu0
      %822 = vmatprep.mubr.f32.mxu0 0.0
      %823 = vmatmul.mubr.f32.gmra.mrb[0].mxu0 %v445
      %v824 = vpop.f32.mrb[0].mxu0
      %v825 = vadd.f32 0.0, %v824
      %v826 = vpop.f32.mrb[0].mxu0
      %827 = vmatprep.mubr.f32.mxu0 0.0
      %828 = vmatmul.mubr.f32.gmra.mrb[0].mxu0 %v448
      %v829 = vpop.f32.mrb[0].mxu0
      %v830 = vadd.f32 0.0, %v829
      %v831 = vpop.f32.mrb[0].mxu0
      %832 = vmatprep.mubr.f32.mxu0 0.0
      %833 = vmatmul.mubr.f32.gmra.mrb[0].mxu0 %v451
      %v834 = vpop.f32.mrb[0].mxu0
      %v835 = vadd.f32 0.0, %v834
      %v836 = vpop.f32.mrb[0].mxu0
      %837 = vdwg.mxu0
      %s838 = smul.u32 %s18, 512
      %s839 = smul.u32 %s17, 512
      %s840 = sadd.s32 %s838, %s839
      %s841 = scalar_lea.vmem %s2, %s840
      %842 = vst [vmem:[%s841] sm:$0xff] %v520
      %843 = vst [vmem:[%s841 + $0x8] sm:$0xff] %v525
      %844 = vst [vmem:[%s841 + $0x10] sm:$0xff] %v530
      %845 = vst [vmem:[%s841 + $0x18] sm:$0xff] %v535
      %846 = vst [vmem:[%s841 + $0x20] sm:$0xff] %v540
      %847 = vst [vmem:[%s841 + $0x28] sm:$0xff] %v545
      %848 = vst [vmem:[%s841 + $0x30] sm:$0xff] %v550
      %849 = vst [vmem:[%s841 + $0x38] sm:$0xff] %v555
      %850 = vst [vmem:[%s841 + $0x40] sm:$0xff] %v560
      %851 = vst [vmem:[%s841 + $0x48] sm:$0xff] %v565
      %852 = vst [vmem:[%s841 + $0x50] sm:$0xff] %v570
      %853 = vst [vmem:[%s841 + $0x58] sm:$0xff] %v575
      %854 = vst [vmem:[%s841 + $0x60] sm:$0xff] %v580
      %855 = vst [vmem:[%s841 + $0x68] sm:$0xff] %v585
      %856 = vst [vmem:[%s841 + $0x70] sm:$0xff] %v590
      %857 = vst [vmem:[%s841 + $0x78] sm:$0xff] %v595
      %858 = vst [vmem:[%s841 + $0x80] sm:$0xff] %v600
      %859 = vst [vmem:[%s841 + $0x88] sm:$0xff] %v605
      %860 = vst [vmem:[%s841 + $0x90] sm:$0xff] %v610
      %861 = vst [vmem:[%s841 + $0x98] sm:$0xff] %v615
      %862 = vst [vmem:[%s841 + $0xa0] sm:$0xff] %v620
      %863 = vst [vmem:[%s841 + $0xa8] sm:$0xff] %v625
      %864 = vst [vmem:[%s841 + $0xb0] sm:$0xff] %v630
      %865 = vst [vmem:[%s841 + $0xb8] sm:$0xff] %v635
      %866 = vst [vmem:[%s841 + $0xc0] sm:$0xff] %v640
      %867 = vst [vmem:[%s841 + $0xc8] sm:$0xff] %v645
      %868 = vst [vmem:[%s841 + $0xd0] sm:$0xff] %v650
      %869 = vst [vmem:[%s841 + $0xd8] sm:$0xff] %v655
      %870 = vst [vmem:[%s841 + $0xe0] sm:$0xff] %v660
      %871 = vst [vmem:[%s841 + $0xe8] sm:$0xff] %v665
      %872 = vst [vmem:[%s841 + $0xf0] sm:$0xff] %v670
      %873 = vst [vmem:[%s841 + $0xf8] sm:$0xff] %v675
      %874 = vst [vmem:[%s841 + $0x100] sm:$0xff] %v680
      %875 = vst [vmem:[%s841 + $0x108] sm:$0xff] %v685
      %876 = vst [vmem:[%s841 + $0x110] sm:$0xff] %v690
      %877 = vst [vmem:[%s841 + $0x118] sm:$0xff] %v695
      %878 = vst [vmem:[%s841 + $0x120] sm:$0xff] %v700
      %879 = vst [vmem:[%s841 + $0x128] sm:$0xff] %v705
      %880 = vst [vmem:[%s841 + $0x130] sm:$0xff] %v710
      %881 = vst [vmem:[%s841 + $0x138] sm:$0xff] %v715
      %882 = vst [vmem:[%s841 + $0x140] sm:$0xff] %v720
      %883 = vst [vmem:[%s841 + $0x148] sm:$0xff] %v725
      %884 = vst [vmem:[%s841 + $0x150] sm:$0xff] %v730
      %885 = vst [vmem:[%s841 + $0x158] sm:$0xff] %v735
      %886 = vst [vmem:[%s841 + $0x160] sm:$0xff] %v740
      %887 = vst [vmem:[%s841 + $0x168] sm:$0xff] %v745
      %888 = vst [vmem:[%s841 + $0x170] sm:$0xff] %v750
      %889 = vst [vmem:[%s841 + $0x178] sm:$0xff] %v755
      %890 = vst [vmem:[%s841 + $0x180] sm:$0xff] %v760
      %891 = vst [vmem:[%s841 + $0x188] sm:$0xff] %v765
      %892 = vst [vmem:[%s841 + $0x190] sm:$0xff] %v770
      %893 = vst [vmem:[%s841 + $0x198] sm:$0xff] %v775
      %894 = vst [vmem:[%s841 + $0x1a0] sm:$0xff] %v780
      %895 = vst [vmem:[%s841 + $0x1a8] sm:$0xff] %v785
      %896 = vst [vmem:[%s841 + $0x1b0] sm:$0xff] %v790
      %897 = vst [vmem:[%s841 + $0x1b8] sm:$0xff] %v795
      %898 = vst [vmem:[%s841 + $0x1c0] sm:$0xff] %v800
      %899 = vst [vmem:[%s841 + $0x1c8] sm:$0xff] %v805
      %900 = vst [vmem:[%s841 + $0x1d0] sm:$0xff] %v810
      %901 = vst [vmem:[%s841 + $0x1d8] sm:$0xff] %v815
      %902 = vst [vmem:[%s841 + $0x1e0] sm:$0xff] %v820
      %903 = vst [vmem:[%s841 + $0x1e8] sm:$0xff] %v825
      %904 = vst [vmem:[%s841 + $0x1f0] sm:$0xff] %v830
      %905 = vst [vmem:[%s841 + $0x1f8] sm:$0xff] %v835
      %v906 = vld [vmem:[#allocation2] sm:$0xff]
      %v907 = vadd.f32 %v520, %v525
      %v908 = vadd.f32 %v907, %v530
      %v909 = vadd.f32 %v908, %v535
      %v910 = vadd.f32 %v909, %v540
      %v911 = vadd.f32 %v910, %v545
      %v912 = vadd.f32 %v911, %v550
      %v913 = vadd.f32 %v912, %v555
      %v914 = vadd.f32 %v913, %v560
      %v915 = vadd.f32 %v914, %v565
      %v916 = vadd.f32 %v915, %v570
      %v917 = vadd.f32 %v916, %v575
      %v918 = vadd.f32 %v917, %v580
      %v919 = vadd.f32 %v918, %v585
      %v920 = vadd.f32 %v919, %v590
      %v921 = vadd.f32 %v920, %v595
      %v922 = vadd.f32 %v921, %v600
      %v923 = vadd.f32 %v922, %v605
      %v924 = vadd.f32 %v923, %v610
      %v925 = vadd.f32 %v924, %v615
      %v926 = vadd.f32 %v925, %v620
      %v927 = vadd.f32 %v926, %v625
      %v928 = vadd.f32 %v927, %v630
      %v929 = vadd.f32 %v928, %v635
      %v930 = vadd.f32 %v929, %v640
      %v931 = vadd.f32 %v930, %v645
      %v932 = vadd.f32 %v931, %v650
      %v933 = vadd.f32 %v932, %v655
      %v934 = vadd.f32 %v933, %v660
      %v935 = vadd.f32 %v934, %v665
      %v936 = vadd.f32 %v935, %v670
      %v937 = vadd.f32 %v936, %v675
      %v938 = vadd.f32 %v937, %v680
      %v939 = vadd.f32 %v938, %v685
      %v940 = vadd.f32 %v939, %v690
      %v941 = vadd.f32 %v940, %v695
      %v942 = vadd.f32 %v941, %v700
      %v943 = vadd.f32 %v942, %v705
      %v944 = vadd.f32 %v943, %v710
      %v945 = vadd.f32 %v944, %v715
      %v946 = vadd.f32 %v945, %v720
      %v947 = vadd.f32 %v946, %v725
      %v948 = vadd.f32 %v947, %v730
      %v949 = vadd.f32 %v948, %v735
      %v950 = vadd.f32 %v949, %v740
      %v951 = vadd.f32 %v950, %v745
      %v952 = vadd.f32 %v951, %v750
      %v953 = vadd.f32 %v952, %v755
      %v954 = vadd.f32 %v953, %v760
      %v955 = vadd.f32 %v954, %v765
      %v956 = vadd.f32 %v955, %v770
      %v957 = vadd.f32 %v956, %v775
      %v958 = vadd.f32 %v957, %v780
      %v959 = vadd.f32 %v958, %v785
      %v960 = vadd.f32 %v959, %v790
      %v961 = vadd.f32 %v960, %v795
      %v962 = vadd.f32 %v961, %v800
      %v963 = vadd.f32 %v962, %v805
      %v964 = vadd.f32 %v963, %v810
      %v965 = vadd.f32 %v964, %v815
      %v966 = vadd.f32 %v965, %v820
      %v967 = vadd.f32 %v966, %v825
      %v968 = vadd.f32 %v967, %v830
      %v969 = vadd.f32 %v968, %v835
      %v970 = vadd.f32 %v906, %v969
      %971 = vst [vmem:[#allocation2] sm:$0xff] %v970
      %v972 = vld [vmem:[#allocation3] sm:$0xff]
      %v973 = vmul.f32 %v520, %v520
      %v974 = vmul.f32 %v525, %v525
      %v975 = vmul.f32 %v530, %v530
      %v976 = vmul.f32 %v535, %v535
      %v977 = vmul.f32 %v540, %v540
      %v978 = vmul.f32 %v545, %v545
      %v979 = vmul.f32 %v550, %v550
      %v980 = vmul.f32 %v555, %v555
      %v981 = vmul.f32 %v560, %v560
      %v982 = vmul.f32 %v565, %v565
      %v983 = vmul.f32 %v570, %v570
      %v984 = vmul.f32 %v575, %v575
      %v985 = vmul.f32 %v580, %v580
      %v986 = vmul.f32 %v585, %v585
      %v987 = vmul.f32 %v590, %v590
      %v988 = vmul.f32 %v595, %v595
      %v989 = vmul.f32 %v600, %v600
      %v990 = vmul.f32 %v605, %v605
      %v991 = vmul.f32 %v610, %v610
      %v992 = vmul.f32 %v615, %v615
      %v993 = vmul.f32 %v620, %v620
      %v994 = vmul.f32 %v625, %v625
      %v995 = vmul.f32 %v630, %v630
      %v996 = vmul.f32 %v635, %v635
      %v997 = vmul.f32 %v640, %v640
      %v998 = vmul.f32 %v645, %v645
      %v999 = vmul.f32 %v650, %v650
      %v1000 = vmul.f32 %v655, %v655
      %v1001 = vmul.f32 %v660, %v660
      %v1002 = vmul.f32 %v665, %v665
      %v1003 = vmul.f32 %v670, %v670
      %v1004 = vmul.f32 %v675, %v675
      %v1005 = vmul.f32 %v680, %v680
      %v1006 = vmul.f32 %v685, %v685
      %v1007 = vmul.f32 %v690, %v690
      %v1008 = vmul.f32 %v695, %v695
      %v1009 = vmul.f32 %v700, %v700
      %v1010 = vmul.f32 %v705, %v705
      %v1011 = vmul.f32 %v710, %v710
      %v1012 = vmul.f32 %v715, %v715
      %v1013 = vmul.f32 %v720, %v720
      %v1014 = vmul.f32 %v725, %v725
      %v1015 = vmul.f32 %v730, %v730
      %v1016 = vmul.f32 %v735, %v735
      %v1017 = vmul.f32 %v740, %v740
      %v1018 = vmul.f32 %v745, %v745
      %v1019 = vmul.f32 %v750, %v750
      %v1020 = vmul.f32 %v755, %v755
      %v1021 = vmul.f32 %v760, %v760
      %v1022 = vmul.f32 %v765, %v765
      %v1023 = vmul.f32 %v770, %v770
      %v1024 = vmul.f32 %v775, %v775
      %v1025 = vmul.f32 %v780, %v780
      %v1026 = vmul.f32 %v785, %v785
      %v1027 = vmul.f32 %v790, %v790
      %v1028 = vmul.f32 %v795, %v795
      %v1029 = vmul.f32 %v800, %v800
      %v1030 = vmul.f32 %v805, %v805
      %v1031 = vmul.f32 %v810, %v810
      %v1032 = vmul.f32 %v815, %v815
      %v1033 = vmul.f32 %v820, %v820
      %v1034 = vmul.f32 %v825, %v825
      %v1035 = vmul.f32 %v830, %v830
      %v1036 = vmul.f32 %v835, %v835
      %v1037 = vadd.f32 %v973, %v974
      %v1038 = vadd.f32 %v1037, %v975
      %v1039 = vadd.f32 %v1038, %v976
      %v1040 = vadd.f32 %v1039, %v977
      %v1041 = vadd.f32 %v1040, %v978
      %v1042 = vadd.f32 %v1041, %v979
      %v1043 = vadd.f32 %v1042, %v980
      %v1044 = vadd.f32 %v1043, %v981
      %v1045 = vadd.f32 %v1044, %v982
      %v1046 = vadd.f32 %v1045, %v983
      %v1047 = vadd.f32 %v1046, %v984
      %v1048 = vadd.f32 %v1047, %v985
      %v1049 = vadd.f32 %v1048, %v986
      %v1050 = vadd.f32 %v1049, %v987
      %v1051 = vadd.f32 %v1050, %v988
      %v1052 = vadd.f32 %v1051, %v989
      %v1053 = vadd.f32 %v1052, %v990
      %v1054 = vadd.f32 %v1053, %v991
      %v1055 = vadd.f32 %v1054, %v992
      %v1056 = vadd.f32 %v1055, %v993
      %v1057 = vadd.f32 %v1056, %v994
      %v1058 = vadd.f32 %v1057, %v995
      %v1059 = vadd.f32 %v1058, %v996
      %v1060 = vadd.f32 %v1059, %v997
      %v1061 = vadd.f32 %v1060, %v998
      %v1062 = vadd.f32 %v1061, %v999
      %v1063 = vadd.f32 %v1062, %v1000
      %v1064 = vadd.f32 %v1063, %v1001
      %v1065 = vadd.f32 %v1064, %v1002
      %v1066 = vadd.f32 %v1065, %v1003
      %v1067 = vadd.f32 %v1066, %v1004
      %v1068 = vadd.f32 %v1067, %v1005
      %v1069 = vadd.f32 %v1068, %v1006
      %v1070 = vadd.f32 %v1069, %v1007
      %v1071 = vadd.f32 %v1070, %v1008
      %v1072 = vadd.f32 %v1071, %v1009
      %v1073 = vadd.f32 %v1072, %v1010
      %v1074 = vadd.f32 %v1073, %v1011
      %v1075 = vadd.f32 %v1074, %v1012
      %v1076 = vadd.f32 %v1075, %v1013
      %v1077 = vadd.f32 %v1076, %v1014
      %v1078 = vadd.f32 %v1077, %v1015
      %v1079 = vadd.f32 %v1078, %v1016
      %v1080 = vadd.f32 %v1079, %v1017
      %v1081 = vadd.f32 %v1080, %v1018
      %v1082 = vadd.f32 %v1081, %v1019
      %v1083 = vadd.f32 %v1082, %v1020
      %v1084 = vadd.f32 %v1083, %v1021
      %v1085 = vadd.f32 %v1084, %v1022
      %v1086 = vadd.f32 %v1085, %v1023
      %v1087 = vadd.f32 %v1086, %v1024
      %v1088 = vadd.f32 %v1087, %v1025
      %v1089 = vadd.f32 %v1088, %v1026
      %v1090 = vadd.f32 %v1089, %v1027
      %v1091 = vadd.f32 %v1090, %v1028
      %v1092 = vadd.f32 %v1091, %v1029
      %v1093 = vadd.f32 %v1092, %v1030
      %v1094 = vadd.f32 %v1093, %v1031
      %v1095 = vadd.f32 %v1094, %v1032
      %v1096 = vadd.f32 %v1095, %v1033
      %v1097 = vadd.f32 %v1096, %v1034
      %v1098 = vadd.f32 %v1097, %v1035
      %v1099 = vadd.f32 %v1098, %v1036
      %v1100 = vadd.f32 %v972, %v1099
      %1101 = vst [vmem:[#allocation3] sm:$0xff] %v1100
      // Predicated region
      $region33: #{generator_forward.8} parent=27 // pred_check
        _
      $region34: #{generator_forward.8} parent=27 // pred_check_branch
        %1103 = sbr.rel (%p179) target = $region36
      $region35: #{generator_forward.8} parent=27 // pred_region
        %v1104 = vld [vmem:[#allocation2] sm:$0xff]
        %v1105 = vrot.slane %v1104, 4
        %v1106 = vadd.f32 %v1104, %v1105
        %v1107 = vrot.slane %v1106, 2
        %v1108 = vadd.f32 %v1106, %v1107
        %v1109 = vrot.slane %v1108, 1
        %v1110 = vadd.f32 %v1108, %v1109
        %v1111 = vld [vmem:[#allocation3] sm:$0xff]
        %v1112 = vrot.slane %v1111, 4
        %v1113 = vadd.f32 %v1111, %v1112
        %v1114 = vrot.slane %v1113, 2
        %v1115 = vadd.f32 %v1113, %v1114
        %v1116 = vrot.slane %v1115, 1
        %v1117 = vadd.f32 %v1115, %v1116
        %v1118 = vmul.f32 %v1110, 0.00048828125
        %v1119 = vmul.f32 %v1117, 0.00048828125
        %v1120 = vmul.f32 %v1118, %v1118
        %v1121 = vsub.f32 %v1119, %v1120
        %v1122 = vmax.f32 %v1121, 0.0
        %v1123 = vadd.f32 %v1122, 1e-05
        %v1124 = vrsqrt.pop %v1123
        %v1125 = vsub.f32 0.0, %v1118
        %v1126 = vmul.f32 %v1125, %v1124
        %v1127 = vld [vmem:[%s2] sm:$0xff]
        %v1128 = vld [vmem:[%s2 + $0x8] sm:$0xff]
        %v1129 = vld [vmem:[%s2 + $0x10] sm:$0xff]
        %v1130 = vld [vmem:[%s2 + $0x18] sm:$0xff]
        %v1131 = vld [vmem:[%s2 + $0x20] sm:$0xff]
        %v1132 = vld [vmem:[%s2 + $0x28] sm:$0xff]
        %v1133 = vld [vmem:[%s2 + $0x30] sm:$0xff]
        %v1134 = vld [vmem:[%s2 + $0x38] sm:$0xff]
        %v1135 = vld [vmem:[%s2 + $0x40] sm:$0xff]
        %v1136 = vld [vmem:[%s2 + $0x48] sm:$0xff]
        %v1137 = vld [vmem:[%s2 + $0x50] sm:$0xff]
        %v1138 = vld [vmem:[%s2 + $0x58] sm:$0xff]
        %v1139 = vld [vmem:[%s2 + $0x60] sm:$0xff]
        %v1140 = vld [vmem:[%s2 + $0x68] sm:$0xff]
        %v1141 = vld [vmem:[%s2 + $0x70] sm:$0xff]
        %v1142 = vld [vmem:[%s2 + $0x78] sm:$0xff]
        %v1143 = vld [vmem:[%s2 + $0x80] sm:$0xff]
        %v1144 = vld [vmem:[%s2 + $0x88] sm:$0xff]
        %v1145 = vld [vmem:[%s2 + $0x90] sm:$0xff]
        %v1146 = vld [vmem:[%s2 + $0x98] sm:$0xff]
        %v1147 = vld [vmem:[%s2 + $0xa0] sm:$0xff]
        %v1148 = vld [vmem:[%s2 + $0xa8] sm:$0xff]
        %v1149 = vld [vmem:[%s2 + $0xb0] sm:$0xff]
        %v1150 = vld [vmem:[%s2 + $0xb8] sm:$0xff]
        %v1151 = vld [vmem:[%s2 + $0xc0] sm:$0xff]
        %v1152 = vld [vmem:[%s2 + $0xc8] sm:$0xff]
        %v1153 = vld [vmem:[%s2 + $0xd0] sm:$0xff]
        %v1154 = vld [vmem:[%s2 + $0xd8] sm:$0xff]
        %v1155 = vld [vmem:[%s2 + $0xe0] sm:$0xff]
        %v1156 = vld [vmem:[%s2 + $0xe8] sm:$0xff]
        %v1157 = vld [vmem:[%s2 + $0xf0] sm:$0xff]
        %v1158 = vld [vmem:[%s2 + $0xf8] sm:$0xff]
        %v1159 = vld [vmem:[%s2 + $0x100] sm:$0xff]
        %v1160 = vld [vmem:[%s2 + $0x108] sm:$0xff]
        %v1161 = vld [vmem:[%s2 + $0x110] sm:$0xff]
        %v1162 = vld [vmem:[%s2 + $0x118] sm:$0xff]
        %v1163 = vld [vmem:[%s2 + $0x120] sm:$0xff]
        %v1164 = vld [vmem:[%s2 + $0x128] sm:$0xff]
        %v1165 = vld [vmem:[%s2 + $0x130] sm:$0xff]
        %v1166 = vld [vmem:[%s2 + $0x138] sm:$0xff]
        %v1167 = vld [vmem:[%s2 + $0x140] sm:$0xff]
        %v1168 = vld [vmem:[%s2 + $0x148] sm:$0xff]
        %v1169 = vld [vmem:[%s2 + $0x150] sm:$0xff]
        %v1170 = vld [vmem:[%s2 + $0x158] sm:$0xff]
        %v1171 = vld [vmem:[%s2 + $0x160] sm:$0xff]
        %v1172 = vld [vmem:[%s2 + $0x168] sm:$0xff]
        %v1173 = vld [vmem:[%s2 + $0x170] sm:$0xff]
        %v1174 = vld [vmem:[%s2 + $0x178] sm:$0xff]
        %v1175 = vld [vmem:[%s2 + $0x180] sm:$0xff]
        %v1176 = vld [vmem:[%s2 + $0x188] sm:$0xff]
        %v1177 = vld [vmem:[%s2 + $0x190] sm:$0xff]
        %v1178 = vld [vmem:[%s2 + $0x198] sm:$0xff]
        %v1179 = vld [vmem:[%s2 + $0x1a0] sm:$0xff]
        %v1180 = vld [vmem:[%s2 + $0x1a8] sm:$0xff]
        %v1181 = vld [vmem:[%s2 + $0x1b0] sm:$0xff]
        %v1182 = vld [vmem:[%s2 + $0x1b8] sm:$0xff]
        %v1183 = vld [vmem:[%s2 + $0x1c0] sm:$0xff]
        %v1184 = vld [vmem:[%s2 + $0x1c8] sm:$0xff]
        %v1185 = vld [vmem:[%s2 + $0x1d0] sm:$0xff]
        %v1186 = vld [vmem:[%s2 + $0x1d8] sm:$0xff]
        %v1187 = vld [vmem:[%s2 + $0x1e0] sm:$0xff]
        %v1188 = vld [vmem:[%s2 + $0x1e8] sm:$0xff]
        %v1189 = vld [vmem:[%s2 + $0x1f0] sm:$0xff]
        %v1190 = vld [vmem:[%s2 + $0x1f8] sm:$0xff]
        %v1191 = vld [vmem:[%s2 + $0x200] sm:$0xff]
        %v1192 = vld [vmem:[%s2 + $0x208] sm:$0xff]
        %v1193 = vld [vmem:[%s2 + $0x210] sm:$0xff]
        %v1194 = vld [vmem:[%s2 + $0x218] sm:$0xff]
        %v1195 = vld [vmem:[%s2 + $0x220] sm:$0xff]
        %v1196 = vld [vmem:[%s2 + $0x228] sm:$0xff]
        %v1197 = vld [vmem:[%s2 + $0x230] sm:$0xff]
        %v1198 = vld [vmem:[%s2 + $0x238] sm:$0xff]
        %v1199 = vld [vmem:[%s2 + $0x240] sm:$0xff]
        %v1200 = vld [vmem:[%s2 + $0x248] sm:$0xff]
        %v1201 = vld [vmem:[%s2 + $0x250] sm:$0xff]
        %v1202 = vld [vmem:[%s2 + $0x258] sm:$0xff]
        %v1203 = vld [vmem:[%s2 + $0x260] sm:$0xff]
        %v1204 = vld [vmem:[%s2 + $0x268] sm:$0xff]
        %v1205 = vld [vmem:[%s2 + $0x270] sm:$0xff]
        %v1206 = vld [vmem:[%s2 + $0x278] sm:$0xff]
        %v1207 = vld [vmem:[%s2 + $0x280] sm:$0xff]
        %v1208 = vld [vmem:[%s2 + $0x288] sm:$0xff]
        %v1209 = vld [vmem:[%s2 + $0x290] sm:$0xff]
        %v1210 = vld [vmem:[%s2 + $0x298] sm:$0xff]
        %v1211 = vld [vmem:[%s2 + $0x2a0] sm:$0xff]
        %v1212 = vld [vmem:[%s2 + $0x2a8] sm:$0xff]
        %v1213 = vld [vmem:[%s2 + $0x2b0] sm:$0xff]
        %v1214 = vld [vmem:[%s2 + $0x2b8] sm:$0xff]
        %v1215 = vld [vmem:[%s2 + $0x2c0] sm:$0xff]
        %v1216 = vld [vmem:[%s2 + $0x2c8] sm:$0xff]
        %v1217 = vld [vmem:[%s2 + $0x2d0] sm:$0xff]
        %v1218 = vld [vmem:[%s2 + $0x2d8] sm:$0xff]
        %v1219 = vld [vmem:[%s2 + $0x2e0] sm:$0xff]
        %v1220 = vld [vmem:[%s2 + $0x2e8] sm:$0xff]
        %v1221 = vld [vmem:[%s2 + $0x2f0] sm:$0xff]
        %v1222 = vld [vmem:[%s2 + $0x2f8] sm:$0xff]
        %v1223 = vld [vmem:[%s2 + $0x300] sm:$0xff]
        %v1224 = vld [vmem:[%s2 + $0x308] sm:$0xff]
        %v1225 = vld [vmem:[%s2 + $0x310] sm:$0xff]
        %v1226 = vld [vmem:[%s2 + $0x318] sm:$0xff]
        %v1227 = vld [vmem:[%s2 + $0x320] sm:$0xff]
        %v1228 = vld [vmem:[%s2 + $0x328] sm:$0xff]
        %v1229 = vld [vmem:[%s2 + $0x330] sm:$0xff]
        %v1230 = vld [vmem:[%s2 + $0x338] sm:$0xff]
        %v1231 = vld [vmem:[%s2 + $0x340] sm:$0xff]
        %v1232 = vld [vmem:[%s2 + $0x348] sm:$0xff]
        %v1233 = vld [vmem:[%s2 + $0x350] sm:$0xff]
        %v1234 = vld [vmem:[%s2 + $0x358] sm:$0xff]
        %v1235 = vld [vmem:[%s2 + $0x360] sm:$0xff]
        %v1236 = vld [vmem:[%s2 + $0x368] sm:$0xff]
        %v1237 = vld [vmem:[%s2 + $0x370] sm:$0xff]
        %v1238 = vld [vmem:[%s2 + $0x378] sm:$0xff]
        %v1239 = vld [vmem:[%s2 + $0x380] sm:$0xff]
        %v1240 = vld [vmem:[%s2 + $0x388] sm:$0xff]
        %v1241 = vld [vmem:[%s2 + $0x390] sm:$0xff]
        %v1242 = vld [vmem:[%s2 + $0x398] sm:$0xff]
        %v1243 = vld [vmem:[%s2 + $0x3a0] sm:$0xff]
        %v1244 = vld [vmem:[%s2 + $0x3a8] sm:$0xff]
        %v1245 = vld [vmem:[%s2 + $0x3b0] sm:$0xff]
        %v1246 = vld [vmem:[%s2 + $0x3b8] sm:$0xff]
        %v1247 = vld [vmem:[%s2 + $0x3c0] sm:$0xff]
        %v1248 = vld [vmem:[%s2 + $0x3c8] sm:$0xff]
        %v1249 = vld [vmem:[%s2 + $0x3d0] sm:$0xff]
        %v1250 = vld [vmem:[%s2 + $0x3d8] sm:$0xff]
        %v1251 = vld [vmem:[%s2 + $0x3e0] sm:$0xff]
        %v1252 = vld [vmem:[%s2 + $0x3e8] sm:$0xff]
        %v1253 = vld [vmem:[%s2 + $0x3f0] sm:$0xff]
        %v1254 = vld [vmem:[%s2 + $0x3f8] sm:$0xff]
        %v1255 = vld [vmem:[%s2 + $0x400] sm:$0xff]
        %v1256 = vld [vmem:[%s2 + $0x408] sm:$0xff]
        %v1257 = vld [vmem:[%s2 + $0x410] sm:$0xff]
        %v1258 = vld [vmem:[%s2 + $0x418] sm:$0xff]
        %v1259 = vld [vmem:[%s2 + $0x420] sm:$0xff]
        %v1260 = vld [vmem:[%s2 + $0x428] sm:$0xff]
        %v1261 = vld [vmem:[%s2 + $0x430] sm:$0xff]
        %v1262 = vld [vmem:[%s2 + $0x438] sm:$0xff]
        %v1263 = vld [vmem:[%s2 + $0x440] sm:$0xff]
        %v1264 = vld [vmem:[%s2 + $0x448] sm:$0xff]
        %v1265 = vld [vmem:[%s2 + $0x450] sm:$0xff]
        %v1266 = vld [vmem:[%s2 + $0x458] sm:$0xff]
        %v1267 = vld [vmem:[%s2 + $0x460] sm:$0xff]
        %v1268 = vld [vmem:[%s2 + $0x468] sm:$0xff]
        %v1269 = vld [vmem:[%s2 + $0x470] sm:$0xff]
        %v1270 = vld [vmem:[%s2 + $0x478] sm:$0xff]
        %v1271 = vld [vmem:[%s2 + $0x480] sm:$0xff]
        %v1272 = vld [vmem:[%s2 + $0x488] sm:$0xff]
        %v1273 = vld [vmem:[%s2 + $0x490] sm:$0xff]
        %v1274 = vld [vmem:[%s2 + $0x498] sm:$0xff]
        %v1275 = vld [vmem:[%s2 + $0x4a0] sm:$0xff]
        %v1276 = vld [vmem:[%s2 + $0x4a8] sm:$0xff]
        %v1277 = vld [vmem:[%s2 + $0x4b0] sm:$0xff]
        %v1278 = vld [vmem:[%s2 + $0x4b8] sm:$0xff]
        %v1279 = vld [vmem:[%s2 + $0x4c0] sm:$0xff]
        %v1280 = vld [vmem:[%s2 + $0x4c8] sm:$0xff]
        %v1281 = vld [vmem:[%s2 + $0x4d0] sm:$0xff]
        %v1282 = vld [vmem:[%s2 + $0x4d8] sm:$0xff]
        %v1283 = vld [vmem:[%s2 + $0x4e0] sm:$0xff]
        %v1284 = vld [vmem:[%s2 + $0x4e8] sm:$0xff]
        %v1285 = vld [vmem:[%s2 + $0x4f0] sm:$0xff]
        %v1286 = vld [vmem:[%s2 + $0x4f8] sm:$0xff]
        %v1287 = vld [vmem:[%s2 + $0x500] sm:$0xff]
        %v1288 = vld [vmem:[%s2 + $0x508] sm:$0xff]
        %v1289 = vld [vmem:[%s2 + $0x510] sm:$0xff]
        %v1290 = vld [vmem:[%s2 + $0x518] sm:$0xff]
        %v1291 = vld [vmem:[%s2 + $0x520] sm:$0xff]
        %v1292 = vld [vmem:[%s2 + $0x528] sm:$0xff]
        %v1293 = vld [vmem:[%s2 + $0x530] sm:$0xff]
        %v1294 = vld [vmem:[%s2 + $0x538] sm:$0xff]
        %v1295 = vld [vmem:[%s2 + $0x540] sm:$0xff]
        %v1296 = vld [vmem:[%s2 + $0x548] sm:$0xff]
        %v1297 = vld [vmem:[%s2 + $0x550] sm:$0xff]
        %v1298 = vld [vmem:[%s2 + $0x558] sm:$0xff]
        %v1299 = vld [vmem:[%s2 + $0x560] sm:$0xff]
        %v1300 = vld [vmem:[%s2 + $0x568] sm:$0xff]
        %v1301 = vld [vmem:[%s2 + $0x570] sm:$0xff]
        %v1302 = vld [vmem:[%s2 + $0x578] sm:$0xff]
        %v1303 = vld [vmem:[%s2 + $0x580] sm:$0xff]
        %v1304 = vld [vmem:[%s2 + $0x588] sm:$0xff]
        %v1305 = vld [vmem:[%s2 + $0x590] sm:$0xff]
        %v1306 = vld [vmem:[%s2 + $0x598] sm:$0xff]
        %v1307 = vld [vmem:[%s2 + $0x5a0] sm:$0xff]
        %v1308 = vld [vmem:[%s2 + $0x5a8] sm:$0xff]
        %v1309 = vld [vmem:[%s2 + $0x5b0] sm:$0xff]
        %v1310 = vld [vmem:[%s2 + $0x5b8] sm:$0xff]
        %v1311 = vld [vmem:[%s2 + $0x5c0] sm:$0xff]
        %v1312 = vld [vmem:[%s2 + $0x5c8] sm:$0xff]
        %v1313 = vld [vmem:[%s2 + $0x5d0] sm:$0xff]
        %v1314 = vld [vmem:[%s2 + $0x5d8] sm:$0xff]
        %v1315 = vld [vmem:[%s2 + $0x5e0] sm:$0xff]
        %v1316 = vld [vmem:[%s2 + $0x5e8] sm:$0xff]
        %v1317 = vld [vmem:[%s2 + $0x5f0] sm:$0xff]
        %v1318 = vld [vmem:[%s2 + $0x5f8] sm:$0xff]
        %v1319 = vld [vmem:[%s2 + $0x600] sm:$0xff]
        %v1320 = vld [vmem:[%s2 + $0x608] sm:$0xff]
        %v1321 = vld [vmem:[%s2 + $0x610] sm:$0xff]
        %v1322 = vld [vmem:[%s2 + $0x618] sm:$0xff]
        %v1323 = vld [vmem:[%s2 + $0x620] sm:$0xff]
        %v1324 = vld [vmem:[%s2 + $0x628] sm:$0xff]
        %v1325 = vld [vmem:[%s2 + $0x630] sm:$0xff]
        %v1326 = vld [vmem:[%s2 + $0x638] sm:$0xff]
        %v1327 = vld [vmem:[%s2 + $0x640] sm:$0xff]
        %v1328 = vld [vmem:[%s2 + $0x648] sm:$0xff]
        %v1329 = vld [vmem:[%s2 + $0x650] sm:$0xff]
        %v1330 = vld [vmem:[%s2 + $0x658] sm:$0xff]
        %v1331 = vld [vmem:[%s2 + $0x660] sm:$0xff]
        %v1332 = vld [vmem:[%s2 + $0x668] sm:$0xff]
        %v1333 = vld [vmem:[%s2 + $0x670] sm:$0xff]
        %v1334 = vld [vmem:[%s2 + $0x678] sm:$0xff]
        %v1335 = vld [vmem:[%s2 + $0x680] sm:$0xff]
        %v1336 = vld [vmem:[%s2 + $0x688] sm:$0xff]
        %v1337 = vld [vmem:[%s2 + $0x690] sm:$0xff]
        %v1338 = vld [vmem:[%s2 + $0x698] sm:$0xff]
        %v1339 = vld [vmem:[%s2 + $0x6a0] sm:$0xff]
        %v1340 = vld [vmem:[%s2 + $0x6a8] sm:$0xff]
        %v1341 = vld [vmem:[%s2 + $0x6b0] sm:$0xff]
        %v1342 = vld [vmem:[%s2 + $0x6b8] sm:$0xff]
        %v1343 = vld [vmem:[%s2 + $0x6c0] sm:$0xff]
        %v1344 = vld [vmem:[%s2 + $0x6c8] sm:$0xff]
        %v1345 = vld [vmem:[%s2 + $0x6d0] sm:$0xff]
        %v1346 = vld [vmem:[%s2 + $0x6d8] sm:$0xff]
        %v1347 = vld [vmem:[%s2 + $0x6e0] sm:$0xff]
        %v1348 = vld [vmem:[%s2 + $0x6e8] sm:$0xff]
        %v1349 = vld [vmem:[%s2 + $0x6f0] sm:$0xff]
        %v1350 = vld [vmem:[%s2 + $0x6f8] sm:$0xff]
        %v1351 = vld [vmem:[%s2 + $0x700] sm:$0xff]
        %v1352 = vld [vmem:[%s2 + $0x708] sm:$0xff]
        %v1353 = vld [vmem:[%s2 + $0x710] sm:$0xff]
        %v1354 = vld [vmem:[%s2 + $0x718] sm:$0xff]
        %v1355 = vld [vmem:[%s2 + $0x720] sm:$0xff]
        %v1356 = vld [vmem:[%s2 + $0x728] sm:$0xff]
        %v1357 = vld [vmem:[%s2 + $0x730] sm:$0xff]
        %v1358 = vld [vmem:[%s2 + $0x738] sm:$0xff]
        %v1359 = vld [vmem:[%s2 + $0x740] sm:$0xff]
        %v1360 = vld [vmem:[%s2 + $0x748] sm:$0xff]
        %v1361 = vld [vmem:[%s2 + $0x750] sm:$0xff]
        %v1362 = vld [vmem:[%s2 + $0x758] sm:$0xff]
        %v1363 = vld [vmem:[%s2 + $0x760] sm:$0xff]
        %v1364 = vld [vmem:[%s2 + $0x768] sm:$0xff]
        %v1365 = vld [vmem:[%s2 + $0x770] sm:$0xff]
        %v1366 = vld [vmem:[%s2 + $0x778] sm:$0xff]
        %v1367 = vld [vmem:[%s2 + $0x780] sm:$0xff]
        %v1368 = vld [vmem:[%s2 + $0x788] sm:$0xff]
        %v1369 = vld [vmem:[%s2 + $0x790] sm:$0xff]
        %v1370 = vld [vmem:[%s2 + $0x798] sm:$0xff]
        %v1371 = vld [vmem:[%s2 + $0x7a0] sm:$0xff]
        %v1372 = vld [vmem:[%s2 + $0x7a8] sm:$0xff]
        %v1373 = vld [vmem:[%s2 + $0x7b0] sm:$0xff]
        %v1374 = vld [vmem:[%s2 + $0x7b8] sm:$0xff]
        %v1375 = vld [vmem:[%s2 + $0x7c0] sm:$0xff]
        %v1376 = vld [vmem:[%s2 + $0x7c8] sm:$0xff]
        %v1377 = vld [vmem:[%s2 + $0x7d0] sm:$0xff]
        %v1378 = vld [vmem:[%s2 + $0x7d8] sm:$0xff]
        %v1379 = vld [vmem:[%s2 + $0x7e0] sm:$0xff]
        %v1380 = vld [vmem:[%s2 + $0x7e8] sm:$0xff]
        %v1381 = vld [vmem:[%s2 + $0x7f0] sm:$0xff]
        %v1382 = vld [vmem:[%s2 + $0x7f8] sm:$0xff]
        %v1383 = vmul.f32 %v1127, %v1124
        %v1384 = vmul.f32 %v1128, %v1124
        %v1385 = vmul.f32 %v1129, %v1124
        %v1386 = vmul.f32 %v1130, %v1124
        %v1387 = vmul.f32 %v1131, %v1124
        %v1388 = vmul.f32 %v1132, %v1124
        %v1389 = vmul.f32 %v1133, %v1124
        %v1390 = vmul.f32 %v1134, %v1124
        %v1391 = vmul.f32 %v1135, %v1124
        %v1392 = vmul.f32 %v1136, %v1124
        %v1393 = vmul.f32 %v1137, %v1124
        %v1394 = vmul.f32 %v1138, %v1124
        %v1395 = vmul.f32 %v1139, %v1124
        %v1396 = vmul.f32 %v1140, %v1124
        %v1397 = vmul.f32 %v1141, %v1124
        %v1398 = vmul.f32 %v1142, %v1124
        %v1399 = vmul.f32 %v1143, %v1124
        %v1400 = vmul.f32 %v1144, %v1124
        %v1401 = vmul.f32 %v1145, %v1124
        %v1402 = vmul.f32 %v1146, %v1124
        %v1403 = vmul.f32 %v1147, %v1124
        %v1404 = vmul.f32 %v1148, %v1124
        %v1405 = vmul.f32 %v1149, %v1124
        %v1406 = vmul.f32 %v1150, %v1124
        %v1407 = vmul.f32 %v1151, %v1124
        %v1408 = vmul.f32 %v1152, %v1124
        %v1409 = vmul.f32 %v1153, %v1124
        %v1410 = vmul.f32 %v1154, %v1124
        %v1411 = vmul.f32 %v1155, %v1124
        %v1412 = vmul.f32 %v1156, %v1124
        %v1413 = vmul.f32 %v1157, %v1124
        %v1414 = vmul.f32 %v1158, %v1124
        %v1415 = vmul.f32 %v1159, %v1124
        %v1416 = vmul.f32 %v1160, %v1124
        %v1417 = vmul.f32 %v1161, %v1124
        %v1418 = vmul.f32 %v1162, %v1124
        %v1419 = vmul.f32 %v1163, %v1124
        %v1420 = vmul.f32 %v1164, %v1124
        %v1421 = vmul.f32 %v1165, %v1124
        %v1422 = vmul.f32 %v1166, %v1124
        %v1423 = vmul.f32 %v1167, %v1124
        %v1424 = vmul.f32 %v1168, %v1124
        %v1425 = vmul.f32 %v1169, %v1124
        %v1426 = vmul.f32 %v1170, %v1124
        %v1427 = vmul.f32 %v1171, %v1124
        %v1428 = vmul.f32 %v1172, %v1124
        %v1429 = vmul.f32 %v1173, %v1124
        %v1430 = vmul.f32 %v1174, %v1124
        %v1431 = vmul.f32 %v1175, %v1124
        %v1432 = vmul.f32 %v1176, %v1124
        %v1433 = vmul.f32 %v1177, %v1124
        %v1434 = vmul.f32 %v1178, %v1124
        %v1435 = vmul.f32 %v1179, %v1124
        %v1436 = vmul.f32 %v1180, %v1124
        %v1437 = vmul.f32 %v1181, %v1124
        %v1438 = vmul.f32 %v1182, %v1124
        %v1439 = vmul.f32 %v1183, %v1124
        %v1440 = vmul.f32 %v1184, %v1124
        %v1441 = vmul.f32 %v1185, %v1124
        %v1442 = vmul.f32 %v1186, %v1124
        %v1443 = vmul.f32 %v1187, %v1124
        %v1444 = vmul.f32 %v1188, %v1124
        %v1445 = vmul.f32 %v1189, %v1124
        %v1446 = vmul.f32 %v1190, %v1124
        %v1447 = vmul.f32 %v1191, %v1124
        %v1448 = vmul.f32 %v1192, %v1124
        %v1449 = vmul.f32 %v1193, %v1124
        %v1450 = vmul.f32 %v1194, %v1124
        %v1451 = vmul.f32 %v1195, %v1124
        %v1452 = vmul.f32 %v1196, %v1124
        %v1453 = vmul.f32 %v1197, %v1124
        %v1454 = vmul.f32 %v1198, %v1124
        %v1455 = vmul.f32 %v1199, %v1124
        %v1456 = vmul.f32 %v1200, %v1124
        %v1457 = vmul.f32 %v1201, %v1124
        %v1458 = vmul.f32 %v1202, %v1124
        %v1459 = vmul.f32 %v1203, %v1124
        %v1460 = vmul.f32 %v1204, %v1124
        %v1461 = vmul.f32 %v1205, %v1124
        %v1462 = vmul.f32 %v1206, %v1124
        %v1463 = vmul.f32 %v1207, %v1124
        %v1464 = vmul.f32 %v1208, %v1124
        %v1465 = vmul.f32 %v1209, %v1124
        %v1466 = vmul.f32 %v1210, %v1124
        %v1467 = vmul.f32 %v1211, %v1124
        %v1468 = vmul.f32 %v1212, %v1124
        %v1469 = vmul.f32 %v1213, %v1124
        %v1470 = vmul.f32 %v1214, %v1124
        %v1471 = vmul.f32 %v1215, %v1124
        %v1472 = vmul.f32 %v1216, %v1124
        %v1473 = vmul.f32 %v1217, %v1124
        %v1474 = vmul.f32 %v1218, %v1124
        %v1475 = vmul.f32 %v1219, %v1124
        %v1476 = vmul.f32 %v1220, %v1124
        %v1477 = vmul.f32 %v1221, %v1124
        %v1478 = vmul.f32 %v1222, %v1124
        %v1479 = vmul.f32 %v1223, %v1124
        %v1480 = vmul.f32 %v1224, %v1124
        %v1481 = vmul.f32 %v1225, %v1124
        %v1482 = vmul.f32 %v1226, %v1124
        %v1483 = vmul.f32 %v1227, %v1124
        %v1484 = vmul.f32 %v1228, %v1124
        %v1485 = vmul.f32 %v1229, %v1124
        %v1486 = vmul.f32 %v1230, %v1124
        %v1487 = vmul.f32 %v1231, %v1124
        %v1488 = vmul.f32 %v1232, %v1124
        %v1489 = vmul.f32 %v1233, %v1124
        %v1490 = vmul.f32 %v1234, %v1124
        %v1491 = vmul.f32 %v1235, %v1124
        %v1492 = vmul.f32 %v1236, %v1124
        %v1493 = vmul.f32 %v1237, %v1124
        %v1494 = vmul.f32 %v1238, %v1124
        %v1495 = vmul.f32 %v1239, %v1124
        %v1496 = vmul.f32 %v1240, %v1124
        %v1497 = vmul.f32 %v1241, %v1124
        %v1498 = vmul.f32 %v1242, %v1124
        %v1499 = vmul.f32 %v1243, %v1124
        %v1500 = vmul.f32 %v1244, %v1124
        %v1501 = vmul.f32 %v1245, %v1124
        %v1502 = vmul.f32 %v1246, %v1124
        %v1503 = vmul.f32 %v1247, %v1124
        %v1504 = vmul.f32 %v1248, %v1124
        %v1505 = vmul.f32 %v1249, %v1124
        %v1506 = vmul.f32 %v1250, %v1124
        %v1507 = vmul.f32 %v1251, %v1124
        %v1508 = vmul.f32 %v1252, %v1124
        %v1509 = vmul.f32 %v1253, %v1124
        %v1510 = vmul.f32 %v1254, %v1124
        %v1511 = vmul.f32 %v1255, %v1124
        %v1512 = vmul.f32 %v1256, %v1124
        %v1513 = vmul.f32 %v1257, %v1124
        %v1514 = vmul.f32 %v1258, %v1124
        %v1515 = vmul.f32 %v1259, %v1124
        %v1516 = vmul.f32 %v1260, %v1124
        %v1517 = vmul.f32 %v1261, %v1124
        %v1518 = vmul.f32 %v1262, %v1124
        %v1519 = vmul.f32 %v1263, %v1124
        %v1520 = vmul.f32 %v1264, %v1124
        %v1521 = vmul.f32 %v1265, %v1124
        %v1522 = vmul.f32 %v1266, %v1124
        %v1523 = vmul.f32 %v1267, %v1124
        %v1524 = vmul.f32 %v1268, %v1124
        %v1525 = vmul.f32 %v1269, %v1124
        %v1526 = vmul.f32 %v1270, %v1124
        %v1527 = vmul.f32 %v1271, %v1124
        %v1528 = vmul.f32 %v1272, %v1124
        %v1529 = vmul.f32 %v1273, %v1124
        %v1530 = vmul.f32 %v1274, %v1124
        %v1531 = vmul.f32 %v1275, %v1124
        %v1532 = vmul.f32 %v1276, %v1124
        %v1533 = vmul.f32 %v1277, %v1124
        %v1534 = vmul.f32 %v1278, %v1124
        %v1535 = vmul.f32 %v1279, %v1124
        %v1536 = vmul.f32 %v1280, %v1124
        %v1537 = vmul.f32 %v1281, %v1124
        %v1538 = vmul.f32 %v1282, %v1124
        %v1539 = vmul.f32 %v1283, %v1124
        %v1540 = vmul.f32 %v1284, %v1124
        %v1541 = vmul.f32 %v1285, %v1124
        %v1542 = vmul.f32 %v1286, %v1124
        %v1543 = vmul.f32 %v1287, %v1124
        %v1544 = vmul.f32 %v1288, %v1124
        %v1545 = vmul.f32 %v1289, %v1124
        %v1546 = vmul.f32 %v1290, %v1124
        %v1547 = vmul.f32 %v1291, %v1124
        %v1548 = vmul.f32 %v1292, %v1124
        %v1549 = vmul.f32 %v1293, %v1124
        %v1550 = vmul.f32 %v1294, %v1124
        %v1551 = vmul.f32 %v1295, %v1124
        %v1552 = vmul.f32 %v1296, %v1124
        %v1553 = vmul.f32 %v1297, %v1124
        %v1554 = vmul.f32 %v1298, %v1124
        %v1555 = vmul.f32 %v1299, %v1124
        %v1556 = vmul.f32 %v1300, %v1124
        %v1557 = vmul.f32 %v1301, %v1124
        %v1558 = vmul.f32 %v1302, %v1124
        %v1559 = vmul.f32 %v1303, %v1124
        %v1560 = vmul.f32 %v1304, %v1124
        %v1561 = vmul.f32 %v1305, %v1124
        %v1562 = vmul.f32 %v1306, %v1124
        %v1563 = vmul.f32 %v1307, %v1124
        %v1564 = vmul.f32 %v1308, %v1124
        %v1565 = vmul.f32 %v1309, %v1124
        %v1566 = vmul.f32 %v1310, %v1124
        %v1567 = vmul.f32 %v1311, %v1124
        %v1568 = vmul.f32 %v1312, %v1124
        %v1569 = vmul.f32 %v1313, %v1124
        %v1570 = vmul.f32 %v1314, %v1124
        %v1571 = vmul.f32 %v1315, %v1124
        %v1572 = vmul.f32 %v1316, %v1124
        %v1573 = vmul.f32 %v1317, %v1124
        %v1574 = vmul.f32 %v1318, %v1124
        %v1575 = vmul.f32 %v1319, %v1124
        %v1576 = vmul.f32 %v1320, %v1124
        %v1577 = vmul.f32 %v1321, %v1124
        %v1578 = vmul.f32 %v1322, %v1124
        %v1579 = vmul.f32 %v1323, %v1124
        %v1580 = vmul.f32 %v1324, %v1124
        %v1581 = vmul.f32 %v1325, %v1124
        %v1582 = vmul.f32 %v1326, %v1124
        %v1583 = vmul.f32 %v1327, %v1124
        %v1584 = vmul.f32 %v1328, %v1124
        %v1585 = vmul.f32 %v1329, %v1124
        %v1586 = vmul.f32 %v1330, %v1124
        %v1587 = vmul.f32 %v1331, %v1124
        %v1588 = vmul.f32 %v1332, %v1124
        %v1589 = vmul.f32 %v1333, %v1124
        %v1590 = vmul.f32 %v1334, %v1124
        %v1591 = vmul.f32 %v1335, %v1124
        %v1592 = vmul.f32 %v1336, %v1124
        %v1593 = vmul.f32 %v1337, %v1124
        %v1594 = vmul.f32 %v1338, %v1124
        %v1595 = vmul.f32 %v1339, %v1124
        %v1596 = vmul.f32 %v1340, %v1124
        %v1597 = vmul.f32 %v1341, %v1124
        %v1598 = vmul.f32 %v1342, %v1124
        %v1599 = vmul.f32 %v1343, %v1124
        %v1600 = vmul.f32 %v1344, %v1124
        %v1601 = vmul.f32 %v1345, %v1124
        %v1602 = vmul.f32 %v1346, %v1124
        %v1603 = vmul.f32 %v1347, %v1124
        %v1604 = vmul.f32 %v1348, %v1124
        %v1605 = vmul.f32 %v1349, %v1124
        %v1606 = vmul.f32 %v1350, %v1124
        %v1607 = vmul.f32 %v1351, %v1124
        %v1608 = vmul.f32 %v1352, %v1124
        %v1609 = vmul.f32 %v1353, %v1124
        %v1610 = vmul.f32 %v1354, %v1124
        %v1611 = vmul.f32 %v1355, %v1124
        %v1612 = vmul.f32 %v1356, %v1124
        %v1613 = vmul.f32 %v1357, %v1124
        %v1614 = vmul.f32 %v1358, %v1124
        %v1615 = vmul.f32 %v1359, %v1124
        %v1616 = vmul.f32 %v1360, %v1124
        %v1617 = vmul.f32 %v1361, %v1124
        %v1618 = vmul.f32 %v1362, %v1124
        %v1619 = vmul.f32 %v1363, %v1124
        %v1620 = vmul.f32 %v1364, %v1124
        %v1621 = vmul.f32 %v1365, %v1124
        %v1622 = vmul.f32 %v1366, %v1124
        %v1623 = vmul.f32 %v1367, %v1124
        %v1624 = vmul.f32 %v1368, %v1124
        %v1625 = vmul.f32 %v1369, %v1124
        %v1626 = vmul.f32 %v1370, %v1124
        %v1627 = vmul.f32 %v1371, %v1124
        %v1628 = vmul.f32 %v1372, %v1124
        %v1629 = vmul.f32 %v1373, %v1124
        %v1630 = vmul.f32 %v1374, %v1124
        %v1631 = vmul.f32 %v1375, %v1124
        %v1632 = vmul.f32 %v1376, %v1124
        %v1633 = vmul.f32 %v1377, %v1124
        %v1634 = vmul.f32 %v1378, %v1124
        %v1635 = vmul.f32 %v1379, %v1124
        %v1636 = vmul.f32 %v1380, %v1124
        %v1637 = vmul.f32 %v1381, %v1124
        %v1638 = vmul.f32 %v1382, %v1124
        %v1639 = vadd.f32 %v1383, %v1126
        %v1640 = vadd.f32 %v1384, %v1126
        %v1641 = vadd.f32 %v1385, %v1126
        %v1642 = vadd.f32 %v1386, %v1126
        %v1643 = vadd.f32 %v1387, %v1126
        %v1644 = vadd.f32 %v1388, %v1126
        %v1645 = vadd.f32 %v1389, %v1126
        %v1646 = vadd.f32 %v1390, %v1126
        %v1647 = vadd.f32 %v1391, %v1126
        %v1648 = vadd.f32 %v1392, %v1126
        %v1649 = vadd.f32 %v1393, %v1126
        %v1650 = vadd.f32 %v1394, %v1126
        %v1651 = vadd.f32 %v1395, %v1126
        %v1652 = vadd.f32 %v1396, %v1126
        %v1653 = vadd.f32 %v1397, %v1126
        %v1654 = vadd.f32 %v1398, %v1126
        %v1655 = vadd.f32 %v1399, %v1126
        %v1656 = vadd.f32 %v1400, %v1126
        %v1657 = vadd.f32 %v1401, %v1126
        %v1658 = vadd.f32 %v1402, %v1126
        %v1659 = vadd.f32 %v1403, %v1126
        %v1660 = vadd.f32 %v1404, %v1126
        %v1661 = vadd.f32 %v1405, %v1126
        %v1662 = vadd.f32 %v1406, %v1126
        %v1663 = vadd.f32 %v1407, %v1126
        %v1664 = vadd.f32 %v1408, %v1126
        %v1665 = vadd.f32 %v1409, %v1126
        %v1666 = vadd.f32 %v1410, %v1126
        %v1667 = vadd.f32 %v1411, %v1126
        %v1668 = vadd.f32 %v1412, %v1126
        %v1669 = vadd.f32 %v1413, %v1126
        %v1670 = vadd.f32 %v1414, %v1126
        %v1671 = vadd.f32 %v1415, %v1126
        %v1672 = vadd.f32 %v1416, %v1126
        %v1673 = vadd.f32 %v1417, %v1126
        %v1674 = vadd.f32 %v1418, %v1126
        %v1675 = vadd.f32 %v1419, %v1126
        %v1676 = vadd.f32 %v1420, %v1126
        %v1677 = vadd.f32 %v1421, %v1126
        %v1678 = vadd.f32 %v1422, %v1126
        %v1679 = vadd.f32 %v1423, %v1126
        %v1680 = vadd.f32 %v1424, %v1126
        %v1681 = vadd.f32 %v1425, %v1126
        %v1682 = vadd.f32 %v1426, %v1126
        %v1683 = vadd.f32 %v1427, %v1126
        %v1684 = vadd.f32 %v1428, %v1126
        %v1685 = vadd.f32 %v1429, %v1126
        %v1686 = vadd.f32 %v1430, %v1126
        %v1687 = vadd.f32 %v1431, %v1126
        %v1688 = vadd.f32 %v1432, %v1126
        %v1689 = vadd.f32 %v1433, %v1126
        %v1690 = vadd.f32 %v1434, %v1126
        %v1691 = vadd.f32 %v1435, %v1126
        %v1692 = vadd.f32 %v1436, %v1126
        %v1693 = vadd.f32 %v1437, %v1126
        %v1694 = vadd.f32 %v1438, %v1126
        %v1695 = vadd.f32 %v1439, %v1126
        %v1696 = vadd.f32 %v1440, %v1126
        %v1697 = vadd.f32 %v1441, %v1126
        %v1698 = vadd.f32 %v1442, %v1126
        %v1699 = vadd.f32 %v1443, %v1126
        %v1700 = vadd.f32 %v1444, %v1126
        %v1701 = vadd.f32 %v1445, %v1126
        %v1702 = vadd.f32 %v1446, %v1126
        %v1703 = vadd.f32 %v1447, %v1126
        %v1704 = vadd.f32 %v1448, %v1126
        %v1705 = vadd.f32 %v1449, %v1126
        %v1706 = vadd.f32 %v1450, %v1126
        %v1707 = vadd.f32 %v1451, %v1126
        %v1708 = vadd.f32 %v1452, %v1126
        %v1709 = vadd.f32 %v1453, %v1126
        %v1710 = vadd.f32 %v1454, %v1126
        %v1711 = vadd.f32 %v1455, %v1126
        %v1712 = vadd.f32 %v1456, %v1126
        %v1713 = vadd.f32 %v1457, %v1126
        %v1714 = vadd.f32 %v1458, %v1126
        %v1715 = vadd.f32 %v1459, %v1126
        %v1716 = vadd.f32 %v1460, %v1126
        %v1717 = vadd.f32 %v1461, %v1126
        %v1718 = vadd.f32 %v1462, %v1126
        %v1719 = vadd.f32 %v1463, %v1126
        %v1720 = vadd.f32 %v1464, %v1126
        %v1721 = vadd.f32 %v1465, %v1126
        %v1722 = vadd.f32 %v1466, %v1126
        %v1723 = vadd.f32 %v1467, %v1126
        %v1724 = vadd.f32 %v1468, %v1126
        %v1725 = vadd.f32 %v1469, %v1126
        %v1726 = vadd.f32 %v1470, %v1126
        %v1727 = vadd.f32 %v1471, %v1126
        %v1728 = vadd.f32 %v1472, %v1126
        %v1729 = vadd.f32 %v1473, %v1126
        %v1730 = vadd.f32 %v1474, %v1126
        %v1731 = vadd.f32 %v1475, %v1126
        %v1732 = vadd.f32 %v1476, %v1126
        %v1733 = vadd.f32 %v1477, %v1126
        %v1734 = vadd.f32 %v1478, %v1126
        %v1735 = vadd.f32 %v1479, %v1126
        %v1736 = vadd.f32 %v1480, %v1126
        %v1737 = vadd.f32 %v1481, %v1126
        %v1738 = vadd.f32 %v1482, %v1126
        %v1739 = vadd.f32 %v1483, %v1126
        %v1740 = vadd.f32 %v1484, %v1126
        %v1741 = vadd.f32 %v1485, %v1126
        %v1742 = vadd.f32 %v1486, %v1126
        %v1743 = vadd.f32 %v1487, %v1126
        %v1744 = vadd.f32 %v1488, %v1126
        %v1745 = vadd.f32 %v1489, %v1126
        %v1746 = vadd.f32 %v1490, %v1126
        %v1747 = vadd.f32 %v1491, %v1126
        %v1748 = vadd.f32 %v1492, %v1126
        %v1749 = vadd.f32 %v1493, %v1126
        %v1750 = vadd.f32 %v1494, %v1126
        %v1751 = vadd.f32 %v1495, %v1126
        %v1752 = vadd.f32 %v1496, %v1126
        %v1753 = vadd.f32 %v1497, %v1126
        %v1754 = vadd.f32 %v1498, %v1126
        %v1755 = vadd.f32 %v1499, %v1126
        %v1756 = vadd.f32 %v1500, %v1126
        %v1757 = vadd.f32 %v1501, %v1126
        %v1758 = vadd.f32 %v1502, %v1126
        %v1759 = vadd.f32 %v1503, %v1126
        %v1760 = vadd.f32 %v1504, %v1126
        %v1761 = vadd.f32 %v1505, %v1126
        %v1762 = vadd.f32 %v1506, %v1126
        %v1763 = vadd.f32 %v1507, %v1126
        %v1764 = vadd.f32 %v1508, %v1126
        %v1765 = vadd.f32 %v1509, %v1126
        %v1766 = vadd.f32 %v1510, %v1126
        %v1767 = vadd.f32 %v1511, %v1126
        %v1768 = vadd.f32 %v1512, %v1126
        %v1769 = vadd.f32 %v1513, %v1126
        %v1770 = vadd.f32 %v1514, %v1126
        %v1771 = vadd.f32 %v1515, %v1126
        %v1772 = vadd.f32 %v1516, %v1126
        %v1773 = vadd.f32 %v1517, %v1126
        %v1774 = vadd.f32 %v1518, %v1126
        %v1775 = vadd.f32 %v1519, %v1126
        %v1776 = vadd.f32 %v1520, %v1126
        %v1777 = vadd.f32 %v1521, %v1126
        %v1778 = vadd.f32 %v1522, %v1126
        %v1779 = vadd.f32 %v1523, %v1126
        %v1780 = vadd.f32 %v1524, %v1126
        %v1781 = vadd.f32 %v1525, %v1126
        %v1782 = vadd.f32 %v1526, %v1126
        %v1783 = vadd.f32 %v1527, %v1126
        %v1784 = vadd.f32 %v1528, %v1126
        %v1785 = vadd.f32 %v1529, %v1126
        %v1786 = vadd.f32 %v1530, %v1126
        %v1787 = vadd.f32 %v1531, %v1126
        %v1788 = vadd.f32 %v1532, %v1126
        %v1789 = vadd.f32 %v1533, %v1126
        %v1790 = vadd.f32 %v1534, %v1126
        %v1791 = vadd.f32 %v1535, %v1126
        %v1792 = vadd.f32 %v1536, %v1126
        %v1793 = vadd.f32 %v1537, %v1126
        %v1794 = vadd.f32 %v1538, %v1126
        %v1795 = vadd.f32 %v1539, %v1126
        %v1796 = vadd.f32 %v1540, %v1126
        %v1797 = vadd.f32 %v1541, %v1126
        %v1798 = vadd.f32 %v1542, %v1126
        %v1799 = vadd.f32 %v1543, %v1126
        %v1800 = vadd.f32 %v1544, %v1126
        %v1801 = vadd.f32 %v1545, %v1126
        %v1802 = vadd.f32 %v1546, %v1126
        %v1803 = vadd.f32 %v1547, %v1126
        %v1804 = vadd.f32 %v1548, %v1126
        %v1805 = vadd.f32 %v1549, %v1126
        %v1806 = vadd.f32 %v1550, %v1126
        %v1807 = vadd.f32 %v1551, %v1126
        %v1808 = vadd.f32 %v1552, %v1126
        %v1809 = vadd.f32 %v1553, %v1126
        %v1810 = vadd.f32 %v1554, %v1126
        %v1811 = vadd.f32 %v1555, %v1126
        %v1812 = vadd.f32 %v1556, %v1126
        %v1813 = vadd.f32 %v1557, %v1126
        %v1814 = vadd.f32 %v1558, %v1126
        %v1815 = vadd.f32 %v1559, %v1126
        %v1816 = vadd.f32 %v1560, %v1126
        %v1817 = vadd.f32 %v1561, %v1126
        %v1818 = vadd.f32 %v1562, %v1126
        %v1819 = vadd.f32 %v1563, %v1126
        %v1820 = vadd.f32 %v1564, %v1126
        %v1821 = vadd.f32 %v1565, %v1126
        %v1822 = vadd.f32 %v1566, %v1126
        %v1823 = vadd.f32 %v1567, %v1126
        %v1824 = vadd.f32 %v1568, %v1126
        %v1825 = vadd.f32 %v1569, %v1126
        %v1826 = vadd.f32 %v1570, %v1126
        %v1827 = vadd.f32 %v1571, %v1126
        %v1828 = vadd.f32 %v1572, %v1126
        %v1829 = vadd.f32 %v1573, %v1126
        %v1830 = vadd.f32 %v1574, %v1126
        %v1831 = vadd.f32 %v1575, %v1126
        %v1832 = vadd.f32 %v1576, %v1126
        %v1833 = vadd.f32 %v1577, %v1126
        %v1834 = vadd.f32 %v1578, %v1126
        %v1835 = vadd.f32 %v1579, %v1126
        %v1836 = vadd.f32 %v1580, %v1126
        %v1837 = vadd.f32 %v1581, %v1126
        %v1838 = vadd.f32 %v1582, %v1126
        %v1839 = vadd.f32 %v1583, %v1126
        %v1840 = vadd.f32 %v1584, %v1126
        %v1841 = vadd.f32 %v1585, %v1126
        %v1842 = vadd.f32 %v1586, %v1126
        %v1843 = vadd.f32 %v1587, %v1126
        %v1844 = vadd.f32 %v1588, %v1126
        %v1845 = vadd.f32 %v1589, %v1126
        %v1846 = vadd.f32 %v1590, %v1126
        %v1847 = vadd.f32 %v1591, %v1126
        %v1848 = vadd.f32 %v1592, %v1126
        %v1849 = vadd.f32 %v1593, %v1126
        %v1850 = vadd.f32 %v1594, %v1126
        %v1851 = vadd.f32 %v1595, %v1126
        %v1852 = vadd.f32 %v1596, %v1126
        %v1853 = vadd.f32 %v1597, %v1126
        %v1854 = vadd.f32 %v1598, %v1126
        %v1855 = vadd.f32 %v1599, %v1126
        %v1856 = vadd.f32 %v1600, %v1126
        %v1857 = vadd.f32 %v1601, %v1126
        %v1858 = vadd.f32 %v1602, %v1126
        %v1859 = vadd.f32 %v1603, %v1126
        %v1860 = vadd.f32 %v1604, %v1126
        %v1861 = vadd.f32 %v1605, %v1126
        %v1862 = vadd.f32 %v1606, %v1126
        %v1863 = vadd.f32 %v1607, %v1126
        %v1864 = vadd.f32 %v1608, %v1126
        %v1865 = vadd.f32 %v1609, %v1126
        %v1866 = vadd.f32 %v1610, %v1126
        %v1867 = vadd.f32 %v1611, %v1126
        %v1868 = vadd.f32 %v1612, %v1126
        %v1869 = vadd.f32 %v1613, %v1126
        %v1870 = vadd.f32 %v1614, %v1126
        %v1871 = vadd.f32 %v1615, %v1126
        %v1872 = vadd.f32 %v1616, %v1126
        %v1873 = vadd.f32 %v1617, %v1126
        %v1874 = vadd.f32 %v1618, %v1126
        %v1875 = vadd.f32 %v1619, %v1126
        %v1876 = vadd.f32 %v1620, %v1126
        %v1877 = vadd.f32 %v1621, %v1126
        %v1878 = vadd.f32 %v1622, %v1126
        %v1879 = vadd.f32 %v1623, %v1126
        %v1880 = vadd.f32 %v1624, %v1126
        %v1881 = vadd.f32 %v1625, %v1126
        %v1882 = vadd.f32 %v1626, %v1126
        %v1883 = vadd.f32 %v1627, %v1126
        %v1884 = vadd.f32 %v1628, %v1126
        %v1885 = vadd.f32 %v1629, %v1126
        %v1886 = vadd.f32 %v1630, %v1126
        %v1887 = vadd.f32 %v1631, %v1126
        %v1888 = vadd.f32 %v1632, %v1126
        %v1889 = vadd.f32 %v1633, %v1126
        %v1890 = vadd.f32 %v1634, %v1126
        %v1891 = vadd.f32 %v1635, %v1126
        %v1892 = vadd.f32 %v1636, %v1126
        %v1893 = vadd.f32 %v1637, %v1126
        %v1894 = vadd.f32 %v1638, %v1126
        %v1895 = vmax.f32 %v1639, 0.0
        %v1896 = vmax.f32 %v1640, 0.0
        %v1897 = vmax.f32 %v1641, 0.0
        %v1898 = vmax.f32 %v1642, 0.0
        %v1899 = vmax.f32 %v1643, 0.0
        %v1900 = vmax.f32 %v1644, 0.0
        %v1901 = vmax.f32 %v1645, 0.0
        %v1902 = vmax.f32 %v1646, 0.0
        %v1903 = vmax.f32 %v1647, 0.0
        %v1904 = vmax.f32 %v1648, 0.0
        %v1905 = vmax.f32 %v1649, 0.0
        %v1906 = vmax.f32 %v1650, 0.0
        %v1907 = vmax.f32 %v1651, 0.0
        %v1908 = vmax.f32 %v1652, 0.0
        %v1909 = vmax.f32 %v1653, 0.0
        %v1910 = vmax.f32 %v1654, 0.0
        %v1911 = vmax.f32 %v1655, 0.0
        %v1912 = vmax.f32 %v1656, 0.0
        %v1913 = vmax.f32 %v1657, 0.0
        %v1914 = vmax.f32 %v1658, 0.0
        %v1915 = vmax.f32 %v1659, 0.0
        %v1916 = vmax.f32 %v1660, 0.0
        %v1917 = vmax.f32 %v1661, 0.0
        %v1918 = vmax.f32 %v1662, 0.0
        %v1919 = vmax.f32 %v1663, 0.0
        %v1920 = vmax.f32 %v1664, 0.0
        %v1921 = vmax.f32 %v1665, 0.0
        %v1922 = vmax.f32 %v1666, 0.0
        %v1923 = vmax.f32 %v1667, 0.0
        %v1924 = vmax.f32 %v1668, 0.0
        %v1925 = vmax.f32 %v1669, 0.0
        %v1926 = vmax.f32 %v1670, 0.0
        %v1927 = vmax.f32 %v1671, 0.0
        %v1928 = vmax.f32 %v1672, 0.0
        %v1929 = vmax.f32 %v1673, 0.0
        %v1930 = vmax.f32 %v1674, 0.0
        %v1931 = vmax.f32 %v1675, 0.0
        %v1932 = vmax.f32 %v1676, 0.0
        %v1933 = vmax.f32 %v1677, 0.0
        %v1934 = vmax.f32 %v1678, 0.0
        %v1935 = vmax.f32 %v1679, 0.0
        %v1936 = vmax.f32 %v1680, 0.0
        %v1937 = vmax.f32 %v1681, 0.0
        %v1938 = vmax.f32 %v1682, 0.0
        %v1939 = vmax.f32 %v1683, 0.0
        %v1940 = vmax.f32 %v1684, 0.0
        %v1941 = vmax.f32 %v1685, 0.0
        %v1942 = vmax.f32 %v1686, 0.0
        %v1943 = vmax.f32 %v1687, 0.0
        %v1944 = vmax.f32 %v1688, 0.0
        %v1945 = vmax.f32 %v1689, 0.0
        %v1946 = vmax.f32 %v1690, 0.0
        %v1947 = vmax.f32 %v1691, 0.0
        %v1948 = vmax.f32 %v1692, 0.0
        %v1949 = vmax.f32 %v1693, 0.0
        %v1950 = vmax.f32 %v1694, 0.0
        %v1951 = vmax.f32 %v1695, 0.0
        %v1952 = vmax.f32 %v1696, 0.0
        %v1953 = vmax.f32 %v1697, 0.0
        %v1954 = vmax.f32 %v1698, 0.0
        %v1955 = vmax.f32 %v1699, 0.0
        %v1956 = vmax.f32 %v1700, 0.0
        %v1957 = vmax.f32 %v1701, 0.0
        %v1958 = vmax.f32 %v1702, 0.0
        %v1959 = vmax.f32 %v1703, 0.0
        %v1960 = vmax.f32 %v1704, 0.0
        %v1961 = vmax.f32 %v1705, 0.0
        %v1962 = vmax.f32 %v1706, 0.0
        %v1963 = vmax.f32 %v1707, 0.0
        %v1964 = vmax.f32 %v1708, 0.0
        %v1965 = vmax.f32 %v1709, 0.0
        %v1966 = vmax.f32 %v1710, 0.0
        %v1967 = vmax.f32 %v1711, 0.0
        %v1968 = vmax.f32 %v1712, 0.0
        %v1969 = vmax.f32 %v1713, 0.0
        %v1970 = vmax.f32 %v1714, 0.0
        %v1971 = vmax.f32 %v1715, 0.0
        %v1972 = vmax.f32 %v1716, 0.0
        %v1973 = vmax.f32 %v1717, 0.0
        %v1974 = vmax.f32 %v1718, 0.0
        %v1975 = vmax.f32 %v1719, 0.0
        %v1976 = vmax.f32 %v1720, 0.0
        %v1977 = vmax.f32 %v1721, 0.0
        %v1978 = vmax.f32 %v1722, 0.0
        %v1979 = vmax.f32 %v1723, 0.0
        %v1980 = vmax.f32 %v1724, 0.0
        %v1981 = vmax.f32 %v1725, 0.0
        %v1982 = vmax.f32 %v1726, 0.0
        %v1983 = vmax.f32 %v1727, 0.0
        %v1984 = vmax.f32 %v1728, 0.0
        %v1985 = vmax.f32 %v1729, 0.0
        %v1986 = vmax.f32 %v1730, 0.0
        %v1987 = vmax.f32 %v1731, 0.0
        %v1988 = vmax.f32 %v1732, 0.0
        %v1989 = vmax.f32 %v1733, 0.0
        %v1990 = vmax.f32 %v1734, 0.0
        %v1991 = vmax.f32 %v1735, 0.0
        %v1992 = vmax.f32 %v1736, 0.0
        %v1993 = vmax.f32 %v1737, 0.0
        %v1994 = vmax.f32 %v1738, 0.0
        %v1995 = vmax.f32 %v1739, 0.0
        %v1996 = vmax.f32 %v1740, 0.0
        %v1997 = vmax.f32 %v1741, 0.0
        %v1998 = vmax.f32 %v1742, 0.0
        %v1999 = vmax.f32 %v1743, 0.0
        %v2000 = vmax.f32 %v1744, 0.0
        %v2001 = vmax.f32 %v1745, 0.0
        %v2002 = vmax.f32 %v1746, 0.0
        %v2003 = vmax.f32 %v1747, 0.0
        %v2004 = vmax.f32 %v1748, 0.0
        %v2005 = vmax.f32 %v1749, 0.0
        %v2006 = vmax.f32 %v1750, 0.0
        %v2007 = vmax.f32 %v1751, 0.0
        %v2008 = vmax.f32 %v1752, 0.0
        %v2009 = vmax.f32 %v1753, 0.0
        %v2010 = vmax.f32 %v1754, 0.0
        %v2011 = vmax.f32 %v1755, 0.0
        %v2012 = vmax.f32 %v1756, 0.0
        %v2013 = vmax.f32 %v1757, 0.0
        %v2014 = vmax.f32 %v1758, 0.0
        %v2015 = vmax.f32 %v1759, 0.0
        %v2016 = vmax.f32 %v1760, 0.0
        %v2017 = vmax.f32 %v1761, 0.0
        %v2018 = vmax.f32 %v1762, 0.0
        %v2019 = vmax.f32 %v1763, 0.0
        %v2020 = vmax.f32 %v1764, 0.0
        %v2021 = vmax.f32 %v1765, 0.0
        %v2022 = vmax.f32 %v1766, 0.0
        %v2023 = vmax.f32 %v1767, 0.0
        %v2024 = vmax.f32 %v1768, 0.0
        %v2025 = vmax.f32 %v1769, 0.0
        %v2026 = vmax.f32 %v1770, 0.0
        %v2027 = vmax.f32 %v1771, 0.0
        %v2028 = vmax.f32 %v1772, 0.0
        %v2029 = vmax.f32 %v1773, 0.0
        %v2030 = vmax.f32 %v1774, 0.0
        %v2031 = vmax.f32 %v1775, 0.0
        %v2032 = vmax.f32 %v1776, 0.0
        %v2033 = vmax.f32 %v1777, 0.0
        %v2034 = vmax.f32 %v1778, 0.0
        %v2035 = vmax.f32 %v1779, 0.0
        %v2036 = vmax.f32 %v1780, 0.0
        %v2037 = vmax.f32 %v1781, 0.0
        %v2038 = vmax.f32 %v1782, 0.0
        %v2039 = vmax.f32 %v1783, 0.0
        %v2040 = vmax.f32 %v1784, 0.0
        %v2041 = vmax.f32 %v1785, 0.0
        %v2042 = vmax.f32 %v1786, 0.0
        %v2043 = vmax.f32 %v1787, 0.0
        %v2044 = vmax.f32 %v1788, 0.0
        %v2045 = vmax.f32 %v1789, 0.0
        %v2046 = vmax.f32 %v1790, 0.0
        %v2047 = vmax.f32 %v1791, 0.0
        %v2048 = vmax.f32 %v1792, 0.0
        %v2049 = vmax.f32 %v1793, 0.0
        %v2050 = vmax.f32 %v1794, 0.0
        %v2051 = vmax.f32 %v1795, 0.0
        %v2052 = vmax.f32 %v1796, 0.0
        %v2053 = vmax.f32 %v1797, 0.0
        %v2054 = vmax.f32 %v1798, 0.0
        %v2055 = vmax.f32 %v1799, 0.0
        %v2056 = vmax.f32 %v1800, 0.0
        %v2057 = vmax.f32 %v1801, 0.0
        %v2058 = vmax.f32 %v1802, 0.0
        %v2059 = vmax.f32 %v1803, 0.0
        %v2060 = vmax.f32 %v1804, 0.0
        %v2061 = vmax.f32 %v1805, 0.0
        %v2062 = vmax.f32 %v1806, 0.0
        %v2063 = vmax.f32 %v1807, 0.0
        %v2064 = vmax.f32 %v1808, 0.0
        %v2065 = vmax.f32 %v1809, 0.0
        %v2066 = vmax.f32 %v1810, 0.0
        %v2067 = vmax.f32 %v1811, 0.0
        %v2068 = vmax.f32 %v1812, 0.0
        %v2069 = vmax.f32 %v1813, 0.0
        %v2070 = vmax.f32 %v1814, 0.0
        %v2071 = vmax.f32 %v1815, 0.0
        %v2072 = vmax.f32 %v1816, 0.0
        %v2073 = vmax.f32 %v1817, 0.0
        %v2074 = vmax.f32 %v1818, 0.0
        %v2075 = vmax.f32 %v1819, 0.0
        %v2076 = vmax.f32 %v1820, 0.0
        %v2077 = vmax.f32 %v1821, 0.0
        %v2078 = vmax.f32 %v1822, 0.0
        %v2079 = vmax.f32 %v1823, 0.0
        %v2080 = vmax.f32 %v1824, 0.0
        %v2081 = vmax.f32 %v1825, 0.0
        %v2082 = vmax.f32 %v1826, 0.0
        %v2083 = vmax.f32 %v1827, 0.0
        %v2084 = vmax.f32 %v1828, 0.0
        %v2085 = vmax.f32 %v1829, 0.0
        %v2086 = vmax.f32 %v1830, 0.0
        %v2087 = vmax.f32 %v1831, 0.0
        %v2088 = vmax.f32 %v1832, 0.0
        %v2089 = vmax.f32 %v1833, 0.0
        %v2090 = vmax.f32 %v1834, 0.0
        %v2091 = vmax.f32 %v1835, 0.0
        %v2092 = vmax.f32 %v1836, 0.0
        %v2093 = vmax.f32 %v1837, 0.0
        %v2094 = vmax.f32 %v1838, 0.0
        %v2095 = vmax.f32 %v1839, 0.0
        %v2096 = vmax.f32 %v1840, 0.0
        %v2097 = vmax.f32 %v1841, 0.0
        %v2098 = vmax.f32 %v1842, 0.0
        %v2099 = vmax.f32 %v1843, 0.0
        %v2100 = vmax.f32 %v1844, 0.0
        %v2101 = vmax.f32 %v1845, 0.0
        %v2102 = vmax.f32 %v1846, 0.0
        %v2103 = vmax.f32 %v1847, 0.0
        %v2104 = vmax.f32 %v1848, 0.0
        %v2105 = vmax.f32 %v1849, 0.0
        %v2106 = vmax.f32 %v1850, 0.0
        %v2107 = vmax.f32 %v1851, 0.0
        %v2108 = vmax.f32 %v1852, 0.0
        %v2109 = vmax.f32 %v1853, 0.0
        %v2110 = vmax.f32 %v1854, 0.0
        %v2111 = vmax.f32 %v1855, 0.0
        %v2112 = vmax.f32 %v1856, 0.0
        %v2113 = vmax.f32 %v1857, 0.0
        %v2114 = vmax.f32 %v1858, 0.0
        %v2115 = vmax.f32 %v1859, 0.0
        %v2116 = vmax.f32 %v1860, 0.0
        %v2117 = vmax.f32 %v1861, 0.0
        %v2118 = vmax.f32 %v1862, 0.0
        %v2119 = vmax.f32 %v1863, 0.0
        %v2120 = vmax.f32 %v1864, 0.0
        %v2121 = vmax.f32 %v1865, 0.0
        %v2122 = vmax.f32 %v1866, 0.0
        %v2123 = vmax.f32 %v1867, 0.0
        %v2124 = vmax.f32 %v1868, 0.0
        %v2125 = vmax.f32 %v1869, 0.0
        %v2126 = vmax.f32 %v1870, 0.0
        %v2127 = vmax.f32 %v1871, 0.0
        %v2128 = vmax.f32 %v1872, 0.0
        %v2129 = vmax.f32 %v1873, 0.0
        %v2130 = vmax.f32 %v1874, 0.0
        %v2131 = vmax.f32 %v1875, 0.0
        %v2132 = vmax.f32 %v1876, 0.0
        %v2133 = vmax.f32 %v1877, 0.0
        %v2134 = vmax.f32 %v1878, 0.0
        %v2135 = vmax.f32 %v1879, 0.0
        %v2136 = vmax.f32 %v1880, 0.0
        %v2137 = vmax.f32 %v1881, 0.0
        %v2138 = vmax.f32 %v1882, 0.0
        %v2139 = vmax.f32 %v1883, 0.0
        %v2140 = vmax.f32 %v1884, 0.0
        %v2141 = vmax.f32 %v1885, 0.0
        %v2142 = vmax.f32 %v1886, 0.0
        %v2143 = vmax.f32 %v1887, 0.0
        %v2144 = vmax.f32 %v1888, 0.0
        %v2145 = vmax.f32 %v1889, 0.0
        %v2146 = vmax.f32 %v1890, 0.0
        %v2147 = vmax.f32 %v1891, 0.0
        %v2148 = vmax.f32 %v1892, 0.0
        %v2149 = vmax.f32 %v1893, 0.0
        %v2150 = vmax.f32 %v1894, 0.0
        %2151 = vst [vmem:[%s2] sm:$0xff] %v1895
        %2152 = vst [vmem:[%s2 + $0x8] sm:$0xff] %v1896
        %2153 = vst [vmem:[%s2 + $0x10] sm:$0xff] %v1897
        %2154 = vst [vmem:[%s2 + $0x18] sm:$0xff] %v1898
        %2155 = vst [vmem:[%s2 + $0x20] sm:$0xff] %v1899
        %2156 = vst [vmem:[%s2 + $0x28] sm:$0xff] %v1900
        %2157 = vst [vmem:[%s2 + $0x30] sm:$0xff] %v1901
        %2158 = vst [vmem:[%s2 + $0x38] sm:$0xff] %v1902
        %2159 = vst [vmem:[%s2 + $0x40] sm:$0xff] %v1903
        %2160 = vst [vmem:[%s2 + $0x48] sm:$0xff] %v1904
        %2161 = vst [vmem:[%s2 + $0x50] sm:$0xff] %v1905
        %2162 = vst [vmem:[%s2 + $0x58] sm:$0xff] %v1906
        %2163 = vst [vmem:[%s2 + $0x60] sm:$0xff] %v1907
        %2164 = vst [vmem:[%s2 + $0x68] sm:$0xff] %v1908
        %2165 = vst [vmem:[%s2 + $0x70] sm:$0xff] %v1909
        %2166 = vst [vmem:[%s2 + $0x78] sm:$0xff] %v1910
        %2167 = vst [vmem:[%s2 + $0x80] sm:$0xff] %v1911
        %2168 = vst [vmem:[%s2 + $0x88] sm:$0xff] %v1912
        %2169 = vst [vmem:[%s2 + $0x90] sm:$0xff] %v1913
        %2170 = vst [vmem:[%s2 + $0x98] sm:$0xff] %v1914
        %2171 = vst [vmem:[%s2 + $0xa0] sm:$0xff] %v1915
        %2172 = vst [vmem:[%s2 + $0xa8] sm:$0xff] %v1916
        %2173 = vst [vmem:[%s2 + $0xb0] sm:$0xff] %v1917
        %2174 = vst [vmem:[%s2 + $0xb8] sm:$0xff] %v1918
        %2175 = vst [vmem:[%s2 + $0xc0] sm:$0xff] %v1919
        %2176 = vst [vmem:[%s2 + $0xc8] sm:$0xff] %v1920
        %2177 = vst [vmem:[%s2 + $0xd0] sm:$0xff] %v1921
        %2178 = vst [vmem:[%s2 + $0xd8] sm:$0xff] %v1922
        %2179 = vst [vmem:[%s2 + $0xe0] sm:$0xff] %v1923
        %2180 = vst [vmem:[%s2 + $0xe8] sm:$0xff] %v1924
        %2181 = vst [vmem:[%s2 + $0xf0] sm:$0xff] %v1925
        %2182 = vst [vmem:[%s2 + $0xf8] sm:$0xff] %v1926
        %2183 = vst [vmem:[%s2 + $0x100] sm:$0xff] %v1927
        %2184 = vst [vmem:[%s2 + $0x108] sm:$0xff] %v1928
        %2185 = vst [vmem:[%s2 + $0x110] sm:$0xff] %v1929
        %2186 = vst [vmem:[%s2 + $0x118] sm:$0xff] %v1930
        %2187 = vst [vmem:[%s2 + $0x120] sm:$0xff] %v1931
        %2188 = vst [vmem:[%s2 + $0x128] sm:$0xff] %v1932
        %2189 = vst [vmem:[%s2 + $0x130] sm:$0xff] %v1933
        %2190 = vst [vmem:[%s2 + $0x138] sm:$0xff] %v1934
        %2191 = vst [vmem:[%s2 + $0x140] sm:$0xff] %v1935
        %2192 = vst [vmem:[%s2 + $0x148] sm:$0xff] %v1936
        %2193 = vst [vmem:[%s2 + $0x150] sm:$0xff] %v1937
        %2194 = vst [vmem:[%s2 + $0x158] sm:$0xff] %v1938
        %2195 = vst [vmem:[%s2 + $0x160] sm:$0xff] %v1939
        %2196 = vst [vmem:[%s2 + $0x168] sm:$0xff] %v1940
        %2197 = vst [vmem:[%s2 + $0x170] sm:$0xff] %v1941
        %2198 = vst [vmem:[%s2 + $0x178] sm:$0xff] %v1942
        %2199 = vst [vmem:[%s2 + $0x180] sm:$0xff] %v1943
        %2200 = vst [vmem:[%s2 + $0x188] sm:$0xff] %v1944
        %2201 = vst [vmem:[%s2 + $0x190] sm:$0xff] %v1945
        %2202 = vst [vmem:[%s2 + $0x198] sm:$0xff] %v1946
        %2203 = vst [vmem:[%s2 + $0x1a0] sm:$0xff] %v1947
        %2204 = vst [vmem:[%s2 + $0x1a8] sm:$0xff] %v1948
        %2205 = vst [vmem:[%s2 + $0x1b0] sm:$0xff] %v1949
        %2206 = vst [vmem:[%s2 + $0x1b8] sm:$0xff] %v1950
        %2207 = vst [vmem:[%s2 + $0x1c0] sm:$0xff] %v1951
        %2208 = vst [vmem:[%s2 + $0x1c8] sm:$0xff] %v1952
        %2209 = vst [vmem:[%s2 + $0x1d0] sm:$0xff] %v1953
        %2210 = vst [vmem:[%s2 + $0x1d8] sm:$0xff] %v1954
        %2211 = vst [vmem:[%s2 + $0x1e0] sm:$0xff] %v1955
        %2212 = vst [vmem:[%s2 + $0x1e8] sm:$0xff] %v1956
        %2213 = vst [vmem:[%s2 + $0x1f0] sm:$0xff] %v1957
        %2214 = vst [vmem:[%s2 + $0x1f8] sm:$0xff] %v1958
        %2215 = vst [vmem:[%s2 + $0x200] sm:$0xff] %v1959
        %2216 = vst [vmem:[%s2 + $0x208] sm:$0xff] %v1960
        %2217 = vst [vmem:[%s2 + $0x210] sm:$0xff] %v1961
        %2218 = vst [vmem:[%s2 + $0x218] sm:$0xff] %v1962
        %2219 = vst [vmem:[%s2 + $0x220] sm:$0xff] %v1963
        %2220 = vst [vmem:[%s2 + $0x228] sm:$0xff] %v1964
        %2221 = vst [vmem:[%s2 + $0x230] sm:$0xff] %v1965
        %2222 = vst [vmem:[%s2 + $0x238] sm:$0xff] %v1966
        %2223 = vst [vmem:[%s2 + $0x240] sm:$0xff] %v1967
        %2224 = vst [vmem:[%s2 + $0x248] sm:$0xff] %v1968
        %2225 = vst [vmem:[%s2 + $0x250] sm:$0xff] %v1969
        %2226 = vst [vmem:[%s2 + $0x258] sm:$0xff] %v1970
        %2227 = vst [vmem:[%s2 + $0x260] sm:$0xff] %v1971
        %2228 = vst [vmem:[%s2 + $0x268] sm:$0xff] %v1972
        %2229 = vst [vmem:[%s2 + $0x270] sm:$0xff] %v1973
        %2230 = vst [vmem:[%s2 + $0x278] sm:$0xff] %v1974
        %2231 = vst [vmem:[%s2 + $0x280] sm:$0xff] %v1975
        %2232 = vst [vmem:[%s2 + $0x288] sm:$0xff] %v1976
        %2233 = vst [vmem:[%s2 + $0x290] sm:$0xff] %v1977
        %2234 = vst [vmem:[%s2 + $0x298] sm:$0xff] %v1978
        %2235 = vst [vmem:[%s2 + $0x2a0] sm:$0xff] %v1979
        %2236 = vst [vmem:[%s2 + $0x2a8] sm:$0xff] %v1980
        %2237 = vst [vmem:[%s2 + $0x2b0] sm:$0xff] %v1981
        %2238 = vst [vmem:[%s2 + $0x2b8] sm:$0xff] %v1982
        %2239 = vst [vmem:[%s2 + $0x2c0] sm:$0xff] %v1983
        %2240 = vst [vmem:[%s2 + $0x2c8] sm:$0xff] %v1984
        %2241 = vst [vmem:[%s2 + $0x2d0] sm:$0xff] %v1985
        %2242 = vst [vmem:[%s2 + $0x2d8] sm:$0xff] %v1986
        %2243 = vst [vmem:[%s2 + $0x2e0] sm:$0xff] %v1987
        %2244 = vst [vmem:[%s2 + $0x2e8] sm:$0xff] %v1988
        %2245 = vst [vmem:[%s2 + $0x2f0] sm:$0xff] %v1989
        %2246 = vst [vmem:[%s2 + $0x2f8] sm:$0xff] %v1990
        %2247 = vst [vmem:[%s2 + $0x300] sm:$0xff] %v1991
        %2248 = vst [vmem:[%s2 + $0x308] sm:$0xff] %v1992
        %2249 = vst [vmem:[%s2 + $0x310] sm:$0xff] %v1993
        %2250 = vst [vmem:[%s2 + $0x318] sm:$0xff] %v1994
        %2251 = vst [vmem:[%s2 + $0x320] sm:$0xff] %v1995
        %2252 = vst [vmem:[%s2 + $0x328] sm:$0xff] %v1996
        %2253 = vst [vmem:[%s2 + $0x330] sm:$0xff] %v1997
        %2254 = vst [vmem:[%s2 + $0x338] sm:$0xff] %v1998
        %2255 = vst [vmem:[%s2 + $0x340] sm:$0xff] %v1999
        %2256 = vst [vmem:[%s2 + $0x348] sm:$0xff] %v2000
        %2257 = vst [vmem:[%s2 + $0x350] sm:$0xff] %v2001
        %2258 = vst [vmem:[%s2 + $0x358] sm:$0xff] %v2002
        %2259 = vst [vmem:[%s2 + $0x360] sm:$0xff] %v2003
        %2260 = vst [vmem:[%s2 + $0x368] sm:$0xff] %v2004
        %2261 = vst [vmem:[%s2 + $0x370] sm:$0xff] %v2005
        %2262 = vst [vmem:[%s2 + $0x378] sm:$0xff] %v2006
        %2263 = vst [vmem:[%s2 + $0x380] sm:$0xff] %v2007
        %2264 = vst [vmem:[%s2 + $0x388] sm:$0xff] %v2008
        %2265 = vst [vmem:[%s2 + $0x390] sm:$0xff] %v2009
        %2266 = vst [vmem:[%s2 + $0x398] sm:$0xff] %v2010
        %2267 = vst [vmem:[%s2 + $0x3a0] sm:$0xff] %v2011
        %2268 = vst [vmem:[%s2 + $0x3a8] sm:$0xff] %v2012
        %2269 = vst [vmem:[%s2 + $0x3b0] sm:$0xff] %v2013
        %2270 = vst [vmem:[%s2 + $0x3b8] sm:$0xff] %v2014
        %2271 = vst [vmem:[%s2 + $0x3c0] sm:$0xff] %v2015
        %2272 = vst [vmem:[%s2 + $0x3c8] sm:$0xff] %v2016
        %2273 = vst [vmem:[%s2 + $0x3d0] sm:$0xff] %v2017
        %2274 = vst [vmem:[%s2 + $0x3d8] sm:$0xff] %v2018
        %2275 = vst [vmem:[%s2 + $0x3e0] sm:$0xff] %v2019
        %2276 = vst [vmem:[%s2 + $0x3e8] sm:$0xff] %v2020
        %2277 = vst [vmem:[%s2 + $0x3f0] sm:$0xff] %v2021
        %2278 = vst [vmem:[%s2 + $0x3f8] sm:$0xff] %v2022
        %2279 = vst [vmem:[%s2 + $0x400] sm:$0xff] %v2023
        %2280 = vst [vmem:[%s2 + $0x408] sm:$0xff] %v2024
        %2281 = vst [vmem:[%s2 + $0x410] sm:$0xff] %v2025
        %2282 = vst [vmem:[%s2 + $0x418] sm:$0xff] %v2026
        %2283 = vst [vmem:[%s2 + $0x420] sm:$0xff] %v2027
        %2284 = vst [vmem:[%s2 + $0x428] sm:$0xff] %v2028
        %2285 = vst [vmem:[%s2 + $0x430] sm:$0xff] %v2029
        %2286 = vst [vmem:[%s2 + $0x438] sm:$0xff] %v2030
        %2287 = vst [vmem:[%s2 + $0x440] sm:$0xff] %v2031
        %2288 = vst [vmem:[%s2 + $0x448] sm:$0xff] %v2032
        %2289 = vst [vmem:[%s2 + $0x450] sm:$0xff] %v2033
        %2290 = vst [vmem:[%s2 + $0x458] sm:$0xff] %v2034
        %2291 = vst [vmem:[%s2 + $0x460] sm:$0xff] %v2035
        %2292 = vst [vmem:[%s2 + $0x468] sm:$0xff] %v2036
        %2293 = vst [vmem:[%s2 + $0x470] sm:$0xff] %v2037
        %2294 = vst [vmem:[%s2 + $0x478] sm:$0xff] %v2038
        %2295 = vst [vmem:[%s2 + $0x480] sm:$0xff] %v2039
        %2296 = vst [vmem:[%s2 + $0x488] sm:$0xff] %v2040
        %2297 = vst [vmem:[%s2 + $0x490] sm:$0xff] %v2041
        %2298 = vst [vmem:[%s2 + $0x498] sm:$0xff] %v2042
        %2299 = vst [vmem:[%s2 + $0x4a0] sm:$0xff] %v2043
        %2300 = vst [vmem:[%s2 + $0x4a8] sm:$0xff] %v2044
        %2301 = vst [vmem:[%s2 + $0x4b0] sm:$0xff] %v2045
        %2302 = vst [vmem:[%s2 + $0x4b8] sm:$0xff] %v2046
        %2303 = vst [vmem:[%s2 + $0x4c0] sm:$0xff] %v2047
        %2304 = vst [vmem:[%s2 + $0x4c8] sm:$0xff] %v2048
        %2305 = vst [vmem:[%s2 + $0x4d0] sm:$0xff] %v2049
        %2306 = vst [vmem:[%s2 + $0x4d8] sm:$0xff] %v2050
        %2307 = vst [vmem:[%s2 + $0x4e0] sm:$0xff] %v2051
        %2308 = vst [vmem:[%s2 + $0x4e8] sm:$0xff] %v2052
        %2309 = vst [vmem:[%s2 + $0x4f0] sm:$0xff] %v2053
        %2310 = vst [vmem:[%s2 + $0x4f8] sm:$0xff] %v2054
        %2311 = vst [vmem:[%s2 + $0x500] sm:$0xff] %v2055
        %2312 = vst [vmem:[%s2 + $0x508] sm:$0xff] %v2056
        %2313 = vst [vmem:[%s2 + $0x510] sm:$0xff] %v2057
        %2314 = vst [vmem:[%s2 + $0x518] sm:$0xff] %v2058
        %2315 = vst [vmem:[%s2 + $0x520] sm:$0xff] %v2059
        %2316 = vst [vmem:[%s2 + $0x528] sm:$0xff] %v2060
        %2317 = vst [vmem:[%s2 + $0x530] sm:$0xff] %v2061
        %2318 = vst [vmem:[%s2 + $0x538] sm:$0xff] %v2062
        %2319 = vst [vmem:[%s2 + $0x540] sm:$0xff] %v2063
        %2320 = vst [vmem:[%s2 + $0x548] sm:$0xff] %v2064
        %2321 = vst [vmem:[%s2 + $0x550] sm:$0xff] %v2065
        %2322 = vst [vmem:[%s2 + $0x558] sm:$0xff] %v2066
        %2323 = vst [vmem:[%s2 + $0x560] sm:$0xff] %v2067
        %2324 = vst [vmem:[%s2 + $0x568] sm:$0xff] %v2068
        %2325 = vst [vmem:[%s2 + $0x570] sm:$0xff] %v2069
        %2326 = vst [vmem:[%s2 + $0x578] sm:$0xff] %v2070
        %2327 = vst [vmem:[%s2 + $0x580] sm:$0xff] %v2071
        %2328 = vst [vmem:[%s2 + $0x588] sm:$0xff] %v2072
        %2329 = vst [vmem:[%s2 + $0x590] sm:$0xff] %v2073
        %2330 = vst [vmem:[%s2 + $0x598] sm:$0xff] %v2074
        %2331 = vst [vmem:[%s2 + $0x5a0] sm:$0xff] %v2075
        %2332 = vst [vmem:[%s2 + $0x5a8] sm:$0xff] %v2076
        %2333 = vst [vmem:[%s2 + $0x5b0] sm:$0xff] %v2077
        %2334 = vst [vmem:[%s2 + $0x5b8] sm:$0xff] %v2078
        %2335 = vst [vmem:[%s2 + $0x5c0] sm:$0xff] %v2079
        %2336 = vst [vmem:[%s2 + $0x5c8] sm:$0xff] %v2080
        %2337 = vst [vmem:[%s2 + $0x5d0] sm:$0xff] %v2081
        %2338 = vst [vmem:[%s2 + $0x5d8] sm:$0xff] %v2082
        %2339 = vst [vmem:[%s2 + $0x5e0] sm:$0xff] %v2083
        %2340 = vst [vmem:[%s2 + $0x5e8] sm:$0xff] %v2084
        %2341 = vst [vmem:[%s2 + $0x5f0] sm:$0xff] %v2085
        %2342 = vst [vmem:[%s2 + $0x5f8] sm:$0xff] %v2086
        %2343 = vst [vmem:[%s2 + $0x600] sm:$0xff] %v2087
        %2344 = vst [vmem:[%s2 + $0x608] sm:$0xff] %v2088
        %2345 = vst [vmem:[%s2 + $0x610] sm:$0xff] %v2089
        %2346 = vst [vmem:[%s2 + $0x618] sm:$0xff] %v2090
        %2347 = vst [vmem:[%s2 + $0x620] sm:$0xff] %v2091
        %2348 = vst [vmem:[%s2 + $0x628] sm:$0xff] %v2092
        %2349 = vst [vmem:[%s2 + $0x630] sm:$0xff] %v2093
        %2350 = vst [vmem:[%s2 + $0x638] sm:$0xff] %v2094
        %2351 = vst [vmem:[%s2 + $0x640] sm:$0xff] %v2095
        %2352 = vst [vmem:[%s2 + $0x648] sm:$0xff] %v2096
        %2353 = vst [vmem:[%s2 + $0x650] sm:$0xff] %v2097
        %2354 = vst [vmem:[%s2 + $0x658] sm:$0xff] %v2098
        %2355 = vst [vmem:[%s2 + $0x660] sm:$0xff] %v2099
        %2356 = vst [vmem:[%s2 + $0x668] sm:$0xff] %v2100
        %2357 = vst [vmem:[%s2 + $0x670] sm:$0xff] %v2101
        %2358 = vst [vmem:[%s2 + $0x678] sm:$0xff] %v2102
        %2359 = vst [vmem:[%s2 + $0x680] sm:$0xff] %v2103
        %2360 = vst [vmem:[%s2 + $0x688] sm:$0xff] %v2104
        %2361 = vst [vmem:[%s2 + $0x690] sm:$0xff] %v2105
        %2362 = vst [vmem:[%s2 + $0x698] sm:$0xff] %v2106
        %2363 = vst [vmem:[%s2 + $0x6a0] sm:$0xff] %v2107
        %2364 = vst [vmem:[%s2 + $0x6a8] sm:$0xff] %v2108
        %2365 = vst [vmem:[%s2 + $0x6b0] sm:$0xff] %v2109
        %2366 = vst [vmem:[%s2 + $0x6b8] sm:$0xff] %v2110
        %2367 = vst [vmem:[%s2 + $0x6c0] sm:$0xff] %v2111
        %2368 = vst [vmem:[%s2 + $0x6c8] sm:$0xff] %v2112
        %2369 = vst [vmem:[%s2 + $0x6d0] sm:$0xff] %v2113
        %2370 = vst [vmem:[%s2 + $0x6d8] sm:$0xff] %v2114
        %2371 = vst [vmem:[%s2 + $0x6e0] sm:$0xff] %v2115
        %2372 = vst [vmem:[%s2 + $0x6e8] sm:$0xff] %v2116
        %2373 = vst [vmem:[%s2 + $0x6f0] sm:$0xff] %v2117
        %2374 = vst [vmem:[%s2 + $0x6f8] sm:$0xff] %v2118
        %2375 = vst [vmem:[%s2 + $0x700] sm:$0xff] %v2119
        %2376 = vst [vmem:[%s2 + $0x708] sm:$0xff] %v2120
        %2377 = vst [vmem:[%s2 + $0x710] sm:$0xff] %v2121
        %2378 = vst [vmem:[%s2 + $0x718] sm:$0xff] %v2122
        %2379 = vst [vmem:[%s2 + $0x720] sm:$0xff] %v2123
        %2380 = vst [vmem:[%s2 + $0x728] sm:$0xff] %v2124
        %2381 = vst [vmem:[%s2 + $0x730] sm:$0xff] %v2125
        %2382 = vst [vmem:[%s2 + $0x738] sm:$0xff] %v2126
        %2383 = vst [vmem:[%s2 + $0x740] sm:$0xff] %v2127
        %2384 = vst [vmem:[%s2 + $0x748] sm:$0xff] %v2128
        %2385 = vst [vmem:[%s2 + $0x750] sm:$0xff] %v2129
        %2386 = vst [vmem:[%s2 + $0x758] sm:$0xff] %v2130
        %2387 = vst [vmem:[%s2 + $0x760] sm:$0xff] %v2131
        %2388 = vst [vmem:[%s2 + $0x768] sm:$0xff] %v2132
        %2389 = vst [vmem:[%s2 + $0x770] sm:$0xff] %v2133
        %2390 = vst [vmem:[%s2 + $0x778] sm:$0xff] %v2134
        %2391 = vst [vmem:[%s2 + $0x780] sm:$0xff] %v2135
        %2392 = vst [vmem:[%s2 + $0x788] sm:$0xff] %v2136
        %2393 = vst [vmem:[%s2 + $0x790] sm:$0xff] %v2137
        %2394 = vst [vmem:[%s2 + $0x798] sm:$0xff] %v2138
        %2395 = vst [vmem:[%s2 + $0x7a0] sm:$0xff] %v2139
        %2396 = vst [vmem:[%s2 + $0x7a8] sm:$0xff] %v2140
        %2397 = vst [vmem:[%s2 + $0x7b0] sm:$0xff] %v2141
        %2398 = vst [vmem:[%s2 + $0x7b8] sm:$0xff] %v2142
        %2399 = vst [vmem:[%s2 + $0x7c0] sm:$0xff] %v2143
        %2400 = vst [vmem:[%s2 + $0x7c8] sm:$0xff] %v2144
        %2401 = vst [vmem:[%s2 + $0x7d0] sm:$0xff] %v2145
        %2402 = vst [vmem:[%s2 + $0x7d8] sm:$0xff] %v2146
        %2403 = vst [vmem:[%s2 + $0x7e0] sm:$0xff] %v2147
        %2404 = vst [vmem:[%s2 + $0x7e8] sm:$0xff] %v2148
        %2405 = vst [vmem:[%s2 + $0x7f0] sm:$0xff] %v2149
        %2406 = vst [vmem:[%s2 + $0x7f8] sm:$0xff] %v2150
      $region36: #{generator_forward.8} parent=27 // pred_fallthru
        _
      // Predicated region
      $region37: #{generator_forward.8} parent=27 // pred_check
        %p2407 = pneg %p92
      $region38: #{generator_forward.8} parent=27 // pred_check_branch
        %2409 = sbr.rel (%p2407) target = $region40
      $region39: #{generator_forward.8} parent=27 // pred_region
        _
      $region40: #{generator_forward.8} parent=27 // pred_fallthru
        _
      // Predicated region
      $region41: #{generator_forward.8} parent=27 // pred_check
        %p2410 = pneg %p92
      $region42: #{generator_forward.8} parent=27 // pred_check_branch
        %2412 = sbr.rel (%p2410) target = $region44
      $region43: #{generator_forward.8} parent=27 // pred_region
        _
      $region44: #{generator_forward.8} parent=27 // pred_fallthru
        _
    $region28: #{generator_forward.8} parent=5 // pred_fallthru
      _
    %p2413 = scmp.le.s32.totalorder 2, %s8
    // Predicated region
    $region45: #{generator_forward.8} parent=5 // pred_check
      %p2414 = pneg %p2413
    $region46: #{generator_forward.8} parent=5 // pred_check_branch
      %2416 = sbr.rel (%p2414) target = $region48
    $region47: #{generator_forward.8} parent=5 // pred_region
      %s2417 = ssub.s32 %s8, 2
    $region48: #{generator_forward.8} parent=5 // pred_fallthru
      _
  $region6: #{generator_forward.8} parent=0 // loop_footer
    %s12 = sadd.s32 1, %s8
  $region7: #{generator_forward.8} parent=0 // loop_footer_branch
    %7 = sbr.rel target = $region3
  $region8: #{generator_forward.8} parent=0 // loop_exit
    _

// kernel: generator_forward.9
$region0: #{generator_forward.9}
  #allocation0 [shape = 'u32[]', space=smem, size = 0x4, offset = 0x4, fixed_abs, tag = 'smem constant byte address 0x4 - core index']
  #allocation1 [shape = 'u32[144,128]{1,0:T(1,128)}', space=vmem, size = 0x12000, scoped, tag = 'internal scratch']
  %s0 = inlined_call_operand.vmem [shape: f32[4,2048,32], index: 0, kind: input, shape index: {}]
  %s1 = inlined_call_operand.vmem [shape: f32[4,32,128], index: 1, kind: input, shape index: {}]
  %s2 = inlined_call_operand.vmem [shape: f32[4,2048,128], index: 2, kind: output, shape index: {}]
  %s3 = sld [smem:[#allocation0]]
  $region41: #{generator_forward.9} parent=0
    _
  %s5 = ssub.s32 1, %s3
  %s6 = scalar_select 0, %s5, %s3
  loop: start=0, step=1, limit=6
  $region2: #{generator_forward.9} parent=0 // loop_pre_header
    _
  $region3: #{generator_forward.9} parent=0 // loop_header
    %s8 = sphi 0, %s12
    %p9 = scmp.ge.s32.totalorder %s8, 6
    %s15 = sphi 0, %s27
    %s16 = sphi 0, %s23
    %s17 = sphi 0, %s15
    %s18 = sphi 0, %s16
    %s19 = sphi 0, %s17
    %s20 = sphi 0, %s18
    %s32 = sphi 0, %s34
    %s35 = sphi 0, %s32
    %s36 = sphi 0, %s35
    %s52 = sphi 0, %s36
    %s58 = sphi 0, %s60
    %s61 = sphi 0, %s58
    %s62 = sphi 0, %s61
    %s78 = sphi 0, %s62
    %s86 = sphi 0, %s88
    %s89 = sphi 0, %s86
    %s90 = sphi 0, %s89
    %s106 = sphi 0, %s90
  $region4: #{generator_forward.9} parent=0 // loop_header_branch
    %11 = sbr.rel (%p9) target = $region8
  $region5: #{generator_forward.9} parent=0 // loop_body
    %s13 = ssub.s32 %s8, 1
    %s14 = ssub.s32 %s8, 2
    %s21 = sadd.s32 1, %s16
    %p22 = scmp.ge.s32.totalorder %s21, 1
    %s23 = scalar_select %p22, 0, %s21
    %s24 = sadd.s32 1, %s15
    %s25 = scalar_select %p22, %s24, %s15
    %p26 = scmp.ge.s32.totalorder %s25, 4
    %s27 = scalar_select %p26, 0, %s25
    %s28 = ssub.s32 %s15, %s27
    %s29 = ssub.s32 %s16, %s23
    %s30 = sor.u32 %s28, %s29
    %p31 = scmp.eq.s32.totalorder %s30, 0
    %s33 = sadd.s32 %s32, 1
    %s34 = scalar_select %p31, %s32, %s33
    %p37 = pneg %p31
    %p38 = scmp.eq.s32.totalorder %s8, 3
    %p39 = por %p37, %p38
    %p40 = scmp.ne.s32.totalorder %s32, %s35
    %p41 = scmp.eq.s32.totalorder %s8, 0
    %p42 = por %p40, %p41
    %p43 = scmp.ne.s32.totalorder %s32, %s35
    %p44 = scmp.eq.s32.totalorder %s13, 3
    %p45 = por %p43, %p44
    %p46 = scmp.ne.s32.totalorder %s35, %s36
    %p47 = scmp.eq.s32.totalorder %s13, 0
    %p48 = por %p46, %p47
    %p49 = scmp.ne.s32.totalorder %s35, %s36
    %p50 = scmp.eq.s32.totalorder %s14, 3
    %p51 = por %p49, %p50
    %p53 = scmp.ne.s32.totalorder %s36, %s52
    %p54 = scmp.eq.s32.totalorder %s14, 0
    %p55 = por %p53, %p54
    %s56 = ssub.s32 %s15, %s27
    %p57 = scmp.eq.s32.totalorder %s56, 0
    %s59 = sadd.s32 %s58, 1
    %s60 = scalar_select %p57, %s58, %s59
    %p63 = pneg %p57
    %p64 = scmp.eq.s32.totalorder %s8, 3
    %p65 = por %p63, %p64
    %p66 = scmp.ne.s32.totalorder %s58, %s61
    %p67 = scmp.eq.s32.totalorder %s8, 0
    %p68 = por %p66, %p67
    %p69 = scmp.ne.s32.totalorder %s58, %s61
    %p70 = scmp.eq.s32.totalorder %s13, 3
    %p71 = por %p69, %p70
    %p72 = scmp.ne.s32.totalorder %s61, %s62
    %p73 = scmp.eq.s32.totalorder %s13, 0
    %p74 = por %p72, %p73
    %p75 = scmp.ne.s32.totalorder %s61, %s62
    %p76 = scmp.eq.s32.totalorder %s14, 3
    %p77 = por %p75, %p76
    %p79 = scmp.ne.s32.totalorder %s62, %s78
    %p80 = scmp.eq.s32.totalorder %s14, 0
    %p81 = por %p79, %p80
    %s82 = ssub.s32 %s15, %s27
    %s83 = ssub.s32 %s16, %s23
    %s84 = sor.u32 %s82, %s83
    %p85 = scmp.eq.s32.totalorder %s84, 0
    %s87 = sadd.s32 %s86, 1
    %s88 = scalar_select %p85, %s86, %s87
    %p91 = pneg %p85
    %p92 = scmp.eq.s32.totalorder %s8, 3
    %p93 = por %p91, %p92
    %p94 = scmp.ne.s32.totalorder %s86, %s89
    %p95 = scmp.eq.s32.totalorder %s8, 0
    %p96 = por %p94, %p95
    %p97 = scmp.ne.s32.totalorder %s86, %s89
    %p98 = scmp.eq.s32.totalorder %s13, 3
    %p99 = por %p97, %p98
    %p100 = scmp.ne.s32.totalorder %s89, %s90
    %p101 = scmp.eq.s32.totalorder %s13, 0
    %p102 = por %p100, %p101
    %p103 = scmp.ne.s32.totalorder %s89, %s90
    %p104 = scmp.eq.s32.totalorder %s14, 3
    %p105 = por %p103, %p104
    %p107 = scmp.ne.s32.totalorder %s90, %s106
    %p108 = scmp.eq.s32.totalorder %s14, 0
    %p109 = por %p107, %p108
    %p110 = scmp.le.s32.totalorder 1, %s8
    %p111 = scmp.lt.s32.totalorder %s8, 5
    %p112 = pnand %p110, %p111
    %p113 = pneg %p112
    // Predicated region
    $region9: #{generator_forward.9} parent=5 // pred_check
      _
    $region10: #{generator_forward.9} parent=5 // pred_check_branch
      %115 = sbr.rel (%p112) target = $region12
    $region11: #{generator_forward.9} parent=5 // pred_region
      %s116 = ssub.s32 %s8, 1
    $region12: #{generator_forward.9} parent=5 // pred_fallthru
      _
    %p117 = scmp.lt.s32.totalorder %s8, 4
    // Predicated region
    $region13: #{generator_forward.9} parent=5 // pred_check
      %p118 = pneg %p117
    $region14: #{generator_forward.9} parent=5 // pred_check_branch
      %120 = sbr.rel (%p118) target = $region16
    $region15: #{generator_forward.9} parent=5 // pred_region
      // Predicated region
      $region17: #{generator_forward.9} parent=15 // pred_check
        %p121 = pneg %p42
      $region18: #{generator_forward.9} parent=15 // pred_check_branch
        %123 = sbr.rel (%p121) target = $region20
      $region19: #{generator_forward.9} parent=15 // pred_region
        %s124 = smul.u32 256, %s16
        %p125 = scmp.lt.s32.totalorder %s15, 3
        %s126 = scalar_select %p125, %s15, 3
        %p127 = scmp.lt.s32.totalorder %s124, 255
        %s128 = scalar_select %p127, %s124, 255
        %s129 = smul.addr %s126, 256
        %s130 = sadd.s32 %s128, %s129
        %s131 = smul.addr %s130, 8
        %s132 = scalar_lea.vmem %s0, %s131
        %s133 = smul.u32 256, %s16
      $region20: #{generator_forward.9} parent=15 // pred_fallthru
        _
      // Predicated region
      $region21: #{generator_forward.9} parent=15 // pred_check
        %p134 = pneg %p68
      $region22: #{generator_forward.9} parent=15 // pred_check_branch
        %136 = sbr.rel (%p134) target = $region24
      $region23: #{generator_forward.9} parent=15 // pred_region
        %p137 = scmp.lt.s32.totalorder %s15, 3
        %s138 = scalar_select %p137, %s15, 3
        %s139 = smul.addr %s138, 4
        %s140 = smul.addr %s139, 8
        %s141 = scalar_lea.vmem %s1, %s140
      $region24: #{generator_forward.9} parent=15 // pred_fallthru
        _
    $region16: #{generator_forward.9} parent=5 // pred_fallthru
      _
    %p142 = scmp.le.s32.totalorder 1, %s8
    %p143 = scmp.lt.s32.totalorder %s8, 5
    %p144 = pnand %p142, %p143
    %p145 = pneg %p144
    // Predicated region
    $region25: #{generator_forward.9} parent=5 // pred_check
      _
    $region26: #{generator_forward.9} parent=5 // pred_check_branch
      %147 = sbr.rel (%p144) target = $region28
    $region27: #{generator_forward.9} parent=5 // pred_region
      %s148 = ssub.s32 %s8, 1
      %s149 = smul.u32 256, %s18
      %p150 = scmp.lt.s32.totalorder %s17, 3
      %s151 = scalar_select %p150, %s17, 3
      %p152 = scmp.lt.s32.totalorder %s149, 255
      %s153 = scalar_select %p152, %s149, 255
      %s154 = smul.addr %s151, 256
      %s155 = sadd.s32 %s153, %s154
      %s156 = smul.addr %s155, 8
      %s157 = scalar_lea.vmem %s0, %s156
      %p158 = pneg %p48
      %p159 = pneg %p45
      %p160 = scmp.lt.s32.totalorder %s17, 3
      %s161 = scalar_select %p160, %s17, 3
      %s162 = smul.addr %s161, 4
      %s163 = smul.addr %s162, 8
      %s164 = scalar_lea.vmem %s1, %s163
      %p165 = pneg %p74
      %p166 = pneg %p71
      %p167 = pneg %p102
      %p168 = pneg %p99
      %s169 = smul.u32 256, %s18
      %p170 = scmp.lt.s32.totalorder %s17, 3
      %s171 = scalar_select %p170, %s17, 3
      %p172 = scmp.lt.s32.totalorder %s169, 255
      %s173 = scalar_select %p172, %s169, 255
      %s174 = smul.addr %s171, 256
      %s175 = sadd.s32 %s173, %s174
      %s176 = smul.addr %s175, 8
      %s177 = scalar_lea.vmem %s2, %s176
      %s178 = smul.u32 256, %s18
      %p179 = scmp.lt.s32.totalorder %s17, 3
      %s180 = scalar_select %p179, %s17, 3
      %p181 = scmp.lt.s32.totalorder %s178, 255
      %s182 = scalar_select %p181, %s178, 255
      %s183 = smul.addr %s180, 256
      %s184 = sadd.s32 %s182, %s183
      %s185 = smul.addr %s184, 8
      %s186 = scalar_lea.vmem %s0, %s185
      %s187 = smul.u32 256, %s18
      %p188 = scmp.lt.s32.totalorder %s17, 3
      %s189 = scalar_select %p188, %s17, 3
      %s190 = smul.addr %s189, 4
      %s191 = smul.addr %s190, 8
      %s192 = scalar_lea.vmem %s1, %s191
      %s193 = smul.u32 256, %s18
      %p194 = scmp.lt.s32.totalorder %s17, 3
      %s195 = scalar_select %p194, %s17, 3
      %p196 = scmp.lt.s32.totalorder %s193, 255
      %s197 = scalar_select %p196, %s193, 255
      %s198 = smul.addr %s195, 256
      %s199 = sadd.s32 %s197, %s198
      %s200 = smul.addr %s199, 8
      %s201 = scalar_lea.vmem %s2, %s200
      %s202 = smul.u32 256, %s18
      %v203 = vld [vmem:[%s186] sm:$0xff]
      %v204 = vld [vmem:[%s186 + $0x8] sm:$0xff]
      %v205 = vld [vmem:[%s186 + $0x10] sm:$0xff]
      %v206 = vld [vmem:[%s186 + $0x18] sm:$0xff]
      %v207 = vld [vmem:[%s186 + $0x20] sm:$0xff]
      %v208 = vld [vmem:[%s186 + $0x28] sm:$0xff]
      %v209 = vld [vmem:[%s186 + $0x30] sm:$0xff]
      %v210 = vld [vmem:[%s186 + $0x38] sm:$0xff]
      %v211 = vld [vmem:[%s186 + $0x40] sm:$0xff]
      %v212 = vld [vmem:[%s186 + $0x48] sm:$0xff]
      %v213 = vld [vmem:[%s186 + $0x50] sm:$0xff]
      %v214 = vld [vmem:[%s186 + $0x58] sm:$0xff]
      %v215 = vld [vmem:[%s186 + $0x60] sm:$0xff]
      %v216 = vld [vmem:[%s186 + $0x68] sm:$0xff]
      %v217 = vld [vmem:[%s186 + $0x70] sm:$0xff]
      %v218 = vld [vmem:[%s186 + $0x78] sm:$0xff]
      %v219 = vld [vmem:[%s186 + $0x80] sm:$0xff]
      %v220 = vld [vmem:[%s186 + $0x88] sm:$0xff]
      %v221 = vld [vmem:[%s186 + $0x90] sm:$0xff]
      %v222 = vld [vmem:[%s186 + $0x98] sm:$0xff]
      %v223 = vld [vmem:[%s186 + $0xa0] sm:$0xff]
      %v224 = vld [vmem:[%s186 + $0xa8] sm:$0xff]
      %v225 = vld [vmem:[%s186 + $0xb0] sm:$0xff]
      %v226 = vld [vmem:[%s186 + $0xb8] sm:$0xff]
      %v227 = vld [vmem:[%s186 + $0xc0] sm:$0xff]
      %v228 = vld [vmem:[%s186 + $0xc8] sm:$0xff]
      %v229 = vld [vmem:[%s186 + $0xd0] sm:$0xff]
      %v230 = vld [vmem:[%s186 + $0xd8] sm:$0xff]
      %v231 = vld [vmem:[%s186 + $0xe0] sm:$0xff]
      %v232 = vld [vmem:[%s186 + $0xe8] sm:$0xff]
      %v233 = vld [vmem:[%s186 + $0xf0] sm:$0xff]
      %v234 = vld [vmem:[%s186 + $0xf8] sm:$0xff]
      %v235 = vld [vmem:[%s186 + $0x100] sm:$0xff]
      %v236 = vld [vmem:[%s186 + $0x108] sm:$0xff]
      %v237 = vld [vmem:[%s186 + $0x110] sm:$0xff]
      %v238 = vld [vmem:[%s186 + $0x118] sm:$0xff]
      %v239 = vld [vmem:[%s186 + $0x120] sm:$0xff]
      %v240 = vld [vmem:[%s186 + $0x128] sm:$0xff]
      %v241 = vld [vmem:[%s186 + $0x130] sm:$0xff]
      %v242 = vld [vmem:[%s186 + $0x138] sm:$0xff]
      %v243 = vld [vmem:[%s186 + $0x140] sm:$0xff]
      %v244 = vld [vmem:[%s186 + $0x148] sm:$0xff]
      %v245 = vld [vmem:[%s186 + $0x150] sm:$0xff]
      %v246 = vld [vmem:[%s186 + $0x158] sm:$0xff]
      %v247 = vld [vmem:[%s186 + $0x160] sm:$0xff]
      %v248 = vld [vmem:[%s186 + $0x168] sm:$0xff]
      %v249 = vld [vmem:[%s186 + $0x170] sm:$0xff]
      %v250 = vld [vmem:[%s186 + $0x178] sm:$0xff]
      %v251 = vld [vmem:[%s186 + $0x180] sm:$0xff]
      %v252 = vld [vmem:[%s186 + $0x188] sm:$0xff]
      %v253 = vld [vmem:[%s186 + $0x190] sm:$0xff]
      %v254 = vld [vmem:[%s186 + $0x198] sm:$0xff]
      %v255 = vld [vmem:[%s186 + $0x1a0] sm:$0xff]
      %v256 = vld [vmem:[%s186 + $0x1a8] sm:$0xff]
      %v257 = vld [vmem:[%s186 + $0x1b0] sm:$0xff]
      %v258 = vld [vmem:[%s186 + $0x1b8] sm:$0xff]
      %v259 = vld [vmem:[%s186 + $0x1c0] sm:$0xff]
      %v260 = vld [vmem:[%s186 + $0x1c8] sm:$0xff]
      %v261 = vld [vmem:[%s186 + $0x1d0] sm:$0xff]
      %v262 = vld [vmem:[%s186 + $0x1d8] sm:$0xff]
      %v263 = vld [vmem:[%s186 + $0x1e0] sm:$0xff]
      %v264 = vld [vmem:[%s186 + $0x1e8] sm:$0xff]
      %v265 = vld [vmem:[%s186 + $0x1f0] sm:$0xff]
      %v266 = vld [vmem:[%s186 + $0x1f8] sm:$0xff]
      %v267 = vld [vmem:[%s186 + $0x200] sm:$0xff]
      %v268 = vld [vmem:[%s186 + $0x208] sm:$0xff]
      %v269 = vld [vmem:[%s186 + $0x210] sm:$0xff]
      %v270 = vld [vmem:[%s186 + $0x218] sm:$0xff]
      %v271 = vld [vmem:[%s186 + $0x220] sm:$0xff]
      %v272 = vld [vmem:[%s186 + $0x228] sm:$0xff]
      %v273 = vld [vmem:[%s186 + $0x230] sm:$0xff]
      %v274 = vld [vmem:[%s186 + $0x238] sm:$0xff]
      %v275 = vld [vmem:[%s186 + $0x240] sm:$0xff]
      %v276 = vld [vmem:[%s186 + $0x248] sm:$0xff]
      %v277 = vld [vmem:[%s186 + $0x250] sm:$0xff]
      %v278 = vld [vmem:[%s186 + $0x258] sm:$0xff]
      %v279 = vld [vmem:[%s186 + $0x260] sm:$0xff]
      %v280 = vld [vmem:[%s186 + $0x268] sm:$0xff]
      %v281 = vld [vmem:[%s186 + $0x270] sm:$0xff]
      %v282 = vld [vmem:[%s186 + $0x278] sm:$0xff]
      %v283 = vld [vmem:[%s186 + $0x280] sm:$0xff]
      %v284 = vld [vmem:[%s186 + $0x288] sm:$0xff]
      %v285 = vld [vmem:[%s186 + $0x290] sm:$0xff]
      %v286 = vld [vmem:[%s186 + $0x298] sm:$0xff]
      %v287 = vld [vmem:[%s186 + $0x2a0] sm:$0xff]
      %v288 = vld [vmem:[%s186 + $0x2a8] sm:$0xff]
      %v289 = vld [vmem:[%s186 + $0x2b0] sm:$0xff]
      %v290 = vld [vmem:[%s186 + $0x2b8] sm:$0xff]
      %v291 = vld [vmem:[%s186 + $0x2c0] sm:$0xff]
      %v292 = vld [vmem:[%s186 + $0x2c8] sm:$0xff]
      %v293 = vld [vmem:[%s186 + $0x2d0] sm:$0xff]
      %v294 = vld [vmem:[%s186 + $0x2d8] sm:$0xff]
      %v295 = vld [vmem:[%s186 + $0x2e0] sm:$0xff]
      %v296 = vld [vmem:[%s186 + $0x2e8] sm:$0xff]
      %v297 = vld [vmem:[%s186 + $0x2f0] sm:$0xff]
      %v298 = vld [vmem:[%s186 + $0x2f8] sm:$0xff]
      %v299 = vld [vmem:[%s186 + $0x300] sm:$0xff]
      %v300 = vld [vmem:[%s186 + $0x308] sm:$0xff]
      %v301 = vld [vmem:[%s186 + $0x310] sm:$0xff]
      %v302 = vld [vmem:[%s186 + $0x318] sm:$0xff]
      %v303 = vld [vmem:[%s186 + $0x320] sm:$0xff]
      %v304 = vld [vmem:[%s186 + $0x328] sm:$0xff]
      %v305 = vld [vmem:[%s186 + $0x330] sm:$0xff]
      %v306 = vld [vmem:[%s186 + $0x338] sm:$0xff]
      %v307 = vld [vmem:[%s186 + $0x340] sm:$0xff]
      %v308 = vld [vmem:[%s186 + $0x348] sm:$0xff]
      %v309 = vld [vmem:[%s186 + $0x350] sm:$0xff]
      %v310 = vld [vmem:[%s186 + $0x358] sm:$0xff]
      %v311 = vld [vmem:[%s186 + $0x360] sm:$0xff]
      %v312 = vld [vmem:[%s186 + $0x368] sm:$0xff]
      %v313 = vld [vmem:[%s186 + $0x370] sm:$0xff]
      %v314 = vld [vmem:[%s186 + $0x378] sm:$0xff]
      %v315 = vld [vmem:[%s186 + $0x380] sm:$0xff]
      %v316 = vld [vmem:[%s186 + $0x388] sm:$0xff]
      %v317 = vld [vmem:[%s186 + $0x390] sm:$0xff]
      %v318 = vld [vmem:[%s186 + $0x398] sm:$0xff]
      %v319 = vld [vmem:[%s186 + $0x3a0] sm:$0xff]
      %v320 = vld [vmem:[%s186 + $0x3a8] sm:$0xff]
      %v321 = vld [vmem:[%s186 + $0x3b0] sm:$0xff]
      %v322 = vld [vmem:[%s186 + $0x3b8] sm:$0xff]
      %v323 = vld [vmem:[%s186 + $0x3c0] sm:$0xff]
      %v324 = vld [vmem:[%s186 + $0x3c8] sm:$0xff]
      %v325 = vld [vmem:[%s186 + $0x3d0] sm:$0xff]
      %v326 = vld [vmem:[%s186 + $0x3d8] sm:$0xff]
      %v327 = vld [vmem:[%s186 + $0x3e0] sm:$0xff]
      %v328 = vld [vmem:[%s186 + $0x3e8] sm:$0xff]
      %v329 = vld [vmem:[%s186 + $0x3f0] sm:$0xff]
      %v330 = vld [vmem:[%s186 + $0x3f8] sm:$0xff]
      %v331 = vld [vmem:[%s186 + $0x400] sm:$0xff]
      %v332 = vld [vmem:[%s186 + $0x408] sm:$0xff]
      %v333 = vld [vmem:[%s186 + $0x410] sm:$0xff]
      %v334 = vld [vmem:[%s186 + $0x418] sm:$0xff]
      %v335 = vld [vmem:[%s186 + $0x420] sm:$0xff]
      %v336 = vld [vmem:[%s186 + $0x428] sm:$0xff]
      %v337 = vld [vmem:[%s186 + $0x430] sm:$0xff]
      %v338 = vld [vmem:[%s186 + $0x438] sm:$0xff]
      %v339 = vld [vmem:[%s186 + $0x440] sm:$0xff]
      %v340 = vld [vmem:[%s186 + $0x448] sm:$0xff]
      %v341 = vld [vmem:[%s186 + $0x450] sm:$0xff]
      %v342 = vld [vmem:[%s186 + $0x458] sm:$0xff]
      %v343 = vld [vmem:[%s186 + $0x460] sm:$0xff]
      %v344 = vld [vmem:[%s186 + $0x468] sm:$0xff]
      %v345 = vld [vmem:[%s186 + $0x470] sm:$0xff]
      %v346 = vld [vmem:[%s186 + $0x478] sm:$0xff]
      %v347 = vld [vmem:[%s186 + $0x480] sm:$0xff]
      %v348 = vld [vmem:[%s186 + $0x488] sm:$0xff]
      %v349 = vld [vmem:[%s186 + $0x490] sm:$0xff]
      %v350 = vld [vmem:[%s186 + $0x498] sm:$0xff]
      %v351 = vld [vmem:[%s186 + $0x4a0] sm:$0xff]
      %v352 = vld [vmem:[%s186 + $0x4a8] sm:$0xff]
      %v353 = vld [vmem:[%s186 + $0x4b0] sm:$0xff]
      %v354 = vld [vmem:[%s186 + $0x4b8] sm:$0xff]
      %v355 = vld [vmem:[%s186 + $0x4c0] sm:$0xff]
      %v356 = vld [vmem:[%s186 + $0x4c8] sm:$0xff]
      %v357 = vld [vmem:[%s186 + $0x4d0] sm:$0xff]
      %v358 = vld [vmem:[%s186 + $0x4d8] sm:$0xff]
      %v359 = vld [vmem:[%s186 + $0x4e0] sm:$0xff]
      %v360 = vld [vmem:[%s186 + $0x4e8] sm:$0xff]
      %v361 = vld [vmem:[%s186 + $0x4f0] sm:$0xff]
      %v362 = vld [vmem:[%s186 + $0x4f8] sm:$0xff]
      %v363 = vld [vmem:[%s186 + $0x500] sm:$0xff]
      %v364 = vld [vmem:[%s186 + $0x508] sm:$0xff]
      %v365 = vld [vmem:[%s186 + $0x510] sm:$0xff]
      %v366 = vld [vmem:[%s186 + $0x518] sm:$0xff]
      %v367 = vld [vmem:[%s186 + $0x520] sm:$0xff]
      %v368 = vld [vmem:[%s186 + $0x528] sm:$0xff]
      %v369 = vld [vmem:[%s186 + $0x530] sm:$0xff]
      %v370 = vld [vmem:[%s186 + $0x538] sm:$0xff]
      %v371 = vld [vmem:[%s186 + $0x540] sm:$0xff]
      %v372 = vld [vmem:[%s186 + $0x548] sm:$0xff]
      %v373 = vld [vmem:[%s186 + $0x550] sm:$0xff]
      %v374 = vld [vmem:[%s186 + $0x558] sm:$0xff]
      %v375 = vld [vmem:[%s186 + $0x560] sm:$0xff]
      %v376 = vld [vmem:[%s186 + $0x568] sm:$0xff]
      %v377 = vld [vmem:[%s186 + $0x570] sm:$0xff]
      %v378 = vld [vmem:[%s186 + $0x578] sm:$0xff]
      %v379 = vld [vmem:[%s186 + $0x580] sm:$0xff]
      %v380 = vld [vmem:[%s186 + $0x588] sm:$0xff]
      %v381 = vld [vmem:[%s186 + $0x590] sm:$0xff]
      %v382 = vld [vmem:[%s186 + $0x598] sm:$0xff]
      %v383 = vld [vmem:[%s186 + $0x5a0] sm:$0xff]
      %v384 = vld [vmem:[%s186 + $0x5a8] sm:$0xff]
      %v385 = vld [vmem:[%s186 + $0x5b0] sm:$0xff]
      %v386 = vld [vmem:[%s186 + $0x5b8] sm:$0xff]
      %v387 = vld [vmem:[%s186 + $0x5c0] sm:$0xff]
      %v388 = vld [vmem:[%s186 + $0x5c8] sm:$0xff]
      %v389 = vld [vmem:[%s186 + $0x5d0] sm:$0xff]
      %v390 = vld [vmem:[%s186 + $0x5d8] sm:$0xff]
      %v391 = vld [vmem:[%s186 + $0x5e0] sm:$0xff]
      %v392 = vld [vmem:[%s186 + $0x5e8] sm:$0xff]
      %v393 = vld [vmem:[%s186 + $0x5f0] sm:$0xff]
      %v394 = vld [vmem:[%s186 + $0x5f8] sm:$0xff]
      %v395 = vld [vmem:[%s186 + $0x600] sm:$0xff]
      %v396 = vld [vmem:[%s186 + $0x608] sm:$0xff]
      %v397 = vld [vmem:[%s186 + $0x610] sm:$0xff]
      %v398 = vld [vmem:[%s186 + $0x618] sm:$0xff]
      %v399 = vld [vmem:[%s186 + $0x620] sm:$0xff]
      %v400 = vld [vmem:[%s186 + $0x628] sm:$0xff]
      %v401 = vld [vmem:[%s186 + $0x630] sm:$0xff]
      %v402 = vld [vmem:[%s186 + $0x638] sm:$0xff]
      %v403 = vld [vmem:[%s186 + $0x640] sm:$0xff]
      %v404 = vld [vmem:[%s186 + $0x648] sm:$0xff]
      %v405 = vld [vmem:[%s186 + $0x650] sm:$0xff]
      %v406 = vld [vmem:[%s186 + $0x658] sm:$0xff]
      %v407 = vld [vmem:[%s186 + $0x660] sm:$0xff]
      %v408 = vld [vmem:[%s186 + $0x668] sm:$0xff]
      %v409 = vld [vmem:[%s186 + $0x670] sm:$0xff]
      %v410 = vld [vmem:[%s186 + $0x678] sm:$0xff]
      %v411 = vld [vmem:[%s186 + $0x680] sm:$0xff]
      %v412 = vld [vmem:[%s186 + $0x688] sm:$0xff]
      %v413 = vld [vmem:[%s186 + $0x690] sm:$0xff]
      %v414 = vld [vmem:[%s186 + $0x698] sm:$0xff]
      %v415 = vld [vmem:[%s186 + $0x6a0] sm:$0xff]
      %v416 = vld [vmem:[%s186 + $0x6a8] sm:$0xff]
      %v417 = vld [vmem:[%s186 + $0x6b0] sm:$0xff]
      %v418 = vld [vmem:[%s186 + $0x6b8] sm:$0xff]
      %v419 = vld [vmem:[%s186 + $0x6c0] sm:$0xff]
      %v420 = vld [vmem:[%s186 + $0x6c8] sm:$0xff]
      %v421 = vld [vmem:[%s186 + $0x6d0] sm:$0xff]
      %v422 = vld [vmem:[%s186 + $0x6d8] sm:$0xff]
      %v423 = vld [vmem:[%s186 + $0x6e0] sm:$0xff]
      %v424 = vld [vmem:[%s186 + $0x6e8] sm:$0xff]
      %v425 = vld [vmem:[%s186 + $0x6f0] sm:$0xff]
      %v426 = vld [vmem:[%s186 + $0x6f8] sm:$0xff]
      %v427 = vld [vmem:[%s186 + $0x700] sm:$0xff]
      %v428 = vld [vmem:[%s186 + $0x708] sm:$0xff]
      %v429 = vld [vmem:[%s186 + $0x710] sm:$0xff]
      %v430 = vld [vmem:[%s186 + $0x718] sm:$0xff]
      %v431 = vld [vmem:[%s186 + $0x720] sm:$0xff]
      %v432 = vld [vmem:[%s186 + $0x728] sm:$0xff]
      %v433 = vld [vmem:[%s186 + $0x730] sm:$0xff]
      %v434 = vld [vmem:[%s186 + $0x738] sm:$0xff]
      %v435 = vld [vmem:[%s186 + $0x740] sm:$0xff]
      %v436 = vld [vmem:[%s186 + $0x748] sm:$0xff]
      %v437 = vld [vmem:[%s186 + $0x750] sm:$0xff]
      %v438 = vld [vmem:[%s186 + $0x758] sm:$0xff]
      %v439 = vld [vmem:[%s186 + $0x760] sm:$0xff]
      %v440 = vld [vmem:[%s186 + $0x768] sm:$0xff]
      %v441 = vld [vmem:[%s186 + $0x770] sm:$0xff]
      %v442 = vld [vmem:[%s186 + $0x778] sm:$0xff]
      %v443 = vld [vmem:[%s186 + $0x780] sm:$0xff]
      %v444 = vld [vmem:[%s186 + $0x788] sm:$0xff]
      %v445 = vld [vmem:[%s186 + $0x790] sm:$0xff]
      %v446 = vld [vmem:[%s186 + $0x798] sm:$0xff]
      %v447 = vld [vmem:[%s186 + $0x7a0] sm:$0xff]
      %v448 = vld [vmem:[%s186 + $0x7a8] sm:$0xff]
      %v449 = vld [vmem:[%s186 + $0x7b0] sm:$0xff]
      %v450 = vld [vmem:[%s186 + $0x7b8] sm:$0xff]
      %v451 = vld [vmem:[%s186 + $0x7c0] sm:$0xff]
      %v452 = vld [vmem:[%s186 + $0x7c8] sm:$0xff]
      %v453 = vld [vmem:[%s186 + $0x7d0] sm:$0xff]
      %v454 = vld [vmem:[%s186 + $0x7d8] sm:$0xff]
      %v455 = vld [vmem:[%s186 + $0x7e0] sm:$0xff]
      %v456 = vld [vmem:[%s186 + $0x7e8] sm:$0xff]
      %v457 = vld [vmem:[%s186 + $0x7f0] sm:$0xff]
      %v458 = vld [vmem:[%s186 + $0x7f8] sm:$0xff]
      %v459 = vld [vmem:[%s192] sm:$0xff]
      %v460 = vld [vmem:[%s192 + $0x8] sm:$0xff]
      %v461 = vld [vmem:[%s192 + $0x10] sm:$0xff]
      %v462 = vld [vmem:[%s192 + $0x18] sm:$0xff]
      %vm463 = vcmask 261120
      %v465 = vsel %vm463, %v203, 0
      %v468 = vsel %vm463, %v204, 0
      %v471 = vsel %vm463, %v205, 0
      %v474 = vsel %vm463, %v206, 0
      %v477 = vsel %vm463, %v207, 0
      %v480 = vsel %vm463, %v208, 0
      %v483 = vsel %vm463, %v209, 0
      %v486 = vsel %vm463, %v210, 0
      %v489 = vsel %vm463, %v211, 0
      %v492 = vsel %vm463, %v212, 0
      %v495 = vsel %vm463, %v213, 0
      %v498 = vsel %vm463, %v214, 0
      %v501 = vsel %vm463, %v215, 0
      %v504 = vsel %vm463, %v216, 0
      %v507 = vsel %vm463, %v217, 0
      %v510 = vsel %vm463, %v218, 0
      %v513 = vsel %vm463, %v219, 0
      %v516 = vsel %vm463, %v220, 0
      %v519 = vsel %vm463, %v221, 0
      %v522 = vsel %vm463, %v222, 0
      %v525 = vsel %vm463, %v223, 0
      %v528 = vsel %vm463, %v224, 0
      %v531 = vsel %vm463, %v225, 0
      %v534 = vsel %vm463, %v226, 0
      %v537 = vsel %vm463, %v227, 0
      %v540 = vsel %vm463, %v228, 0
      %v543 = vsel %vm463, %v229, 0
      %v546 = vsel %vm463, %v230, 0
      %v549 = vsel %vm463, %v231, 0
      %v552 = vsel %vm463, %v232, 0
      %v555 = vsel %vm463, %v233, 0
      %v558 = vsel %vm463, %v234, 0
      %v561 = vsel %vm463, %v235, 0
      %v564 = vsel %vm463, %v236, 0
      %v567 = vsel %vm463, %v237, 0
      %v570 = vsel %vm463, %v238, 0
      %v573 = vsel %vm463, %v239, 0
      %v576 = vsel %vm463, %v240, 0
      %v579 = vsel %vm463, %v241, 0
      %v582 = vsel %vm463, %v242, 0
      %v585 = vsel %vm463, %v243, 0
      %v588 = vsel %vm463, %v244, 0
      %v591 = vsel %vm463, %v245, 0
      %v594 = vsel %vm463, %v246, 0
      %v597 = vsel %vm463, %v247, 0
      %v600 = vsel %vm463, %v248, 0
      %v603 = vsel %vm463, %v249, 0
      %v606 = vsel %vm463, %v250, 0
      %v609 = vsel %vm463, %v251, 0
      %v612 = vsel %vm463, %v252, 0
      %v615 = vsel %vm463, %v253, 0
      %v618 = vsel %vm463, %v254, 0
      %v621 = vsel %vm463, %v255, 0
      %v624 = vsel %vm463, %v256, 0
      %v627 = vsel %vm463, %v257, 0
      %v630 = vsel %vm463, %v258, 0
      %v633 = vsel %vm463, %v259, 0
      %v636 = vsel %vm463, %v260, 0
      %v639 = vsel %vm463, %v261, 0
      %v642 = vsel %vm463, %v262, 0
      %v645 = vsel %vm463, %v263, 0
      %v648 = vsel %vm463, %v264, 0
      %v651 = vsel %vm463, %v265, 0
      %v654 = vsel %vm463, %v266, 0
      %v657 = vsel %vm463, %v267, 0
      %v660 = vsel %vm463, %v268, 0
      %v663 = vsel %vm463, %v269, 0
      %v666 = vsel %vm463, %v270, 0
      %v669 = vsel %vm463, %v271, 0
      %v672 = vsel %vm463, %v272, 0
      %v675 = vsel %vm463, %v273, 0
      %v678 = vsel %vm463, %v274, 0
      %v681 = vsel %vm463, %v275, 0
      %v684 = vsel %vm463, %v276, 0
      %v687 = vsel %vm463, %v277, 0
      %v690 = vsel %vm463, %v278, 0
      %v693 = vsel %vm463, %v279, 0
      %v696 = vsel %vm463, %v280, 0
      %v699 = vsel %vm463, %v281, 0
      %v702 = vsel %vm463, %v282, 0
      %v705 = vsel %vm463, %v283, 0
      %v708 = vsel %vm463, %v284, 0
      %v711 = vsel %vm463, %v285, 0
      %v714 = vsel %vm463, %v286, 0
      %v717 = vsel %vm463, %v287, 0
      %v720 = vsel %vm463, %v288, 0
      %v723 = vsel %vm463, %v289, 0
      %v726 = vsel %vm463, %v290, 0
      %v729 = vsel %vm463, %v291, 0
      %v732 = vsel %vm463, %v292, 0
      %v735 = vsel %vm463, %v293, 0
      %v738 = vsel %vm463, %v294, 0
      %v741 = vsel %vm463, %v295, 0
      %v744 = vsel %vm463, %v296, 0
      %v747 = vsel %vm463, %v297, 0
      %v750 = vsel %vm463, %v298, 0
      %v753 = vsel %vm463, %v299, 0
      %v756 = vsel %vm463, %v300, 0
      %v759 = vsel %vm463, %v301, 0
      %v762 = vsel %vm463, %v302, 0
      %v765 = vsel %vm463, %v303, 0
      %v768 = vsel %vm463, %v304, 0
      %v771 = vsel %vm463, %v305, 0
      %v774 = vsel %vm463, %v306, 0
      %v777 = vsel %vm463, %v307, 0
      %v780 = vsel %vm463, %v308, 0
      %v783 = vsel %vm463, %v309, 0
      %v786 = vsel %vm463, %v310, 0
      %v789 = vsel %vm463, %v311, 0
      %v792 = vsel %vm463, %v312, 0
      %v795 = vsel %vm463, %v313, 0
      %v798 = vsel %vm463, %v314, 0
      %v801 = vsel %vm463, %v315, 0
      %v804 = vsel %vm463, %v316, 0
      %v807 = vsel %vm463, %v317, 0
      %v810 = vsel %vm463, %v318, 0
      %v813 = vsel %vm463, %v319, 0
      %v816 = vsel %vm463, %v320, 0
      %v819 = vsel %vm463, %v321, 0
      %v822 = vsel %vm463, %v322, 0
      %v825 = vsel %vm463, %v323, 0
      %v828 = vsel %vm463, %v324, 0
      %v831 = vsel %vm463, %v325, 0
      %v834 = vsel %vm463, %v326, 0
      %v837 = vsel %vm463, %v327, 0
      %v840 = vsel %vm463, %v328, 0
      %v843 = vsel %vm463, %v329, 0
      %v846 = vsel %vm463, %v330, 0
      %v849 = vsel %vm463, %v331, 0
      %v852 = vsel %vm463, %v332, 0
      %v855 = vsel %vm463, %v333, 0
      %v858 = vsel %vm463, %v334, 0
      %v861 = vsel %vm463, %v335, 0
      %v864 = vsel %vm463, %v336, 0
      %v867 = vsel %vm463, %v337, 0
      %v870 = vsel %vm463, %v338, 0
      %v873 = vsel %vm463, %v339, 0
      %v876 = vsel %vm463, %v340, 0
      %v879 = vsel %vm463, %v341, 0
      %v882 = vsel %vm463, %v342, 0
      %v885 = vsel %vm463, %v343, 0
      %v888 = vsel %vm463, %v344, 0
      %v891 = vsel %vm463, %v345, 0
      %v894 = vsel %vm463, %v346, 0
      %v897 = vsel %vm463, %v347, 0
      %v900 = vsel %vm463, %v348, 0
      %v903 = vsel %vm463, %v349, 0
      %v906 = vsel %vm463, %v350, 0
      %v909 = vsel %vm463, %v351, 0
      %v912 = vsel %vm463, %v352, 0
      %v915 = vsel %vm463, %v353, 0
      %v918 = vsel %vm463, %v354, 0
      %v921 = vsel %vm463, %v355, 0
      %v924 = vsel %vm463, %v356, 0
      %v927 = vsel %vm463, %v357, 0
      %v930 = vsel %vm463, %v358, 0
      %v933 = vsel %vm463, %v359, 0
      %v936 = vsel %vm463, %v360, 0
      %v939 = vsel %vm463, %v361, 0
      %v942 = vsel %vm463, %v362, 0
      %v945 = vsel %vm463, %v363, 0
      %v948 = vsel %vm463, %v364, 0
      %v951 = vsel %vm463, %v365, 0
      %v954 = vsel %vm463, %v366, 0
      %v957 = vsel %vm463, %v367, 0
      %v960 = vsel %vm463, %v368, 0
      %v963 = vsel %vm463, %v369, 0
      %v966 = vsel %vm463, %v370, 0
      %v969 = vsel %vm463, %v371, 0
      %v972 = vsel %vm463, %v372, 0
      %v975 = vsel %vm463, %v373, 0
      %v978 = vsel %vm463, %v374, 0
      %v981 = vsel %vm463, %v375, 0
      %v984 = vsel %vm463, %v376, 0
      %v987 = vsel %vm463, %v377, 0
      %v990 = vsel %vm463, %v378, 0
      %v993 = vsel %vm463, %v379, 0
      %v996 = vsel %vm463, %v380, 0
      %v999 = vsel %vm463, %v381, 0
      %v1002 = vsel %vm463, %v382, 0
      %v1005 = vsel %vm463, %v383, 0
      %v1008 = vsel %vm463, %v384, 0
      %v1011 = vsel %vm463, %v385, 0
      %v1014 = vsel %vm463, %v386, 0
      %v1017 = vsel %vm463, %v387, 0
      %v1020 = vsel %vm463, %v388, 0
      %v1023 = vsel %vm463, %v389, 0
      %v1026 = vsel %vm463, %v390, 0
      %v1029 = vsel %vm463, %v391, 0
      %v1032 = vsel %vm463, %v392, 0
      %v1035 = vsel %vm463, %v393, 0
      %v1038 = vsel %vm463, %v394, 0
      %v1041 = vsel %vm463, %v395, 0
      %v1044 = vsel %vm463, %v396, 0
      %v1047 = vsel %vm463, %v397, 0
      %v1050 = vsel %vm463, %v398, 0
      %v1053 = vsel %vm463, %v399, 0
      %v1056 = vsel %vm463, %v400, 0
      %v1059 = vsel %vm463, %v401, 0
      %v1062 = vsel %vm463, %v402, 0
      %v1065 = vsel %vm463, %v403, 0
      %v1068 = vsel %vm463, %v404, 0
      %v1071 = vsel %vm463, %v405, 0
      %v1074 = vsel %vm463, %v406, 0
      %v1077 = vsel %vm463, %v407, 0
      %v1080 = vsel %vm463, %v408, 0
      %v1083 = vsel %vm463, %v409, 0
      %v1086 = vsel %vm463, %v410, 0
      %v1089 = vsel %vm463, %v411, 0
      %v1092 = vsel %vm463, %v412, 0
      %v1095 = vsel %vm463, %v413, 0
      %v1098 = vsel %vm463, %v414, 0
      %v1101 = vsel %vm463, %v415, 0
      %v1104 = vsel %vm463, %v416, 0
      %v1107 = vsel %vm463, %v417, 0
      %v1110 = vsel %vm463, %v418, 0
      %v1113 = vsel %vm463, %v419, 0
      %v1116 = vsel %vm463, %v420, 0
      %v1119 = vsel %vm463, %v421, 0
      %v1122 = vsel %vm463, %v422, 0
      %v1125 = vsel %vm463, %v423, 0
      %v1128 = vsel %vm463, %v424, 0
      %v1131 = vsel %vm463, %v425, 0
      %v1134 = vsel %vm463, %v426, 0
      %v1137 = vsel %vm463, %v427, 0
      %v1140 = vsel %vm463, %v428, 0
      %v1143 = vsel %vm463, %v429, 0
      %v1146 = vsel %vm463, %v430, 0
      %v1149 = vsel %vm463, %v431, 0
      %v1152 = vsel %vm463, %v432, 0
      %v1155 = vsel %vm463, %v433, 0
      %v1158 = vsel %vm463, %v434, 0
      %v1161 = vsel %vm463, %v435, 0
      %v1164 = vsel %vm463, %v436, 0
      %v1167 = vsel %vm463, %v437, 0
      %v1170 = vsel %vm463, %v438, 0
      %v1173 = vsel %vm463, %v439, 0
      %v1176 = vsel %vm463, %v440, 0
      %v1179 = vsel %vm463, %v441, 0
      %v1182 = vsel %vm463, %v442, 0
      %v1185 = vsel %vm463, %v443, 0
      %v1188 = vsel %vm463, %v444, 0
      %v1191 = vsel %vm463, %v445, 0
      %v1194 = vsel %vm463, %v446, 0
      %v1197 = vsel %vm463, %v447, 0
      %v1200 = vsel %vm463, %v448, 0
      %v1203 = vsel %vm463, %v449, 0
      %v1206 = vsel %vm463, %v450, 0
      %v1209 = vsel %vm463, %v451, 0
      %v1212 = vsel %vm463, %v452, 0
      %v1215 = vsel %vm463, %v453, 0
      %v1218 = vsel %vm463, %v454, 0
      %v1221 = vsel %vm463, %v455, 0
      %v1224 = vsel %vm463, %v456, 0
      %v1227 = vsel %vm463, %v457, 0
      %v1230 = vsel %vm463, %v458, 0
      %1232 = vmatprep.subr.mxu0 0.0
      %1233 = vmatpush1.msra.mxu0 %v459
      %1234 = vmatprep.subr.mxu0 0.0
      %1235 = vmatpush1.msra.mxu0 %v460
      %1236 = vmatprep.subr.mxu0 0.0
      %1237 = vmatpush1.msra.mxu0 %v461
      %1238 = vmatprep.subr.mxu0 0.0
      %1239 = vmatpush1.msra.mxu0 %v462
      %1240 = vmatprep.subr.mxu0 0.0
      %1241 = vmatpush1.msra.mxu0 0.0
      %1242 = vmatprep.subr.mxu0 0.0
      %1243 = vmatpush1.msra.mxu0 0.0
      %1244 = vmatprep.subr.mxu0 0.0
      %1245 = vmatpush1.msra.mxu0 0.0
      %1246 = vmatprep.subr.mxu0 0.0
      %1247 = vmatpush1.msra.mxu0 0.0
      %1248 = vmatprep.subr.mxu0 0.0
      %1249 = vmatpush1.msra.mxu0 0.0
      %1250 = vmatprep.subr.mxu0 0.0
      %1251 = vmatpush1.msra.mxu0 0.0
      %1252 = vmatprep.subr.mxu0 0.0
      %1253 = vmatpush1.msra.mxu0 0.0
      %1254 = vmatprep.subr.mxu0 0.0
      %1255 = vmatpush1.msra.mxu0 0.0
      %1256 = vmatprep.subr.mxu0 0.0
      %1257 = vmatpush1.msra.mxu0 0.0
      %1258 = vmatprep.subr.mxu0 0.0
      %1259 = vmatpush1.msra.mxu0 0.0
      %1260 = vmatprep.subr.mxu0 0.0
      %1261 = vmatpush1.msra.mxu0 0.0
      %1262 = vmatprep.subr.mxu0 0.0
      %1263 = vmatpush1.msra.mxu0 0.0
      %1264 = vmatprep.subr.mxu0 0.0
      %1265 = vmatpush1.msra.mxu0 0.0
      %1266 = vmatprep.subr.mxu0 0.0
      %1267 = vmatpush1.msra.mxu0 0.0
      %1268 = vmatprep.subr.mxu0 0.0
      %1269 = vmatpush1.msra.mxu0 0.0
      %1270 = vmatprep.subr.mxu0 0.0
      %1271 = vmatpush1.msra.mxu0 0.0
      %1272 = vmatprep.subr.mxu0 0.0
      %1273 = vmatpush1.msra.mxu0 0.0
      %1274 = vmatprep.subr.mxu0 0.0
      %1275 = vmatpush1.msra.mxu0 0.0
      %1276 = vmatprep.subr.mxu0 0.0
      %1277 = vmatpush1.msra.mxu0 0.0
      %1278 = vmatprep.subr.mxu0 0.0
      %1279 = vmatpush1.msra.mxu0 0.0
      %1280 = vmatprep.subr.mxu0 0.0
      %1281 = vmatpush1.msra.mxu0 0.0
      %1282 = vmatprep.subr.mxu0 0.0
      %1283 = vmatpush1.msra.mxu0 0.0
      %1284 = vmatprep.subr.mxu0 0.0
      %1285 = vmatpush1.msra.mxu0 0.0
      %1286 = vmatprep.subr.mxu0 0.0
      %1287 = vmatpush1.msra.mxu0 0.0
      %1288 = vmatprep.subr.mxu0 0.0
      %1289 = vmatpush1.msra.mxu0 0.0
      %1290 = vmatprep.subr.mxu0 0.0
      %1291 = vmatpush1.msra.mxu0 0.0
      %1292 = vmatprep.subr.mxu0 0.0
      %1293 = vmatpush1.msra.mxu0 0.0
      %1294 = vmatprep.subr.mxu0 0.0
      %1295 = vmatpush1.msra.mxu0 0.0
      %1296 = vmatprep.mubr.f32.mxu0 0.0
      %1297 = vmatmul.mubr.f32.gmra.mrb[0].mxu0 %v465
      %v1298 = vpop.f32.mrb[0].mxu0
      %v1299 = vadd.f32 0.0, %v1298
      %v1300 = vpop.f32.mrb[0].mxu0
      %1301 = vmatprep.mubr.f32.mxu0 0.0
      %1302 = vmatmul.mubr.f32.gmra.mrb[0].mxu0 %v468
      %v1303 = vpop.f32.mrb[0].mxu0
      %v1304 = vadd.f32 0.0, %v1303
      %v1305 = vpop.f32.mrb[0].mxu0
      %1306 = vmatprep.mubr.f32.mxu0 0.0
      %1307 = vmatmul.mubr.f32.gmra.mrb[0].mxu0 %v471
      %v1308 = vpop.f32.mrb[0].mxu0
      %v1309 = vadd.f32 0.0, %v1308
      %v1310 = vpop.f32.mrb[0].mxu0
      %1311 = vmatprep.mubr.f32.mxu0 0.0
      %1312 = vmatmul.mubr.f32.gmra.mrb[0].mxu0 %v474
      %v1313 = vpop.f32.mrb[0].mxu0
      %v1314 = vadd.f32 0.0, %v1313
      %v1315 = vpop.f32.mrb[0].mxu0
      %1316 = vmatprep.mubr.f32.mxu0 0.0
      %1317 = vmatmul.mubr.f32.gmra.mrb[0].mxu0 %v477
      %v1318 = vpop.f32.mrb[0].mxu0
      %v1319 = vadd.f32 0.0, %v1318
      %v1320 = vpop.f32.mrb[0].mxu0
      %1321 = vmatprep.mubr.f32.mxu0 0.0
      %1322 = vmatmul.mubr.f32.gmra.mrb[0].mxu0 %v480
      %v1323 = vpop.f32.mrb[0].mxu0
      %v1324 = vadd.f32 0.0, %v1323
      %v1325 = vpop.f32.mrb[0].mxu0
      %1326 = vmatprep.mubr.f32.mxu0 0.0
      %1327 = vmatmul.mubr.f32.gmra.mrb[0].mxu0 %v483
      %v1328 = vpop.f32.mrb[0].mxu0
      %v1329 = vadd.f32 0.0, %v1328
      %v1330 = vpop.f32.mrb[0].mxu0
      %1331 = vmatprep.mubr.f32.mxu0 0.0
      %1332 = vmatmul.mubr.f32.gmra.mrb[0].mxu0 %v486
      %v1333 = vpop.f32.mrb[0].mxu0
      %v1334 = vadd.f32 0.0, %v1333
      %v1335 = vpop.f32.mrb[0].mxu0
      %1336 = vmatprep.mubr.f32.mxu0 0.0
      %1337 = vmatmul.mubr.f32.gmra.mrb[0].mxu0 %v489
      %v1338 = vpop.f32.mrb[0].mxu0
      %v1339 = vadd.f32 0.0, %v1338
      %v1340 = vpop.f32.mrb[0].mxu0
      %1341 = vmatprep.mubr.f32.mxu0 0.0
      %1342 = vmatmul.mubr.f32.gmra.mrb[0].mxu0 %v492
      %v1343 = vpop.f32.mrb[0].mxu0
      %v1344 = vadd.f32 0.0, %v1343
      %v1345 = vpop.f32.mrb[0].mxu0
      %1346 = vmatprep.mubr.f32.mxu0 0.0
      %1347 = vmatmul.mubr.f32.gmra.mrb[0].mxu0 %v495
      %v1348 = vpop.f32.mrb[0].mxu0
      %v1349 = vadd.f32 0.0, %v1348
      %v1350 = vpop.f32.mrb[0].mxu0
      %1351 = vmatprep.mubr.f32.mxu0 0.0
      %1352 = vmatmul.mubr.f32.gmra.mrb[0].mxu0 %v498
      %v1353 = vpop.f32.mrb[0].mxu0
      %v1354 = vadd.f32 0.0, %v1353
      %v1355 = vpop.f32.mrb[0].mxu0
      %1356 = vmatprep.mubr.f32.mxu0 0.0
      %1357 = vmatmul.mubr.f32.gmra.mrb[0].mxu0 %v501
      %v1358 = vpop.f32.mrb[0].mxu0
      %v1359 = vadd.f32 0.0, %v1358
      %v1360 = vpop.f32.mrb[0].mxu0
      %1361 = vmatprep.mubr.f32.mxu0 0.0
      %1362 = vmatmul.mubr.f32.gmra.mrb[0].mxu0 %v504
      %v1363 = vpop.f32.mrb[0].mxu0
      %v1364 = vadd.f32 0.0, %v1363
      %v1365 = vpop.f32.mrb[0].mxu0
      %1366 = vmatprep.mubr.f32.mxu0 0.0
      %1367 = vmatmul.mubr.f32.gmra.mrb[0].mxu0 %v507
      %v1368 = vpop.f32.mrb[0].mxu0
      %v1369 = vadd.f32 0.0, %v1368
      %v1370 = vpop.f32.mrb[0].mxu0
      %1371 = vmatprep.mubr.f32.mxu0 0.0
      %1372 = vmatmul.mubr.f32.gmra.mrb[0].mxu0 %v510
      %v1373 = vpop.f32.mrb[0].mxu0
      %v1374 = vadd.f32 0.0, %v1373
      %v1375 = vpop.f32.mrb[0].mxu0
      %1376 = vmatprep.mubr.f32.mxu0 0.0
      %1377 = vmatmul.mubr.f32.gmra.mrb[0].mxu0 %v513
      %v1378 = vpop.f32.mrb[0].mxu0
      %v1379 = vadd.f32 0.0, %v1378
      %v1380 = vpop.f32.mrb[0].mxu0
      %1381 = vmatprep.mubr.f32.mxu0 0.0
      %1382 = vmatmul.mubr.f32.gmra.mrb[0].mxu0 %v516
      %v1383 = vpop.f32.mrb[0].mxu0
      %v1384 = vadd.f32 0.0, %v1383
      %v1385 = vpop.f32.mrb[0].mxu0
      %1386 = vmatprep.mubr.f32.mxu0 0.0
      %1387 = vmatmul.mubr.f32.gmra.mrb[0].mxu0 %v519
      %v1388 = vpop.f32.mrb[0].mxu0
      %v1389 = vadd.f32 0.0, %v1388
      %v1390 = vpop.f32.mrb[0].mxu0
      %1391 = vmatprep.mubr.f32.mxu0 0.0
      %1392 = vmatmul.mubr.f32.gmra.mrb[0].mxu0 %v522
      %v1393 = vpop.f32.mrb[0].mxu0
      %v1394 = vadd.f32 0.0, %v1393
      %v1395 = vpop.f32.mrb[0].mxu0
      %1396 = vmatprep.mubr.f32.mxu0 0.0
      %1397 = vmatmul.mubr.f32.gmra.mrb[0].mxu0 %v525
      %v1398 = vpop.f32.mrb[0].mxu0
      %v1399 = vadd.f32 0.0, %v1398
      %v1400 = vpop.f32.mrb[0].mxu0
      %1401 = vmatprep.mubr.f32.mxu0 0.0
      %1402 = vmatmul.mubr.f32.gmra.mrb[0].mxu0 %v528
      %v1403 = vpop.f32.mrb[0].mxu0
      %v1404 = vadd.f32 0.0, %v1403
      %v1405 = vpop.f32.mrb[0].mxu0
      %1406 = vmatprep.mubr.f32.mxu0 0.0
      %1407 = vmatmul.mubr.f32.gmra.mrb[0].mxu0 %v531
      %v1408 = vpop.f32.mrb[0].mxu0
      %v1409 = vadd.f32 0.0, %v1408
      %v1410 = vpop.f32.mrb[0].mxu0
      %1411 = vmatprep.mubr.f32.mxu0 0.0
      %1412 = vmatmul.mubr.f32.gmra.mrb[0].mxu0 %v534
      %v1413 = vpop.f32.mrb[0].mxu0
      %v1414 = vadd.f32 0.0, %v1413
      %v1415 = vpop.f32.mrb[0].mxu0
      %1416 = vmatprep.mubr.f32.mxu0 0.0
      %1417 = vmatmul.mubr.f32.gmra.mrb[0].mxu0 %v537
      %v1418 = vpop.f32.mrb[0].mxu0
      %v1419 = vadd.f32 0.0, %v1418
      %v1420 = vpop.f32.mrb[0].mxu0
      %1421 = vmatprep.mubr.f32.mxu0 0.0
      %1422 = vmatmul.mubr.f32.gmra.mrb[0].mxu0 %v540
      %v1423 = vpop.f32.mrb[0].mxu0
      %v1424 = vadd.f32 0.0, %v1423
      %v1425 = vpop.f32.mrb[0].mxu0
      %1426 = vmatprep.mubr.f32.mxu0 0.0
      %1427 = vmatmul.mubr.f32.gmra.mrb[0].mxu0 %v543
      %v1428 = vpop.f32.mrb[0].mxu0
      %v1429 = vadd.f32 0.0, %v1428
      %v1430 = vpop.f32.mrb[0].mxu0
      %1431 = vmatprep.mubr.f32.mxu0 0.0
      %1432 = vmatmul.mubr.f32.gmra.mrb[0].mxu0 %v546
      %v1433 = vpop.f32.mrb[0].mxu0
      %v1434 = vadd.f32 0.0, %v1433
      %v1435 = vpop.f32.mrb[0].mxu0
      %1436 = vmatprep.mubr.f32.mxu0 0.0
      %1437 = vmatmul.mubr.f32.gmra.mrb[0].mxu0 %v549
      %v1438 = vpop.f32.mrb[0].mxu0
      %v1439 = vadd.f32 0.0, %v1438
      %v1440 = vpop.f32.mrb[0].mxu0
      %1441 = vmatprep.mubr.f32.mxu0 0.0
      %1442 = vmatmul.mubr.f32.gmra.mrb[0].mxu0 %v552
      %v1443 = vpop.f32.mrb[0].mxu0
      %v1444 = vadd.f32 0.0, %v1443
      %v1445 = vpop.f32.mrb[0].mxu0
      %1446 = vmatprep.mubr.f32.mxu0 0.0
      %1447 = vmatmul.mubr.f32.gmra.mrb[0].mxu0 %v555
      %v1448 = vpop.f32.mrb[0].mxu0
      %v1449 = vadd.f32 0.0, %v1448
      %v1450 = vpop.f32.mrb[0].mxu0
      %1451 = vmatprep.mubr.f32.mxu0 0.0
      %1452 = vmatmul.mubr.f32.gmra.mrb[0].mxu0 %v558
      %v1453 = vpop.f32.mrb[0].mxu0
      %v1454 = vadd.f32 0.0, %v1453
      %v1455 = vpop.f32.mrb[0].mxu0
      %1456 = vmatprep.mubr.f32.mxu0 0.0
      %1457 = vmatmul.mubr.f32.gmra.mrb[0].mxu0 %v561
      %v1458 = vpop.f32.mrb[0].mxu0
      %v1459 = vadd.f32 0.0, %v1458
      %v1460 = vpop.f32.mrb[0].mxu0
      %1461 = vmatprep.mubr.f32.mxu0 0.0
      %1462 = vmatmul.mubr.f32.gmra.mrb[0].mxu0 %v564
      %v1463 = vpop.f32.mrb[0].mxu0
      %v1464 = vadd.f32 0.0, %v1463
      %v1465 = vpop.f32.mrb[0].mxu0
      %1466 = vmatprep.mubr.f32.mxu0 0.0
      %1467 = vmatmul.mubr.f32.gmra.mrb[0].mxu0 %v567
      %v1468 = vpop.f32.mrb[0].mxu0
      %v1469 = vadd.f32 0.0, %v1468
      %v1470 = vpop.f32.mrb[0].mxu0
      %1471 = vmatprep.mubr.f32.mxu0 0.0
      %1472 = vmatmul.mubr.f32.gmra.mrb[0].mxu0 %v570
      %v1473 = vpop.f32.mrb[0].mxu0
      %v1474 = vadd.f32 0.0, %v1473
      %v1475 = vpop.f32.mrb[0].mxu0
      %1476 = vmatprep.mubr.f32.mxu0 0.0
      %1477 = vmatmul.mubr.f32.gmra.mrb[0].mxu0 %v573
      %v1478 = vpop.f32.mrb[0].mxu0
      %v1479 = vadd.f32 0.0, %v1478
      %v1480 = vpop.f32.mrb[0].mxu0
      %1481 = vmatprep.mubr.f32.mxu0 0.0
      %1482 = vmatmul.mubr.f32.gmra.mrb[0].mxu0 %v576
      %v1483 = vpop.f32.mrb[0].mxu0
      %v1484 = vadd.f32 0.0, %v1483
      %v1485 = vpop.f32.mrb[0].mxu0
      %1486 = vmatprep.mubr.f32.mxu0 0.0
      %1487 = vmatmul.mubr.f32.gmra.mrb[0].mxu0 %v579
      %v1488 = vpop.f32.mrb[0].mxu0
      %v1489 = vadd.f32 0.0, %v1488
      %v1490 = vpop.f32.mrb[0].mxu0
      %1491 = vmatprep.mubr.f32.mxu0 0.0
      %1492 = vmatmul.mubr.f32.gmra.mrb[0].mxu0 %v582
      %v1493 = vpop.f32.mrb[0].mxu0
      %v1494 = vadd.f32 0.0, %v1493
      %v1495 = vpop.f32.mrb[0].mxu0
      %1496 = vmatprep.mubr.f32.mxu0 0.0
      %1497 = vmatmul.mubr.f32.gmra.mrb[0].mxu0 %v585
      %v1498 = vpop.f32.mrb[0].mxu0
      %v1499 = vadd.f32 0.0, %v1498
      %v1500 = vpop.f32.mrb[0].mxu0
      %1501 = vmatprep.mubr.f32.mxu0 0.0
      %1502 = vmatmul.mubr.f32.gmra.mrb[0].mxu0 %v588
      %v1503 = vpop.f32.mrb[0].mxu0
      %v1504 = vadd.f32 0.0, %v1503
      %v1505 = vpop.f32.mrb[0].mxu0
      %1506 = vmatprep.mubr.f32.mxu0 0.0
      %1507 = vmatmul.mubr.f32.gmra.mrb[0].mxu0 %v591
      %v1508 = vpop.f32.mrb[0].mxu0
      %v1509 = vadd.f32 0.0, %v1508
      %v1510 = vpop.f32.mrb[0].mxu0
      %1511 = vmatprep.mubr.f32.mxu0 0.0
      %1512 = vmatmul.mubr.f32.gmra.mrb[0].mxu0 %v594
      %v1513 = vpop.f32.mrb[0].mxu0
      %v1514 = vadd.f32 0.0, %v1513
      %v1515 = vpop.f32.mrb[0].mxu0
      %1516 = vmatprep.mubr.f32.mxu0 0.0
      %1517 = vmatmul.mubr.f32.gmra.mrb[0].mxu0 %v597
      %v1518 = vpop.f32.mrb[0].mxu0
      %v1519 = vadd.f32 0.0, %v1518
      %v1520 = vpop.f32.mrb[0].mxu0
      %1521 = vmatprep.mubr.f32.mxu0 0.0
      %1522 = vmatmul.mubr.f32.gmra.mrb[0].mxu0 %v600
      %v1523 = vpop.f32.mrb[0].mxu0
      %v1524 = vadd.f32 0.0, %v1523
      %v1525 = vpop.f32.mrb[0].mxu0
      %1526 = vmatprep.mubr.f32.mxu0 0.0
      %1527 = vmatmul.mubr.f32.gmra.mrb[0].mxu0 %v603
      %v1528 = vpop.f32.mrb[0].mxu0
      %v1529 = vadd.f32 0.0, %v1528
      %v1530 = vpop.f32.mrb[0].mxu0
      %1531 = vmatprep.mubr.f32.mxu0 0.0
      %1532 = vmatmul.mubr.f32.gmra.mrb[0].mxu0 %v606
      %v1533 = vpop.f32.mrb[0].mxu0
      %v1534 = vadd.f32 0.0, %v1533
      %v1535 = vpop.f32.mrb[0].mxu0
      %1536 = vmatprep.mubr.f32.mxu0 0.0
      %1537 = vmatmul.mubr.f32.gmra.mrb[0].mxu0 %v609
      %v1538 = vpop.f32.mrb[0].mxu0
      %v1539 = vadd.f32 0.0, %v1538
      %v1540 = vpop.f32.mrb[0].mxu0
      %1541 = vmatprep.mubr.f32.mxu0 0.0
      %1542 = vmatmul.mubr.f32.gmra.mrb[0].mxu0 %v612
      %v1543 = vpop.f32.mrb[0].mxu0
      %v1544 = vadd.f32 0.0, %v1543
      %v1545 = vpop.f32.mrb[0].mxu0
      %1546 = vmatprep.mubr.f32.mxu0 0.0
      %1547 = vmatmul.mubr.f32.gmra.mrb[0].mxu0 %v615
      %v1548 = vpop.f32.mrb[0].mxu0
      %v1549 = vadd.f32 0.0, %v1548
      %v1550 = vpop.f32.mrb[0].mxu0
      %1551 = vmatprep.mubr.f32.mxu0 0.0
      %1552 = vmatmul.mubr.f32.gmra.mrb[0].mxu0 %v618
      %v1553 = vpop.f32.mrb[0].mxu0
      %v1554 = vadd.f32 0.0, %v1553
      %v1555 = vpop.f32.mrb[0].mxu0
      %1556 = vmatprep.mubr.f32.mxu0 0.0
      %1557 = vmatmul.mubr.f32.gmra.mrb[0].mxu0 %v621
      %v1558 = vpop.f32.mrb[0].mxu0
      %v1559 = vadd.f32 0.0, %v1558
      %v1560 = vpop.f32.mrb[0].mxu0
      %1561 = vmatprep.mubr.f32.mxu0 0.0
      %1562 = vmatmul.mubr.f32.gmra.mrb[0].mxu0 %v624
      %v1563 = vpop.f32.mrb[0].mxu0
      %v1564 = vadd.f32 0.0, %v1563
      %v1565 = vpop.f32.mrb[0].mxu0
      %1566 = vmatprep.mubr.f32.mxu0 0.0
      %1567 = vmatmul.mubr.f32.gmra.mrb[0].mxu0 %v627
      %v1568 = vpop.f32.mrb[0].mxu0
      %v1569 = vadd.f32 0.0, %v1568
      %v1570 = vpop.f32.mrb[0].mxu0
      %1571 = vmatprep.mubr.f32.mxu0 0.0
      %1572 = vmatmul.mubr.f32.gmra.mrb[0].mxu0 %v630
      %v1573 = vpop.f32.mrb[0].mxu0
      %v1574 = vadd.f32 0.0, %v1573
      %v1575 = vpop.f32.mrb[0].mxu0
      %1576 = vmatprep.mubr.f32.mxu0 0.0
      %1577 = vmatmul.mubr.f32.gmra.mrb[0].mxu0 %v633
      %v1578 = vpop.f32.mrb[0].mxu0
      %v1579 = vadd.f32 0.0, %v1578
      %v1580 = vpop.f32.mrb[0].mxu0
      %1581 = vmatprep.mubr.f32.mxu0 0.0
      %1582 = vmatmul.mubr.f32.gmra.mrb[0].mxu0 %v636
      %v1583 = vpop.f32.mrb[0].mxu0
      %v1584 = vadd.f32 0.0, %v1583
      %v1585 = vpop.f32.mrb[0].mxu0
      %1586 = vmatprep.mubr.f32.mxu0 0.0
      %1587 = vmatmul.mubr.f32.gmra.mrb[0].mxu0 %v639
      %v1588 = vpop.f32.mrb[0].mxu0
      %v1589 = vadd.f32 0.0, %v1588
      %v1590 = vpop.f32.mrb[0].mxu0
      %1591 = vmatprep.mubr.f32.mxu0 0.0
      %1592 = vmatmul.mubr.f32.gmra.mrb[0].mxu0 %v642
      %v1593 = vpop.f32.mrb[0].mxu0
      %v1594 = vadd.f32 0.0, %v1593
      %v1595 = vpop.f32.mrb[0].mxu0
      %1596 = vmatprep.mubr.f32.mxu0 0.0
      %1597 = vmatmul.mubr.f32.gmra.mrb[0].mxu0 %v645
      %v1598 = vpop.f32.mrb[0].mxu0
      %v1599 = vadd.f32 0.0, %v1598
      %v1600 = vpop.f32.mrb[0].mxu0
      %1601 = vmatprep.mubr.f32.mxu0 0.0
      %1602 = vmatmul.mubr.f32.gmra.mrb[0].mxu0 %v648
      %v1603 = vpop.f32.mrb[0].mxu0
      %v1604 = vadd.f32 0.0, %v1603
      %v1605 = vpop.f32.mrb[0].mxu0
      %1606 = vmatprep.mubr.f32.mxu0 0.0
      %1607 = vmatmul.mubr.f32.gmra.mrb[0].mxu0 %v651
      %v1608 = vpop.f32.mrb[0].mxu0
      %v1609 = vadd.f32 0.0, %v1608
      %v1610 = vpop.f32.mrb[0].mxu0
      %1611 = vmatprep.mubr.f32.mxu0 0.0
      %1612 = vmatmul.mubr.f32.gmra.mrb[0].mxu0 %v654
      %v1613 = vpop.f32.mrb[0].mxu0
      %v1614 = vadd.f32 0.0, %v1613
      %v1615 = vpop.f32.mrb[0].mxu0
      %1616 = vmatprep.mubr.f32.mxu0 0.0
      %1617 = vmatmul.mubr.f32.gmra.mrb[0].mxu0 %v657
      %v1618 = vpop.f32.mrb[0].mxu0
      %v1619 = vadd.f32 0.0, %v1618
      %v1620 = vpop.f32.mrb[0].mxu0
      %1621 = vmatprep.mubr.f32.mxu0 0.0
      %1622 = vmatmul.mubr.f32.gmra.mrb[0].mxu0 %v660
      %v1623 = vpop.f32.mrb[0].mxu0
      %v1624 = vadd.f32 0.0, %v1623
      %v1625 = vpop.f32.mrb[0].mxu0
      %1626 = vmatprep.mubr.f32.mxu0 0.0
      %1627 = vmatmul.mubr.f32.gmra.mrb[0].mxu0 %v663
      %v1628 = vpop.f32.mrb[0].mxu0
      %v1629 = vadd.f32 0.0, %v1628
      %v1630 = vpop.f32.mrb[0].mxu0
      %1631 = vmatprep.mubr.f32.mxu0 0.0
      %1632 = vmatmul.mubr.f32.gmra.mrb[0].mxu0 %v666
      %v1633 = vpop.f32.mrb[0].mxu0
      %v1634 = vadd.f32 0.0, %v1633
      %v1635 = vpop.f32.mrb[0].mxu0
      %1636 = vmatprep.mubr.f32.mxu0 0.0
      %1637 = vmatmul.mubr.f32.gmra.mrb[0].mxu0 %v669
      %v1638 = vpop.f32.mrb[0].mxu0
      %v1639 = vadd.f32 0.0, %v1638
      %v1640 = vpop.f32.mrb[0].mxu0
      %1641 = vmatprep.mubr.f32.mxu0 0.0
      %1642 = vmatmul.mubr.f32.gmra.mrb[0].mxu0 %v672
      %v1643 = vpop.f32.mrb[0].mxu0
      %v1644 = vadd.f32 0.0, %v1643
      %v1645 = vpop.f32.mrb[0].mxu0
      %1646 = vmatprep.mubr.f32.mxu0 0.0
      %1647 = vmatmul.mubr.f32.gmra.mrb[0].mxu0 %v675
      %v1648 = vpop.f32.mrb[0].mxu0
      %v1649 = vadd.f32 0.0, %v1648
      %v1650 = vpop.f32.mrb[0].mxu0
      %1651 = vmatprep.mubr.f32.mxu0 0.0
      %1652 = vmatmul.mubr.f32.gmra.mrb[0].mxu0 %v678
      %v1653 = vpop.f32.mrb[0].mxu0
      %v1654 = vadd.f32 0.0, %v1653
      %v1655 = vpop.f32.mrb[0].mxu0
      %1656 = vmatprep.mubr.f32.mxu0 0.0
      %1657 = vmatmul.mubr.f32.gmra.mrb[0].mxu0 %v681
      %v1658 = vpop.f32.mrb[0].mxu0
      %v1659 = vadd.f32 0.0, %v1658
      %v1660 = vpop.f32.mrb[0].mxu0
      %1661 = vmatprep.mubr.f32.mxu0 0.0
      %1662 = vmatmul.mubr.f32.gmra.mrb[0].mxu0 %v684
      %v1663 = vpop.f32.mrb[0].mxu0
      %v1664 = vadd.f32 0.0, %v1663
      %v1665 = vpop.f32.mrb[0].mxu0
      %1666 = vmatprep.mubr.f32.mxu0 0.0
      %1667 = vmatmul.mubr.f32.gmra.mrb[0].mxu0 %v687
      %v1668 = vpop.f32.mrb[0].mxu0
      %v1669 = vadd.f32 0.0, %v1668
      %v1670 = vpop.f32.mrb[0].mxu0
      %1671 = vmatprep.mubr.f32.mxu0 0.0
      %1672 = vmatmul.mubr.f32.gmra.mrb[0].mxu0 %v690
      %v1673 = vpop.f32.mrb[0].mxu0
      %v1674 = vadd.f32 0.0, %v1673
      %v1675 = vpop.f32.mrb[0].mxu0
      %1676 = vmatprep.mubr.f32.mxu0 0.0
      %1677 = vmatmul.mubr.f32.gmra.mrb[0].mxu0 %v693
      %v1678 = vpop.f32.mrb[0].mxu0
      %v1679 = vadd.f32 0.0, %v1678
      %v1680 = vpop.f32.mrb[0].mxu0
      %1681 = vmatprep.mubr.f32.mxu0 0.0
      %1682 = vmatmul.mubr.f32.gmra.mrb[0].mxu0 %v696
      %v1683 = vpop.f32.mrb[0].mxu0
      %v1684 = vadd.f32 0.0, %v1683
      %v1685 = vpop.f32.mrb[0].mxu0
      %1686 = vmatprep.mubr.f32.mxu0 0.0
      %1687 = vmatmul.mubr.f32.gmra.mrb[0].mxu0 %v699
      %v1688 = vpop.f32.mrb[0].mxu0
      %v1689 = vadd.f32 0.0, %v1688
      %v1690 = vpop.f32.mrb[0].mxu0
      %1691 = vmatprep.mubr.f32.mxu0 0.0
      %1692 = vmatmul.mubr.f32.gmra.mrb[0].mxu0 %v702
      %v1693 = vpop.f32.mrb[0].mxu0
      %v1694 = vadd.f32 0.0, %v1693
      %v1695 = vpop.f32.mrb[0].mxu0
      %1696 = vmatprep.mubr.f32.mxu0 0.0
      %1697 = vmatmul.mubr.f32.gmra.mrb[0].mxu0 %v705
      %v1698 = vpop.f32.mrb[0].mxu0
      %v1699 = vadd.f32 0.0, %v1698
      %v1700 = vpop.f32.mrb[0].mxu0
      %1701 = vmatprep.mubr.f32.mxu0 0.0
      %1702 = vmatmul.mubr.f32.gmra.mrb[0].mxu0 %v708
      %v1703 = vpop.f32.mrb[0].mxu0
      %v1704 = vadd.f32 0.0, %v1703
      %v1705 = vpop.f32.mrb[0].mxu0
      %1706 = vmatprep.mubr.f32.mxu0 0.0
      %1707 = vmatmul.mubr.f32.gmra.mrb[0].mxu0 %v711
      %v1708 = vpop.f32.mrb[0].mxu0
      %v1709 = vadd.f32 0.0, %v1708
      %v1710 = vpop.f32.mrb[0].mxu0
      %1711 = vmatprep.mubr.f32.mxu0 0.0
      %1712 = vmatmul.mubr.f32.gmra.mrb[0].mxu0 %v714
      %v1713 = vpop.f32.mrb[0].mxu0
      %v1714 = vadd.f32 0.0, %v1713
      %v1715 = vpop.f32.mrb[0].mxu0
      %1716 = vmatprep.mubr.f32.mxu0 0.0
      %1717 = vmatmul.mubr.f32.gmra.mrb[0].mxu0 %v717
      %v1718 = vpop.f32.mrb[0].mxu0
      %v1719 = vadd.f32 0.0, %v1718
      %v1720 = vpop.f32.mrb[0].mxu0
      %1721 = vmatprep.mubr.f32.mxu0 0.0
      %1722 = vmatmul.mubr.f32.gmra.mrb[0].mxu0 %v720
      %v1723 = vpop.f32.mrb[0].mxu0
      %v1724 = vadd.f32 0.0, %v1723
      %v1725 = vpop.f32.mrb[0].mxu0
      %1726 = vmatprep.mubr.f32.mxu0 0.0
      %1727 = vmatmul.mubr.f32.gmra.mrb[0].mxu0 %v723
      %v1728 = vpop.f32.mrb[0].mxu0
      %v1729 = vadd.f32 0.0, %v1728
      %v1730 = vpop.f32.mrb[0].mxu0
      %1731 = vmatprep.mubr.f32.mxu0 0.0
      %1732 = vmatmul.mubr.f32.gmra.mrb[0].mxu0 %v726
      %v1733 = vpop.f32.mrb[0].mxu0
      %v1734 = vadd.f32 0.0, %v1733
      %v1735 = vpop.f32.mrb[0].mxu0
      %1736 = vmatprep.mubr.f32.mxu0 0.0
      %1737 = vmatmul.mubr.f32.gmra.mrb[0].mxu0 %v729
      %v1738 = vpop.f32.mrb[0].mxu0
      %v1739 = vadd.f32 0.0, %v1738
      %v1740 = vpop.f32.mrb[0].mxu0
      %1741 = vmatprep.mubr.f32.mxu0 0.0
      %1742 = vmatmul.mubr.f32.gmra.mrb[0].mxu0 %v732
      %v1743 = vpop.f32.mrb[0].mxu0
      %v1744 = vadd.f32 0.0, %v1743
      %v1745 = vpop.f32.mrb[0].mxu0
      %1746 = vmatprep.mubr.f32.mxu0 0.0
      %1747 = vmatmul.mubr.f32.gmra.mrb[0].mxu0 %v735
      %v1748 = vpop.f32.mrb[0].mxu0
      %v1749 = vadd.f32 0.0, %v1748
      %v1750 = vpop.f32.mrb[0].mxu0
      %1751 = vmatprep.mubr.f32.mxu0 0.0
      %1752 = vmatmul.mubr.f32.gmra.mrb[0].mxu0 %v738
      %v1753 = vpop.f32.mrb[0].mxu0
      %v1754 = vadd.f32 0.0, %v1753
      %v1755 = vpop.f32.mrb[0].mxu0
      %1756 = vmatprep.mubr.f32.mxu0 0.0
      %1757 = vmatmul.mubr.f32.gmra.mrb[0].mxu0 %v741
      %v1758 = vpop.f32.mrb[0].mxu0
      %v1759 = vadd.f32 0.0, %v1758
      %v1760 = vpop.f32.mrb[0].mxu0
      %1761 = vmatprep.mubr.f32.mxu0 0.0
      %1762 = vmatmul.mubr.f32.gmra.mrb[0].mxu0 %v744
      %v1763 = vpop.f32.mrb[0].mxu0
      %v1764 = vadd.f32 0.0, %v1763
      %v1765 = vpop.f32.mrb[0].mxu0
      %1766 = vmatprep.mubr.f32.mxu0 0.0
      %1767 = vmatmul.mubr.f32.gmra.mrb[0].mxu0 %v747
      %v1768 = vpop.f32.mrb[0].mxu0
      %v1769 = vadd.f32 0.0, %v1768
      %v1770 = vpop.f32.mrb[0].mxu0
      %1771 = vmatprep.mubr.f32.mxu0 0.0
      %1772 = vmatmul.mubr.f32.gmra.mrb[0].mxu0 %v750
      %v1773 = vpop.f32.mrb[0].mxu0
      %v1774 = vadd.f32 0.0, %v1773
      %v1775 = vpop.f32.mrb[0].mxu0
      %1776 = vmatprep.mubr.f32.mxu0 0.0
      %1777 = vmatmul.mubr.f32.gmra.mrb[0].mxu0 %v753
      %v1778 = vpop.f32.mrb[0].mxu0
      %v1779 = vadd.f32 0.0, %v1778
      %v1780 = vpop.f32.mrb[0].mxu0
      %1781 = vmatprep.mubr.f32.mxu0 0.0
      %1782 = vmatmul.mubr.f32.gmra.mrb[0].mxu0 %v756
      %v1783 = vpop.f32.mrb[0].mxu0
      %v1784 = vadd.f32 0.0, %v1783
      %v1785 = vpop.f32.mrb[0].mxu0
      %1786 = vmatprep.mubr.f32.mxu0 0.0
      %1787 = vmatmul.mubr.f32.gmra.mrb[0].mxu0 %v759
      %v1788 = vpop.f32.mrb[0].mxu0
      %v1789 = vadd.f32 0.0, %v1788
      %v1790 = vpop.f32.mrb[0].mxu0
      %1791 = vmatprep.mubr.f32.mxu0 0.0
      %1792 = vmatmul.mubr.f32.gmra.mrb[0].mxu0 %v762
      %v1793 = vpop.f32.mrb[0].mxu0
      %v1794 = vadd.f32 0.0, %v1793
      %v1795 = vpop.f32.mrb[0].mxu0
      %1796 = vmatprep.mubr.f32.mxu0 0.0
      %1797 = vmatmul.mubr.f32.gmra.mrb[0].mxu0 %v765
      %v1798 = vpop.f32.mrb[0].mxu0
      %v1799 = vadd.f32 0.0, %v1798
      %v1800 = vpop.f32.mrb[0].mxu0
      %1801 = vmatprep.mubr.f32.mxu0 0.0
      %1802 = vmatmul.mubr.f32.gmra.mrb[0].mxu0 %v768
      %v1803 = vpop.f32.mrb[0].mxu0
      %v1804 = vadd.f32 0.0, %v1803
      %v1805 = vpop.f32.mrb[0].mxu0
      %1806 = vmatprep.mubr.f32.mxu0 0.0
      %1807 = vmatmul.mubr.f32.gmra.mrb[0].mxu0 %v771
      %v1808 = vpop.f32.mrb[0].mxu0
      %v1809 = vadd.f32 0.0, %v1808
      %v1810 = vpop.f32.mrb[0].mxu0
      %1811 = vmatprep.mubr.f32.mxu0 0.0
      %1812 = vmatmul.mubr.f32.gmra.mrb[0].mxu0 %v774
      %v1813 = vpop.f32.mrb[0].mxu0
      %v1814 = vadd.f32 0.0, %v1813
      %v1815 = vpop.f32.mrb[0].mxu0
      %1816 = vmatprep.mubr.f32.mxu0 0.0
      %1817 = vmatmul.mubr.f32.gmra.mrb[0].mxu0 %v777
      %v1818 = vpop.f32.mrb[0].mxu0
      %v1819 = vadd.f32 0.0, %v1818
      %v1820 = vpop.f32.mrb[0].mxu0
      %1821 = vmatprep.mubr.f32.mxu0 0.0
      %1822 = vmatmul.mubr.f32.gmra.mrb[0].mxu0 %v780
      %v1823 = vpop.f32.mrb[0].mxu0
      %v1824 = vadd.f32 0.0, %v1823
      %v1825 = vpop.f32.mrb[0].mxu0
      %1826 = vmatprep.mubr.f32.mxu0 0.0
      %1827 = vmatmul.mubr.f32.gmra.mrb[0].mxu0 %v783
      %v1828 = vpop.f32.mrb[0].mxu0
      %v1829 = vadd.f32 0.0, %v1828
      %v1830 = vpop.f32.mrb[0].mxu0
      %1831 = vmatprep.mubr.f32.mxu0 0.0
      %1832 = vmatmul.mubr.f32.gmra.mrb[0].mxu0 %v786
      %v1833 = vpop.f32.mrb[0].mxu0
      %v1834 = vadd.f32 0.0, %v1833
      %v1835 = vpop.f32.mrb[0].mxu0
      %1836 = vmatprep.mubr.f32.mxu0 0.0
      %1837 = vmatmul.mubr.f32.gmra.mrb[0].mxu0 %v789
      %v1838 = vpop.f32.mrb[0].mxu0
      %v1839 = vadd.f32 0.0, %v1838
      %v1840 = vpop.f32.mrb[0].mxu0
      %1841 = vmatprep.mubr.f32.mxu0 0.0
      %1842 = vmatmul.mubr.f32.gmra.mrb[0].mxu0 %v792
      %v1843 = vpop.f32.mrb[0].mxu0
      %v1844 = vadd.f32 0.0, %v1843
      %v1845 = vpop.f32.mrb[0].mxu0
      %1846 = vmatprep.mubr.f32.mxu0 0.0
      %1847 = vmatmul.mubr.f32.gmra.mrb[0].mxu0 %v795
      %v1848 = vpop.f32.mrb[0].mxu0
      %v1849 = vadd.f32 0.0, %v1848
      %v1850 = vpop.f32.mrb[0].mxu0
      %1851 = vmatprep.mubr.f32.mxu0 0.0
      %1852 = vmatmul.mubr.f32.gmra.mrb[0].mxu0 %v798
      %v1853 = vpop.f32.mrb[0].mxu0
      %v1854 = vadd.f32 0.0, %v1853
      %v1855 = vpop.f32.mrb[0].mxu0
      %1856 = vmatprep.mubr.f32.mxu0 0.0
      %1857 = vmatmul.mubr.f32.gmra.mrb[0].mxu0 %v801
      %v1858 = vpop.f32.mrb[0].mxu0
      %v1859 = vadd.f32 0.0, %v1858
      %v1860 = vpop.f32.mrb[0].mxu0
      %1861 = vmatprep.mubr.f32.mxu0 0.0
      %1862 = vmatmul.mubr.f32.gmra.mrb[0].mxu0 %v804
      %v1863 = vpop.f32.mrb[0].mxu0
      %v1864 = vadd.f32 0.0, %v1863
      %v1865 = vpop.f32.mrb[0].mxu0
      %1866 = vmatprep.mubr.f32.mxu0 0.0
      %1867 = vmatmul.mubr.f32.gmra.mrb[0].mxu0 %v807
      %v1868 = vpop.f32.mrb[0].mxu0
      %v1869 = vadd.f32 0.0, %v1868
      %v1870 = vpop.f32.mrb[0].mxu0
      %1871 = vmatprep.mubr.f32.mxu0 0.0
      %1872 = vmatmul.mubr.f32.gmra.mrb[0].mxu0 %v810
      %v1873 = vpop.f32.mrb[0].mxu0
      %v1874 = vadd.f32 0.0, %v1873
      %v1875 = vpop.f32.mrb[0].mxu0
      %1876 = vmatprep.mubr.f32.mxu0 0.0
      %1877 = vmatmul.mubr.f32.gmra.mrb[0].mxu0 %v813
      %v1878 = vpop.f32.mrb[0].mxu0
      %v1879 = vadd.f32 0.0, %v1878
      %v1880 = vpop.f32.mrb[0].mxu0
      %1881 = vmatprep.mubr.f32.mxu0 0.0
      %1882 = vmatmul.mubr.f32.gmra.mrb[0].mxu0 %v816
      %v1883 = vpop.f32.mrb[0].mxu0
      %v1884 = vadd.f32 0.0, %v1883
      %v1885 = vpop.f32.mrb[0].mxu0
      %1886 = vmatprep.mubr.f32.mxu0 0.0
      %1887 = vmatmul.mubr.f32.gmra.mrb[0].mxu0 %v819
      %v1888 = vpop.f32.mrb[0].mxu0
      %v1889 = vadd.f32 0.0, %v1888
      %v1890 = vpop.f32.mrb[0].mxu0
      %1891 = vmatprep.mubr.f32.mxu0 0.0
      %1892 = vmatmul.mubr.f32.gmra.mrb[0].mxu0 %v822
      %v1893 = vpop.f32.mrb[0].mxu0
      %v1894 = vadd.f32 0.0, %v1893
      %v1895 = vpop.f32.mrb[0].mxu0
      %1896 = vmatprep.mubr.f32.mxu0 0.0
      %1897 = vmatmul.mubr.f32.gmra.mrb[0].mxu0 %v825
      %v1898 = vpop.f32.mrb[0].mxu0
      %v1899 = vadd.f32 0.0, %v1898
      %v1900 = vpop.f32.mrb[0].mxu0
      %1901 = vmatprep.mubr.f32.mxu0 0.0
      %1902 = vmatmul.mubr.f32.gmra.mrb[0].mxu0 %v828
      %v1903 = vpop.f32.mrb[0].mxu0
      %v1904 = vadd.f32 0.0, %v1903
      %v1905 = vpop.f32.mrb[0].mxu0
      %1906 = vmatprep.mubr.f32.mxu0 0.0
      %1907 = vmatmul.mubr.f32.gmra.mrb[0].mxu0 %v831
      %v1908 = vpop.f32.mrb[0].mxu0
      %v1909 = vadd.f32 0.0, %v1908
      %v1910 = vpop.f32.mrb[0].mxu0
      %1911 = vmatprep.mubr.f32.mxu0 0.0
      %1912 = vmatmul.mubr.f32.gmra.mrb[0].mxu0 %v834
      %v1913 = vpop.f32.mrb[0].mxu0
      %v1914 = vadd.f32 0.0, %v1913
      %v1915 = vpop.f32.mrb[0].mxu0
      %1916 = vmatprep.mubr.f32.mxu0 0.0
      %1917 = vmatmul.mubr.f32.gmra.mrb[0].mxu0 %v837
      %v1918 = vpop.f32.mrb[0].mxu0
      %v1919 = vadd.f32 0.0, %v1918
      %v1920 = vpop.f32.mrb[0].mxu0
      %1921 = vmatprep.mubr.f32.mxu0 0.0
      %1922 = vmatmul.mubr.f32.gmra.mrb[0].mxu0 %v840
      %v1923 = vpop.f32.mrb[0].mxu0
      %v1924 = vadd.f32 0.0, %v1923
      %v1925 = vpop.f32.mrb[0].mxu0
      %1926 = vmatprep.mubr.f32.mxu0 0.0
      %1927 = vmatmul.mubr.f32.gmra.mrb[0].mxu0 %v843
      %v1928 = vpop.f32.mrb[0].mxu0
      %v1929 = vadd.f32 0.0, %v1928
      %v1930 = vpop.f32.mrb[0].mxu0
      %1931 = vmatprep.mubr.f32.mxu0 0.0
      %1932 = vmatmul.mubr.f32.gmra.mrb[0].mxu0 %v846
      %v1933 = vpop.f32.mrb[0].mxu0
      %v1934 = vadd.f32 0.0, %v1933
      %v1935 = vpop.f32.mrb[0].mxu0
      %1936 = vmatprep.mubr.f32.mxu0 0.0
      %1937 = vmatmul.mubr.f32.gmra.mrb[0].mxu0 %v849
      %v1938 = vpop.f32.mrb[0].mxu0
      %v1939 = vadd.f32 0.0, %v1938
      %v1940 = vpop.f32.mrb[0].mxu0
      %1941 = vmatprep.mubr.f32.mxu0 0.0
      %1942 = vmatmul.mubr.f32.gmra.mrb[0].mxu0 %v852
      %v1943 = vpop.f32.mrb[0].mxu0
      %v1944 = vadd.f32 0.0, %v1943
      %v1945 = vpop.f32.mrb[0].mxu0
      %1946 = vmatprep.mubr.f32.mxu0 0.0
      %1947 = vmatmul.mubr.f32.gmra.mrb[0].mxu0 %v855
      %v1948 = vpop.f32.mrb[0].mxu0
      %v1949 = vadd.f32 0.0, %v1948
      %v1950 = vpop.f32.mrb[0].mxu0
      %1951 = vmatprep.mubr.f32.mxu0 0.0
      %1952 = vmatmul.mubr.f32.gmra.mrb[0].mxu0 %v858
      %v1953 = vpop.f32.mrb[0].mxu0
      %v1954 = vadd.f32 0.0, %v1953
      %v1955 = vpop.f32.mrb[0].mxu0
      %1956 = vmatprep.mubr.f32.mxu0 0.0
      %1957 = vmatmul.mubr.f32.gmra.mrb[0].mxu0 %v861
      %v1958 = vpop.f32.mrb[0].mxu0
      %v1959 = vadd.f32 0.0, %v1958
      %v1960 = vpop.f32.mrb[0].mxu0
      %1961 = vmatprep.mubr.f32.mxu0 0.0
      %1962 = vmatmul.mubr.f32.gmra.mrb[0].mxu0 %v864
      %v1963 = vpop.f32.mrb[0].mxu0
      %v1964 = vadd.f32 0.0, %v1963
      %v1965 = vpop.f32.mrb[0].mxu0
      %1966 = vmatprep.mubr.f32.mxu0 0.0
      %1967 = vmatmul.mubr.f32.gmra.mrb[0].mxu0 %v867
      %v1968 = vpop.f32.mrb[0].mxu0
      %v1969 = vadd.f32 0.0, %v1968
      %v1970 = vpop.f32.mrb[0].mxu0
      %1971 = vmatprep.mubr.f32.mxu0 0.0
      %1972 = vmatmul.mubr.f32.gmra.mrb[0].mxu0 %v870
      %v1973 = vpop.f32.mrb[0].mxu0
      %v1974 = vadd.f32 0.0, %v1973
      %v1975 = vpop.f32.mrb[0].mxu0
      %1976 = vmatprep.mubr.f32.mxu0 0.0
      %1977 = vmatmul.mubr.f32.gmra.mrb[0].mxu0 %v873
      %v1978 = vpop.f32.mrb[0].mxu0
      %v1979 = vadd.f32 0.0, %v1978
      %v1980 = vpop.f32.mrb[0].mxu0
      %1981 = vmatprep.mubr.f32.mxu0 0.0
      %1982 = vmatmul.mubr.f32.gmra.mrb[0].mxu0 %v876
      %v1983 = vpop.f32.mrb[0].mxu0
      %v1984 = vadd.f32 0.0, %v1983
      %v1985 = vpop.f32.mrb[0].mxu0
      %1986 = vmatprep.mubr.f32.mxu0 0.0
      %1987 = vmatmul.mubr.f32.gmra.mrb[0].mxu0 %v879
      %v1988 = vpop.f32.mrb[0].mxu0
      %v1989 = vadd.f32 0.0, %v1988
      %v1990 = vpop.f32.mrb[0].mxu0
      %1991 = vmatprep.mubr.f32.mxu0 0.0
      %1992 = vmatmul.mubr.f32.gmra.mrb[0].mxu0 %v882
      %v1993 = vpop.f32.mrb[0].mxu0
      %v1994 = vadd.f32 0.0, %v1993
      %v1995 = vpop.f32.mrb[0].mxu0
      %1996 = vmatprep.mubr.f32.mxu0 0.0
      %1997 = vmatmul.mubr.f32.gmra.mrb[0].mxu0 %v885
      %v1998 = vpop.f32.mrb[0].mxu0
      %v1999 = vadd.f32 0.0, %v1998
      %v2000 = vpop.f32.mrb[0].mxu0
      %2001 = vmatprep.mubr.f32.mxu0 0.0
      %2002 = vmatmul.mubr.f32.gmra.mrb[0].mxu0 %v888
      %v2003 = vpop.f32.mrb[0].mxu0
      %v2004 = vadd.f32 0.0, %v2003
      %v2005 = vpop.f32.mrb[0].mxu0
      %2006 = vmatprep.mubr.f32.mxu0 0.0
      %2007 = vmatmul.mubr.f32.gmra.mrb[0].mxu0 %v891
      %v2008 = vpop.f32.mrb[0].mxu0
      %v2009 = vadd.f32 0.0, %v2008
      %v2010 = vpop.f32.mrb[0].mxu0
      %2011 = vmatprep.mubr.f32.mxu0 0.0
      %2012 = vmatmul.mubr.f32.gmra.mrb[0].mxu0 %v894
      %v2013 = vpop.f32.mrb[0].mxu0
      %v2014 = vadd.f32 0.0, %v2013
      %v2015 = vpop.f32.mrb[0].mxu0
      %2016 = vmatprep.mubr.f32.mxu0 0.0
      %2017 = vmatmul.mubr.f32.gmra.mrb[0].mxu0 %v897
      %v2018 = vpop.f32.mrb[0].mxu0
      %v2019 = vadd.f32 0.0, %v2018
      %v2020 = vpop.f32.mrb[0].mxu0
      %2021 = vmatprep.mubr.f32.mxu0 0.0
      %2022 = vmatmul.mubr.f32.gmra.mrb[0].mxu0 %v900
      %v2023 = vpop.f32.mrb[0].mxu0
      %v2024 = vadd.f32 0.0, %v2023
      %v2025 = vpop.f32.mrb[0].mxu0
      %2026 = vmatprep.mubr.f32.mxu0 0.0
      %2027 = vmatmul.mubr.f32.gmra.mrb[0].mxu0 %v903
      %v2028 = vpop.f32.mrb[0].mxu0
      %v2029 = vadd.f32 0.0, %v2028
      %v2030 = vpop.f32.mrb[0].mxu0
      %2031 = vmatprep.mubr.f32.mxu0 0.0
      %2032 = vmatmul.mubr.f32.gmra.mrb[0].mxu0 %v906
      %v2033 = vpop.f32.mrb[0].mxu0
      %v2034 = vadd.f32 0.0, %v2033
      %v2035 = vpop.f32.mrb[0].mxu0
      %2036 = vmatprep.mubr.f32.mxu0 0.0
      %2037 = vmatmul.mubr.f32.gmra.mrb[0].mxu0 %v909
      %v2038 = vpop.f32.mrb[0].mxu0
      %v2039 = vadd.f32 0.0, %v2038
      %v2040 = vpop.f32.mrb[0].mxu0
      %2041 = vmatprep.mubr.f32.mxu0 0.0
      %2042 = vmatmul.mubr.f32.gmra.mrb[0].mxu0 %v912
      %v2043 = vpop.f32.mrb[0].mxu0
      %v2044 = vadd.f32 0.0, %v2043
      %v2045 = vpop.f32.mrb[0].mxu0
      %2046 = vmatprep.mubr.f32.mxu0 0.0
      %2047 = vmatmul.mubr.f32.gmra.mrb[0].mxu0 %v915
      %v2048 = vpop.f32.mrb[0].mxu0
      %v2049 = vadd.f32 0.0, %v2048
      %v2050 = vpop.f32.mrb[0].mxu0
      %2051 = vmatprep.mubr.f32.mxu0 0.0
      %2052 = vmatmul.mubr.f32.gmra.mrb[0].mxu0 %v918
      %v2053 = vpop.f32.mrb[0].mxu0
      %v2054 = vadd.f32 0.0, %v2053
      %v2055 = vpop.f32.mrb[0].mxu0
      %2056 = vmatprep.mubr.f32.mxu0 0.0
      %2057 = vmatmul.mubr.f32.gmra.mrb[0].mxu0 %v921
      %v2058 = vpop.f32.mrb[0].mxu0
      %v2059 = vadd.f32 0.0, %v2058
      %v2060 = vpop.f32.mrb[0].mxu0
      %2061 = vmatprep.mubr.f32.mxu0 0.0
      %2062 = vmatmul.mubr.f32.gmra.mrb[0].mxu0 %v924
      %v2063 = vpop.f32.mrb[0].mxu0
      %v2064 = vadd.f32 0.0, %v2063
      %v2065 = vpop.f32.mrb[0].mxu0
      %2066 = vmatprep.mubr.f32.mxu0 0.0
      %2067 = vmatmul.mubr.f32.gmra.mrb[0].mxu0 %v927
      %v2068 = vpop.f32.mrb[0].mxu0
      %v2069 = vadd.f32 0.0, %v2068
      %v2070 = vpop.f32.mrb[0].mxu0
      %2071 = vmatprep.mubr.f32.mxu0 0.0
      %2072 = vmatmul.mubr.f32.gmra.mrb[0].mxu0 %v930
      %v2073 = vpop.f32.mrb[0].mxu0
      %v2074 = vadd.f32 0.0, %v2073
      %v2075 = vpop.f32.mrb[0].mxu0
      %2076 = vmatprep.mubr.f32.mxu0 0.0
      %2077 = vmatmul.mubr.f32.gmra.mrb[0].mxu0 %v933
      %v2078 = vpop.f32.mrb[0].mxu0
      %v2079 = vadd.f32 0.0, %v2078
      %v2080 = vpop.f32.mrb[0].mxu0
      %2081 = vmatprep.mubr.f32.mxu0 0.0
      %2082 = vmatmul.mubr.f32.gmra.mrb[0].mxu0 %v936
      %v2083 = vpop.f32.mrb[0].mxu0
      %v2084 = vadd.f32 0.0, %v2083
      %v2085 = vpop.f32.mrb[0].mxu0
      %2086 = vmatprep.mubr.f32.mxu0 0.0
      %2087 = vmatmul.mubr.f32.gmra.mrb[0].mxu0 %v939
      %v2088 = vpop.f32.mrb[0].mxu0
      %v2089 = vadd.f32 0.0, %v2088
      %v2090 = vpop.f32.mrb[0].mxu0
      %2091 = vmatprep.mubr.f32.mxu0 0.0
      %2092 = vmatmul.mubr.f32.gmra.mrb[0].mxu0 %v942
      %v2093 = vpop.f32.mrb[0].mxu0
      %v2094 = vadd.f32 0.0, %v2093
      %v2095 = vpop.f32.mrb[0].mxu0
      %2096 = vmatprep.mubr.f32.mxu0 0.0
      %2097 = vmatmul.mubr.f32.gmra.mrb[0].mxu0 %v945
      %v2098 = vpop.f32.mrb[0].mxu0
      %v2099 = vadd.f32 0.0, %v2098
      %v2100 = vpop.f32.mrb[0].mxu0
      %2101 = vmatprep.mubr.f32.mxu0 0.0
      %2102 = vmatmul.mubr.f32.gmra.mrb[0].mxu0 %v948
      %v2103 = vpop.f32.mrb[0].mxu0
      %v2104 = vadd.f32 0.0, %v2103
      %v2105 = vpop.f32.mrb[0].mxu0
      %2106 = vmatprep.mubr.f32.mxu0 0.0
      %2107 = vmatmul.mubr.f32.gmra.mrb[0].mxu0 %v951
      %v2108 = vpop.f32.mrb[0].mxu0
      %v2109 = vadd.f32 0.0, %v2108
      %v2110 = vpop.f32.mrb[0].mxu0
      %2111 = vmatprep.mubr.f32.mxu0 0.0
      %2112 = vmatmul.mubr.f32.gmra.mrb[0].mxu0 %v954
      %v2113 = vpop.f32.mrb[0].mxu0
      %v2114 = vadd.f32 0.0, %v2113
      %v2115 = vpop.f32.mrb[0].mxu0
      %2116 = vmatprep.mubr.f32.mxu0 0.0
      %2117 = vmatmul.mubr.f32.gmra.mrb[0].mxu0 %v957
      %v2118 = vpop.f32.mrb[0].mxu0
      %v2119 = vadd.f32 0.0, %v2118
      %v2120 = vpop.f32.mrb[0].mxu0
      %2121 = vmatprep.mubr.f32.mxu0 0.0
      %2122 = vmatmul.mubr.f32.gmra.mrb[0].mxu0 %v960
      %v2123 = vpop.f32.mrb[0].mxu0
      %v2124 = vadd.f32 0.0, %v2123
      %v2125 = vpop.f32.mrb[0].mxu0
      %2126 = vmatprep.mubr.f32.mxu0 0.0
      %2127 = vmatmul.mubr.f32.gmra.mrb[0].mxu0 %v963
      %v2128 = vpop.f32.mrb[0].mxu0
      %v2129 = vadd.f32 0.0, %v2128
      %v2130 = vpop.f32.mrb[0].mxu0
      %2131 = vmatprep.mubr.f32.mxu0 0.0
      %2132 = vmatmul.mubr.f32.gmra.mrb[0].mxu0 %v966
      %v2133 = vpop.f32.mrb[0].mxu0
      %v2134 = vadd.f32 0.0, %v2133
      %v2135 = vpop.f32.mrb[0].mxu0
      %2136 = vmatprep.mubr.f32.mxu0 0.0
      %2137 = vmatmul.mubr.f32.gmra.mrb[0].mxu0 %v969
      %v2138 = vpop.f32.mrb[0].mxu0
      %v2139 = vadd.f32 0.0, %v2138
      %v2140 = vpop.f32.mrb[0].mxu0
      %2141 = vmatprep.mubr.f32.mxu0 0.0
      %2142 = vmatmul.mubr.f32.gmra.mrb[0].mxu0 %v972
      %v2143 = vpop.f32.mrb[0].mxu0
      %v2144 = vadd.f32 0.0, %v2143
      %v2145 = vpop.f32.mrb[0].mxu0
      %2146 = vmatprep.mubr.f32.mxu0 0.0
      %2147 = vmatmul.mubr.f32.gmra.mrb[0].mxu0 %v975
      %v2148 = vpop.f32.mrb[0].mxu0
      %v2149 = vadd.f32 0.0, %v2148
      %v2150 = vpop.f32.mrb[0].mxu0
      %2151 = vmatprep.mubr.f32.mxu0 0.0
      %2152 = vmatmul.mubr.f32.gmra.mrb[0].mxu0 %v978
      %v2153 = vpop.f32.mrb[0].mxu0
      %v2154 = vadd.f32 0.0, %v2153
      %v2155 = vpop.f32.mrb[0].mxu0
      %2156 = vmatprep.mubr.f32.mxu0 0.0
      %2157 = vmatmul.mubr.f32.gmra.mrb[0].mxu0 %v981
      %v2158 = vpop.f32.mrb[0].mxu0
      %v2159 = vadd.f32 0.0, %v2158
      %v2160 = vpop.f32.mrb[0].mxu0
      %2161 = vmatprep.mubr.f32.mxu0 0.0
      %2162 = vmatmul.mubr.f32.gmra.mrb[0].mxu0 %v984
      %v2163 = vpop.f32.mrb[0].mxu0
      %v2164 = vadd.f32 0.0, %v2163
      %v2165 = vpop.f32.mrb[0].mxu0
      %2166 = vmatprep.mubr.f32.mxu0 0.0
      %2167 = vmatmul.mubr.f32.gmra.mrb[0].mxu0 %v987
      %v2168 = vpop.f32.mrb[0].mxu0
      %v2169 = vadd.f32 0.0, %v2168
      %v2170 = vpop.f32.mrb[0].mxu0
      %2171 = vmatprep.mubr.f32.mxu0 0.0
      %2172 = vmatmul.mubr.f32.gmra.mrb[0].mxu0 %v990
      %v2173 = vpop.f32.mrb[0].mxu0
      %v2174 = vadd.f32 0.0, %v2173
      %v2175 = vpop.f32.mrb[0].mxu0
      %2176 = vmatprep.mubr.f32.mxu0 0.0
      %2177 = vmatmul.mubr.f32.gmra.mrb[0].mxu0 %v993
      %v2178 = vpop.f32.mrb[0].mxu0
      %v2179 = vadd.f32 0.0, %v2178
      %v2180 = vpop.f32.mrb[0].mxu0
      %2181 = vmatprep.mubr.f32.mxu0 0.0
      %2182 = vmatmul.mubr.f32.gmra.mrb[0].mxu0 %v996
      %v2183 = vpop.f32.mrb[0].mxu0
      %v2184 = vadd.f32 0.0, %v2183
      %v2185 = vpop.f32.mrb[0].mxu0
      %2186 = vmatprep.mubr.f32.mxu0 0.0
      %2187 = vmatmul.mubr.f32.gmra.mrb[0].mxu0 %v999
      %v2188 = vpop.f32.mrb[0].mxu0
      %v2189 = vadd.f32 0.0, %v2188
      %v2190 = vpop.f32.mrb[0].mxu0
      %2191 = vmatprep.mubr.f32.mxu0 0.0
      %2192 = vmatmul.mubr.f32.gmra.mrb[0].mxu0 %v1002
      %v2193 = vpop.f32.mrb[0].mxu0
      %v2194 = vadd.f32 0.0, %v2193
      %v2195 = vpop.f32.mrb[0].mxu0
      %2196 = vmatprep.mubr.f32.mxu0 0.0
      %2197 = vmatmul.mubr.f32.gmra.mrb[0].mxu0 %v1005
      %v2198 = vpop.f32.mrb[0].mxu0
      %v2199 = vadd.f32 0.0, %v2198
      %v2200 = vpop.f32.mrb[0].mxu0
      %2201 = vmatprep.mubr.f32.mxu0 0.0
      %2202 = vmatmul.mubr.f32.gmra.mrb[0].mxu0 %v1008
      %v2203 = vpop.f32.mrb[0].mxu0
      %v2204 = vadd.f32 0.0, %v2203
      %v2205 = vpop.f32.mrb[0].mxu0
      %2206 = vmatprep.mubr.f32.mxu0 0.0
      %2207 = vmatmul.mubr.f32.gmra.mrb[0].mxu0 %v1011
      %v2208 = vpop.f32.mrb[0].mxu0
      %v2209 = vadd.f32 0.0, %v2208
      %v2210 = vpop.f32.mrb[0].mxu0
      %2211 = vmatprep.mubr.f32.mxu0 0.0
      %2212 = vmatmul.mubr.f32.gmra.mrb[0].mxu0 %v1014
      %v2213 = vpop.f32.mrb[0].mxu0
      %v2214 = vadd.f32 0.0, %v2213
      %v2215 = vpop.f32.mrb[0].mxu0
      %2216 = vmatprep.mubr.f32.mxu0 0.0
      %2217 = vmatmul.mubr.f32.gmra.mrb[0].mxu0 %v1017
      %v2218 = vpop.f32.mrb[0].mxu0
      %v2219 = vadd.f32 0.0, %v2218
      %v2220 = vpop.f32.mrb[0].mxu0
      %2221 = vmatprep.mubr.f32.mxu0 0.0
      %2222 = vmatmul.mubr.f32.gmra.mrb[0].mxu0 %v1020
      %v2223 = vpop.f32.mrb[0].mxu0
      %v2224 = vadd.f32 0.0, %v2223
      %v2225 = vpop.f32.mrb[0].mxu0
      %2226 = vmatprep.mubr.f32.mxu0 0.0
      %2227 = vmatmul.mubr.f32.gmra.mrb[0].mxu0 %v1023
      %v2228 = vpop.f32.mrb[0].mxu0
      %v2229 = vadd.f32 0.0, %v2228
      %v2230 = vpop.f32.mrb[0].mxu0
      %2231 = vmatprep.mubr.f32.mxu0 0.0
      %2232 = vmatmul.mubr.f32.gmra.mrb[0].mxu0 %v1026
      %v2233 = vpop.f32.mrb[0].mxu0
      %v2234 = vadd.f32 0.0, %v2233
      %v2235 = vpop.f32.mrb[0].mxu0
      %2236 = vmatprep.mubr.f32.mxu0 0.0
      %2237 = vmatmul.mubr.f32.gmra.mrb[0].mxu0 %v1029
      %v2238 = vpop.f32.mrb[0].mxu0
      %v2239 = vadd.f32 0.0, %v2238
      %v2240 = vpop.f32.mrb[0].mxu0
      %2241 = vmatprep.mubr.f32.mxu0 0.0
      %2242 = vmatmul.mubr.f32.gmra.mrb[0].mxu0 %v1032
      %v2243 = vpop.f32.mrb[0].mxu0
      %v2244 = vadd.f32 0.0, %v2243
      %v2245 = vpop.f32.mrb[0].mxu0
      %2246 = vmatprep.mubr.f32.mxu0 0.0
      %2247 = vmatmul.mubr.f32.gmra.mrb[0].mxu0 %v1035
      %v2248 = vpop.f32.mrb[0].mxu0
      %v2249 = vadd.f32 0.0, %v2248
      %v2250 = vpop.f32.mrb[0].mxu0
      %2251 = vmatprep.mubr.f32.mxu0 0.0
      %2252 = vmatmul.mubr.f32.gmra.mrb[0].mxu0 %v1038
      %v2253 = vpop.f32.mrb[0].mxu0
      %v2254 = vadd.f32 0.0, %v2253
      %v2255 = vpop.f32.mrb[0].mxu0
      %2256 = vmatprep.mubr.f32.mxu0 0.0
      %2257 = vmatmul.mubr.f32.gmra.mrb[0].mxu0 %v1041
      %v2258 = vpop.f32.mrb[0].mxu0
      %v2259 = vadd.f32 0.0, %v2258
      %v2260 = vpop.f32.mrb[0].mxu0
      %2261 = vmatprep.mubr.f32.mxu0 0.0
      %2262 = vmatmul.mubr.f32.gmra.mrb[0].mxu0 %v1044
      %v2263 = vpop.f32.mrb[0].mxu0
      %v2264 = vadd.f32 0.0, %v2263
      %v2265 = vpop.f32.mrb[0].mxu0
      %2266 = vmatprep.mubr.f32.mxu0 0.0
      %2267 = vmatmul.mubr.f32.gmra.mrb[0].mxu0 %v1047
      %v2268 = vpop.f32.mrb[0].mxu0
      %v2269 = vadd.f32 0.0, %v2268
      %v2270 = vpop.f32.mrb[0].mxu0
      %2271 = vmatprep.mubr.f32.mxu0 0.0
      %2272 = vmatmul.mubr.f32.gmra.mrb[0].mxu0 %v1050
      %v2273 = vpop.f32.mrb[0].mxu0
      %v2274 = vadd.f32 0.0, %v2273
      %v2275 = vpop.f32.mrb[0].mxu0
      %2276 = vmatprep.mubr.f32.mxu0 0.0
      %2277 = vmatmul.mubr.f32.gmra.mrb[0].mxu0 %v1053
      %v2278 = vpop.f32.mrb[0].mxu0
      %v2279 = vadd.f32 0.0, %v2278
      %v2280 = vpop.f32.mrb[0].mxu0
      %2281 = vmatprep.mubr.f32.mxu0 0.0
      %2282 = vmatmul.mubr.f32.gmra.mrb[0].mxu0 %v1056
      %v2283 = vpop.f32.mrb[0].mxu0
      %v2284 = vadd.f32 0.0, %v2283
      %v2285 = vpop.f32.mrb[0].mxu0
      %2286 = vmatprep.mubr.f32.mxu0 0.0
      %2287 = vmatmul.mubr.f32.gmra.mrb[0].mxu0 %v1059
      %v2288 = vpop.f32.mrb[0].mxu0
      %v2289 = vadd.f32 0.0, %v2288
      %v2290 = vpop.f32.mrb[0].mxu0
      %2291 = vmatprep.mubr.f32.mxu0 0.0
      %2292 = vmatmul.mubr.f32.gmra.mrb[0].mxu0 %v1062
      %v2293 = vpop.f32.mrb[0].mxu0
      %v2294 = vadd.f32 0.0, %v2293
      %v2295 = vpop.f32.mrb[0].mxu0
      %2296 = vmatprep.mubr.f32.mxu0 0.0
      %2297 = vmatmul.mubr.f32.gmra.mrb[0].mxu0 %v1065
      %v2298 = vpop.f32.mrb[0].mxu0
      %v2299 = vadd.f32 0.0, %v2298
      %v2300 = vpop.f32.mrb[0].mxu0
      %2301 = vmatprep.mubr.f32.mxu0 0.0
      %2302 = vmatmul.mubr.f32.gmra.mrb[0].mxu0 %v1068
      %v2303 = vpop.f32.mrb[0].mxu0
      %v2304 = vadd.f32 0.0, %v2303
      %v2305 = vpop.f32.mrb[0].mxu0
      %2306 = vmatprep.mubr.f32.mxu0 0.0
      %2307 = vmatmul.mubr.f32.gmra.mrb[0].mxu0 %v1071
      %v2308 = vpop.f32.mrb[0].mxu0
      %v2309 = vadd.f32 0.0, %v2308
      %v2310 = vpop.f32.mrb[0].mxu0
      %2311 = vmatprep.mubr.f32.mxu0 0.0
      %2312 = vmatmul.mubr.f32.gmra.mrb[0].mxu0 %v1074
      %v2313 = vpop.f32.mrb[0].mxu0
      %v2314 = vadd.f32 0.0, %v2313
      %v2315 = vpop.f32.mrb[0].mxu0
      %2316 = vmatprep.mubr.f32.mxu0 0.0
      %2317 = vmatmul.mubr.f32.gmra.mrb[0].mxu0 %v1077
      %v2318 = vpop.f32.mrb[0].mxu0
      %v2319 = vadd.f32 0.0, %v2318
      %v2320 = vpop.f32.mrb[0].mxu0
      %2321 = vmatprep.mubr.f32.mxu0 0.0
      %2322 = vmatmul.mubr.f32.gmra.mrb[0].mxu0 %v1080
      %v2323 = vpop.f32.mrb[0].mxu0
      %v2324 = vadd.f32 0.0, %v2323
      %v2325 = vpop.f32.mrb[0].mxu0
      %2326 = vmatprep.mubr.f32.mxu0 0.0
      %2327 = vmatmul.mubr.f32.gmra.mrb[0].mxu0 %v1083
      %v2328 = vpop.f32.mrb[0].mxu0
      %v2329 = vadd.f32 0.0, %v2328
      %v2330 = vpop.f32.mrb[0].mxu0
      %2331 = vmatprep.mubr.f32.mxu0 0.0
      %2332 = vmatmul.mubr.f32.gmra.mrb[0].mxu0 %v1086
      %v2333 = vpop.f32.mrb[0].mxu0
      %v2334 = vadd.f32 0.0, %v2333
      %v2335 = vpop.f32.mrb[0].mxu0
      %2336 = vmatprep.mubr.f32.mxu0 0.0
      %2337 = vmatmul.mubr.f32.gmra.mrb[0].mxu0 %v1089
      %v2338 = vpop.f32.mrb[0].mxu0
      %v2339 = vadd.f32 0.0, %v2338
      %v2340 = vpop.f32.mrb[0].mxu0
      %2341 = vmatprep.mubr.f32.mxu0 0.0
      %2342 = vmatmul.mubr.f32.gmra.mrb[0].mxu0 %v1092
      %v2343 = vpop.f32.mrb[0].mxu0
      %v2344 = vadd.f32 0.0, %v2343
      %v2345 = vpop.f32.mrb[0].mxu0
      %2346 = vmatprep.mubr.f32.mxu0 0.0
      %2347 = vmatmul.mubr.f32.gmra.mrb[0].mxu0 %v1095
      %v2348 = vpop.f32.mrb[0].mxu0
      %v2349 = vadd.f32 0.0, %v2348
      %v2350 = vpop.f32.mrb[0].mxu0
      %2351 = vmatprep.mubr.f32.mxu0 0.0
      %2352 = vmatmul.mubr.f32.gmra.mrb[0].mxu0 %v1098
      %v2353 = vpop.f32.mrb[0].mxu0
      %v2354 = vadd.f32 0.0, %v2353
      %v2355 = vpop.f32.mrb[0].mxu0
      %2356 = vmatprep.mubr.f32.mxu0 0.0
      %2357 = vmatmul.mubr.f32.gmra.mrb[0].mxu0 %v1101
      %v2358 = vpop.f32.mrb[0].mxu0
      %v2359 = vadd.f32 0.0, %v2358
      %v2360 = vpop.f32.mrb[0].mxu0
      %2361 = vmatprep.mubr.f32.mxu0 0.0
      %2362 = vmatmul.mubr.f32.gmra.mrb[0].mxu0 %v1104
      %v2363 = vpop.f32.mrb[0].mxu0
      %v2364 = vadd.f32 0.0, %v2363
      %v2365 = vpop.f32.mrb[0].mxu0
      %2366 = vmatprep.mubr.f32.mxu0 0.0
      %2367 = vmatmul.mubr.f32.gmra.mrb[0].mxu0 %v1107
      %v2368 = vpop.f32.mrb[0].mxu0
      %v2369 = vadd.f32 0.0, %v2368
      %v2370 = vpop.f32.mrb[0].mxu0
      %2371 = vmatprep.mubr.f32.mxu0 0.0
      %2372 = vmatmul.mubr.f32.gmra.mrb[0].mxu0 %v1110
      %v2373 = vpop.f32.mrb[0].mxu0
      %v2374 = vadd.f32 0.0, %v2373
      %v2375 = vpop.f32.mrb[0].mxu0
      %2376 = vmatprep.mubr.f32.mxu0 0.0
      %2377 = vmatmul.mubr.f32.gmra.mrb[0].mxu0 %v1113
      %v2378 = vpop.f32.mrb[0].mxu0
      %v2379 = vadd.f32 0.0, %v2378
      %v2380 = vpop.f32.mrb[0].mxu0
      %2381 = vmatprep.mubr.f32.mxu0 0.0
      %2382 = vmatmul.mubr.f32.gmra.mrb[0].mxu0 %v1116
      %v2383 = vpop.f32.mrb[0].mxu0
      %v2384 = vadd.f32 0.0, %v2383
      %v2385 = vpop.f32.mrb[0].mxu0
      %2386 = vmatprep.mubr.f32.mxu0 0.0
      %2387 = vmatmul.mubr.f32.gmra.mrb[0].mxu0 %v1119
      %v2388 = vpop.f32.mrb[0].mxu0
      %v2389 = vadd.f32 0.0, %v2388
      %v2390 = vpop.f32.mrb[0].mxu0
      %2391 = vmatprep.mubr.f32.mxu0 0.0
      %2392 = vmatmul.mubr.f32.gmra.mrb[0].mxu0 %v1122
      %v2393 = vpop.f32.mrb[0].mxu0
      %v2394 = vadd.f32 0.0, %v2393
      %v2395 = vpop.f32.mrb[0].mxu0
      %2396 = vmatprep.mubr.f32.mxu0 0.0
      %2397 = vmatmul.mubr.f32.gmra.mrb[0].mxu0 %v1125
      %v2398 = vpop.f32.mrb[0].mxu0
      %v2399 = vadd.f32 0.0, %v2398
      %v2400 = vpop.f32.mrb[0].mxu0
      %2401 = vmatprep.mubr.f32.mxu0 0.0
      %2402 = vmatmul.mubr.f32.gmra.mrb[0].mxu0 %v1128
      %v2403 = vpop.f32.mrb[0].mxu0
      %v2404 = vadd.f32 0.0, %v2403
      %v2405 = vpop.f32.mrb[0].mxu0
      %2406 = vmatprep.mubr.f32.mxu0 0.0
      %2407 = vmatmul.mubr.f32.gmra.mrb[0].mxu0 %v1131
      %v2408 = vpop.f32.mrb[0].mxu0
      %v2409 = vadd.f32 0.0, %v2408
      %v2410 = vpop.f32.mrb[0].mxu0
      %2411 = vmatprep.mubr.f32.mxu0 0.0
      %2412 = vmatmul.mubr.f32.gmra.mrb[0].mxu0 %v1134
      %v2413 = vpop.f32.mrb[0].mxu0
      %v2414 = vadd.f32 0.0, %v2413
      %v2415 = vpop.f32.mrb[0].mxu0
      %2416 = vmatprep.mubr.f32.mxu0 0.0
      %2417 = vmatmul.mubr.f32.gmra.mrb[0].mxu0 %v1137
      %v2418 = vpop.f32.mrb[0].mxu0
      %v2419 = vadd.f32 0.0, %v2418
      %v2420 = vpop.f32.mrb[0].mxu0
      %2421 = vmatprep.mubr.f32.mxu0 0.0
      %2422 = vmatmul.mubr.f32.gmra.mrb[0].mxu0 %v1140
      %v2423 = vpop.f32.mrb[0].mxu0
      %v2424 = vadd.f32 0.0, %v2423
      %v2425 = vpop.f32.mrb[0].mxu0
      %2426 = vmatprep.mubr.f32.mxu0 0.0
      %2427 = vmatmul.mubr.f32.gmra.mrb[0].mxu0 %v1143
      %v2428 = vpop.f32.mrb[0].mxu0
      %v2429 = vadd.f32 0.0, %v2428
      %v2430 = vpop.f32.mrb[0].mxu0
      %2431 = vmatprep.mubr.f32.mxu0 0.0
      %2432 = vmatmul.mubr.f32.gmra.mrb[0].mxu0 %v1146
      %v2433 = vpop.f32.mrb[0].mxu0
      %v2434 = vadd.f32 0.0, %v2433
      %v2435 = vpop.f32.mrb[0].mxu0
      %2436 = vmatprep.mubr.f32.mxu0 0.0
      %2437 = vmatmul.mubr.f32.gmra.mrb[0].mxu0 %v1149
      %v2438 = vpop.f32.mrb[0].mxu0
      %v2439 = vadd.f32 0.0, %v2438
      %v2440 = vpop.f32.mrb[0].mxu0
      %2441 = vmatprep.mubr.f32.mxu0 0.0
      %2442 = vmatmul.mubr.f32.gmra.mrb[0].mxu0 %v1152
      %v2443 = vpop.f32.mrb[0].mxu0
      %v2444 = vadd.f32 0.0, %v2443
      %v2445 = vpop.f32.mrb[0].mxu0
      %2446 = vmatprep.mubr.f32.mxu0 0.0
      %2447 = vmatmul.mubr.f32.gmra.mrb[0].mxu0 %v1155
      %v2448 = vpop.f32.mrb[0].mxu0
      %v2449 = vadd.f32 0.0, %v2448
      %v2450 = vpop.f32.mrb[0].mxu0
      %2451 = vmatprep.mubr.f32.mxu0 0.0
      %2452 = vmatmul.mubr.f32.gmra.mrb[0].mxu0 %v1158
      %v2453 = vpop.f32.mrb[0].mxu0
      %v2454 = vadd.f32 0.0, %v2453
      %v2455 = vpop.f32.mrb[0].mxu0
      %2456 = vmatprep.mubr.f32.mxu0 0.0
      %2457 = vmatmul.mubr.f32.gmra.mrb[0].mxu0 %v1161
      %v2458 = vpop.f32.mrb[0].mxu0
      %v2459 = vadd.f32 0.0, %v2458
      %v2460 = vpop.f32.mrb[0].mxu0
      %2461 = vmatprep.mubr.f32.mxu0 0.0
      %2462 = vmatmul.mubr.f32.gmra.mrb[0].mxu0 %v1164
      %v2463 = vpop.f32.mrb[0].mxu0
      %v2464 = vadd.f32 0.0, %v2463
      %v2465 = vpop.f32.mrb[0].mxu0
      %2466 = vmatprep.mubr.f32.mxu0 0.0
      %2467 = vmatmul.mubr.f32.gmra.mrb[0].mxu0 %v1167
      %v2468 = vpop.f32.mrb[0].mxu0
      %v2469 = vadd.f32 0.0, %v2468
      %v2470 = vpop.f32.mrb[0].mxu0
      %2471 = vmatprep.mubr.f32.mxu0 0.0
      %2472 = vmatmul.mubr.f32.gmra.mrb[0].mxu0 %v1170
      %v2473 = vpop.f32.mrb[0].mxu0
      %v2474 = vadd.f32 0.0, %v2473
      %v2475 = vpop.f32.mrb[0].mxu0
      %2476 = vmatprep.mubr.f32.mxu0 0.0
      %2477 = vmatmul.mubr.f32.gmra.mrb[0].mxu0 %v1173
      %v2478 = vpop.f32.mrb[0].mxu0
      %v2479 = vadd.f32 0.0, %v2478
      %v2480 = vpop.f32.mrb[0].mxu0
      %2481 = vmatprep.mubr.f32.mxu0 0.0
      %2482 = vmatmul.mubr.f32.gmra.mrb[0].mxu0 %v1176
      %v2483 = vpop.f32.mrb[0].mxu0
      %v2484 = vadd.f32 0.0, %v2483
      %v2485 = vpop.f32.mrb[0].mxu0
      %2486 = vmatprep.mubr.f32.mxu0 0.0
      %2487 = vmatmul.mubr.f32.gmra.mrb[0].mxu0 %v1179
      %v2488 = vpop.f32.mrb[0].mxu0
      %v2489 = vadd.f32 0.0, %v2488
      %v2490 = vpop.f32.mrb[0].mxu0
      %2491 = vmatprep.mubr.f32.mxu0 0.0
      %2492 = vmatmul.mubr.f32.gmra.mrb[0].mxu0 %v1182
      %v2493 = vpop.f32.mrb[0].mxu0
      %v2494 = vadd.f32 0.0, %v2493
      %v2495 = vpop.f32.mrb[0].mxu0
      %2496 = vmatprep.mubr.f32.mxu0 0.0
      %2497 = vmatmul.mubr.f32.gmra.mrb[0].mxu0 %v1185
      %v2498 = vpop.f32.mrb[0].mxu0
      %v2499 = vadd.f32 0.0, %v2498
      %v2500 = vpop.f32.mrb[0].mxu0
      %2501 = vmatprep.mubr.f32.mxu0 0.0
      %2502 = vmatmul.mubr.f32.gmra.mrb[0].mxu0 %v1188
      %v2503 = vpop.f32.mrb[0].mxu0
      %v2504 = vadd.f32 0.0, %v2503
      %v2505 = vpop.f32.mrb[0].mxu0
      %2506 = vmatprep.mubr.f32.mxu0 0.0
      %2507 = vmatmul.mubr.f32.gmra.mrb[0].mxu0 %v1191
      %v2508 = vpop.f32.mrb[0].mxu0
      %v2509 = vadd.f32 0.0, %v2508
      %v2510 = vpop.f32.mrb[0].mxu0
      %2511 = vmatprep.mubr.f32.mxu0 0.0
      %2512 = vmatmul.mubr.f32.gmra.mrb[0].mxu0 %v1194
      %v2513 = vpop.f32.mrb[0].mxu0
      %v2514 = vadd.f32 0.0, %v2513
      %v2515 = vpop.f32.mrb[0].mxu0
      %2516 = vmatprep.mubr.f32.mxu0 0.0
      %2517 = vmatmul.mubr.f32.gmra.mrb[0].mxu0 %v1197
      %v2518 = vpop.f32.mrb[0].mxu0
      %v2519 = vadd.f32 0.0, %v2518
      %v2520 = vpop.f32.mrb[0].mxu0
      %2521 = vmatprep.mubr.f32.mxu0 0.0
      %2522 = vmatmul.mubr.f32.gmra.mrb[0].mxu0 %v1200
      %v2523 = vpop.f32.mrb[0].mxu0
      %v2524 = vadd.f32 0.0, %v2523
      %v2525 = vpop.f32.mrb[0].mxu0
      %2526 = vmatprep.mubr.f32.mxu0 0.0
      %2527 = vmatmul.mubr.f32.gmra.mrb[0].mxu0 %v1203
      %v2528 = vpop.f32.mrb[0].mxu0
      %v2529 = vadd.f32 0.0, %v2528
      %v2530 = vpop.f32.mrb[0].mxu0
      %2531 = vmatprep.mubr.f32.mxu0 0.0
      %2532 = vmatmul.mubr.f32.gmra.mrb[0].mxu0 %v1206
      %v2533 = vpop.f32.mrb[0].mxu0
      %v2534 = vadd.f32 0.0, %v2533
      %v2535 = vpop.f32.mrb[0].mxu0
      %2536 = vmatprep.mubr.f32.mxu0 0.0
      %2537 = vmatmul.mubr.f32.gmra.mrb[0].mxu0 %v1209
      %v2538 = vpop.f32.mrb[0].mxu0
      %v2539 = vadd.f32 0.0, %v2538
      %v2540 = vpop.f32.mrb[0].mxu0
      %2541 = vmatprep.mubr.f32.mxu0 0.0
      %2542 = vmatmul.mubr.f32.gmra.mrb[0].mxu0 %v1212
      %v2543 = vpop.f32.mrb[0].mxu0
      %v2544 = vadd.f32 0.0, %v2543
      %v2545 = vpop.f32.mrb[0].mxu0
      %2546 = vmatprep.mubr.f32.mxu0 0.0
      %2547 = vmatmul.mubr.f32.gmra.mrb[0].mxu0 %v1215
      %v2548 = vpop.f32.mrb[0].mxu0
      %v2549 = vadd.f32 0.0, %v2548
      %v2550 = vpop.f32.mrb[0].mxu0
      %2551 = vmatprep.mubr.f32.mxu0 0.0
      %2552 = vmatmul.mubr.f32.gmra.mrb[0].mxu0 %v1218
      %v2553 = vpop.f32.mrb[0].mxu0
      %v2554 = vadd.f32 0.0, %v2553
      %v2555 = vpop.f32.mrb[0].mxu0
      %2556 = vmatprep.mubr.f32.mxu0 0.0
      %2557 = vmatmul.mubr.f32.gmra.mrb[0].mxu0 %v1221
      %v2558 = vpop.f32.mrb[0].mxu0
      %v2559 = vadd.f32 0.0, %v2558
      %v2560 = vpop.f32.mrb[0].mxu0
      %2561 = vmatprep.mubr.f32.mxu0 0.0
      %2562 = vmatmul.mubr.f32.gmra.mrb[0].mxu0 %v1224
      %v2563 = vpop.f32.mrb[0].mxu0
      %v2564 = vadd.f32 0.0, %v2563
      %v2565 = vpop.f32.mrb[0].mxu0
      %2566 = vmatprep.mubr.f32.mxu0 0.0
      %2567 = vmatmul.mubr.f32.gmra.mrb[0].mxu0 %v1227
      %v2568 = vpop.f32.mrb[0].mxu0
      %v2569 = vadd.f32 0.0, %v2568
      %v2570 = vpop.f32.mrb[0].mxu0
      %2571 = vmatprep.mubr.f32.mxu0 0.0
      %2572 = vmatmul.mubr.f32.gmra.mrb[0].mxu0 %v1230
      %v2573 = vpop.f32.mrb[0].mxu0
      %v2574 = vadd.f32 0.0, %v2573
      %v2575 = vpop.f32.mrb[0].mxu0
      %2576 = vdwg.mxu0
      %v2577 = vtanh.pop %v1299
      %v2578 = vtanh.pop %v1304
      %v2579 = vtanh.pop %v1309
      %v2580 = vtanh.pop %v1314
      %v2581 = vtanh.pop %v1319
      %v2582 = vtanh.pop %v1324
      %v2583 = vtanh.pop %v1329
      %v2584 = vtanh.pop %v1334
      %v2585 = vtanh.pop %v1339
      %v2586 = vtanh.pop %v1344
      %v2587 = vtanh.pop %v1349
      %v2588 = vtanh.pop %v1354
      %v2589 = vtanh.pop %v1359
      %v2590 = vtanh.pop %v1364
      %v2591 = vtanh.pop %v1369
      %v2592 = vtanh.pop %v1374
      %v2593 = vtanh.pop %v1379
      %v2594 = vtanh.pop %v1384
      %v2595 = vtanh.pop %v1389
      %v2596 = vtanh.pop %v1394
      %v2597 = vtanh.pop %v1399
      %v2598 = vtanh.pop %v1404
      %v2599 = vtanh.pop %v1409
      %v2600 = vtanh.pop %v1414
      %v2601 = vtanh.pop %v1419
      %v2602 = vtanh.pop %v1424
      %v2603 = vtanh.pop %v1429
      %v2604 = vtanh.pop %v1434
      %v2605 = vtanh.pop %v1439
      %v2606 = vtanh.pop %v1444
      %v2607 = vtanh.pop %v1449
      %v2608 = vtanh.pop %v1454
      %v2609 = vtanh.pop %v1459
      %v2610 = vtanh.pop %v1464
      %v2611 = vtanh.pop %v1469
      %v2612 = vtanh.pop %v1474
      %v2613 = vtanh.pop %v1479
      %v2614 = vtanh.pop %v1484
      %v2615 = vtanh.pop %v1489
      %v2616 = vtanh.pop %v1494
      %v2617 = vtanh.pop %v1499
      %v2618 = vtanh.pop %v1504
      %v2619 = vtanh.pop %v1509
      %v2620 = vtanh.pop %v1514
      %v2621 = vtanh.pop %v1519
      %v2622 = vtanh.pop %v1524
      %v2623 = vtanh.pop %v1529
      %v2624 = vtanh.pop %v1534
      %v2625 = vtanh.pop %v1539
      %v2626 = vtanh.pop %v1544
      %v2627 = vtanh.pop %v1549
      %v2628 = vtanh.pop %v1554
      %v2629 = vtanh.pop %v1559
      %v2630 = vtanh.pop %v1564
      %v2631 = vtanh.pop %v1569
      %v2632 = vtanh.pop %v1574
      %v2633 = vtanh.pop %v1579
      %v2634 = vtanh.pop %v1584
      %v2635 = vtanh.pop %v1589
      %v2636 = vtanh.pop %v1594
      %v2637 = vtanh.pop %v1599
      %v2638 = vtanh.pop %v1604
      %v2639 = vtanh.pop %v1609
      %v2640 = vtanh.pop %v1614
      %v2641 = vtanh.pop %v1619
      %v2642 = vtanh.pop %v1624
      %v2643 = vtanh.pop %v1629
      %v2644 = vtanh.pop %v1634
      %v2645 = vtanh.pop %v1639
      %v2646 = vtanh.pop %v1644
      %v2647 = vtanh.pop %v1649
      %v2648 = vtanh.pop %v1654
      %v2649 = vtanh.pop %v1659
      %v2650 = vtanh.pop %v1664
      %v2651 = vtanh.pop %v1669
      %v2652 = vtanh.pop %v1674
      %v2653 = vtanh.pop %v1679
      %v2654 = vtanh.pop %v1684
      %v2655 = vtanh.pop %v1689
      %v2656 = vtanh.pop %v1694
      %v2657 = vtanh.pop %v1699
      %v2658 = vtanh.pop %v1704
      %v2659 = vtanh.pop %v1709
      %v2660 = vtanh.pop %v1714
      %v2661 = vtanh.pop %v1719
      %v2662 = vtanh.pop %v1724
      %v2663 = vtanh.pop %v1729
      %v2664 = vtanh.pop %v1734
      %v2665 = vtanh.pop %v1739
      %v2666 = vtanh.pop %v1744
      %v2667 = vtanh.pop %v1749
      %v2668 = vtanh.pop %v1754
      %v2669 = vtanh.pop %v1759
      %v2670 = vtanh.pop %v1764
      %v2671 = vtanh.pop %v1769
      %v2672 = vtanh.pop %v1774
      %v2673 = vtanh.pop %v1779
      %v2674 = vtanh.pop %v1784
      %v2675 = vtanh.pop %v1789
      %v2676 = vtanh.pop %v1794
      %v2677 = vtanh.pop %v1799
      %v2678 = vtanh.pop %v1804
      %v2679 = vtanh.pop %v1809
      %v2680 = vtanh.pop %v1814
      %v2681 = vtanh.pop %v1819
      %v2682 = vtanh.pop %v1824
      %v2683 = vtanh.pop %v1829
      %v2684 = vtanh.pop %v1834
      %v2685 = vtanh.pop %v1839
      %v2686 = vtanh.pop %v1844
      %v2687 = vtanh.pop %v1849
      %v2688 = vtanh.pop %v1854
      %v2689 = vtanh.pop %v1859
      %v2690 = vtanh.pop %v1864
      %v2691 = vtanh.pop %v1869
      %v2692 = vtanh.pop %v1874
      %v2693 = vtanh.pop %v1879
      %v2694 = vtanh.pop %v1884
      %v2695 = vtanh.pop %v1889
      %v2696 = vtanh.pop %v1894
      %v2697 = vtanh.pop %v1899
      %v2698 = vtanh.pop %v1904
      %v2699 = vtanh.pop %v1909
      %v2700 = vtanh.pop %v1914
      %v2701 = vtanh.pop %v1919
      %v2702 = vtanh.pop %v1924
      %v2703 = vtanh.pop %v1929
      %v2704 = vtanh.pop %v1934
      %v2705 = vtanh.pop %v1939
      %v2706 = vtanh.pop %v1944
      %v2707 = vtanh.pop %v1949
      %v2708 = vtanh.pop %v1954
      %v2709 = vtanh.pop %v1959
      %v2710 = vtanh.pop %v1964
      %v2711 = vtanh.pop %v1969
      %v2712 = vtanh.pop %v1974
      %v2713 = vtanh.pop %v1979
      %v2714 = vtanh.pop %v1984
      %v2715 = vtanh.pop %v1989
      %v2716 = vtanh.pop %v1994
      %v2717 = vtanh.pop %v1999
      %v2718 = vtanh.pop %v2004
      %v2719 = vtanh.pop %v2009
      %v2720 = vtanh.pop %v2014
      %v2721 = vtanh.pop %v2019
      %v2722 = vtanh.pop %v2024
      %v2723 = vtanh.pop %v2029
      %v2724 = vtanh.pop %v2034
      %v2725 = vtanh.pop %v2039
      %v2726 = vtanh.pop %v2044
      %v2727 = vtanh.pop %v2049
      %v2728 = vtanh.pop %v2054
      %v2729 = vtanh.pop %v2059
      %v2730 = vtanh.pop %v2064
      %v2731 = vtanh.pop %v2069
      %v2732 = vtanh.pop %v2074
      %v2733 = vtanh.pop %v2079
      %v2734 = vtanh.pop %v2084
      %v2735 = vtanh.pop %v2089
      %v2736 = vtanh.pop %v2094
      %v2737 = vtanh.pop %v2099
      %v2738 = vtanh.pop %v2104
      %v2739 = vtanh.pop %v2109
      %v2740 = vtanh.pop %v2114
      %v2741 = vtanh.pop %v2119
      %v2742 = vtanh.pop %v2124
      %v2743 = vtanh.pop %v2129
      %v2744 = vtanh.pop %v2134
      %v2745 = vtanh.pop %v2139
      %v2746 = vtanh.pop %v2144
      %v2747 = vtanh.pop %v2149
      %v2748 = vtanh.pop %v2154
      %v2749 = vtanh.pop %v2159
      %v2750 = vtanh.pop %v2164
      %v2751 = vtanh.pop %v2169
      %v2752 = vtanh.pop %v2174
      %v2753 = vtanh.pop %v2179
      %v2754 = vtanh.pop %v2184
      %v2755 = vtanh.pop %v2189
      %v2756 = vtanh.pop %v2194
      %v2757 = vtanh.pop %v2199
      %v2758 = vtanh.pop %v2204
      %v2759 = vtanh.pop %v2209
      %v2760 = vtanh.pop %v2214
      %v2761 = vtanh.pop %v2219
      %v2762 = vtanh.pop %v2224
      %v2763 = vtanh.pop %v2229
      %v2764 = vtanh.pop %v2234
      %v2765 = vtanh.pop %v2239
      %v2766 = vtanh.pop %v2244
      %v2767 = vtanh.pop %v2249
      %v2768 = vtanh.pop %v2254
      %v2769 = vtanh.pop %v2259
      %v2770 = vtanh.pop %v2264
      %v2771 = vtanh.pop %v2269
      %v2772 = vtanh.pop %v2274
      %v2773 = vtanh.pop %v2279
      %v2774 = vtanh.pop %v2284
      %v2775 = vtanh.pop %v2289
      %v2776 = vtanh.pop %v2294
      %v2777 = vtanh.pop %v2299
      %v2778 = vtanh.pop %v2304
      %v2779 = vtanh.pop %v2309
      %v2780 = vtanh.pop %v2314
      %v2781 = vtanh.pop %v2319
      %v2782 = vtanh.pop %v2324
      %v2783 = vtanh.pop %v2329
      %v2784 = vtanh.pop %v2334
      %v2785 = vtanh.pop %v2339
      %v2786 = vtanh.pop %v2344
      %v2787 = vtanh.pop %v2349
      %v2788 = vtanh.pop %v2354
      %v2789 = vtanh.pop %v2359
      %v2790 = vtanh.pop %v2364
      %v2791 = vtanh.pop %v2369
      %v2792 = vtanh.pop %v2374
      %v2793 = vtanh.pop %v2379
      %v2794 = vtanh.pop %v2384
      %v2795 = vtanh.pop %v2389
      %v2796 = vtanh.pop %v2394
      %v2797 = vtanh.pop %v2399
      %v2798 = vtanh.pop %v2404
      %v2799 = vtanh.pop %v2409
      %v2800 = vtanh.pop %v2414
      %v2801 = vtanh.pop %v2419
      %v2802 = vtanh.pop %v2424
      %v2803 = vtanh.pop %v2429
      %v2804 = vtanh.pop %v2434
      %v2805 = vtanh.pop %v2439
      %v2806 = vtanh.pop %v2444
      %v2807 = vtanh.pop %v2449
      %v2808 = vtanh.pop %v2454
      %v2809 = vtanh.pop %v2459
      %v2810 = vtanh.pop %v2464
      %v2811 = vtanh.pop %v2469
      %v2812 = vtanh.pop %v2474
      %v2813 = vtanh.pop %v2479
      %v2814 = vtanh.pop %v2484
      %v2815 = vtanh.pop %v2489
      %v2816 = vtanh.pop %v2494
      %v2817 = vtanh.pop %v2499
      %v2818 = vtanh.pop %v2504
      %v2819 = vtanh.pop %v2509
      %v2820 = vtanh.pop %v2514
      %v2821 = vtanh.pop %v2519
      %v2822 = vtanh.pop %v2524
      %v2823 = vtanh.pop %v2529
      %v2824 = vtanh.pop %v2534
      %v2825 = vtanh.pop %v2539
      %v2826 = vtanh.pop %v2544
      %v2827 = vtanh.pop %v2549
      %v2828 = vtanh.pop %v2554
      %v2829 = vtanh.pop %v2559
      %v2830 = vtanh.pop %v2564
      %v2831 = vtanh.pop %v2569
      %v2832 = vtanh.pop %v2574
      %2833 = vst [vmem:[%s201] sm:$0xff] %v2577
      %2834 = vst [vmem:[%s201 + $0x8] sm:$0xff] %v2578
      %2835 = vst [vmem:[%s201 + $0x10] sm:$0xff] %v2579
      %2836 = vst [vmem:[%s201 + $0x18] sm:$0xff] %v2580
      %2837 = vst [vmem:[%s201 + $0x20] sm:$0xff] %v2581
      %2838 = vst [vmem:[%s201 + $0x28] sm:$0xff] %v2582
      %2839 = vst [vmem:[%s201 + $0x30] sm:$0xff] %v2583
      %2840 = vst [vmem:[%s201 + $0x38] sm:$0xff] %v2584
      %2841 = vst [vmem:[%s201 + $0x40] sm:$0xff] %v2585
      %2842 = vst [vmem:[%s201 + $0x48] sm:$0xff] %v2586
      %2843 = vst [vmem:[%s201 + $0x50] sm:$0xff] %v2587
      %2844 = vst [vmem:[%s201 + $0x58] sm:$0xff] %v2588
      %2845 = vst [vmem:[%s201 + $0x60] sm:$0xff] %v2589
      %2846 = vst [vmem:[%s201 + $0x68] sm:$0xff] %v2590
      %2847 = vst [vmem:[%s201 + $0x70] sm:$0xff] %v2591
      %2848 = vst [vmem:[%s201 + $0x78] sm:$0xff] %v2592
      %2849 = vst [vmem:[%s201 + $0x80] sm:$0xff] %v2593
      %2850 = vst [vmem:[%s201 + $0x88] sm:$0xff] %v2594
      %2851 = vst [vmem:[%s201 + $0x90] sm:$0xff] %v2595
      %2852 = vst [vmem:[%s201 + $0x98] sm:$0xff] %v2596
      %2853 = vst [vmem:[%s201 + $0xa0] sm:$0xff] %v2597
      %2854 = vst [vmem:[%s201 + $0xa8] sm:$0xff] %v2598
      %2855 = vst [vmem:[%s201 + $0xb0] sm:$0xff] %v2599
      %2856 = vst [vmem:[%s201 + $0xb8] sm:$0xff] %v2600
      %2857 = vst [vmem:[%s201 + $0xc0] sm:$0xff] %v2601
      %2858 = vst [vmem:[%s201 + $0xc8] sm:$0xff] %v2602
      %2859 = vst [vmem:[%s201 + $0xd0] sm:$0xff] %v2603
      %2860 = vst [vmem:[%s201 + $0xd8] sm:$0xff] %v2604
      %2861 = vst [vmem:[%s201 + $0xe0] sm:$0xff] %v2605
      %2862 = vst [vmem:[%s201 + $0xe8] sm:$0xff] %v2606
      %2863 = vst [vmem:[%s201 + $0xf0] sm:$0xff] %v2607
      %2864 = vst [vmem:[%s201 + $0xf8] sm:$0xff] %v2608
      %2865 = vst [vmem:[%s201 + $0x100] sm:$0xff] %v2609
      %2866 = vst [vmem:[%s201 + $0x108] sm:$0xff] %v2610
      %2867 = vst [vmem:[%s201 + $0x110] sm:$0xff] %v2611
      %2868 = vst [vmem:[%s201 + $0x118] sm:$0xff] %v2612
      %2869 = vst [vmem:[%s201 + $0x120] sm:$0xff] %v2613
      %2870 = vst [vmem:[%s201 + $0x128] sm:$0xff] %v2614
      %2871 = vst [vmem:[%s201 + $0x130] sm:$0xff] %v2615
      %2872 = vst [vmem:[%s201 + $0x138] sm:$0xff] %v2616
      %2873 = vst [vmem:[%s201 + $0x140] sm:$0xff] %v2617
      %2874 = vst [vmem:[%s201 + $0x148] sm:$0xff] %v2618
      %2875 = vst [vmem:[%s201 + $0x150] sm:$0xff] %v2619
      %2876 = vst [vmem:[%s201 + $0x158] sm:$0xff] %v2620
      %2877 = vst [vmem:[%s201 + $0x160] sm:$0xff] %v2621
      %2878 = vst [vmem:[%s201 + $0x168] sm:$0xff] %v2622
      %2879 = vst [vmem:[%s201 + $0x170] sm:$0xff] %v2623
      %2880 = vst [vmem:[%s201 + $0x178] sm:$0xff] %v2624
      %2881 = vst [vmem:[%s201 + $0x180] sm:$0xff] %v2625
      %2882 = vst [vmem:[%s201 + $0x188] sm:$0xff] %v2626
      %2883 = vst [vmem:[%s201 + $0x190] sm:$0xff] %v2627
      %2884 = vst [vmem:[%s201 + $0x198] sm:$0xff] %v2628
      %2885 = vst [vmem:[%s201 + $0x1a0] sm:$0xff] %v2629
      %2886 = vst [vmem:[%s201 + $0x1a8] sm:$0xff] %v2630
      %2887 = vst [vmem:[%s201 + $0x1b0] sm:$0xff] %v2631
      %2888 = vst [vmem:[%s201 + $0x1b8] sm:$0xff] %v2632
      %2889 = vst [vmem:[%s201 + $0x1c0] sm:$0xff] %v2633
      %2890 = vst [vmem:[%s201 + $0x1c8] sm:$0xff] %v2634
      %2891 = vst [vmem:[%s201 + $0x1d0] sm:$0xff] %v2635
      %2892 = vst [vmem:[%s201 + $0x1d8] sm:$0xff] %v2636
      %2893 = vst [vmem:[%s201 + $0x1e0] sm:$0xff] %v2637
      %2894 = vst [vmem:[%s201 + $0x1e8] sm:$0xff] %v2638
      %2895 = vst [vmem:[%s201 + $0x1f0] sm:$0xff] %v2639
      %2896 = vst [vmem:[%s201 + $0x1f8] sm:$0xff] %v2640
      %2897 = vst [vmem:[%s201 + $0x200] sm:$0xff] %v2641
      %2898 = vst [vmem:[%s201 + $0x208] sm:$0xff] %v2642
      %2899 = vst [vmem:[%s201 + $0x210] sm:$0xff] %v2643
      %2900 = vst [vmem:[%s201 + $0x218] sm:$0xff] %v2644
      %2901 = vst [vmem:[%s201 + $0x220] sm:$0xff] %v2645
      %2902 = vst [vmem:[%s201 + $0x228] sm:$0xff] %v2646
      %2903 = vst [vmem:[%s201 + $0x230] sm:$0xff] %v2647
      %2904 = vst [vmem:[%s201 + $0x238] sm:$0xff] %v2648
      %2905 = vst [vmem:[%s201 + $0x240] sm:$0xff] %v2649
      %2906 = vst [vmem:[%s201 + $0x248] sm:$0xff] %v2650
      %2907 = vst [vmem:[%s201 + $0x250] sm:$0xff] %v2651
      %2908 = vst [vmem:[%s201 + $0x258] sm:$0xff] %v2652
      %2909 = vst [vmem:[%s201 + $0x260] sm:$0xff] %v2653
      %2910 = vst [vmem:[%s201 + $0x268] sm:$0xff] %v2654
      %2911 = vst [vmem:[%s201 + $0x270] sm:$0xff] %v2655
      %2912 = vst [vmem:[%s201 + $0x278] sm:$0xff] %v2656
      %2913 = vst [vmem:[%s201 + $0x280] sm:$0xff] %v2657
      %2914 = vst [vmem:[%s201 + $0x288] sm:$0xff] %v2658
      %2915 = vst [vmem:[%s201 + $0x290] sm:$0xff] %v2659
      %2916 = vst [vmem:[%s201 + $0x298] sm:$0xff] %v2660
      %2917 = vst [vmem:[%s201 + $0x2a0] sm:$0xff] %v2661
      %2918 = vst [vmem:[%s201 + $0x2a8] sm:$0xff] %v2662
      %2919 = vst [vmem:[%s201 + $0x2b0] sm:$0xff] %v2663
      %2920 = vst [vmem:[%s201 + $0x2b8] sm:$0xff] %v2664
      %2921 = vst [vmem:[%s201 + $0x2c0] sm:$0xff] %v2665
      %2922 = vst [vmem:[%s201 + $0x2c8] sm:$0xff] %v2666
      %2923 = vst [vmem:[%s201 + $0x2d0] sm:$0xff] %v2667
      %2924 = vst [vmem:[%s201 + $0x2d8] sm:$0xff] %v2668
      %2925 = vst [vmem:[%s201 + $0x2e0] sm:$0xff] %v2669
      %2926 = vst [vmem:[%s201 + $0x2e8] sm:$0xff] %v2670
      %2927 = vst [vmem:[%s201 + $0x2f0] sm:$0xff] %v2671
      %2928 = vst [vmem:[%s201 + $0x2f8] sm:$0xff] %v2672
      %2929 = vst [vmem:[%s201 + $0x300] sm:$0xff] %v2673
      %2930 = vst [vmem:[%s201 + $0x308] sm:$0xff] %v2674
      %2931 = vst [vmem:[%s201 + $0x310] sm:$0xff] %v2675
      %2932 = vst [vmem:[%s201 + $0x318] sm:$0xff] %v2676
      %2933 = vst [vmem:[%s201 + $0x320] sm:$0xff] %v2677
      %2934 = vst [vmem:[%s201 + $0x328] sm:$0xff] %v2678
      %2935 = vst [vmem:[%s201 + $0x330] sm:$0xff] %v2679
      %2936 = vst [vmem:[%s201 + $0x338] sm:$0xff] %v2680
      %2937 = vst [vmem:[%s201 + $0x340] sm:$0xff] %v2681
      %2938 = vst [vmem:[%s201 + $0x348] sm:$0xff] %v2682
      %2939 = vst [vmem:[%s201 + $0x350] sm:$0xff] %v2683
      %2940 = vst [vmem:[%s201 + $0x358] sm:$0xff] %v2684
      %2941 = vst [vmem:[%s201 + $0x360] sm:$0xff] %v2685
      %2942 = vst [vmem:[%s201 + $0x368] sm:$0xff] %v2686
      %2943 = vst [vmem:[%s201 + $0x370] sm:$0xff] %v2687
      %2944 = vst [vmem:[%s201 + $0x378] sm:$0xff] %v2688
      %2945 = vst [vmem:[%s201 + $0x380] sm:$0xff] %v2689
      %2946 = vst [vmem:[%s201 + $0x388] sm:$0xff] %v2690
      %2947 = vst [vmem:[%s201 + $0x390] sm:$0xff] %v2691
      %2948 = vst [vmem:[%s201 + $0x398] sm:$0xff] %v2692
      %2949 = vst [vmem:[%s201 + $0x3a0] sm:$0xff] %v2693
      %2950 = vst [vmem:[%s201 + $0x3a8] sm:$0xff] %v2694
      %2951 = vst [vmem:[%s201 + $0x3b0] sm:$0xff] %v2695
      %2952 = vst [vmem:[%s201 + $0x3b8] sm:$0xff] %v2696
      %2953 = vst [vmem:[%s201 + $0x3c0] sm:$0xff] %v2697
      %2954 = vst [vmem:[%s201 + $0x3c8] sm:$0xff] %v2698
      %2955 = vst [vmem:[%s201 + $0x3d0] sm:$0xff] %v2699
      %2956 = vst [vmem:[%s201 + $0x3d8] sm:$0xff] %v2700
      %2957 = vst [vmem:[%s201 + $0x3e0] sm:$0xff] %v2701
      %2958 = vst [vmem:[%s201 + $0x3e8] sm:$0xff] %v2702
      %2959 = vst [vmem:[%s201 + $0x3f0] sm:$0xff] %v2703
      %2960 = vst [vmem:[%s201 + $0x3f8] sm:$0xff] %v2704
      %2961 = vst [vmem:[%s201 + $0x400] sm:$0xff] %v2705
      %2962 = vst [vmem:[%s201 + $0x408] sm:$0xff] %v2706
      %2963 = vst [vmem:[%s201 + $0x410] sm:$0xff] %v2707
      %2964 = vst [vmem:[%s201 + $0x418] sm:$0xff] %v2708
      %2965 = vst [vmem:[%s201 + $0x420] sm:$0xff] %v2709
      %2966 = vst [vmem:[%s201 + $0x428] sm:$0xff] %v2710
      %2967 = vst [vmem:[%s201 + $0x430] sm:$0xff] %v2711
      %2968 = vst [vmem:[%s201 + $0x438] sm:$0xff] %v2712
      %2969 = vst [vmem:[%s201 + $0x440] sm:$0xff] %v2713
      %2970 = vst [vmem:[%s201 + $0x448] sm:$0xff] %v2714
      %2971 = vst [vmem:[%s201 + $0x450] sm:$0xff] %v2715
      %2972 = vst [vmem:[%s201 + $0x458] sm:$0xff] %v2716
      %2973 = vst [vmem:[%s201 + $0x460] sm:$0xff] %v2717
      %2974 = vst [vmem:[%s201 + $0x468] sm:$0xff] %v2718
      %2975 = vst [vmem:[%s201 + $0x470] sm:$0xff] %v2719
      %2976 = vst [vmem:[%s201 + $0x478] sm:$0xff] %v2720
      %2977 = vst [vmem:[%s201 + $0x480] sm:$0xff] %v2721
      %2978 = vst [vmem:[%s201 + $0x488] sm:$0xff] %v2722
      %2979 = vst [vmem:[%s201 + $0x490] sm:$0xff] %v2723
      %2980 = vst [vmem:[%s201 + $0x498] sm:$0xff] %v2724
      %2981 = vst [vmem:[%s201 + $0x4a0] sm:$0xff] %v2725
      %2982 = vst [vmem:[%s201 + $0x4a8] sm:$0xff] %v2726
      %2983 = vst [vmem:[%s201 + $0x4b0] sm:$0xff] %v2727
      %2984 = vst [vmem:[%s201 + $0x4b8] sm:$0xff] %v2728
      %2985 = vst [vmem:[%s201 + $0x4c0] sm:$0xff] %v2729
      %2986 = vst [vmem:[%s201 + $0x4c8] sm:$0xff] %v2730
      %2987 = vst [vmem:[%s201 + $0x4d0] sm:$0xff] %v2731
      %2988 = vst [vmem:[%s201 + $0x4d8] sm:$0xff] %v2732
      %2989 = vst [vmem:[%s201 + $0x4e0] sm:$0xff] %v2733
      %2990 = vst [vmem:[%s201 + $0x4e8] sm:$0xff] %v2734
      %2991 = vst [vmem:[%s201 + $0x4f0] sm:$0xff] %v2735
      %2992 = vst [vmem:[%s201 + $0x4f8] sm:$0xff] %v2736
      %2993 = vst [vmem:[%s201 + $0x500] sm:$0xff] %v2737
      %2994 = vst [vmem:[%s201 + $0x508] sm:$0xff] %v2738
      %2995 = vst [vmem:[%s201 + $0x510] sm:$0xff] %v2739
      %2996 = vst [vmem:[%s201 + $0x518] sm:$0xff] %v2740
      %2997 = vst [vmem:[%s201 + $0x520] sm:$0xff] %v2741
      %2998 = vst [vmem:[%s201 + $0x528] sm:$0xff] %v2742
      %2999 = vst [vmem:[%s201 + $0x530] sm:$0xff] %v2743
      %3000 = vst [vmem:[%s201 + $0x538] sm:$0xff] %v2744
      %3001 = vst [vmem:[%s201 + $0x540] sm:$0xff] %v2745
      %3002 = vst [vmem:[%s201 + $0x548] sm:$0xff] %v2746
      %3003 = vst [vmem:[%s201 + $0x550] sm:$0xff] %v2747
      %3004 = vst [vmem:[%s201 + $0x558] sm:$0xff] %v2748
      %3005 = vst [vmem:[%s201 + $0x560] sm:$0xff] %v2749
      %3006 = vst [vmem:[%s201 + $0x568] sm:$0xff] %v2750
      %3007 = vst [vmem:[%s201 + $0x570] sm:$0xff] %v2751
      %3008 = vst [vmem:[%s201 + $0x578] sm:$0xff] %v2752
      %3009 = vst [vmem:[%s201 + $0x580] sm:$0xff] %v2753
      %3010 = vst [vmem:[%s201 + $0x588] sm:$0xff] %v2754
      %3011 = vst [vmem:[%s201 + $0x590] sm:$0xff] %v2755
      %3012 = vst [vmem:[%s201 + $0x598] sm:$0xff] %v2756
      %3013 = vst [vmem:[%s201 + $0x5a0] sm:$0xff] %v2757
      %3014 = vst [vmem:[%s201 + $0x5a8] sm:$0xff] %v2758
      %3015 = vst [vmem:[%s201 + $0x5b0] sm:$0xff] %v2759
      %3016 = vst [vmem:[%s201 + $0x5b8] sm:$0xff] %v2760
      %3017 = vst [vmem:[%s201 + $0x5c0] sm:$0xff] %v2761
      %3018 = vst [vmem:[%s201 + $0x5c8] sm:$0xff] %v2762
      %3019 = vst [vmem:[%s201 + $0x5d0] sm:$0xff] %v2763
      %3020 = vst [vmem:[%s201 + $0x5d8] sm:$0xff] %v2764
      %3021 = vst [vmem:[%s201 + $0x5e0] sm:$0xff] %v2765
      %3022 = vst [vmem:[%s201 + $0x5e8] sm:$0xff] %v2766
      %3023 = vst [vmem:[%s201 + $0x5f0] sm:$0xff] %v2767
      %3024 = vst [vmem:[%s201 + $0x5f8] sm:$0xff] %v2768
      %3025 = vst [vmem:[%s201 + $0x600] sm:$0xff] %v2769
      %3026 = vst [vmem:[%s201 + $0x608] sm:$0xff] %v2770
      %3027 = vst [vmem:[%s201 + $0x610] sm:$0xff] %v2771
      %3028 = vst [vmem:[%s201 + $0x618] sm:$0xff] %v2772
      %3029 = vst [vmem:[%s201 + $0x620] sm:$0xff] %v2773
      %3030 = vst [vmem:[%s201 + $0x628] sm:$0xff] %v2774
      %3031 = vst [vmem:[%s201 + $0x630] sm:$0xff] %v2775
      %3032 = vst [vmem:[%s201 + $0x638] sm:$0xff] %v2776
      %3033 = vst [vmem:[%s201 + $0x640] sm:$0xff] %v2777
      %3034 = vst [vmem:[%s201 + $0x648] sm:$0xff] %v2778
      %3035 = vst [vmem:[%s201 + $0x650] sm:$0xff] %v2779
      %3036 = vst [vmem:[%s201 + $0x658] sm:$0xff] %v2780
      %3037 = vst [vmem:[%s201 + $0x660] sm:$0xff] %v2781
      %3038 = vst [vmem:[%s201 + $0x668] sm:$0xff] %v2782
      %3039 = vst [vmem:[%s201 + $0x670] sm:$0xff] %v2783
      %3040 = vst [vmem:[%s201 + $0x678] sm:$0xff] %v2784
      %3041 = vst [vmem:[%s201 + $0x680] sm:$0xff] %v2785
      %3042 = vst [vmem:[%s201 + $0x688] sm:$0xff] %v2786
      %3043 = vst [vmem:[%s201 + $0x690] sm:$0xff] %v2787
      %3044 = vst [vmem:[%s201 + $0x698] sm:$0xff] %v2788
      %3045 = vst [vmem:[%s201 + $0x6a0] sm:$0xff] %v2789
      %3046 = vst [vmem:[%s201 + $0x6a8] sm:$0xff] %v2790
      %3047 = vst [vmem:[%s201 + $0x6b0] sm:$0xff] %v2791
      %3048 = vst [vmem:[%s201 + $0x6b8] sm:$0xff] %v2792
      %3049 = vst [vmem:[%s201 + $0x6c0] sm:$0xff] %v2793
      %3050 = vst [vmem:[%s201 + $0x6c8] sm:$0xff] %v2794
      %3051 = vst [vmem:[%s201 + $0x6d0] sm:$0xff] %v2795
      %3052 = vst [vmem:[%s201 + $0x6d8] sm:$0xff] %v2796
      %3053 = vst [vmem:[%s201 + $0x6e0] sm:$0xff] %v2797
      %3054 = vst [vmem:[%s201 + $0x6e8] sm:$0xff] %v2798
      %3055 = vst [vmem:[%s201 + $0x6f0] sm:$0xff] %v2799
      %3056 = vst [vmem:[%s201 + $0x6f8] sm:$0xff] %v2800
      %3057 = vst [vmem:[%s201 + $0x700] sm:$0xff] %v2801
      %3058 = vst [vmem:[%s201 + $0x708] sm:$0xff] %v2802
      %3059 = vst [vmem:[%s201 + $0x710] sm:$0xff] %v2803
      %3060 = vst [vmem:[%s201 + $0x718] sm:$0xff] %v2804
      %3061 = vst [vmem:[%s201 + $0x720] sm:$0xff] %v2805
      %3062 = vst [vmem:[%s201 + $0x728] sm:$0xff] %v2806
      %3063 = vst [vmem:[%s201 + $0x730] sm:$0xff] %v2807
      %3064 = vst [vmem:[%s201 + $0x738] sm:$0xff] %v2808
      %3065 = vst [vmem:[%s201 + $0x740] sm:$0xff] %v2809
      %3066 = vst [vmem:[%s201 + $0x748] sm:$0xff] %v2810
      %3067 = vst [vmem:[%s201 + $0x750] sm:$0xff] %v2811
      %3068 = vst [vmem:[%s201 + $0x758] sm:$0xff] %v2812
      %3069 = vst [vmem:[%s201 + $0x760] sm:$0xff] %v2813
      %3070 = vst [vmem:[%s201 + $0x768] sm:$0xff] %v2814
      %3071 = vst [vmem:[%s201 + $0x770] sm:$0xff] %v2815
      %3072 = vst [vmem:[%s201 + $0x778] sm:$0xff] %v2816
      %3073 = vst [vmem:[%s201 + $0x780] sm:$0xff] %v2817
      %3074 = vst [vmem:[%s201 + $0x788] sm:$0xff] %v2818
      %3075 = vst [vmem:[%s201 + $0x790] sm:$0xff] %v2819
      %3076 = vst [vmem:[%s201 + $0x798] sm:$0xff] %v2820
      %3077 = vst [vmem:[%s201 + $0x7a0] sm:$0xff] %v2821
      %3078 = vst [vmem:[%s201 + $0x7a8] sm:$0xff] %v2822
      %3079 = vst [vmem:[%s201 + $0x7b0] sm:$0xff] %v2823
      %3080 = vst [vmem:[%s201 + $0x7b8] sm:$0xff] %v2824
      %3081 = vst [vmem:[%s201 + $0x7c0] sm:$0xff] %v2825
      %3082 = vst [vmem:[%s201 + $0x7c8] sm:$0xff] %v2826
      %3083 = vst [vmem:[%s201 + $0x7d0] sm:$0xff] %v2827
      %3084 = vst [vmem:[%s201 + $0x7d8] sm:$0xff] %v2828
      %3085 = vst [vmem:[%s201 + $0x7e0] sm:$0xff] %v2829
      %3086 = vst [vmem:[%s201 + $0x7e8] sm:$0xff] %v2830
      %3087 = vst [vmem:[%s201 + $0x7f0] sm:$0xff] %v2831
      %3088 = vst [vmem:[%s201 + $0x7f8] sm:$0xff] %v2832
      %s3089 = smul.u32 256, %s18
      %p3090 = scmp.lt.s32.totalorder %s17, 3
      %s3091 = scalar_select %p3090, %s17, 3
      %p3092 = scmp.lt.s32.totalorder %s3089, 255
      %s3093 = scalar_select %p3092, %s3089, 255
      %s3094 = smul.addr %s3091, 256
      %s3095 = sadd.s32 %s3093, %s3094
      %s3096 = smul.addr %s3095, 8
      %s3097 = scalar_lea.vmem %s2, %s3096
      // Predicated region
      $region29: #{generator_forward.9} parent=27 // pred_check
        %p3098 = pneg %p99
      $region30: #{generator_forward.9} parent=27 // pred_check_branch
        %3100 = sbr.rel (%p3098) target = $region32
      $region31: #{generator_forward.9} parent=27 // pred_region
        %s3101 = smul.u32 256, %s18
      $region32: #{generator_forward.9} parent=27 // pred_fallthru
        _
    $region28: #{generator_forward.9} parent=5 // pred_fallthru
      _
    %p3102 = scmp.le.s32.totalorder 2, %s8
    // Predicated region
    $region33: #{generator_forward.9} parent=5 // pred_check
      %p3103 = pneg %p3102
    $region34: #{generator_forward.9} parent=5 // pred_check_branch
      %3105 = sbr.rel (%p3103) target = $region36
    $region35: #{generator_forward.9} parent=5 // pred_region
      %s3106 = ssub.s32 %s8, 2
      // Predicated region
      $region37: #{generator_forward.9} parent=35 // pred_check
        %p3107 = pneg %p105
      $region38: #{generator_forward.9} parent=35 // pred_check_branch
        %3109 = sbr.rel (%p3107) target = $region40
      $region39: #{generator_forward.9} parent=35 // pred_region
        %s3110 = smul.u32 256, %s20
        %p3111 = scmp.lt.s32.totalorder %s19, 3
        %s3112 = scalar_select %p3111, %s19, 3
        %p3113 = scmp.lt.s32.totalorder %s3110, 255
        %s3114 = scalar_select %p3113, %s3110, 255
        %s3115 = smul.addr %s3112, 256
        %s3116 = sadd.s32 %s3114, %s3115
        %s3117 = smul.addr %s3116, 8
        %s3118 = scalar_lea.vmem %s2, %s3117
      $region40: #{generator_forward.9} parent=35 // pred_fallthru
        _
    $region36: #{generator_forward.9} parent=5 // pred_fallthru
      _
  $region6: #{generator_forward.9} parent=0 // loop_footer
    %s12 = sadd.s32 1, %s8
  $region7: #{generator_forward.9} parent=0 // loop_footer_branch
    %7 = sbr.rel target = $region3
  $region8: #{generator_forward.9} parent=0 // loop_exit
    _

</llo_original>
